<compile_context>
chip_gen: v7x
topology: tpu7x:2x2x1
jax: 0.10.0
libtpu: 0.0.40
codegen_flags: <defaults>
</compile_context>

<pallas_src>
import functools

import jax
import jax.numpy as jnp
from jax.experimental import pallas as pl
from jax.experimental.pallas import tpu as pltpu

N_MAPS = 128
N_LABELS = 12
N_LAYERS = 9
BN_EPS = 1e-5
_W_OFF = 16  # bf16 sublane packing is (16, 128): interior write + kw=1 view stay aligned


# ---------------------------------------------------------------------------
# Single fused kernel: conv0 + 9 x (conv3x3 + ReLU + residual + BN) + head.
# ---------------------------------------------------------------------------
def _fused_resnet_kernel(p0_ref, w0_ref, wc_ref, fcw_ref, fcb_ref, o_ref,
                         xpad_ref, oldx_ref, *, B, H, W):
    # p0_ref  : (B*H*W, 128)  bf16  conv0 im2col patches (9 real cols, rest zero)
    # w0_ref  : (128, 128)    bf16  conv0 weights, row t = kh*3+kw (rows 9.. zero)
    # wc_ref  : (81, 128, 128) bf16 conv1..9 weights, row (layer*9 + tap) -> (Cin, Cout)
    # fcw_ref : (128, 128)    f32   fc weight, cols 12.. zero
    # fcb_ref : (1, 128)      f32   fc bias,   cols 12.. zero
    # o_ref   : (B, 128)      f32   lane-dense padded logits
    # xpad_ref: (B, H+2, W+2*_W_OFF, C) bf16 scratch; zero halo, data at cols 16..16+W-1
    # oldx_ref: (B*H*W, C)    f32   pre-BN residual carry
    C = N_MAPS
    M = B * H * W

    def write_interior(x_f32):
        # Single aligned bf16 store of the current activation into the padded buffer.
        xpad_ref[:, 1:H + 1, _W_OFF:_W_OFF + W, :] = (
            x_f32.astype(jnp.bfloat16).reshape(B, H, W, C))

    # Zero once: the +/-1 halo ring read by the border taps must be zero.
    xpad_ref[...] = jnp.zeros_like(xpad_ref)

    # ---- conv0 (Cin=1 specialisation, pre-im2col'ed) + ReLU; no BN at layer 0 ----
    x0 = jnp.maximum(
        jnp.dot(p0_ref[...], w0_ref[...], preferred_element_type=jnp.float32),
        0.0)                                                  # (M, C) f32
    oldx_ref[...] = x0                                        # pre-BN residual value
    write_interior(x0)

    # ---- conv1 .. conv9 (rolled loop: bounded live ranges, weights read per tap) ----
    @pl.loop(1, N_LAYERS + 1)
    def _layer(li):
        base = (li - 1) * 9
        # 9 accumulating K=128 matmuls reading the shifted tap views directly
        # (no (M, 9C) concat copy; kw=1 view is vreg-aligned, kw=0/2 need a shift).
        acc = None
        for kh in range(3):
            for kw in range(3):
                patch = xpad_ref[:, kh:kh + H,
                                 _W_OFF - 1 + kw:_W_OFF - 1 + kw + W, :]
                part = jnp.dot(patch.reshape(M, C),
                               wc_ref[base + kh * 3 + kw],
                               preferred_element_type=jnp.float32)
                acc = part if acc is None else acc + part
        y = jnp.maximum(acc, 0.0)                             # ReLU, (M, C) f32

        is_even = (li % 2) == 0
        x_pre = jnp.where(is_even, y + oldx_ref[...], y)      # residual add (pre-BN)

        @pl.when(is_even)
        def _():
            oldx_ref[...] = x_pre

        # BatchNorm2d(affine=False), training-mode biased stats, two-pass, f32.
        mean = jnp.mean(x_pre, axis=0, keepdims=True)         # (1, C)
        xc = x_pre - mean
        var = jnp.mean(xc * xc, axis=0, keepdims=True)        # biased variance
        xn = xc * jax.lax.rsqrt(var + BN_EPS)

        write_interior(xn)                                    # next layer's input (bf16)

        # ---- head on the final layer: spatial mean + Linear(128 -> 12, lane-padded) ----
        @pl.when(li == N_LAYERS)
        def _():
            m = jnp.mean(xn.reshape(B, H * W, C), axis=1)     # (B, C) f32
            o_ref[...] = (jnp.dot(m, fcw_ref[...],
                                  preferred_element_type=jnp.float32)
                          + fcb_ref[...])


# ---------------------------------------------------------------------------
# Host-side layout plumbing (one-time, tiny): weight packing + conv0 im2col.
# NOTE: weights here are laid out (kh, kw, Cin, Cout); imported PyTorch Conv2d
# weights (Cout, Cin, kh, kw) must be permuted with .transpose(2, 3, 1, 0), and
# the Linear weight (out, in) must be transposed, before packing.
# ---------------------------------------------------------------------------
def _pack_params(params):
    # conv0: (3,3,1,128) -> (9,128) -> zero-pad K to (128,128), bf16.
    w0 = params["conv_w0"].reshape(9, N_MAPS)
    w0 = jnp.pad(w0, ((0, N_MAPS - 9), (0, 0))).astype(jnp.bfloat16)
    # conv1..9: (3,3,128,128) -> per-tap (Cin,Cout) blocks -> (81, 128, 128), bf16.
    wc = jnp.stack([w.reshape(9, N_MAPS, N_MAPS) for w in params["conv_w"]])
    wc = wc.reshape(N_LAYERS * 9, N_MAPS, N_MAPS).astype(jnp.bfloat16)
    # FC: pad output lanes 12 -> 128 (lane-dense store; sliced back outside).
    fcw = jnp.pad(params["fc_w"],
                  ((0, 0), (0, N_MAPS - N_LABELS))).astype(jnp.float32)
    fcb = jnp.pad(params["fc_b"].reshape(1, N_LABELS),
                  ((0, 0), (0, N_MAPS - N_LABELS))).astype(jnp.float32)
    return w0, wc, fcw, fcb


def _conv0_im2col(x_nchw):
    # (B, 1, H, W) -> (B*H*W, 128) bf16 patches for the Cin=1 conv0 (cols 9.. zero).
    B, _, H, W = x_nchw.shape
    x = x_nchw[:, 0, :, :].astype(jnp.float32)             # (B, H, W)
    xp = jnp.pad(x, ((0, 0), (1, 1), (1, 1)))
    cols = [xp[:, kh:kh + H, kw:kw + W].reshape(B * H * W, 1)
            for kh in range(3) for kw in range(3)]
    p = jnp.concatenate(cols, axis=1)                      # (B*H*W, 9)
    p = jnp.pad(p, ((0, 0), (0, N_MAPS - 9)))
    return p.astype(jnp.bfloat16)


# ---------------------------------------------------------------------------
# Full forward pass (mirrors ResModel.forward).
# ---------------------------------------------------------------------------
@jax.jit
def res_model_forward(x_nchw, params):
    B, cin, H, W = x_nchw.shape
    assert cin == 1
    assert W % 8 == 0 and (B * H * W) % 8 == 0, "layout assumes 8-aligned widths"
    M = B * H * W

    p0 = _conv0_im2col(x_nchw)
    w0, wc, fcw, fcb = _pack_params(params)

    kernel = functools.partial(_fused_resnet_kernel, B=B, H=H, W=W)

    flops = (2 * M * N_MAPS * N_MAPS                      # conv0 (padded K=128)
             + N_LAYERS * 2 * M * (9 * N_MAPS) * N_MAPS   # conv1..9
             + 2 * B * N_MAPS * N_MAPS)                   # FC head
    bytes_accessed = int(p0.size * 2 + w0.size * 2 + wc.size * 2
                         + fcw.size * 4 + fcb.size * 4 + B * N_MAPS * 4)

    logits_padded = pl.pallas_call(
        kernel,
        out_shape=jax.ShapeDtypeStruct((B, N_MAPS), jnp.float32),
        in_specs=[pl.BlockSpec(memory_space=pltpu.MemorySpace.VMEM)] * 5,
        out_specs=pl.BlockSpec(memory_space=pltpu.MemorySpace.VMEM),
        scratch_shapes=[
            pltpu.VMEM((B, H + 2, W + 2 * _W_OFF, N_MAPS), jnp.bfloat16),  # padded act
            pltpu.VMEM((M, N_MAPS), jnp.float32),                          # old_x (f32)
        ],
        compiler_params=pltpu.CompilerParams(
            vmem_limit_bytes=32 * 1024 * 1024),   # actual residency is ~4 MiB at B=2
        cost_estimate=pl.CostEstimate(
            flops=flops,
            transcendentals=N_LAYERS * N_MAPS,
            bytes_accessed=bytes_accessed),
    )(p0, w0, wc, fcw, fcb)

    return logits_padded[:, :N_LABELS]


# ---------------------------------------------------------------------------
# Deterministic parameter construction (shapes per ResModel.__init__).
# ---------------------------------------------------------------------------
def init_params(key):
    keys = jax.random.split(key, N_LAYERS + 3)
    conv_w0 = jax.random.normal(keys[0], (3, 3, 1, N_MAPS), jnp.float32) * 0.3
    conv_w = [jax.random.normal(keys[i], (3, 3, N_MAPS, N_MAPS), jnp.float32) * 0.03
              for i in range(1, N_LAYERS + 1)]
    fc_w = jax.random.normal(keys[N_LAYERS + 1], (N_MAPS, N_LABELS), jnp.float32) * 0.05
    fc_b = jax.random.normal(keys[N_LAYERS + 2], (N_LABELS,), jnp.float32) * 0.05
    return {"conv_w0": conv_w0, "conv_w": conv_w, "fc_w": fc_w, "fc_b": fc_b}


if __name__ == "__main__":
    key = jax.random.PRNGKey(0)
    k_params, k_x = jax.random.split(key)
    params = init_params(k_params)

    # NCHW input consistent with the module: (batch=2, 1 channel, 16x16 "spectrogram").
    x = jax.random.normal(k_x, (2, 1, 16, 16), jnp.float32)

    out = res_model_forward(x, params)
    out = jax.block_until_ready(out)

    assert out.shape == (2, N_LABELS), out.shape
    assert bool(jnp.all(jnp.isfinite(out)))
    print("KERNEL_OK")
</pallas_src>

<mosaic_0001>
module attributes {stable_mosaic.version = 11 : i64} {
  func.func @_fused_resnet_kernel(%arg0: memref<512x128xbf16, #tpu.memory_space<vmem>>, %arg1: memref<128x128xbf16, #tpu.memory_space<vmem>>, %arg2: memref<81x128x128xbf16, #tpu.memory_space<vmem>>, %arg3: memref<128x128xf32, #tpu.memory_space<vmem>>, %arg4: memref<1x128xf32, #tpu.memory_space<vmem>>, %arg5: memref<2x128xf32, #tpu.memory_space<vmem>>, %arg6: memref<2x18x48x128xbf16, #tpu.memory_space<vmem>>, %arg7: memref<512x128xf32, #tpu.memory_space<vmem>>) attributes {dimension_semantics = [], scalar_prefetch = 0 : i64, scratch_operands = 2 : i64, tpu.core_type = #tpu.core_type<tc>} {
    %cst = arith.constant 0.000000e+00 : bf16
    %0 = vector.broadcast %cst : bf16 to vector<2x18x48x128xbf16>
    %c0 = arith.constant 0 : index
    %c0_0 = arith.constant 0 : index
    %c0_1 = arith.constant 0 : index
    %c0_2 = arith.constant 0 : index
    %1 = vector.load %arg6[%c0, %c0_0, %c0_1, %c0_2] : memref<2x18x48x128xbf16, #tpu.memory_space<vmem>>, vector<2x18x48x128xbf16>
    tpu.vector_store %arg6[%c0, %c0_0, %c0_1, %c0_2], %0 {strides = array<i32>} : memref<2x18x48x128xbf16, #tpu.memory_space<vmem>>, vector<2x18x48x128xbf16>,
    %c0_3 = arith.constant 0 : index
    %c0_4 = arith.constant 0 : index
    %2 = vector.load %arg0[%c0_3, %c0_4] : memref<512x128xbf16, #tpu.memory_space<vmem>>, vector<512x128xbf16>
    %c0_5 = arith.constant 0 : index
    %c0_6 = arith.constant 0 : index
    %3 = vector.load %arg1[%c0_5, %c0_6] : memref<128x128xbf16, #tpu.memory_space<vmem>>, vector<128x128xbf16>
    %cst_7 = arith.constant dense<0.000000e+00> : vector<512x128xf32>
    %4 = tpu.matmul %2, %3, %cst_7 {dimension_numbers = #tpu.dot_dimension_numbers<[1], [0], [0], [1], [0, 0, 1, 1], [], []>} : vector<512x128xbf16>, vector<128x128xbf16>, vector<512x128xf32> -> vector<512x128xf32>
    %cst_8 = arith.constant 0.000000e+00 : f32
    %5 = vector.broadcast %cst_8 : f32 to vector<512x128xf32>
    %6 = arith.maximumf %4, %5 : vector<512x128xf32>
    %c0_9 = arith.constant 0 : index
    %c0_10 = arith.constant 0 : index
    %7 = vector.load %arg7[%c0_9, %c0_10] : memref<512x128xf32, #tpu.memory_space<vmem>>, vector<512x128xf32>
    tpu.vector_store %arg7[%c0_9, %c0_10], %6 {strides = array<i32>} : memref<512x128xf32, #tpu.memory_space<vmem>>, vector<512x128xf32>,
    %8 = arith.truncf %6 : vector<512x128xf32> to vector<512x128xbf16>
    %9 = vector.shape_cast %8 : vector<512x128xbf16> to vector<2x16x16x128xbf16>
    %c0_11 = arith.constant 0 : index
    %c1 = arith.constant 1 : index
    %c16 = arith.constant 16 : index
    %c0_12 = arith.constant 0 : index
    %10 = vector.load %arg6[%c0_11, %c1, %c16, %c0_12] : memref<2x18x48x128xbf16, #tpu.memory_space<vmem>>, vector<2x16x16x128xbf16>
    tpu.vector_store %arg6[%c0_11, %c1, %c16, %c0_12], %9 {strides = array<i32>} : memref<2x18x48x128xbf16, #tpu.memory_space<vmem>>, vector<2x16x16x128xbf16>,
    %c0_i32 = arith.constant 0 : i32
    %c9_i32 = arith.constant 9 : i32
    %11 = arith.addi %c0_i32, %c9_i32 : i32
    %c1_i32 = arith.constant 1 : i32
    scf.for %arg8 = %c0_i32 to %11 step %c1_i32  : i32 {
      %c1_i32_14 = arith.constant 1 : i32
      %12 = arith.muli %arg8, %c1_i32_14 : i32
      %c1_i32_15 = arith.constant 1 : i32
      %13 = arith.addi %c1_i32_15, %12 : i32
      %c1_i32_16 = arith.constant 1 : i32
      %14 = arith.subi %13, %c1_i32_16 : i32
      %c9_i32_17 = arith.constant 9 : i32
      %15 = arith.muli %14, %c9_i32_17 : i32
      %c0_18 = arith.constant 0 : index
      %c0_19 = arith.constant 0 : index
      %c15 = arith.constant 15 : index
      %c0_20 = arith.constant 0 : index
      %16 = vector.load %arg6[%c0_18, %c0_19, %c15, %c0_20] : memref<2x18x48x128xbf16, #tpu.memory_space<vmem>>, vector<2x16x16x128xbf16>
      %17 = vector.shape_cast %16 : vector<2x16x16x128xbf16> to vector<512x128xbf16>
      %c0_i32_21 = arith.constant 0 : i32
      %18 = arith.addi %15, %c0_i32_21 : i32
      %c0_i32_22 = arith.constant 0 : i32
      %19 = arith.addi %18, %c0_i32_22 : i32
      %20 = arith.index_cast %19 : i32 to index
      %c0_23 = arith.constant 0 : index
      %c0_24 = arith.constant 0 : index
      %21 = vector.load %arg2[%20, %c0_23, %c0_24] : memref<81x128x128xbf16, #tpu.memory_space<vmem>>, vector<1x128x128xbf16>
      %22 = vector.shape_cast %21 : vector<1x128x128xbf16> to vector<128x128xbf16>
      %cst_25 = arith.constant dense<0.000000e+00> : vector<512x128xf32>
      %23 = tpu.matmul %17, %22, %cst_25 {dimension_numbers = #tpu.dot_dimension_numbers<[1], [0], [0], [1], [0, 0, 1, 1], [], []>} : vector<512x128xbf16>, vector<128x128xbf16>, vector<512x128xf32> -> vector<512x128xf32>
      %c0_26 = arith.constant 0 : index
      %c0_27 = arith.constant 0 : index
      %c16_28 = arith.constant 16 : index
      %c0_29 = arith.constant 0 : index
      %24 = vector.load %arg6[%c0_26, %c0_27, %c16_28, %c0_29] : memref<2x18x48x128xbf16, #tpu.memory_space<vmem>>, vector<2x16x16x128xbf16>
      %25 = vector.shape_cast %24 : vector<2x16x16x128xbf16> to vector<512x128xbf16>
      %c0_i32_30 = arith.constant 0 : i32
      %26 = arith.addi %15, %c0_i32_30 : i32
      %c1_i32_31 = arith.constant 1 : i32
      %27 = arith.addi %26, %c1_i32_31 : i32
      %28 = arith.index_cast %27 : i32 to index
      %c0_32 = arith.constant 0 : index
      %c0_33 = arith.constant 0 : index
      %29 = vector.load %arg2[%28, %c0_32, %c0_33] : memref<81x128x128xbf16, #tpu.memory_space<vmem>>, vector<1x128x128xbf16>
      %30 = vector.shape_cast %29 : vector<1x128x128xbf16> to vector<128x128xbf16>
      %cst_34 = arith.constant dense<0.000000e+00> : vector<512x128xf32>
      %31 = tpu.matmul %25, %30, %cst_34 {dimension_numbers = #tpu.dot_dimension_numbers<[1], [0], [0], [1], [0, 0, 1, 1], [], []>} : vector<512x128xbf16>, vector<128x128xbf16>, vector<512x128xf32> -> vector<512x128xf32>
      %32 = arith.addf %23, %31 : vector<512x128xf32>
      %c0_35 = arith.constant 0 : index
      %c0_36 = arith.constant 0 : index
      %c17 = arith.constant 17 : index
      %c0_37 = arith.constant 0 : index
      %33 = vector.load %arg6[%c0_35, %c0_36, %c17, %c0_37] : memref<2x18x48x128xbf16, #tpu.memory_space<vmem>>, vector<2x16x16x128xbf16>
      %34 = vector.shape_cast %33 : vector<2x16x16x128xbf16> to vector<512x128xbf16>
      %c0_i32_38 = arith.constant 0 : i32
      %35 = arith.addi %15, %c0_i32_38 : i32
      %c2_i32 = arith.constant 2 : i32
      %36 = arith.addi %35, %c2_i32 : i32
      %37 = arith.index_cast %36 : i32 to index
      %c0_39 = arith.constant 0 : index
      %c0_40 = arith.constant 0 : index
      %38 = vector.load %arg2[%37, %c0_39, %c0_40] : memref<81x128x128xbf16, #tpu.memory_space<vmem>>, vector<1x128x128xbf16>
      %39 = vector.shape_cast %38 : vector<1x128x128xbf16> to vector<128x128xbf16>
      %cst_41 = arith.constant dense<0.000000e+00> : vector<512x128xf32>
      %40 = tpu.matmul %34, %39, %cst_41 {dimension_numbers = #tpu.dot_dimension_numbers<[1], [0], [0], [1], [0, 0, 1, 1], [], []>} : vector<512x128xbf16>, vector<128x128xbf16>, vector<512x128xf32> -> vector<512x128xf32>
      %41 = arith.addf %32, %40 : vector<512x128xf32>
      %c0_42 = arith.constant 0 : index
      %c1_43 = arith.constant 1 : index
      %c15_44 = arith.constant 15 : index
      %c0_45 = arith.constant 0 : index
      %42 = vector.load %arg6[%c0_42, %c1_43, %c15_44, %c0_45] : memref<2x18x48x128xbf16, #tpu.memory_space<vmem>>, vector<2x16x16x128xbf16>
      %43 = vector.shape_cast %42 : vector<2x16x16x128xbf16> to vector<512x128xbf16>
      %c3_i32 = arith.constant 3 : i32
      %44 = arith.addi %15, %c3_i32 : i32
      %c0_i32_46 = arith.constant 0 : i32
      %45 = arith.addi %44, %c0_i32_46 : i32
      %46 = arith.index_cast %45 : i32 to index
      %c0_47 = arith.constant 0 : index
      %c0_48 = arith.constant 0 : index
      %47 = vector.load %arg2[%46, %c0_47, %c0_48] : memref<81x128x128xbf16, #tpu.memory_space<vmem>>, vector<1x128x128xbf16>
      %48 = vector.shape_cast %47 : vector<1x128x128xbf16> to vector<128x128xbf16>
      %cst_49 = arith.constant dense<0.000000e+00> : vector<512x128xf32>
      %49 = tpu.matmul %43, %48, %cst_49 {dimension_numbers = #tpu.dot_dimension_numbers<[1], [0], [0], [1], [0, 0, 1, 1], [], []>} : vector<512x128xbf16>, vector<128x128xbf16>, vector<512x128xf32> -> vector<512x128xf32>
      %50 = arith.addf %41, %49 : vector<512x128xf32>
      %c0_50 = arith.constant 0 : index
      %c1_51 = arith.constant 1 : index
      %c16_52 = arith.constant 16 : index
      %c0_53 = arith.constant 0 : index
      %51 = vector.load %arg6[%c0_50, %c1_51, %c16_52, %c0_53] : memref<2x18x48x128xbf16, #tpu.memory_space<vmem>>, vector<2x16x16x128xbf16>
      %52 = vector.shape_cast %51 : vector<2x16x16x128xbf16> to vector<512x128xbf16>
      %c3_i32_54 = arith.constant 3 : i32
      %53 = arith.addi %15, %c3_i32_54 : i32
      %c1_i32_55 = arith.constant 1 : i32
      %54 = arith.addi %53, %c1_i32_55 : i32
      %55 = arith.index_cast %54 : i32 to index
      %c0_56 = arith.constant 0 : index
      %c0_57 = arith.constant 0 : index
      %56 = vector.load %arg2[%55, %c0_56, %c0_57] : memref<81x128x128xbf16, #tpu.memory_space<vmem>>, vector<1x128x128xbf16>
      %57 = vector.shape_cast %56 : vector<1x128x128xbf16> to vector<128x128xbf16>
      %cst_58 = arith.constant dense<0.000000e+00> : vector<512x128xf32>
      %58 = tpu.matmul %52, %57, %cst_58 {dimension_numbers = #tpu.dot_dimension_numbers<[1], [0], [0], [1], [0, 0, 1, 1], [], []>} : vector<512x128xbf16>, vector<128x128xbf16>, vector<512x128xf32> -> vector<512x128xf32>
      %59 = arith.addf %50, %58 : vector<512x128xf32>
      %c0_59 = arith.constant 0 : index
      %c1_60 = arith.constant 1 : index
      %c17_61 = arith.constant 17 : index
      %c0_62 = arith.constant 0 : index
      %60 = vector.load %arg6[%c0_59, %c1_60, %c17_61, %c0_62] : memref<2x18x48x128xbf16, #tpu.memory_space<vmem>>, vector<2x16x16x128xbf16>
      %61 = vector.shape_cast %60 : vector<2x16x16x128xbf16> to vector<512x128xbf16>
      %c3_i32_63 = arith.constant 3 : i32
      %62 = arith.addi %15, %c3_i32_63 : i32
      %c2_i32_64 = arith.constant 2 : i32
      %63 = arith.addi %62, %c2_i32_64 : i32
      %64 = arith.index_cast %63 : i32 to index
      %c0_65 = arith.constant 0 : index
      %c0_66 = arith.constant 0 : index
      %65 = vector.load %arg2[%64, %c0_65, %c0_66] : memref<81x128x128xbf16, #tpu.memory_space<vmem>>, vector<1x128x128xbf16>
      %66 = vector.shape_cast %65 : vector<1x128x128xbf16> to vector<128x128xbf16>
      %cst_67 = arith.constant dense<0.000000e+00> : vector<512x128xf32>
      %67 = tpu.matmul %61, %66, %cst_67 {dimension_numbers = #tpu.dot_dimension_numbers<[1], [0], [0], [1], [0, 0, 1, 1], [], []>} : vector<512x128xbf16>, vector<128x128xbf16>, vector<512x128xf32> -> vector<512x128xf32>
      %68 = arith.addf %59, %67 : vector<512x128xf32>
      %c0_68 = arith.constant 0 : index
      %c2 = arith.constant 2 : index
      %c15_69 = arith.constant 15 : index
      %c0_70 = arith.constant 0 : index
      %69 = vector.load %arg6[%c0_68, %c2, %c15_69, %c0_70] : memref<2x18x48x128xbf16, #tpu.memory_space<vmem>>, vector<2x16x16x128xbf16>
      %70 = vector.shape_cast %69 : vector<2x16x16x128xbf16> to vector<512x128xbf16>
      %c6_i32 = arith.constant 6 : i32
      %71 = arith.addi %15, %c6_i32 : i32
      %c0_i32_71 = arith.constant 0 : i32
      %72 = arith.addi %71, %c0_i32_71 : i32
      %73 = arith.index_cast %72 : i32 to index
      %c0_72 = arith.constant 0 : index
      %c0_73 = arith.constant 0 : index
      %74 = vector.load %arg2[%73, %c0_72, %c0_73] : memref<81x128x128xbf16, #tpu.memory_space<vmem>>, vector<1x128x128xbf16>
      %75 = vector.shape_cast %74 : vector<1x128x128xbf16> to vector<128x128xbf16>
      %cst_74 = arith.constant dense<0.000000e+00> : vector<512x128xf32>
      %76 = tpu.matmul %70, %75, %cst_74 {dimension_numbers = #tpu.dot_dimension_numbers<[1], [0], [0], [1], [0, 0, 1, 1], [], []>} : vector<512x128xbf16>, vector<128x128xbf16>, vector<512x128xf32> -> vector<512x128xf32>
      %77 = arith.addf %68, %76 : vector<512x128xf32>
      %c0_75 = arith.constant 0 : index
      %c2_76 = arith.constant 2 : index
      %c16_77 = arith.constant 16 : index
      %c0_78 = arith.constant 0 : index
      %78 = vector.load %arg6[%c0_75, %c2_76, %c16_77, %c0_78] : memref<2x18x48x128xbf16, #tpu.memory_space<vmem>>, vector<2x16x16x128xbf16>
      %79 = vector.shape_cast %78 : vector<2x16x16x128xbf16> to vector<512x128xbf16>
      %c6_i32_79 = arith.constant 6 : i32
      %80 = arith.addi %15, %c6_i32_79 : i32
      %c1_i32_80 = arith.constant 1 : i32
      %81 = arith.addi %80, %c1_i32_80 : i32
      %82 = arith.index_cast %81 : i32 to index
      %c0_81 = arith.constant 0 : index
      %c0_82 = arith.constant 0 : index
      %83 = vector.load %arg2[%82, %c0_81, %c0_82] : memref<81x128x128xbf16, #tpu.memory_space<vmem>>, vector<1x128x128xbf16>
      %84 = vector.shape_cast %83 : vector<1x128x128xbf16> to vector<128x128xbf16>
      %cst_83 = arith.constant dense<0.000000e+00> : vector<512x128xf32>
      %85 = tpu.matmul %79, %84, %cst_83 {dimension_numbers = #tpu.dot_dimension_numbers<[1], [0], [0], [1], [0, 0, 1, 1], [], []>} : vector<512x128xbf16>, vector<128x128xbf16>, vector<512x128xf32> -> vector<512x128xf32>
      %86 = arith.addf %77, %85 : vector<512x128xf32>
      %c0_84 = arith.constant 0 : index
      %c2_85 = arith.constant 2 : index
      %c17_86 = arith.constant 17 : index
      %c0_87 = arith.constant 0 : index
      %87 = vector.load %arg6[%c0_84, %c2_85, %c17_86, %c0_87] : memref<2x18x48x128xbf16, #tpu.memory_space<vmem>>, vector<2x16x16x128xbf16>
      %88 = vector.shape_cast %87 : vector<2x16x16x128xbf16> to vector<512x128xbf16>
      %c6_i32_88 = arith.constant 6 : i32
      %89 = arith.addi %15, %c6_i32_88 : i32
      %c2_i32_89 = arith.constant 2 : i32
      %90 = arith.addi %89, %c2_i32_89 : i32
      %91 = arith.index_cast %90 : i32 to index
      %c0_90 = arith.constant 0 : index
      %c0_91 = arith.constant 0 : index
      %92 = vector.load %arg2[%91, %c0_90, %c0_91] : memref<81x128x128xbf16, #tpu.memory_space<vmem>>, vector<1x128x128xbf16>
      %93 = vector.shape_cast %92 : vector<1x128x128xbf16> to vector<128x128xbf16>
      %cst_92 = arith.constant dense<0.000000e+00> : vector<512x128xf32>
      %94 = tpu.matmul %88, %93, %cst_92 {dimension_numbers = #tpu.dot_dimension_numbers<[1], [0], [0], [1], [0, 0, 1, 1], [], []>} : vector<512x128xbf16>, vector<128x128xbf16>, vector<512x128xf32> -> vector<512x128xf32>
      %95 = arith.addf %86, %94 : vector<512x128xf32>
      %cst_93 = arith.constant 0.000000e+00 : f32
      %96 = vector.broadcast %cst_93 : f32 to vector<512x128xf32>
      %97 = arith.maximumf %95, %96 : vector<512x128xf32>
      %c2_i32_94 = arith.constant 2 : i32
      %c0_i32_95 = arith.constant 0 : i32
      %98 = arith.cmpi eq, %c2_i32_94, %c0_i32_95 : i32
      %c1_i32_96 = arith.constant 1 : i32
      %99 = arith.select %98, %c1_i32_96, %c2_i32_94 : i32
      %100 = arith.remsi %13, %99 : i32
      %c0_i32_97 = arith.constant 0 : i32
      %101 = arith.cmpi ne, %100, %c0_i32_97 : i32
      %c0_i32_98 = arith.constant 0 : i32
      %102 = arith.cmpi slt, %100, %c0_i32_98 : i32
      %c0_i32_99 = arith.constant 0 : i32
      %103 = arith.cmpi slt, %99, %c0_i32_99 : i32
      %104 = arith.xori %102, %103 : i1
      %105 = arith.andi %104, %101 : i1
      %106 = arith.addi %100, %99 : i32
      %107 = arith.select %105, %106, %100 : i32
      %c0_i32_100 = arith.constant 0 : i32
      %108 = arith.cmpi eq, %107, %c0_i32_100 : i32
      %c0_101 = arith.constant 0 : index
      %c0_102 = arith.constant 0 : index
      %109 = vector.load %arg7[%c0_101, %c0_102] : memref<512x128xf32, #tpu.memory_space<vmem>>, vector<512x128xf32>
      %110 = arith.addf %97, %109 : vector<512x128xf32>
      %111 = arith.select %108, %110, %97 : vector<512x128xf32>
      %112 = arith.extui %108 : i1 to i32
      %c0_i32_103 = arith.constant 0 : i32
      %113 = arith.cmpi ne, %112, %c0_i32_103 : i32
      scf.if %113 {
        %c0_115 = arith.constant 0 : index
        %c0_116 = arith.constant 0 : index
        %136 = vector.load %arg7[%c0_115, %c0_116] : memref<512x128xf32, #tpu.memory_space<vmem>>, vector<512x128xf32>
        tpu.vector_store %arg7[%c0_115, %c0_116], %111 {strides = array<i32>} : memref<512x128xf32, #tpu.memory_space<vmem>>, vector<512x128xf32>,
      } else {
      }
      %cst_104 = arith.constant dense<0.000000e+00> : vector<128xf32>
      %114 = vector.multi_reduction <add>, %111, %cst_104 [0] : vector<512x128xf32> to vector<128xf32>
      %115 = vector.shape_cast %114 : vector<128xf32> to vector<1x128xf32>
      %cst_105 = arith.constant 5.120000e+02 : f32
      %116 = vector.broadcast %cst_105 : f32 to vector<1x128xf32>
      %117 = arith.divf %115, %116 : vector<1x128xf32>
      %118 = vector.broadcast %117 : vector<1x128xf32> to vector<512x128xf32>
      %119 = arith.subf %111, %118 : vector<512x128xf32>
      %120 = arith.mulf %119, %119 : vector<512x128xf32>
      %cst_106 = arith.constant dense<0.000000e+00> : vector<128xf32>
      %121 = vector.multi_reduction <add>, %120, %cst_106 [0] : vector<512x128xf32> to vector<128xf32>
      %122 = vector.shape_cast %121 : vector<128xf32> to vector<1x128xf32>
      %cst_107 = arith.constant 5.120000e+02 : f32
      %123 = vector.broadcast %cst_107 : f32 to vector<1x128xf32>
      %124 = arith.divf %122, %123 : vector<1x128xf32>
      %cst_108 = arith.constant 9.99999974E-6 : f32
      %125 = vector.broadcast %cst_108 : f32 to vector<1x128xf32>
      %126 = arith.addf %124, %125 : vector<1x128xf32>
      %127 = math.rsqrt %126 : vector<1x128xf32>
      %128 = vector.broadcast %127 : vector<1x128xf32> to vector<512x128xf32>
      %129 = arith.mulf %119, %128 : vector<512x128xf32>
      %130 = arith.truncf %129 : vector<512x128xf32> to vector<512x128xbf16>
      %131 = vector.shape_cast %130 : vector<512x128xbf16> to vector<2x16x16x128xbf16>
      %c0_109 = arith.constant 0 : index
      %c1_110 = arith.constant 1 : index
      %c16_111 = arith.constant 16 : index
      %c0_112 = arith.constant 0 : index
      %132 = vector.load %arg6[%c0_109, %c1_110, %c16_111, %c0_112] : memref<2x18x48x128xbf16, #tpu.memory_space<vmem>>, vector<2x16x16x128xbf16>
      tpu.vector_store %arg6[%c0_109, %c1_110, %c16_111, %c0_112], %131 {strides = array<i32>} : memref<2x18x48x128xbf16, #tpu.memory_space<vmem>>, vector<2x16x16x128xbf16>,
      %c9_i32_113 = arith.constant 9 : i32
      %133 = arith.cmpi eq, %13, %c9_i32_113 : i32
      %134 = arith.extui %133 : i1 to i32
      %c0_i32_114 = arith.constant 0 : i32
      %135 = arith.cmpi ne, %134, %c0_i32_114 : i32
      scf.if %135 {
        %136 = vector.shape_cast %129 : vector<512x128xf32> to vector<2x256x128xf32>
        %cst_115 = arith.constant dense<0.000000e+00> : vector<2x128xf32>
        %137 = vector.multi_reduction <add>, %136, %cst_115 [1] : vector<2x256x128xf32> to vector<2x128xf32>
        %cst_116 = arith.constant 2.560000e+02 : f32
        %138 = vector.broadcast %cst_116 : f32 to vector<2x128xf32>
        %139 = arith.divf %137, %138 : vector<2x128xf32>
        %c0_117 = arith.constant 0 : index
        %c0_118 = arith.constant 0 : index
        %140 = vector.load %arg3[%c0_117, %c0_118] : memref<128x128xf32, #tpu.memory_space<vmem>>, vector<128x128xf32>
        %cst_119 = arith.constant dense<0.000000e+00> : vector<2x128xf32>
        %141 = tpu.matmul %139, %140, %cst_119 {dimension_numbers = #tpu.dot_dimension_numbers<[1], [0], [0], [1], [0, 0, 1, 1], [], []>} : vector<2x128xf32>, vector<128x128xf32>, vector<2x128xf32> -> vector<2x128xf32>
        %c0_120 = arith.constant 0 : index
        %c0_121 = arith.constant 0 : index
        %142 = vector.load %arg4[%c0_120, %c0_121] : memref<1x128xf32, #tpu.memory_space<vmem>>, vector<1x128xf32>
        %143 = vector.broadcast %142 : vector<1x128xf32> to vector<2x128xf32>
        %144 = arith.addf %141, %143 : vector<2x128xf32>
        %c0_122 = arith.constant 0 : index
        %c0_123 = arith.constant 0 : index
        %145 = vector.load %arg5[%c0_122, %c0_123] : memref<2x128xf32, #tpu.memory_space<vmem>>, vector<2x128xf32>
        tpu.vector_store %arg5[%c0_122, %c0_123], %144 {strides = array<i32>} : memref<2x128xf32, #tpu.memory_space<vmem>>, vector<2x128xf32>,
      } else {
      }
    }
    %c9_i32_13 = arith.constant 9 : i32
    return
  }
}

</mosaic_0001>

<llo_original>
// kernel: res_model_forward.1
$region0: #{res_model_forward.1}
  #allocation0 [shape = 'u32[]', space=smem, size = 0x4, offset = 0x4, fixed_abs, tag = 'smem constant byte address 0x4 - core index']
  #allocation1 [shape = 'u32[144,128]{1,0:T(1,128)}', space=vmem, size = 0x12000, scoped, tag = 'internal scratch']
  #allocation2 [shape = 'bf16[2,18,48,128]{3,2,1,0:T(16,128)(2,1)}', space=vmem, size = 0x6c000, scoped, tag = 'scratch operand']
  #allocation3 [shape = 'f32[512,128]{1,0:T(8,128)}', space=vmem, size = 0x40000, scoped, tag = 'scratch operand']
  %s0 = inlined_call_operand.vmem [shape: bf16[512,128], index: 0, kind: input, shape index: {}]
  %s1 = inlined_call_operand.vmem [shape: bf16[128,128], index: 1, kind: input, shape index: {}]
  %s2 = inlined_call_operand.vmem [shape: bf16[81,128,128], index: 2, kind: input, shape index: {}]
  %s3 = inlined_call_operand.vmem [shape: f32[128,128], index: 3, kind: input, shape index: {}]
  %s4 = inlined_call_operand.vmem [shape: f32[1,128], index: 4, kind: input, shape index: {}]
  %s5 = inlined_call_operand.hbm [shape: f32[2,128], index: 5, kind: output, shape index: {}]
  %s6 = sld [smem:[#allocation0]]
  $region45: #{res_model_forward.1} parent=0
    _
  %s8 = ssub.s32 1, %s6
  %s9 = scalar_select 0, %s8, %s6
  $region1: #{res_model_forward.1} parent=0
    #allocation4 [shape = 'u8[1024]{0}', space=vmem, size = 0x400, scoped, tag = 'output window, operand 0, single buffered']
    #allocation5 [shape = 's32[1]{0}', space=sflag, size = 0x4, scoped, tag = 'scoped memory for res_model_forward.1']
    %10 = vsyncpa [#allocation5], 0
    // Predicated region
    $region2: #{res_model_forward.1} parent=1 // pred_check
      _
    $region3: #{res_model_forward.1} parent=1 // pred_check_branch
      %12 = sbr.rel (0) target = $region5
    $region4: #{res_model_forward.1} parent=1 // pred_region
      _
    $region5: #{res_model_forward.1} parent=1 // pred_fallthru
      _
    // Predicated region
    $region6: #{res_model_forward.1} parent=1 // pred_check
      _
    $region7: #{res_model_forward.1} parent=1 // pred_check_branch
      %14 = sbr.rel (0) target = $region9
    $region8: #{res_model_forward.1} parent=1 // pred_region
      _
    $region9: #{res_model_forward.1} parent=1 // pred_fallthru
      _
    // Predicated region
    $region10: #{res_model_forward.1} parent=1 // pred_check
      _
    $region11: #{res_model_forward.1} parent=1 // pred_check_branch
      %16 = sbr.rel (0) target = $region13
    $region12: #{res_model_forward.1} parent=1 // pred_region
      _
    $region13: #{res_model_forward.1} parent=1 // pred_fallthru
      _
    // Predicated region
    $region14: #{res_model_forward.1} parent=1 // pred_check
      _
    $region15: #{res_model_forward.1} parent=1 // pred_check_branch
      %18 = sbr.rel (0) target = $region17
    $region16: #{res_model_forward.1} parent=1 // pred_region
      _
    $region17: #{res_model_forward.1} parent=1 // pred_fallthru
      _
    // Predicated region
    $region18: #{res_model_forward.1} parent=1 // pred_check
      _
    $region19: #{res_model_forward.1} parent=1 // pred_check_branch
      %20 = sbr.rel (0) target = $region21
    $region20: #{res_model_forward.1} parent=1 // pred_region
      _
    $region21: #{res_model_forward.1} parent=1 // pred_fallthru
      _
    %22 = vst [vmem:[#allocation2] sm:$0xff] 0
    %23 = vst [vmem:[#allocation2 + $0x8] sm:$0xff] 0
    %24 = vst [vmem:[#allocation2 + $0x10] sm:$0xff] 0
    %25 = vst [vmem:[#allocation2 + $0x18] sm:$0xff] 0
    %26 = vst [vmem:[#allocation2 + $0x20] sm:$0xff] 0
    %27 = vst [vmem:[#allocation2 + $0x28] sm:$0xff] 0
    %28 = vst [vmem:[#allocation2 + $0x30] sm:$0xff] 0
    %29 = vst [vmem:[#allocation2 + $0x38] sm:$0xff] 0
    %30 = vst [vmem:[#allocation2 + $0x40] sm:$0xff] 0
    %31 = vst [vmem:[#allocation2 + $0x48] sm:$0xff] 0
    %32 = vst [vmem:[#allocation2 + $0x50] sm:$0xff] 0
    %33 = vst [vmem:[#allocation2 + $0x58] sm:$0xff] 0
    %34 = vst [vmem:[#allocation2 + $0x60] sm:$0xff] 0
    %35 = vst [vmem:[#allocation2 + $0x68] sm:$0xff] 0
    %36 = vst [vmem:[#allocation2 + $0x70] sm:$0xff] 0
    %37 = vst [vmem:[#allocation2 + $0x78] sm:$0xff] 0
    %38 = vst [vmem:[#allocation2 + $0x80] sm:$0xff] 0
    %39 = vst [vmem:[#allocation2 + $0x88] sm:$0xff] 0
    %40 = vst [vmem:[#allocation2 + $0x90] sm:$0xff] 0
    %41 = vst [vmem:[#allocation2 + $0x98] sm:$0xff] 0
    %42 = vst [vmem:[#allocation2 + $0xa0] sm:$0xff] 0
    %43 = vst [vmem:[#allocation2 + $0xa8] sm:$0xff] 0
    %44 = vst [vmem:[#allocation2 + $0xb0] sm:$0xff] 0
    %45 = vst [vmem:[#allocation2 + $0xb8] sm:$0xff] 0
    %46 = vst [vmem:[#allocation2 + $0xc0] sm:$0xff] 0
    %47 = vst [vmem:[#allocation2 + $0xc8] sm:$0xff] 0
    %48 = vst [vmem:[#allocation2 + $0xd0] sm:$0xff] 0
    %49 = vst [vmem:[#allocation2 + $0xd8] sm:$0xff] 0
    %50 = vst [vmem:[#allocation2 + $0xe0] sm:$0xff] 0
    %51 = vst [vmem:[#allocation2 + $0xe8] sm:$0xff] 0
    %52 = vst [vmem:[#allocation2 + $0xf0] sm:$0xff] 0
    %53 = vst [vmem:[#allocation2 + $0xf8] sm:$0xff] 0
    %54 = vst [vmem:[#allocation2 + $0x100] sm:$0xff] 0
    %55 = vst [vmem:[#allocation2 + $0x108] sm:$0xff] 0
    %56 = vst [vmem:[#allocation2 + $0x110] sm:$0xff] 0
    %57 = vst [vmem:[#allocation2 + $0x118] sm:$0xff] 0
    %58 = vst [vmem:[#allocation2 + $0x120] sm:$0xff] 0
    %59 = vst [vmem:[#allocation2 + $0x128] sm:$0xff] 0
    %60 = vst [vmem:[#allocation2 + $0x130] sm:$0xff] 0
    %61 = vst [vmem:[#allocation2 + $0x138] sm:$0xff] 0
    %62 = vst [vmem:[#allocation2 + $0x140] sm:$0xff] 0
    %63 = vst [vmem:[#allocation2 + $0x148] sm:$0xff] 0
    %64 = vst [vmem:[#allocation2 + $0x150] sm:$0xff] 0
    %65 = vst [vmem:[#allocation2 + $0x158] sm:$0xff] 0
    %66 = vst [vmem:[#allocation2 + $0x160] sm:$0xff] 0
    %67 = vst [vmem:[#allocation2 + $0x168] sm:$0xff] 0
    %68 = vst [vmem:[#allocation2 + $0x170] sm:$0xff] 0
    %69 = vst [vmem:[#allocation2 + $0x178] sm:$0xff] 0
    %70 = vst [vmem:[#allocation2 + $0x180] sm:$0xff] 0
    %71 = vst [vmem:[#allocation2 + $0x188] sm:$0xff] 0
    %72 = vst [vmem:[#allocation2 + $0x190] sm:$0xff] 0
    %73 = vst [vmem:[#allocation2 + $0x198] sm:$0xff] 0
    %74 = vst [vmem:[#allocation2 + $0x1a0] sm:$0xff] 0
    %75 = vst [vmem:[#allocation2 + $0x1a8] sm:$0xff] 0
    %76 = vst [vmem:[#allocation2 + $0x1b0] sm:$0xff] 0
    %77 = vst [vmem:[#allocation2 + $0x1b8] sm:$0xff] 0
    %78 = vst [vmem:[#allocation2 + $0x1c0] sm:$0xff] 0
    %79 = vst [vmem:[#allocation2 + $0x1c8] sm:$0xff] 0
    %80 = vst [vmem:[#allocation2 + $0x1d0] sm:$0xff] 0
    %81 = vst [vmem:[#allocation2 + $0x1d8] sm:$0xff] 0
    %82 = vst [vmem:[#allocation2 + $0x1e0] sm:$0xff] 0
    %83 = vst [vmem:[#allocation2 + $0x1e8] sm:$0xff] 0
    %84 = vst [vmem:[#allocation2 + $0x1f0] sm:$0xff] 0
    %85 = vst [vmem:[#allocation2 + $0x1f8] sm:$0xff] 0
    %86 = vst [vmem:[#allocation2 + $0x200] sm:$0xff] 0
    %87 = vst [vmem:[#allocation2 + $0x208] sm:$0xff] 0
    %88 = vst [vmem:[#allocation2 + $0x210] sm:$0xff] 0
    %89 = vst [vmem:[#allocation2 + $0x218] sm:$0xff] 0
    %90 = vst [vmem:[#allocation2 + $0x220] sm:$0xff] 0
    %91 = vst [vmem:[#allocation2 + $0x228] sm:$0xff] 0
    %92 = vst [vmem:[#allocation2 + $0x230] sm:$0xff] 0
    %93 = vst [vmem:[#allocation2 + $0x238] sm:$0xff] 0
    %94 = vst [vmem:[#allocation2 + $0x240] sm:$0xff] 0
    %95 = vst [vmem:[#allocation2 + $0x248] sm:$0xff] 0
    %96 = vst [vmem:[#allocation2 + $0x250] sm:$0xff] 0
    %97 = vst [vmem:[#allocation2 + $0x258] sm:$0xff] 0
    %98 = vst [vmem:[#allocation2 + $0x260] sm:$0xff] 0
    %99 = vst [vmem:[#allocation2 + $0x268] sm:$0xff] 0
    %100 = vst [vmem:[#allocation2 + $0x270] sm:$0xff] 0
    %101 = vst [vmem:[#allocation2 + $0x278] sm:$0xff] 0
    %102 = vst [vmem:[#allocation2 + $0x280] sm:$0xff] 0
    %103 = vst [vmem:[#allocation2 + $0x288] sm:$0xff] 0
    %104 = vst [vmem:[#allocation2 + $0x290] sm:$0xff] 0
    %105 = vst [vmem:[#allocation2 + $0x298] sm:$0xff] 0
    %106 = vst [vmem:[#allocation2 + $0x2a0] sm:$0xff] 0
    %107 = vst [vmem:[#allocation2 + $0x2a8] sm:$0xff] 0
    %108 = vst [vmem:[#allocation2 + $0x2b0] sm:$0xff] 0
    %109 = vst [vmem:[#allocation2 + $0x2b8] sm:$0xff] 0
    %110 = vst [vmem:[#allocation2 + $0x2c0] sm:$0xff] 0
    %111 = vst [vmem:[#allocation2 + $0x2c8] sm:$0xff] 0
    %112 = vst [vmem:[#allocation2 + $0x2d0] sm:$0xff] 0
    %113 = vst [vmem:[#allocation2 + $0x2d8] sm:$0xff] 0
    %114 = vst [vmem:[#allocation2 + $0x2e0] sm:$0xff] 0
    %115 = vst [vmem:[#allocation2 + $0x2e8] sm:$0xff] 0
    %116 = vst [vmem:[#allocation2 + $0x2f0] sm:$0xff] 0
    %117 = vst [vmem:[#allocation2 + $0x2f8] sm:$0xff] 0
    %118 = vst [vmem:[#allocation2 + $0x300] sm:$0xff] 0
    %119 = vst [vmem:[#allocation2 + $0x308] sm:$0xff] 0
    %120 = vst [vmem:[#allocation2 + $0x310] sm:$0xff] 0
    %121 = vst [vmem:[#allocation2 + $0x318] sm:$0xff] 0
    %122 = vst [vmem:[#allocation2 + $0x320] sm:$0xff] 0
    %123 = vst [vmem:[#allocation2 + $0x328] sm:$0xff] 0
    %124 = vst [vmem:[#allocation2 + $0x330] sm:$0xff] 0
    %125 = vst [vmem:[#allocation2 + $0x338] sm:$0xff] 0
    %126 = vst [vmem:[#allocation2 + $0x340] sm:$0xff] 0
    %127 = vst [vmem:[#allocation2 + $0x348] sm:$0xff] 0
    %128 = vst [vmem:[#allocation2 + $0x350] sm:$0xff] 0
    %129 = vst [vmem:[#allocation2 + $0x358] sm:$0xff] 0
    %v130 = vld [vmem:[%s0] sm:$0xf]
    %v131 = vld [vmem:[%s0 + $0x4] sm:$0xf]
    %v132 = vld [vmem:[%s0 + $0x8] sm:$0xf]
    %v133 = vld [vmem:[%s0 + $0xc] sm:$0xf]
    %v134 = vld [vmem:[%s0 + $0x10] sm:$0xf]
    %v135 = vld [vmem:[%s0 + $0x14] sm:$0xf]
    %v136 = vld [vmem:[%s0 + $0x18] sm:$0xf]
    %v137 = vld [vmem:[%s0 + $0x1c] sm:$0xf]
    %v138 = vld [vmem:[%s0 + $0x20] sm:$0xf]
    %v139 = vld [vmem:[%s0 + $0x24] sm:$0xf]
    %v140 = vld [vmem:[%s0 + $0x28] sm:$0xf]
    %v141 = vld [vmem:[%s0 + $0x2c] sm:$0xf]
    %v142 = vld [vmem:[%s0 + $0x30] sm:$0xf]
    %v143 = vld [vmem:[%s0 + $0x34] sm:$0xf]
    %v144 = vld [vmem:[%s0 + $0x38] sm:$0xf]
    %v145 = vld [vmem:[%s0 + $0x3c] sm:$0xf]
    %v146 = vld [vmem:[%s0 + $0x40] sm:$0xf]
    %v147 = vld [vmem:[%s0 + $0x44] sm:$0xf]
    %v148 = vld [vmem:[%s0 + $0x48] sm:$0xf]
    %v149 = vld [vmem:[%s0 + $0x4c] sm:$0xf]
    %v150 = vld [vmem:[%s0 + $0x50] sm:$0xf]
    %v151 = vld [vmem:[%s0 + $0x54] sm:$0xf]
    %v152 = vld [vmem:[%s0 + $0x58] sm:$0xf]
    %v153 = vld [vmem:[%s0 + $0x5c] sm:$0xf]
    %v154 = vld [vmem:[%s0 + $0x60] sm:$0xf]
    %v155 = vld [vmem:[%s0 + $0x64] sm:$0xf]
    %v156 = vld [vmem:[%s0 + $0x68] sm:$0xf]
    %v157 = vld [vmem:[%s0 + $0x6c] sm:$0xf]
    %v158 = vld [vmem:[%s0 + $0x70] sm:$0xf]
    %v159 = vld [vmem:[%s0 + $0x74] sm:$0xf]
    %v160 = vld [vmem:[%s0 + $0x78] sm:$0xf]
    %v161 = vld [vmem:[%s0 + $0x7c] sm:$0xf]
    %v162 = vld [vmem:[%s0 + $0x80] sm:$0xf]
    %v163 = vld [vmem:[%s0 + $0x84] sm:$0xf]
    %v164 = vld [vmem:[%s0 + $0x88] sm:$0xf]
    %v165 = vld [vmem:[%s0 + $0x8c] sm:$0xf]
    %v166 = vld [vmem:[%s0 + $0x90] sm:$0xf]
    %v167 = vld [vmem:[%s0 + $0x94] sm:$0xf]
    %v168 = vld [vmem:[%s0 + $0x98] sm:$0xf]
    %v169 = vld [vmem:[%s0 + $0x9c] sm:$0xf]
    %v170 = vld [vmem:[%s0 + $0xa0] sm:$0xf]
    %v171 = vld [vmem:[%s0 + $0xa4] sm:$0xf]
    %v172 = vld [vmem:[%s0 + $0xa8] sm:$0xf]
    %v173 = vld [vmem:[%s0 + $0xac] sm:$0xf]
    %v174 = vld [vmem:[%s0 + $0xb0] sm:$0xf]
    %v175 = vld [vmem:[%s0 + $0xb4] sm:$0xf]
    %v176 = vld [vmem:[%s0 + $0xb8] sm:$0xf]
    %v177 = vld [vmem:[%s0 + $0xbc] sm:$0xf]
    %v178 = vld [vmem:[%s0 + $0xc0] sm:$0xf]
    %v179 = vld [vmem:[%s0 + $0xc4] sm:$0xf]
    %v180 = vld [vmem:[%s0 + $0xc8] sm:$0xf]
    %v181 = vld [vmem:[%s0 + $0xcc] sm:$0xf]
    %v182 = vld [vmem:[%s0 + $0xd0] sm:$0xf]
    %v183 = vld [vmem:[%s0 + $0xd4] sm:$0xf]
    %v184 = vld [vmem:[%s0 + $0xd8] sm:$0xf]
    %v185 = vld [vmem:[%s0 + $0xdc] sm:$0xf]
    %v186 = vld [vmem:[%s0 + $0xe0] sm:$0xf]
    %v187 = vld [vmem:[%s0 + $0xe4] sm:$0xf]
    %v188 = vld [vmem:[%s0 + $0xe8] sm:$0xf]
    %v189 = vld [vmem:[%s0 + $0xec] sm:$0xf]
    %v190 = vld [vmem:[%s0 + $0xf0] sm:$0xf]
    %v191 = vld [vmem:[%s0 + $0xf4] sm:$0xf]
    %v192 = vld [vmem:[%s0 + $0xf8] sm:$0xf]
    %v193 = vld [vmem:[%s0 + $0xfc] sm:$0xf]
    %v194 = vld [vmem:[%s1] sm:$0xf]
    %v195 = vld [vmem:[%s1 + $0x4] sm:$0xf]
    %v196 = vld [vmem:[%s1 + $0x8] sm:$0xf]
    %v197 = vld [vmem:[%s1 + $0xc] sm:$0xf]
    %v198 = vld [vmem:[%s1 + $0x10] sm:$0xf]
    %v199 = vld [vmem:[%s1 + $0x14] sm:$0xf]
    %v200 = vld [vmem:[%s1 + $0x18] sm:$0xf]
    %v201 = vld [vmem:[%s1 + $0x1c] sm:$0xf]
    %v202 = vld [vmem:[%s1 + $0x20] sm:$0xf]
    %v203 = vld [vmem:[%s1 + $0x24] sm:$0xf]
    %v204 = vld [vmem:[%s1 + $0x28] sm:$0xf]
    %v205 = vld [vmem:[%s1 + $0x2c] sm:$0xf]
    %v206 = vld [vmem:[%s1 + $0x30] sm:$0xf]
    %v207 = vld [vmem:[%s1 + $0x34] sm:$0xf]
    %v208 = vld [vmem:[%s1 + $0x38] sm:$0xf]
    %v209 = vld [vmem:[%s1 + $0x3c] sm:$0xf]
    %v274 = vunpack.c.l.b16 %v130
    %v275 = vunpack.c.l.b16 %v131
    %v276 = vunpack.c.l.b16 %v132
    %v277 = vunpack.c.l.b16 %v133
    %v278 = vunpack.c.l.b16 %v134
    %v279 = vunpack.c.l.b16 %v135
    %v280 = vunpack.c.l.b16 %v136
    %v281 = vunpack.c.l.b16 %v137
    %v282 = vunpack.c.l.b16 %v138
    %v283 = vunpack.c.l.b16 %v139
    %v284 = vunpack.c.l.b16 %v140
    %v285 = vunpack.c.l.b16 %v141
    %v286 = vunpack.c.l.b16 %v142
    %v287 = vunpack.c.l.b16 %v143
    %v288 = vunpack.c.l.b16 %v144
    %v289 = vunpack.c.l.b16 %v145
    %v290 = vunpack.c.l.b16 %v146
    %v291 = vunpack.c.l.b16 %v147
    %v292 = vunpack.c.l.b16 %v148
    %v293 = vunpack.c.l.b16 %v149
    %v294 = vunpack.c.l.b16 %v150
    %v295 = vunpack.c.l.b16 %v151
    %v296 = vunpack.c.l.b16 %v152
    %v297 = vunpack.c.l.b16 %v153
    %v298 = vunpack.c.l.b16 %v154
    %v299 = vunpack.c.l.b16 %v155
    %v300 = vunpack.c.l.b16 %v156
    %v301 = vunpack.c.l.b16 %v157
    %v302 = vunpack.c.l.b16 %v158
    %v303 = vunpack.c.l.b16 %v159
    %v304 = vunpack.c.l.b16 %v160
    %v305 = vunpack.c.l.b16 %v161
    %v306 = vunpack.c.l.b16 %v162
    %v307 = vunpack.c.l.b16 %v163
    %v308 = vunpack.c.l.b16 %v164
    %v309 = vunpack.c.l.b16 %v165
    %v310 = vunpack.c.l.b16 %v166
    %v311 = vunpack.c.l.b16 %v167
    %v312 = vunpack.c.l.b16 %v168
    %v313 = vunpack.c.l.b16 %v169
    %v314 = vunpack.c.l.b16 %v170
    %v315 = vunpack.c.l.b16 %v171
    %v316 = vunpack.c.l.b16 %v172
    %v317 = vunpack.c.l.b16 %v173
    %v318 = vunpack.c.l.b16 %v174
    %v319 = vunpack.c.l.b16 %v175
    %v320 = vunpack.c.l.b16 %v176
    %v321 = vunpack.c.l.b16 %v177
    %v322 = vunpack.c.l.b16 %v178
    %v323 = vunpack.c.l.b16 %v179
    %v324 = vunpack.c.l.b16 %v180
    %v325 = vunpack.c.l.b16 %v181
    %v326 = vunpack.c.l.b16 %v182
    %v327 = vunpack.c.l.b16 %v183
    %v328 = vunpack.c.l.b16 %v184
    %v329 = vunpack.c.l.b16 %v185
    %v330 = vunpack.c.l.b16 %v186
    %v331 = vunpack.c.l.b16 %v187
    %v332 = vunpack.c.l.b16 %v188
    %v333 = vunpack.c.l.b16 %v189
    %v334 = vunpack.c.l.b16 %v190
    %v335 = vunpack.c.l.b16 %v191
    %v336 = vunpack.c.l.b16 %v192
    %v337 = vunpack.c.l.b16 %v193
    %v338 = vpack.c.b16 %v275, %v274
    %v339 = vpack.c.b16 %v277, %v276
    %v340 = vpack.c.b16 %v279, %v278
    %v341 = vpack.c.b16 %v281, %v280
    %v342 = vpack.c.b16 %v283, %v282
    %v343 = vpack.c.b16 %v285, %v284
    %v344 = vpack.c.b16 %v287, %v286
    %v345 = vpack.c.b16 %v289, %v288
    %v346 = vpack.c.b16 %v291, %v290
    %v347 = vpack.c.b16 %v293, %v292
    %v348 = vpack.c.b16 %v295, %v294
    %v349 = vpack.c.b16 %v297, %v296
    %v350 = vpack.c.b16 %v299, %v298
    %v351 = vpack.c.b16 %v301, %v300
    %v352 = vpack.c.b16 %v303, %v302
    %v353 = vpack.c.b16 %v305, %v304
    %v354 = vpack.c.b16 %v307, %v306
    %v355 = vpack.c.b16 %v309, %v308
    %v356 = vpack.c.b16 %v311, %v310
    %v357 = vpack.c.b16 %v313, %v312
    %v358 = vpack.c.b16 %v315, %v314
    %v359 = vpack.c.b16 %v317, %v316
    %v360 = vpack.c.b16 %v319, %v318
    %v361 = vpack.c.b16 %v321, %v320
    %v362 = vpack.c.b16 %v323, %v322
    %v363 = vpack.c.b16 %v325, %v324
    %v364 = vpack.c.b16 %v327, %v326
    %v365 = vpack.c.b16 %v329, %v328
    %v366 = vpack.c.b16 %v331, %v330
    %v367 = vpack.c.b16 %v333, %v332
    %v368 = vpack.c.b16 %v335, %v334
    %v369 = vpack.c.b16 %v337, %v336
    %v418 = vunpack.c.l.b16 %v194
    %v419 = vunpack.c.l.b16 %v195
    %v420 = vunpack.c.l.b16 %v196
    %v421 = vunpack.c.l.b16 %v197
    %v422 = vunpack.c.l.b16 %v198
    %v423 = vunpack.c.l.b16 %v199
    %v424 = vunpack.c.l.b16 %v200
    %v425 = vunpack.c.l.b16 %v201
    %v426 = vunpack.c.l.b16 %v202
    %v427 = vunpack.c.l.b16 %v203
    %v428 = vunpack.c.l.b16 %v204
    %v429 = vunpack.c.l.b16 %v205
    %v430 = vunpack.c.l.b16 %v206
    %v431 = vunpack.c.l.b16 %v207
    %v432 = vunpack.c.l.b16 %v208
    %v433 = vunpack.c.l.b16 %v209
    %v434 = vpack.c.b16 %v419, %v418
    %v435 = vpack.c.b16 %v421, %v420
    %v436 = vpack.c.b16 %v423, %v422
    %v437 = vpack.c.b16 %v425, %v424
    %v438 = vpack.c.b16 %v427, %v426
    %v439 = vpack.c.b16 %v429, %v428
    %v440 = vpack.c.b16 %v431, %v430
    %v441 = vpack.c.b16 %v433, %v432
    %450 = vmatprep.subr.bf16.mxu0 0
    %451 = vmatpush1.bf16.msra.mxu0 %v434
    %452 = vmatprep.subr.bf16.mxu0 0
    %453 = vmatpush1.bf16.msra.mxu0 %v435
    %454 = vmatprep.subr.bf16.mxu0 0
    %455 = vmatpush1.bf16.msra.mxu0 %v436
    %456 = vmatprep.subr.bf16.mxu0 0
    %457 = vmatpush1.bf16.msra.mxu0 %v437
    %458 = vmatprep.subr.bf16.mxu0 0
    %459 = vmatpush1.bf16.msra.mxu0 %v438
    %460 = vmatprep.subr.bf16.mxu0 0
    %461 = vmatpush1.bf16.msra.mxu0 %v439
    %462 = vmatprep.subr.bf16.mxu0 0
    %463 = vmatpush1.bf16.msra.mxu0 %v440
    %464 = vmatprep.subr.bf16.mxu0 0
    %465 = vmatpush1.bf16.msra.mxu0 %v441
    %466 = vmatprep.subr.bf16.mxu0 0
    %467 = vmatpush1.bf16.msra.mxu0 0
    %468 = vmatprep.subr.bf16.mxu0 0
    %469 = vmatpush1.bf16.msra.mxu0 0
    %470 = vmatprep.subr.bf16.mxu0 0
    %471 = vmatpush1.bf16.msra.mxu0 0
    %472 = vmatprep.subr.bf16.mxu0 0
    %473 = vmatpush1.bf16.msra.mxu0 0
    %474 = vmatprep.subr.bf16.mxu0 0
    %475 = vmatpush1.bf16.msra.mxu0 0
    %476 = vmatprep.subr.bf16.mxu0 0
    %477 = vmatpush1.bf16.msra.mxu0 0
    %478 = vmatprep.subr.bf16.mxu0 0
    %479 = vmatpush1.bf16.msra.mxu0 0
    %480 = vmatprep.subr.bf16.mxu0 0
    %481 = vmatpush1.bf16.msra.mxu0 0
    %482 = vmatprep.mubr.bf16.mxu0 0
    %483 = vmatmul.mubr.bf16.gmra.mrb[0].mxu0 %v338
    %v484 = vpop.f32.mrb[0].mxu0
    %v485 = vadd.f32 0.0, %v484
    %v486 = vpop.f32.mrb[0].mxu0
    %v487 = vpop.f32.mrb[0].mxu0
    %v488 = vadd.f32 0.0, %v487
    %v489 = vpop.f32.mrb[0].mxu0
    %490 = vmatprep.mubr.bf16.mxu0 0
    %491 = vmatmul.mubr.bf16.gmra.mrb[0].mxu0 %v339
    %v492 = vpop.f32.mrb[0].mxu0
    %v493 = vadd.f32 0.0, %v492
    %v494 = vpop.f32.mrb[0].mxu0
    %v495 = vpop.f32.mrb[0].mxu0
    %v496 = vadd.f32 0.0, %v495
    %v497 = vpop.f32.mrb[0].mxu0
    %498 = vmatprep.mubr.bf16.mxu0 0
    %499 = vmatmul.mubr.bf16.gmra.mrb[0].mxu0 %v340
    %v500 = vpop.f32.mrb[0].mxu0
    %v501 = vadd.f32 0.0, %v500
    %v502 = vpop.f32.mrb[0].mxu0
    %v503 = vpop.f32.mrb[0].mxu0
    %v504 = vadd.f32 0.0, %v503
    %v505 = vpop.f32.mrb[0].mxu0
    %506 = vmatprep.mubr.bf16.mxu0 0
    %507 = vmatmul.mubr.bf16.gmra.mrb[0].mxu0 %v341
    %v508 = vpop.f32.mrb[0].mxu0
    %v509 = vadd.f32 0.0, %v508
    %v510 = vpop.f32.mrb[0].mxu0
    %v511 = vpop.f32.mrb[0].mxu0
    %v512 = vadd.f32 0.0, %v511
    %v513 = vpop.f32.mrb[0].mxu0
    %514 = vmatprep.mubr.bf16.mxu0 0
    %515 = vmatmul.mubr.bf16.gmra.mrb[0].mxu0 %v342
    %v516 = vpop.f32.mrb[0].mxu0
    %v517 = vadd.f32 0.0, %v516
    %v518 = vpop.f32.mrb[0].mxu0
    %v519 = vpop.f32.mrb[0].mxu0
    %v520 = vadd.f32 0.0, %v519
    %v521 = vpop.f32.mrb[0].mxu0
    %522 = vmatprep.mubr.bf16.mxu0 0
    %523 = vmatmul.mubr.bf16.gmra.mrb[0].mxu0 %v343
    %v524 = vpop.f32.mrb[0].mxu0
    %v525 = vadd.f32 0.0, %v524
    %v526 = vpop.f32.mrb[0].mxu0
    %v527 = vpop.f32.mrb[0].mxu0
    %v528 = vadd.f32 0.0, %v527
    %v529 = vpop.f32.mrb[0].mxu0
    %530 = vmatprep.mubr.bf16.mxu0 0
    %531 = vmatmul.mubr.bf16.gmra.mrb[0].mxu0 %v344
    %v532 = vpop.f32.mrb[0].mxu0
    %v533 = vadd.f32 0.0, %v532
    %v534 = vpop.f32.mrb[0].mxu0
    %v535 = vpop.f32.mrb[0].mxu0
    %v536 = vadd.f32 0.0, %v535
    %v537 = vpop.f32.mrb[0].mxu0
    %538 = vmatprep.mubr.bf16.mxu0 0
    %539 = vmatmul.mubr.bf16.gmra.mrb[0].mxu0 %v345
    %v540 = vpop.f32.mrb[0].mxu0
    %v541 = vadd.f32 0.0, %v540
    %v542 = vpop.f32.mrb[0].mxu0
    %v543 = vpop.f32.mrb[0].mxu0
    %v544 = vadd.f32 0.0, %v543
    %v545 = vpop.f32.mrb[0].mxu0
    %546 = vmatprep.mubr.bf16.mxu0 0
    %547 = vmatmul.mubr.bf16.gmra.mrb[0].mxu0 %v346
    %v548 = vpop.f32.mrb[0].mxu0
    %v549 = vadd.f32 0.0, %v548
    %v550 = vpop.f32.mrb[0].mxu0
    %v551 = vpop.f32.mrb[0].mxu0
    %v552 = vadd.f32 0.0, %v551
    %v553 = vpop.f32.mrb[0].mxu0
    %554 = vmatprep.mubr.bf16.mxu0 0
    %555 = vmatmul.mubr.bf16.gmra.mrb[0].mxu0 %v347
    %v556 = vpop.f32.mrb[0].mxu0
    %v557 = vadd.f32 0.0, %v556
    %v558 = vpop.f32.mrb[0].mxu0
    %v559 = vpop.f32.mrb[0].mxu0
    %v560 = vadd.f32 0.0, %v559
    %v561 = vpop.f32.mrb[0].mxu0
    %562 = vmatprep.mubr.bf16.mxu0 0
    %563 = vmatmul.mubr.bf16.gmra.mrb[0].mxu0 %v348
    %v564 = vpop.f32.mrb[0].mxu0
    %v565 = vadd.f32 0.0, %v564
    %v566 = vpop.f32.mrb[0].mxu0
    %v567 = vpop.f32.mrb[0].mxu0
    %v568 = vadd.f32 0.0, %v567
    %v569 = vpop.f32.mrb[0].mxu0
    %570 = vmatprep.mubr.bf16.mxu0 0
    %571 = vmatmul.mubr.bf16.gmra.mrb[0].mxu0 %v349
    %v572 = vpop.f32.mrb[0].mxu0
    %v573 = vadd.f32 0.0, %v572
    %v574 = vpop.f32.mrb[0].mxu0
    %v575 = vpop.f32.mrb[0].mxu0
    %v576 = vadd.f32 0.0, %v575
    %v577 = vpop.f32.mrb[0].mxu0
    %578 = vmatprep.mubr.bf16.mxu0 0
    %579 = vmatmul.mubr.bf16.gmra.mrb[0].mxu0 %v350
    %v580 = vpop.f32.mrb[0].mxu0
    %v581 = vadd.f32 0.0, %v580
    %v582 = vpop.f32.mrb[0].mxu0
    %v583 = vpop.f32.mrb[0].mxu0
    %v584 = vadd.f32 0.0, %v583
    %v585 = vpop.f32.mrb[0].mxu0
    %586 = vmatprep.mubr.bf16.mxu0 0
    %587 = vmatmul.mubr.bf16.gmra.mrb[0].mxu0 %v351
    %v588 = vpop.f32.mrb[0].mxu0
    %v589 = vadd.f32 0.0, %v588
    %v590 = vpop.f32.mrb[0].mxu0
    %v591 = vpop.f32.mrb[0].mxu0
    %v592 = vadd.f32 0.0, %v591
    %v593 = vpop.f32.mrb[0].mxu0
    %594 = vmatprep.mubr.bf16.mxu0 0
    %595 = vmatmul.mubr.bf16.gmra.mrb[0].mxu0 %v352
    %v596 = vpop.f32.mrb[0].mxu0
    %v597 = vadd.f32 0.0, %v596
    %v598 = vpop.f32.mrb[0].mxu0
    %v599 = vpop.f32.mrb[0].mxu0
    %v600 = vadd.f32 0.0, %v599
    %v601 = vpop.f32.mrb[0].mxu0
    %602 = vmatprep.mubr.bf16.mxu0 0
    %603 = vmatmul.mubr.bf16.gmra.mrb[0].mxu0 %v353
    %v604 = vpop.f32.mrb[0].mxu0
    %v605 = vadd.f32 0.0, %v604
    %v606 = vpop.f32.mrb[0].mxu0
    %v607 = vpop.f32.mrb[0].mxu0
    %v608 = vadd.f32 0.0, %v607
    %v609 = vpop.f32.mrb[0].mxu0
    %610 = vmatprep.mubr.bf16.mxu0 0
    %611 = vmatmul.mubr.bf16.gmra.mrb[0].mxu0 %v354
    %v612 = vpop.f32.mrb[0].mxu0
    %v613 = vadd.f32 0.0, %v612
    %v614 = vpop.f32.mrb[0].mxu0
    %v615 = vpop.f32.mrb[0].mxu0
    %v616 = vadd.f32 0.0, %v615
    %v617 = vpop.f32.mrb[0].mxu0
    %618 = vmatprep.mubr.bf16.mxu0 0
    %619 = vmatmul.mubr.bf16.gmra.mrb[0].mxu0 %v355
    %v620 = vpop.f32.mrb[0].mxu0
    %v621 = vadd.f32 0.0, %v620
    %v622 = vpop.f32.mrb[0].mxu0
    %v623 = vpop.f32.mrb[0].mxu0
    %v624 = vadd.f32 0.0, %v623
    %v625 = vpop.f32.mrb[0].mxu0
    %626 = vmatprep.mubr.bf16.mxu0 0
    %627 = vmatmul.mubr.bf16.gmra.mrb[0].mxu0 %v356
    %v628 = vpop.f32.mrb[0].mxu0
    %v629 = vadd.f32 0.0, %v628
    %v630 = vpop.f32.mrb[0].mxu0
    %v631 = vpop.f32.mrb[0].mxu0
    %v632 = vadd.f32 0.0, %v631
    %v633 = vpop.f32.mrb[0].mxu0
    %634 = vmatprep.mubr.bf16.mxu0 0
    %635 = vmatmul.mubr.bf16.gmra.mrb[0].mxu0 %v357
    %v636 = vpop.f32.mrb[0].mxu0
    %v637 = vadd.f32 0.0, %v636
    %v638 = vpop.f32.mrb[0].mxu0
    %v639 = vpop.f32.mrb[0].mxu0
    %v640 = vadd.f32 0.0, %v639
    %v641 = vpop.f32.mrb[0].mxu0
    %642 = vmatprep.mubr.bf16.mxu0 0
    %643 = vmatmul.mubr.bf16.gmra.mrb[0].mxu0 %v358
    %v644 = vpop.f32.mrb[0].mxu0
    %v645 = vadd.f32 0.0, %v644
    %v646 = vpop.f32.mrb[0].mxu0
    %v647 = vpop.f32.mrb[0].mxu0
    %v648 = vadd.f32 0.0, %v647
    %v649 = vpop.f32.mrb[0].mxu0
    %650 = vmatprep.mubr.bf16.mxu0 0
    %651 = vmatmul.mubr.bf16.gmra.mrb[0].mxu0 %v359
    %v652 = vpop.f32.mrb[0].mxu0
    %v653 = vadd.f32 0.0, %v652
    %v654 = vpop.f32.mrb[0].mxu0
    %v655 = vpop.f32.mrb[0].mxu0
    %v656 = vadd.f32 0.0, %v655
    %v657 = vpop.f32.mrb[0].mxu0
    %658 = vmatprep.mubr.bf16.mxu0 0
    %659 = vmatmul.mubr.bf16.gmra.mrb[0].mxu0 %v360
    %v660 = vpop.f32.mrb[0].mxu0
    %v661 = vadd.f32 0.0, %v660
    %v662 = vpop.f32.mrb[0].mxu0
    %v663 = vpop.f32.mrb[0].mxu0
    %v664 = vadd.f32 0.0, %v663
    %v665 = vpop.f32.mrb[0].mxu0
    %666 = vmatprep.mubr.bf16.mxu0 0
    %667 = vmatmul.mubr.bf16.gmra.mrb[0].mxu0 %v361
    %v668 = vpop.f32.mrb[0].mxu0
    %v669 = vadd.f32 0.0, %v668
    %v670 = vpop.f32.mrb[0].mxu0
    %v671 = vpop.f32.mrb[0].mxu0
    %v672 = vadd.f32 0.0, %v671
    %v673 = vpop.f32.mrb[0].mxu0
    %674 = vmatprep.mubr.bf16.mxu0 0
    %675 = vmatmul.mubr.bf16.gmra.mrb[0].mxu0 %v362
    %v676 = vpop.f32.mrb[0].mxu0
    %v677 = vadd.f32 0.0, %v676
    %v678 = vpop.f32.mrb[0].mxu0
    %v679 = vpop.f32.mrb[0].mxu0
    %v680 = vadd.f32 0.0, %v679
    %v681 = vpop.f32.mrb[0].mxu0
    %682 = vmatprep.mubr.bf16.mxu0 0
    %683 = vmatmul.mubr.bf16.gmra.mrb[0].mxu0 %v363
    %v684 = vpop.f32.mrb[0].mxu0
    %v685 = vadd.f32 0.0, %v684
    %v686 = vpop.f32.mrb[0].mxu0
    %v687 = vpop.f32.mrb[0].mxu0
    %v688 = vadd.f32 0.0, %v687
    %v689 = vpop.f32.mrb[0].mxu0
    %690 = vmatprep.mubr.bf16.mxu0 0
    %691 = vmatmul.mubr.bf16.gmra.mrb[0].mxu0 %v364
    %v692 = vpop.f32.mrb[0].mxu0
    %v693 = vadd.f32 0.0, %v692
    %v694 = vpop.f32.mrb[0].mxu0
    %v695 = vpop.f32.mrb[0].mxu0
    %v696 = vadd.f32 0.0, %v695
    %v697 = vpop.f32.mrb[0].mxu0
    %698 = vmatprep.mubr.bf16.mxu0 0
    %699 = vmatmul.mubr.bf16.gmra.mrb[0].mxu0 %v365
    %v700 = vpop.f32.mrb[0].mxu0
    %v701 = vadd.f32 0.0, %v700
    %v702 = vpop.f32.mrb[0].mxu0
    %v703 = vpop.f32.mrb[0].mxu0
    %v704 = vadd.f32 0.0, %v703
    %v705 = vpop.f32.mrb[0].mxu0
    %706 = vmatprep.mubr.bf16.mxu0 0
    %707 = vmatmul.mubr.bf16.gmra.mrb[0].mxu0 %v366
    %v708 = vpop.f32.mrb[0].mxu0
    %v709 = vadd.f32 0.0, %v708
    %v710 = vpop.f32.mrb[0].mxu0
    %v711 = vpop.f32.mrb[0].mxu0
    %v712 = vadd.f32 0.0, %v711
    %v713 = vpop.f32.mrb[0].mxu0
    %714 = vmatprep.mubr.bf16.mxu0 0
    %715 = vmatmul.mubr.bf16.gmra.mrb[0].mxu0 %v367
    %v716 = vpop.f32.mrb[0].mxu0
    %v717 = vadd.f32 0.0, %v716
    %v718 = vpop.f32.mrb[0].mxu0
    %v719 = vpop.f32.mrb[0].mxu0
    %v720 = vadd.f32 0.0, %v719
    %v721 = vpop.f32.mrb[0].mxu0
    %722 = vmatprep.mubr.bf16.mxu0 0
    %723 = vmatmul.mubr.bf16.gmra.mrb[0].mxu0 %v368
    %v724 = vpop.f32.mrb[0].mxu0
    %v725 = vadd.f32 0.0, %v724
    %v726 = vpop.f32.mrb[0].mxu0
    %v727 = vpop.f32.mrb[0].mxu0
    %v728 = vadd.f32 0.0, %v727
    %v729 = vpop.f32.mrb[0].mxu0
    %730 = vmatprep.mubr.bf16.mxu0 0
    %731 = vmatmul.mubr.bf16.gmra.mrb[0].mxu0 %v369
    %v732 = vpop.f32.mrb[0].mxu0
    %v733 = vadd.f32 0.0, %v732
    %v734 = vpop.f32.mrb[0].mxu0
    %v735 = vpop.f32.mrb[0].mxu0
    %v736 = vadd.f32 0.0, %v735
    %v737 = vpop.f32.mrb[0].mxu0
    %738 = vdwg.mxu0
    %v739 = vmax.f32 %v485, 0.0
    %v740 = vmax.f32 %v488, 0.0
    %v741 = vmax.f32 %v493, 0.0
    %v742 = vmax.f32 %v496, 0.0
    %v743 = vmax.f32 %v501, 0.0
    %v744 = vmax.f32 %v504, 0.0
    %v745 = vmax.f32 %v509, 0.0
    %v746 = vmax.f32 %v512, 0.0
    %v747 = vmax.f32 %v517, 0.0
    %v748 = vmax.f32 %v520, 0.0
    %v749 = vmax.f32 %v525, 0.0
    %v750 = vmax.f32 %v528, 0.0
    %v751 = vmax.f32 %v533, 0.0
    %v752 = vmax.f32 %v536, 0.0
    %v753 = vmax.f32 %v541, 0.0
    %v754 = vmax.f32 %v544, 0.0
    %v755 = vmax.f32 %v549, 0.0
    %v756 = vmax.f32 %v552, 0.0
    %v757 = vmax.f32 %v557, 0.0
    %v758 = vmax.f32 %v560, 0.0
    %v759 = vmax.f32 %v565, 0.0
    %v760 = vmax.f32 %v568, 0.0
    %v761 = vmax.f32 %v573, 0.0
    %v762 = vmax.f32 %v576, 0.0
    %v763 = vmax.f32 %v581, 0.0
    %v764 = vmax.f32 %v584, 0.0
    %v765 = vmax.f32 %v589, 0.0
    %v766 = vmax.f32 %v592, 0.0
    %v767 = vmax.f32 %v597, 0.0
    %v768 = vmax.f32 %v600, 0.0
    %v769 = vmax.f32 %v605, 0.0
    %v770 = vmax.f32 %v608, 0.0
    %v771 = vmax.f32 %v613, 0.0
    %v772 = vmax.f32 %v616, 0.0
    %v773 = vmax.f32 %v621, 0.0
    %v774 = vmax.f32 %v624, 0.0
    %v775 = vmax.f32 %v629, 0.0
    %v776 = vmax.f32 %v632, 0.0
    %v777 = vmax.f32 %v637, 0.0
    %v778 = vmax.f32 %v640, 0.0
    %v779 = vmax.f32 %v645, 0.0
    %v780 = vmax.f32 %v648, 0.0
    %v781 = vmax.f32 %v653, 0.0
    %v782 = vmax.f32 %v656, 0.0
    %v783 = vmax.f32 %v661, 0.0
    %v784 = vmax.f32 %v664, 0.0
    %v785 = vmax.f32 %v669, 0.0
    %v786 = vmax.f32 %v672, 0.0
    %v787 = vmax.f32 %v677, 0.0
    %v788 = vmax.f32 %v680, 0.0
    %v789 = vmax.f32 %v685, 0.0
    %v790 = vmax.f32 %v688, 0.0
    %v791 = vmax.f32 %v693, 0.0
    %v792 = vmax.f32 %v696, 0.0
    %v793 = vmax.f32 %v701, 0.0
    %v794 = vmax.f32 %v704, 0.0
    %v795 = vmax.f32 %v709, 0.0
    %v796 = vmax.f32 %v712, 0.0
    %v797 = vmax.f32 %v717, 0.0
    %v798 = vmax.f32 %v720, 0.0
    %v799 = vmax.f32 %v725, 0.0
    %v800 = vmax.f32 %v728, 0.0
    %v801 = vmax.f32 %v733, 0.0
    %v802 = vmax.f32 %v736, 0.0
    %803 = vst [vmem:[#allocation3] sm:$0xff] %v739
    %804 = vst [vmem:[#allocation3 + $0x8] sm:$0xff] %v740
    %805 = vst [vmem:[#allocation3 + $0x10] sm:$0xff] %v741
    %806 = vst [vmem:[#allocation3 + $0x18] sm:$0xff] %v742
    %807 = vst [vmem:[#allocation3 + $0x20] sm:$0xff] %v743
    %808 = vst [vmem:[#allocation3 + $0x28] sm:$0xff] %v744
    %809 = vst [vmem:[#allocation3 + $0x30] sm:$0xff] %v745
    %810 = vst [vmem:[#allocation3 + $0x38] sm:$0xff] %v746
    %811 = vst [vmem:[#allocation3 + $0x40] sm:$0xff] %v747
    %812 = vst [vmem:[#allocation3 + $0x48] sm:$0xff] %v748
    %813 = vst [vmem:[#allocation3 + $0x50] sm:$0xff] %v749
    %814 = vst [vmem:[#allocation3 + $0x58] sm:$0xff] %v750
    %815 = vst [vmem:[#allocation3 + $0x60] sm:$0xff] %v751
    %816 = vst [vmem:[#allocation3 + $0x68] sm:$0xff] %v752
    %817 = vst [vmem:[#allocation3 + $0x70] sm:$0xff] %v753
    %818 = vst [vmem:[#allocation3 + $0x78] sm:$0xff] %v754
    %819 = vst [vmem:[#allocation3 + $0x80] sm:$0xff] %v755
    %820 = vst [vmem:[#allocation3 + $0x88] sm:$0xff] %v756
    %821 = vst [vmem:[#allocation3 + $0x90] sm:$0xff] %v757
    %822 = vst [vmem:[#allocation3 + $0x98] sm:$0xff] %v758
    %823 = vst [vmem:[#allocation3 + $0xa0] sm:$0xff] %v759
    %824 = vst [vmem:[#allocation3 + $0xa8] sm:$0xff] %v760
    %825 = vst [vmem:[#allocation3 + $0xb0] sm:$0xff] %v761
    %826 = vst [vmem:[#allocation3 + $0xb8] sm:$0xff] %v762
    %827 = vst [vmem:[#allocation3 + $0xc0] sm:$0xff] %v763
    %828 = vst [vmem:[#allocation3 + $0xc8] sm:$0xff] %v764
    %829 = vst [vmem:[#allocation3 + $0xd0] sm:$0xff] %v765
    %830 = vst [vmem:[#allocation3 + $0xd8] sm:$0xff] %v766
    %831 = vst [vmem:[#allocation3 + $0xe0] sm:$0xff] %v767
    %832 = vst [vmem:[#allocation3 + $0xe8] sm:$0xff] %v768
    %833 = vst [vmem:[#allocation3 + $0xf0] sm:$0xff] %v769
    %834 = vst [vmem:[#allocation3 + $0xf8] sm:$0xff] %v770
    %835 = vst [vmem:[#allocation3 + $0x100] sm:$0xff] %v771
    %836 = vst [vmem:[#allocation3 + $0x108] sm:$0xff] %v772
    %837 = vst [vmem:[#allocation3 + $0x110] sm:$0xff] %v773
    %838 = vst [vmem:[#allocation3 + $0x118] sm:$0xff] %v774
    %839 = vst [vmem:[#allocation3 + $0x120] sm:$0xff] %v775
    %840 = vst [vmem:[#allocation3 + $0x128] sm:$0xff] %v776
    %841 = vst [vmem:[#allocation3 + $0x130] sm:$0xff] %v777
    %842 = vst [vmem:[#allocation3 + $0x138] sm:$0xff] %v778
    %843 = vst [vmem:[#allocation3 + $0x140] sm:$0xff] %v779
    %844 = vst [vmem:[#allocation3 + $0x148] sm:$0xff] %v780
    %845 = vst [vmem:[#allocation3 + $0x150] sm:$0xff] %v781
    %846 = vst [vmem:[#allocation3 + $0x158] sm:$0xff] %v782
    %847 = vst [vmem:[#allocation3 + $0x160] sm:$0xff] %v783
    %848 = vst [vmem:[#allocation3 + $0x168] sm:$0xff] %v784
    %849 = vst [vmem:[#allocation3 + $0x170] sm:$0xff] %v785
    %850 = vst [vmem:[#allocation3 + $0x178] sm:$0xff] %v786
    %851 = vst [vmem:[#allocation3 + $0x180] sm:$0xff] %v787
    %852 = vst [vmem:[#allocation3 + $0x188] sm:$0xff] %v788
    %853 = vst [vmem:[#allocation3 + $0x190] sm:$0xff] %v789
    %854 = vst [vmem:[#allocation3 + $0x198] sm:$0xff] %v790
    %855 = vst [vmem:[#allocation3 + $0x1a0] sm:$0xff] %v791
    %856 = vst [vmem:[#allocation3 + $0x1a8] sm:$0xff] %v792
    %857 = vst [vmem:[#allocation3 + $0x1b0] sm:$0xff] %v793
    %858 = vst [vmem:[#allocation3 + $0x1b8] sm:$0xff] %v794
    %859 = vst [vmem:[#allocation3 + $0x1c0] sm:$0xff] %v795
    %860 = vst [vmem:[#allocation3 + $0x1c8] sm:$0xff] %v796
    %861 = vst [vmem:[#allocation3 + $0x1d0] sm:$0xff] %v797
    %862 = vst [vmem:[#allocation3 + $0x1d8] sm:$0xff] %v798
    %863 = vst [vmem:[#allocation3 + $0x1e0] sm:$0xff] %v799
    %864 = vst [vmem:[#allocation3 + $0x1e8] sm:$0xff] %v800
    %865 = vst [vmem:[#allocation3 + $0x1f0] sm:$0xff] %v801
    %866 = vst [vmem:[#allocation3 + $0x1f8] sm:$0xff] %v802
    %v867 = vpack.c.bf16 %v740, %v739
    %v868 = vpack.c.bf16 %v742, %v741
    %v869 = vpack.c.bf16 %v744, %v743
    %v870 = vpack.c.bf16 %v746, %v745
    %v871 = vpack.c.bf16 %v748, %v747
    %v872 = vpack.c.bf16 %v750, %v749
    %v873 = vpack.c.bf16 %v752, %v751
    %v874 = vpack.c.bf16 %v754, %v753
    %v875 = vpack.c.bf16 %v756, %v755
    %v876 = vpack.c.bf16 %v758, %v757
    %v877 = vpack.c.bf16 %v760, %v759
    %v878 = vpack.c.bf16 %v762, %v761
    %v879 = vpack.c.bf16 %v764, %v763
    %v880 = vpack.c.bf16 %v766, %v765
    %v881 = vpack.c.bf16 %v768, %v767
    %v882 = vpack.c.bf16 %v770, %v769
    %v883 = vpack.c.bf16 %v772, %v771
    %v884 = vpack.c.bf16 %v774, %v773
    %v885 = vpack.c.bf16 %v776, %v775
    %v886 = vpack.c.bf16 %v778, %v777
    %v887 = vpack.c.bf16 %v780, %v779
    %v888 = vpack.c.bf16 %v782, %v781
    %v889 = vpack.c.bf16 %v784, %v783
    %v890 = vpack.c.bf16 %v786, %v785
    %v891 = vpack.c.bf16 %v788, %v787
    %v892 = vpack.c.bf16 %v790, %v789
    %v893 = vpack.c.bf16 %v792, %v791
    %v894 = vpack.c.bf16 %v794, %v793
    %v895 = vpack.c.bf16 %v796, %v795
    %v896 = vpack.c.bf16 %v798, %v797
    %v897 = vpack.c.bf16 %v800, %v799
    %v898 = vpack.c.bf16 %v802, %v801
    %s899 = scalar_lea.vmem [#allocation2], 24
    %900 = vst [vmem:[%s899 + $0x8] sm:$0xff] %v867
    %901 = vst [vmem:[%s899 + $0x20] sm:$0xff] %v868
    %902 = vst [vmem:[%s899 + $0x38] sm:$0xff] %v869
    %903 = vst [vmem:[%s899 + $0x50] sm:$0xff] %v870
    %904 = vst [vmem:[%s899 + $0x68] sm:$0xff] %v871
    %905 = vst [vmem:[%s899 + $0x80] sm:$0xff] %v872
    %906 = vst [vmem:[%s899 + $0x98] sm:$0xff] %v873
    %907 = vst [vmem:[%s899 + $0xb0] sm:$0xff] %v874
    %908 = vst [vmem:[%s899 + $0xc8] sm:$0xff] %v875
    %909 = vst [vmem:[%s899 + $0xe0] sm:$0xff] %v876
    %910 = vst [vmem:[%s899 + $0xf8] sm:$0xff] %v877
    %911 = vst [vmem:[%s899 + $0x110] sm:$0xff] %v878
    %912 = vst [vmem:[%s899 + $0x128] sm:$0xff] %v879
    %913 = vst [vmem:[%s899 + $0x140] sm:$0xff] %v880
    %914 = vst [vmem:[%s899 + $0x158] sm:$0xff] %v881
    %915 = vst [vmem:[%s899 + $0x170] sm:$0xff] %v882
    %916 = vst [vmem:[%s899 + $0x1b8] sm:$0xff] %v883
    %917 = vst [vmem:[%s899 + $0x1d0] sm:$0xff] %v884
    %918 = vst [vmem:[%s899 + $0x1e8] sm:$0xff] %v885
    %919 = vst [vmem:[%s899 + $0x200] sm:$0xff] %v886
    %920 = vst [vmem:[%s899 + $0x218] sm:$0xff] %v887
    %921 = vst [vmem:[%s899 + $0x230] sm:$0xff] %v888
    %922 = vst [vmem:[%s899 + $0x248] sm:$0xff] %v889
    %923 = vst [vmem:[%s899 + $0x260] sm:$0xff] %v890
    %924 = vst [vmem:[%s899 + $0x278] sm:$0xff] %v891
    %925 = vst [vmem:[%s899 + $0x290] sm:$0xff] %v892
    %926 = vst [vmem:[%s899 + $0x2a8] sm:$0xff] %v893
    %927 = vst [vmem:[%s899 + $0x2c0] sm:$0xff] %v894
    %928 = vst [vmem:[%s899 + $0x2d8] sm:$0xff] %v895
    %929 = vst [vmem:[%s899 + $0x2f0] sm:$0xff] %v896
    %930 = vst [vmem:[%s899 + $0x308] sm:$0xff] %v897
    %931 = vst [vmem:[%s899 + $0x320] sm:$0xff] %v898
    loop: start=0, step=1, limit=9
    $region22: #{res_model_forward.1} parent=1 // loop_pre_header
      _
    $region23: #{res_model_forward.1} parent=1 // loop_header
      %s933 = sphi 0, %s937
      %p934 = scmp.ge.s32.totalorder %s933, 9
    $region24: #{res_model_forward.1} parent=1 // loop_header_branch
      %936 = sbr.rel (%p934) target = $region28
    $region25: #{res_model_forward.1} parent=1 // loop_body
      %s938 = sadd.s32 %s933, 1
      %s939 = smul.u32 %s933, 9
      %v940 = vld [vmem:[#allocation2] sm:$0x80]
      %v941 = vld [vmem:[#allocation2 + $0x8] sm:$0xff]
      %v942 = vld [vmem:[#allocation2 + $0x18] sm:$0x80]
      %v943 = vld [vmem:[#allocation2 + $0x20] sm:$0xff]
      %v944 = vld [vmem:[#allocation2 + $0x30] sm:$0x80]
      %v945 = vld [vmem:[#allocation2 + $0x38] sm:$0xff]
      %v946 = vld [vmem:[#allocation2 + $0x48] sm:$0x80]
      %v947 = vld [vmem:[#allocation2 + $0x50] sm:$0xff]
      %v948 = vld [vmem:[#allocation2 + $0x60] sm:$0x80]
      %v949 = vld [vmem:[#allocation2 + $0x68] sm:$0xff]
      %v950 = vld [vmem:[#allocation2 + $0x78] sm:$0x80]
      %v951 = vld [vmem:[#allocation2 + $0x80] sm:$0xff]
      %v952 = vld [vmem:[#allocation2 + $0x90] sm:$0x80]
      %v953 = vld [vmem:[#allocation2 + $0x98] sm:$0xff]
      %v954 = vld [vmem:[#allocation2 + $0xa8] sm:$0x80]
      %v955 = vld [vmem:[#allocation2 + $0xb0] sm:$0xff]
      %v956 = vld [vmem:[#allocation2 + $0xc0] sm:$0x80]
      %v957 = vld [vmem:[#allocation2 + $0xc8] sm:$0xff]
      %v958 = vld [vmem:[#allocation2 + $0xd8] sm:$0x80]
      %v959 = vld [vmem:[#allocation2 + $0xe0] sm:$0xff]
      %v960 = vld [vmem:[#allocation2 + $0xf0] sm:$0x80]
      %v961 = vld [vmem:[#allocation2 + $0xf8] sm:$0xff]
      %v962 = vld [vmem:[#allocation2 + $0x108] sm:$0x80]
      %v963 = vld [vmem:[#allocation2 + $0x110] sm:$0xff]
      %v964 = vld [vmem:[#allocation2 + $0x120] sm:$0x80]
      %v965 = vld [vmem:[#allocation2 + $0x128] sm:$0xff]
      %v966 = vld [vmem:[#allocation2 + $0x138] sm:$0x80]
      %v967 = vld [vmem:[#allocation2 + $0x140] sm:$0xff]
      %v968 = vld [vmem:[#allocation2 + $0x150] sm:$0x80]
      %v969 = vld [vmem:[#allocation2 + $0x158] sm:$0xff]
      %v970 = vld [vmem:[#allocation2 + $0x168] sm:$0x80]
      %v971 = vld [vmem:[#allocation2 + $0x170] sm:$0xff]
      %v972 = vld [vmem:[#allocation2 + $0x1b0] sm:$0x80]
      %v973 = vld [vmem:[#allocation2 + $0x1b8] sm:$0xff]
      %v974 = vld [vmem:[#allocation2 + $0x1c8] sm:$0x80]
      %v975 = vld [vmem:[#allocation2 + $0x1d0] sm:$0xff]
      %v976 = vld [vmem:[#allocation2 + $0x1e0] sm:$0x80]
      %v977 = vld [vmem:[#allocation2 + $0x1e8] sm:$0xff]
      %v978 = vld [vmem:[#allocation2 + $0x1f8] sm:$0x80]
      %v979 = vld [vmem:[#allocation2 + $0x200] sm:$0xff]
      %v980 = vld [vmem:[#allocation2 + $0x210] sm:$0x80]
      %v981 = vld [vmem:[#allocation2 + $0x218] sm:$0xff]
      %v982 = vld [vmem:[#allocation2 + $0x228] sm:$0x80]
      %v983 = vld [vmem:[#allocation2 + $0x230] sm:$0xff]
      %v984 = vld [vmem:[#allocation2 + $0x240] sm:$0x80]
      %v985 = vld [vmem:[#allocation2 + $0x248] sm:$0xff]
      %v986 = vld [vmem:[#allocation2 + $0x258] sm:$0x80]
      %v987 = vld [vmem:[#allocation2 + $0x260] sm:$0xff]
      %v988 = vld [vmem:[#allocation2 + $0x270] sm:$0x80]
      %v989 = vld [vmem:[#allocation2 + $0x278] sm:$0xff]
      %v990 = vld [vmem:[#allocation2 + $0x288] sm:$0x80]
      %v991 = vld [vmem:[#allocation2 + $0x290] sm:$0xff]
      %v992 = vld [vmem:[#allocation2 + $0x2a0] sm:$0x80]
      %v993 = vld [vmem:[#allocation2 + $0x2a8] sm:$0xff]
      %v994 = vld [vmem:[#allocation2 + $0x2b8] sm:$0x80]
      %v995 = vld [vmem:[#allocation2 + $0x2c0] sm:$0xff]
      %v996 = vld [vmem:[#allocation2 + $0x2d0] sm:$0x80]
      %v997 = vld [vmem:[#allocation2 + $0x2d8] sm:$0xff]
      %v998 = vld [vmem:[#allocation2 + $0x2e8] sm:$0x80]
      %v999 = vld [vmem:[#allocation2 + $0x2f0] sm:$0xff]
      %v1000 = vld [vmem:[#allocation2 + $0x300] sm:$0x80]
      %v1001 = vld [vmem:[#allocation2 + $0x308] sm:$0xff]
      %v1002 = vld [vmem:[#allocation2 + $0x318] sm:$0x80]
      %v1003 = vld [vmem:[#allocation2 + $0x320] sm:$0xff]
      %vm1004 = vsmask.f32 256
      %v1006 = vshrl.u32 %v940, 16
      %v1008 = vrot.slane %v1006, 7
      %v1010 = vshrl.u32 %v941, 16
      %v1012 = vrot.slane %v1010, 7
      %v1013 = vshll.u32 %v941, 16
      %v1015 = vor.u32 %v1012, %v1013
      %v1016 = vsel %vm1004, %v1008, %v1015
      %v1018 = vshrl.u32 %v942, 16
      %v1020 = vrot.slane %v1018, 7
      %v1022 = vshrl.u32 %v943, 16
      %v1024 = vrot.slane %v1022, 7
      %v1025 = vshll.u32 %v943, 16
      %v1027 = vor.u32 %v1024, %v1025
      %v1028 = vsel %vm1004, %v1020, %v1027
      %v1030 = vshrl.u32 %v944, 16
      %v1032 = vrot.slane %v1030, 7
      %v1034 = vshrl.u32 %v945, 16
      %v1036 = vrot.slane %v1034, 7
      %v1037 = vshll.u32 %v945, 16
      %v1039 = vor.u32 %v1036, %v1037
      %v1040 = vsel %vm1004, %v1032, %v1039
      %v1042 = vshrl.u32 %v946, 16
      %v1044 = vrot.slane %v1042, 7
      %v1046 = vshrl.u32 %v947, 16
      %v1048 = vrot.slane %v1046, 7
      %v1049 = vshll.u32 %v947, 16
      %v1051 = vor.u32 %v1048, %v1049
      %v1052 = vsel %vm1004, %v1044, %v1051
      %v1054 = vshrl.u32 %v948, 16
      %v1056 = vrot.slane %v1054, 7
      %v1058 = vshrl.u32 %v949, 16
      %v1060 = vrot.slane %v1058, 7
      %v1061 = vshll.u32 %v949, 16
      %v1063 = vor.u32 %v1060, %v1061
      %v1064 = vsel %vm1004, %v1056, %v1063
      %v1066 = vshrl.u32 %v950, 16
      %v1068 = vrot.slane %v1066, 7
      %v1070 = vshrl.u32 %v951, 16
      %v1072 = vrot.slane %v1070, 7
      %v1073 = vshll.u32 %v951, 16
      %v1075 = vor.u32 %v1072, %v1073
      %v1076 = vsel %vm1004, %v1068, %v1075
      %v1078 = vshrl.u32 %v952, 16
      %v1080 = vrot.slane %v1078, 7
      %v1082 = vshrl.u32 %v953, 16
      %v1084 = vrot.slane %v1082, 7
      %v1085 = vshll.u32 %v953, 16
      %v1087 = vor.u32 %v1084, %v1085
      %v1088 = vsel %vm1004, %v1080, %v1087
      %v1090 = vshrl.u32 %v954, 16
      %v1092 = vrot.slane %v1090, 7
      %v1094 = vshrl.u32 %v955, 16
      %v1096 = vrot.slane %v1094, 7
      %v1097 = vshll.u32 %v955, 16
      %v1099 = vor.u32 %v1096, %v1097
      %v1100 = vsel %vm1004, %v1092, %v1099
      %v1102 = vshrl.u32 %v956, 16
      %v1104 = vrot.slane %v1102, 7
      %v1106 = vshrl.u32 %v957, 16
      %v1108 = vrot.slane %v1106, 7
      %v1109 = vshll.u32 %v957, 16
      %v1111 = vor.u32 %v1108, %v1109
      %v1112 = vsel %vm1004, %v1104, %v1111
      %v1114 = vshrl.u32 %v958, 16
      %v1116 = vrot.slane %v1114, 7
      %v1118 = vshrl.u32 %v959, 16
      %v1120 = vrot.slane %v1118, 7
      %v1121 = vshll.u32 %v959, 16
      %v1123 = vor.u32 %v1120, %v1121
      %v1124 = vsel %vm1004, %v1116, %v1123
      %v1126 = vshrl.u32 %v960, 16
      %v1128 = vrot.slane %v1126, 7
      %v1130 = vshrl.u32 %v961, 16
      %v1132 = vrot.slane %v1130, 7
      %v1133 = vshll.u32 %v961, 16
      %v1135 = vor.u32 %v1132, %v1133
      %v1136 = vsel %vm1004, %v1128, %v1135
      %v1138 = vshrl.u32 %v962, 16
      %v1140 = vrot.slane %v1138, 7
      %v1142 = vshrl.u32 %v963, 16
      %v1144 = vrot.slane %v1142, 7
      %v1145 = vshll.u32 %v963, 16
      %v1147 = vor.u32 %v1144, %v1145
      %v1148 = vsel %vm1004, %v1140, %v1147
      %v1150 = vshrl.u32 %v964, 16
      %v1152 = vrot.slane %v1150, 7
      %v1154 = vshrl.u32 %v965, 16
      %v1156 = vrot.slane %v1154, 7
      %v1157 = vshll.u32 %v965, 16
      %v1159 = vor.u32 %v1156, %v1157
      %v1160 = vsel %vm1004, %v1152, %v1159
      %v1162 = vshrl.u32 %v966, 16
      %v1164 = vrot.slane %v1162, 7
      %v1166 = vshrl.u32 %v967, 16
      %v1168 = vrot.slane %v1166, 7
      %v1169 = vshll.u32 %v967, 16
      %v1171 = vor.u32 %v1168, %v1169
      %v1172 = vsel %vm1004, %v1164, %v1171
      %v1174 = vshrl.u32 %v968, 16
      %v1176 = vrot.slane %v1174, 7
      %v1178 = vshrl.u32 %v969, 16
      %v1180 = vrot.slane %v1178, 7
      %v1181 = vshll.u32 %v969, 16
      %v1183 = vor.u32 %v1180, %v1181
      %v1184 = vsel %vm1004, %v1176, %v1183
      %v1186 = vshrl.u32 %v970, 16
      %v1188 = vrot.slane %v1186, 7
      %v1190 = vshrl.u32 %v971, 16
      %v1192 = vrot.slane %v1190, 7
      %v1193 = vshll.u32 %v971, 16
      %v1195 = vor.u32 %v1192, %v1193
      %v1196 = vsel %vm1004, %v1188, %v1195
      %v1198 = vshrl.u32 %v972, 16
      %v1200 = vrot.slane %v1198, 7
      %v1202 = vshrl.u32 %v973, 16
      %v1204 = vrot.slane %v1202, 7
      %v1205 = vshll.u32 %v973, 16
      %v1207 = vor.u32 %v1204, %v1205
      %v1208 = vsel %vm1004, %v1200, %v1207
      %v1210 = vshrl.u32 %v974, 16
      %v1212 = vrot.slane %v1210, 7
      %v1214 = vshrl.u32 %v975, 16
      %v1216 = vrot.slane %v1214, 7
      %v1217 = vshll.u32 %v975, 16
      %v1219 = vor.u32 %v1216, %v1217
      %v1220 = vsel %vm1004, %v1212, %v1219
      %v1222 = vshrl.u32 %v976, 16
      %v1224 = vrot.slane %v1222, 7
      %v1226 = vshrl.u32 %v977, 16
      %v1228 = vrot.slane %v1226, 7
      %v1229 = vshll.u32 %v977, 16
      %v1231 = vor.u32 %v1228, %v1229
      %v1232 = vsel %vm1004, %v1224, %v1231
      %v1234 = vshrl.u32 %v978, 16
      %v1236 = vrot.slane %v1234, 7
      %v1238 = vshrl.u32 %v979, 16
      %v1240 = vrot.slane %v1238, 7
      %v1241 = vshll.u32 %v979, 16
      %v1243 = vor.u32 %v1240, %v1241
      %v1244 = vsel %vm1004, %v1236, %v1243
      %v1246 = vshrl.u32 %v980, 16
      %v1248 = vrot.slane %v1246, 7
      %v1250 = vshrl.u32 %v981, 16
      %v1252 = vrot.slane %v1250, 7
      %v1253 = vshll.u32 %v981, 16
      %v1255 = vor.u32 %v1252, %v1253
      %v1256 = vsel %vm1004, %v1248, %v1255
      %v1258 = vshrl.u32 %v982, 16
      %v1260 = vrot.slane %v1258, 7
      %v1262 = vshrl.u32 %v983, 16
      %v1264 = vrot.slane %v1262, 7
      %v1265 = vshll.u32 %v983, 16
      %v1267 = vor.u32 %v1264, %v1265
      %v1268 = vsel %vm1004, %v1260, %v1267
      %v1270 = vshrl.u32 %v984, 16
      %v1272 = vrot.slane %v1270, 7
      %v1274 = vshrl.u32 %v985, 16
      %v1276 = vrot.slane %v1274, 7
      %v1277 = vshll.u32 %v985, 16
      %v1279 = vor.u32 %v1276, %v1277
      %v1280 = vsel %vm1004, %v1272, %v1279
      %v1282 = vshrl.u32 %v986, 16
      %v1284 = vrot.slane %v1282, 7
      %v1286 = vshrl.u32 %v987, 16
      %v1288 = vrot.slane %v1286, 7
      %v1289 = vshll.u32 %v987, 16
      %v1291 = vor.u32 %v1288, %v1289
      %v1292 = vsel %vm1004, %v1284, %v1291
      %v1294 = vshrl.u32 %v988, 16
      %v1296 = vrot.slane %v1294, 7
      %v1298 = vshrl.u32 %v989, 16
      %v1300 = vrot.slane %v1298, 7
      %v1301 = vshll.u32 %v989, 16
      %v1303 = vor.u32 %v1300, %v1301
      %v1304 = vsel %vm1004, %v1296, %v1303
      %v1306 = vshrl.u32 %v990, 16
      %v1308 = vrot.slane %v1306, 7
      %v1310 = vshrl.u32 %v991, 16
      %v1312 = vrot.slane %v1310, 7
      %v1313 = vshll.u32 %v991, 16
      %v1315 = vor.u32 %v1312, %v1313
      %v1316 = vsel %vm1004, %v1308, %v1315
      %v1318 = vshrl.u32 %v992, 16
      %v1320 = vrot.slane %v1318, 7
      %v1322 = vshrl.u32 %v993, 16
      %v1324 = vrot.slane %v1322, 7
      %v1325 = vshll.u32 %v993, 16
      %v1327 = vor.u32 %v1324, %v1325
      %v1328 = vsel %vm1004, %v1320, %v1327
      %v1330 = vshrl.u32 %v994, 16
      %v1332 = vrot.slane %v1330, 7
      %v1334 = vshrl.u32 %v995, 16
      %v1336 = vrot.slane %v1334, 7
      %v1337 = vshll.u32 %v995, 16
      %v1339 = vor.u32 %v1336, %v1337
      %v1340 = vsel %vm1004, %v1332, %v1339
      %v1342 = vshrl.u32 %v996, 16
      %v1344 = vrot.slane %v1342, 7
      %v1346 = vshrl.u32 %v997, 16
      %v1348 = vrot.slane %v1346, 7
      %v1349 = vshll.u32 %v997, 16
      %v1351 = vor.u32 %v1348, %v1349
      %v1352 = vsel %vm1004, %v1344, %v1351
      %v1354 = vshrl.u32 %v998, 16
      %v1356 = vrot.slane %v1354, 7
      %v1358 = vshrl.u32 %v999, 16
      %v1360 = vrot.slane %v1358, 7
      %v1361 = vshll.u32 %v999, 16
      %v1363 = vor.u32 %v1360, %v1361
      %v1364 = vsel %vm1004, %v1356, %v1363
      %v1366 = vshrl.u32 %v1000, 16
      %v1368 = vrot.slane %v1366, 7
      %v1370 = vshrl.u32 %v1001, 16
      %v1372 = vrot.slane %v1370, 7
      %v1373 = vshll.u32 %v1001, 16
      %v1375 = vor.u32 %v1372, %v1373
      %v1376 = vsel %vm1004, %v1368, %v1375
      %v1378 = vshrl.u32 %v1002, 16
      %v1380 = vrot.slane %v1378, 7
      %v1382 = vshrl.u32 %v1003, 16
      %v1384 = vrot.slane %v1382, 7
      %v1385 = vshll.u32 %v1003, 16
      %v1387 = vor.u32 %v1384, %v1385
      %v1388 = vsel %vm1004, %v1380, %v1387
      %s1421 = smul.u32 %s939, 16
      %s1422 = smul.addr %s1421, 4
      %s1423 = scalar_lea.vmem %s2, %s1422
      %v1424 = vld [vmem:[%s1423] sm:$0xf]
      %v1425 = vld [vmem:[%s1423 + $0x4] sm:$0xf]
      %v1426 = vld [vmem:[%s1423 + $0x8] sm:$0xf]
      %v1427 = vld [vmem:[%s1423 + $0xc] sm:$0xf]
      %v1428 = vld [vmem:[%s1423 + $0x10] sm:$0xf]
      %v1429 = vld [vmem:[%s1423 + $0x14] sm:$0xf]
      %v1430 = vld [vmem:[%s1423 + $0x18] sm:$0xf]
      %v1431 = vld [vmem:[%s1423 + $0x1c] sm:$0xf]
      %v1432 = vld [vmem:[%s1423 + $0x20] sm:$0xf]
      %v1433 = vld [vmem:[%s1423 + $0x24] sm:$0xf]
      %v1434 = vld [vmem:[%s1423 + $0x28] sm:$0xf]
      %v1435 = vld [vmem:[%s1423 + $0x2c] sm:$0xf]
      %v1436 = vld [vmem:[%s1423 + $0x30] sm:$0xf]
      %v1437 = vld [vmem:[%s1423 + $0x34] sm:$0xf]
      %v1438 = vld [vmem:[%s1423 + $0x38] sm:$0xf]
      %v1439 = vld [vmem:[%s1423 + $0x3c] sm:$0xf]
      %s1440 = sadd.s32 %s939, 1
      %s1441 = smul.u32 %s1440, 16
      %s1442 = smul.addr %s1441, 4
      %s1443 = scalar_lea.vmem %s2, %s1442
      %v1444 = vld [vmem:[%s1443] sm:$0xf]
      %v1445 = vld [vmem:[%s1443 + $0x4] sm:$0xf]
      %v1446 = vld [vmem:[%s1443 + $0x8] sm:$0xf]
      %v1447 = vld [vmem:[%s1443 + $0xc] sm:$0xf]
      %v1448 = vld [vmem:[%s1443 + $0x10] sm:$0xf]
      %v1449 = vld [vmem:[%s1443 + $0x14] sm:$0xf]
      %v1450 = vld [vmem:[%s1443 + $0x18] sm:$0xf]
      %v1451 = vld [vmem:[%s1443 + $0x1c] sm:$0xf]
      %v1452 = vld [vmem:[%s1443 + $0x20] sm:$0xf]
      %v1453 = vld [vmem:[%s1443 + $0x24] sm:$0xf]
      %v1454 = vld [vmem:[%s1443 + $0x28] sm:$0xf]
      %v1455 = vld [vmem:[%s1443 + $0x2c] sm:$0xf]
      %v1456 = vld [vmem:[%s1443 + $0x30] sm:$0xf]
      %v1457 = vld [vmem:[%s1443 + $0x34] sm:$0xf]
      %v1458 = vld [vmem:[%s1443 + $0x38] sm:$0xf]
      %v1459 = vld [vmem:[%s1443 + $0x3c] sm:$0xf]
      %v1476 = vunpack.c.l.b16 %v1444
      %v1477 = vunpack.c.l.b16 %v1445
      %v1478 = vunpack.c.l.b16 %v1446
      %v1479 = vunpack.c.l.b16 %v1447
      %v1480 = vunpack.c.l.b16 %v1448
      %v1481 = vunpack.c.l.b16 %v1449
      %v1482 = vunpack.c.l.b16 %v1450
      %v1483 = vunpack.c.l.b16 %v1451
      %v1484 = vunpack.c.l.b16 %v1452
      %v1485 = vunpack.c.l.b16 %v1453
      %v1486 = vunpack.c.l.b16 %v1454
      %v1487 = vunpack.c.l.b16 %v1455
      %v1488 = vunpack.c.l.b16 %v1456
      %v1489 = vunpack.c.l.b16 %v1457
      %v1490 = vunpack.c.l.b16 %v1458
      %v1491 = vunpack.c.l.b16 %v1459
      %v1492 = vpack.c.b16 %v1477, %v1476
      %v1493 = vpack.c.b16 %v1479, %v1478
      %v1494 = vpack.c.b16 %v1481, %v1480
      %v1495 = vpack.c.b16 %v1483, %v1482
      %v1496 = vpack.c.b16 %v1485, %v1484
      %v1497 = vpack.c.b16 %v1487, %v1486
      %v1498 = vpack.c.b16 %v1489, %v1488
      %v1499 = vpack.c.b16 %v1491, %v1490
      %1508 = vmatprep.subr.bf16.mxu0 0
      %1509 = vmatpush1.bf16.msra.mxu0 %v1492
      %1510 = vmatprep.subr.bf16.mxu0 0
      %1511 = vmatpush1.bf16.msra.mxu0 %v1493
      %1512 = vmatprep.subr.bf16.mxu0 0
      %1513 = vmatpush1.bf16.msra.mxu0 %v1494
      %1514 = vmatprep.subr.bf16.mxu0 0
      %1515 = vmatpush1.bf16.msra.mxu0 %v1495
      %1516 = vmatprep.subr.bf16.mxu0 0
      %1517 = vmatpush1.bf16.msra.mxu0 %v1496
      %1518 = vmatprep.subr.bf16.mxu0 0
      %1519 = vmatpush1.bf16.msra.mxu0 %v1497
      %1520 = vmatprep.subr.bf16.mxu0 0
      %1521 = vmatpush1.bf16.msra.mxu0 %v1498
      %1522 = vmatprep.subr.bf16.mxu0 0
      %1523 = vmatpush1.bf16.msra.mxu0 %v1499
      %1524 = vmatprep.subr.bf16.mxu0 0
      %1525 = vmatpush1.bf16.msra.mxu0 0
      %1526 = vmatprep.subr.bf16.mxu0 0
      %1527 = vmatpush1.bf16.msra.mxu0 0
      %1528 = vmatprep.subr.bf16.mxu0 0
      %1529 = vmatpush1.bf16.msra.mxu0 0
      %1530 = vmatprep.subr.bf16.mxu0 0
      %1531 = vmatpush1.bf16.msra.mxu0 0
      %1532 = vmatprep.subr.bf16.mxu0 0
      %1533 = vmatpush1.bf16.msra.mxu0 0
      %1534 = vmatprep.subr.bf16.mxu0 0
      %1535 = vmatpush1.bf16.msra.mxu0 0
      %1536 = vmatprep.subr.bf16.mxu0 0
      %1537 = vmatpush1.bf16.msra.mxu0 0
      %1538 = vmatprep.subr.bf16.mxu0 0
      %1539 = vmatpush1.bf16.msra.mxu0 0
      %1540 = vmatprep.mubr.bf16.mxu0 0
      %1541 = vmatmul.mubr.bf16.gmra.mrb[0].mxu0 %v941
      %v1542 = vpop.f32.mrb[0].mxu0
      %v1543 = vadd.f32 0.0, %v1542
      %v1544 = vpop.f32.mrb[0].mxu0
      %v1545 = vpop.f32.mrb[0].mxu0
      %v1546 = vadd.f32 0.0, %v1545
      %v1547 = vpop.f32.mrb[0].mxu0
      %1548 = vmatprep.mubr.bf16.mxu0 0
      %1549 = vmatmul.mubr.bf16.gmra.mrb[0].mxu0 %v943
      %v1550 = vpop.f32.mrb[0].mxu0
      %v1551 = vadd.f32 0.0, %v1550
      %v1552 = vpop.f32.mrb[0].mxu0
      %v1553 = vpop.f32.mrb[0].mxu0
      %v1554 = vadd.f32 0.0, %v1553
      %v1555 = vpop.f32.mrb[0].mxu0
      %1556 = vmatprep.mubr.bf16.mxu0 0
      %1557 = vmatmul.mubr.bf16.gmra.mrb[0].mxu0 %v945
      %v1558 = vpop.f32.mrb[0].mxu0
      %v1559 = vadd.f32 0.0, %v1558
      %v1560 = vpop.f32.mrb[0].mxu0
      %v1561 = vpop.f32.mrb[0].mxu0
      %v1562 = vadd.f32 0.0, %v1561
      %v1563 = vpop.f32.mrb[0].mxu0
      %1564 = vmatprep.mubr.bf16.mxu0 0
      %1565 = vmatmul.mubr.bf16.gmra.mrb[0].mxu0 %v947
      %v1566 = vpop.f32.mrb[0].mxu0
      %v1567 = vadd.f32 0.0, %v1566
      %v1568 = vpop.f32.mrb[0].mxu0
      %v1569 = vpop.f32.mrb[0].mxu0
      %v1570 = vadd.f32 0.0, %v1569
      %v1571 = vpop.f32.mrb[0].mxu0
      %1572 = vmatprep.mubr.bf16.mxu0 0
      %1573 = vmatmul.mubr.bf16.gmra.mrb[0].mxu0 %v949
      %v1574 = vpop.f32.mrb[0].mxu0
      %v1575 = vadd.f32 0.0, %v1574
      %v1576 = vpop.f32.mrb[0].mxu0
      %v1577 = vpop.f32.mrb[0].mxu0
      %v1578 = vadd.f32 0.0, %v1577
      %v1579 = vpop.f32.mrb[0].mxu0
      %1580 = vmatprep.mubr.bf16.mxu0 0
      %1581 = vmatmul.mubr.bf16.gmra.mrb[0].mxu0 %v951
      %v1582 = vpop.f32.mrb[0].mxu0
      %v1583 = vadd.f32 0.0, %v1582
      %v1584 = vpop.f32.mrb[0].mxu0
      %v1585 = vpop.f32.mrb[0].mxu0
      %v1586 = vadd.f32 0.0, %v1585
      %v1587 = vpop.f32.mrb[0].mxu0
      %1588 = vmatprep.mubr.bf16.mxu0 0
      %1589 = vmatmul.mubr.bf16.gmra.mrb[0].mxu0 %v953
      %v1590 = vpop.f32.mrb[0].mxu0
      %v1591 = vadd.f32 0.0, %v1590
      %v1592 = vpop.f32.mrb[0].mxu0
      %v1593 = vpop.f32.mrb[0].mxu0
      %v1594 = vadd.f32 0.0, %v1593
      %v1595 = vpop.f32.mrb[0].mxu0
      %1596 = vmatprep.mubr.bf16.mxu0 0
      %1597 = vmatmul.mubr.bf16.gmra.mrb[0].mxu0 %v955
      %v1598 = vpop.f32.mrb[0].mxu0
      %v1599 = vadd.f32 0.0, %v1598
      %v1600 = vpop.f32.mrb[0].mxu0
      %v1601 = vpop.f32.mrb[0].mxu0
      %v1602 = vadd.f32 0.0, %v1601
      %v1603 = vpop.f32.mrb[0].mxu0
      %1604 = vmatprep.mubr.bf16.mxu0 0
      %1605 = vmatmul.mubr.bf16.gmra.mrb[0].mxu0 %v957
      %v1606 = vpop.f32.mrb[0].mxu0
      %v1607 = vadd.f32 0.0, %v1606
      %v1608 = vpop.f32.mrb[0].mxu0
      %v1609 = vpop.f32.mrb[0].mxu0
      %v1610 = vadd.f32 0.0, %v1609
      %v1611 = vpop.f32.mrb[0].mxu0
      %1612 = vmatprep.mubr.bf16.mxu0 0
      %1613 = vmatmul.mubr.bf16.gmra.mrb[0].mxu0 %v959
      %v1614 = vpop.f32.mrb[0].mxu0
      %v1615 = vadd.f32 0.0, %v1614
      %v1616 = vpop.f32.mrb[0].mxu0
      %v1617 = vpop.f32.mrb[0].mxu0
      %v1618 = vadd.f32 0.0, %v1617
      %v1619 = vpop.f32.mrb[0].mxu0
      %1620 = vmatprep.mubr.bf16.mxu0 0
      %1621 = vmatmul.mubr.bf16.gmra.mrb[0].mxu0 %v961
      %v1622 = vpop.f32.mrb[0].mxu0
      %v1623 = vadd.f32 0.0, %v1622
      %v1624 = vpop.f32.mrb[0].mxu0
      %v1625 = vpop.f32.mrb[0].mxu0
      %v1626 = vadd.f32 0.0, %v1625
      %v1627 = vpop.f32.mrb[0].mxu0
      %1628 = vmatprep.mubr.bf16.mxu0 0
      %1629 = vmatmul.mubr.bf16.gmra.mrb[0].mxu0 %v963
      %v1630 = vpop.f32.mrb[0].mxu0
      %v1631 = vadd.f32 0.0, %v1630
      %v1632 = vpop.f32.mrb[0].mxu0
      %v1633 = vpop.f32.mrb[0].mxu0
      %v1634 = vadd.f32 0.0, %v1633
      %v1635 = vpop.f32.mrb[0].mxu0
      %1636 = vmatprep.mubr.bf16.mxu0 0
      %1637 = vmatmul.mubr.bf16.gmra.mrb[0].mxu0 %v965
      %v1638 = vpop.f32.mrb[0].mxu0
      %v1639 = vadd.f32 0.0, %v1638
      %v1640 = vpop.f32.mrb[0].mxu0
      %v1641 = vpop.f32.mrb[0].mxu0
      %v1642 = vadd.f32 0.0, %v1641
      %v1643 = vpop.f32.mrb[0].mxu0
      %1644 = vmatprep.mubr.bf16.mxu0 0
      %1645 = vmatmul.mubr.bf16.gmra.mrb[0].mxu0 %v967
      %v1646 = vpop.f32.mrb[0].mxu0
      %v1647 = vadd.f32 0.0, %v1646
      %v1648 = vpop.f32.mrb[0].mxu0
      %v1649 = vpop.f32.mrb[0].mxu0
      %v1650 = vadd.f32 0.0, %v1649
      %v1651 = vpop.f32.mrb[0].mxu0
      %1652 = vmatprep.mubr.bf16.mxu0 0
      %1653 = vmatmul.mubr.bf16.gmra.mrb[0].mxu0 %v969
      %v1654 = vpop.f32.mrb[0].mxu0
      %v1655 = vadd.f32 0.0, %v1654
      %v1656 = vpop.f32.mrb[0].mxu0
      %v1657 = vpop.f32.mrb[0].mxu0
      %v1658 = vadd.f32 0.0, %v1657
      %v1659 = vpop.f32.mrb[0].mxu0
      %1660 = vmatprep.mubr.bf16.mxu0 0
      %1661 = vmatmul.mubr.bf16.gmra.mrb[0].mxu0 %v971
      %v1662 = vpop.f32.mrb[0].mxu0
      %v1663 = vadd.f32 0.0, %v1662
      %v1664 = vpop.f32.mrb[0].mxu0
      %v1665 = vpop.f32.mrb[0].mxu0
      %v1666 = vadd.f32 0.0, %v1665
      %v1667 = vpop.f32.mrb[0].mxu0
      %1668 = vmatprep.mubr.bf16.mxu0 0
      %1669 = vmatmul.mubr.bf16.gmra.mrb[0].mxu0 %v973
      %v1670 = vpop.f32.mrb[0].mxu0
      %v1671 = vadd.f32 0.0, %v1670
      %v1672 = vpop.f32.mrb[0].mxu0
      %v1673 = vpop.f32.mrb[0].mxu0
      %v1674 = vadd.f32 0.0, %v1673
      %v1675 = vpop.f32.mrb[0].mxu0
      %1676 = vmatprep.mubr.bf16.mxu0 0
      %1677 = vmatmul.mubr.bf16.gmra.mrb[0].mxu0 %v975
      %v1678 = vpop.f32.mrb[0].mxu0
      %v1679 = vadd.f32 0.0, %v1678
      %v1680 = vpop.f32.mrb[0].mxu0
      %v1681 = vpop.f32.mrb[0].mxu0
      %v1682 = vadd.f32 0.0, %v1681
      %v1683 = vpop.f32.mrb[0].mxu0
      %1684 = vmatprep.mubr.bf16.mxu0 0
      %1685 = vmatmul.mubr.bf16.gmra.mrb[0].mxu0 %v977
      %v1686 = vpop.f32.mrb[0].mxu0
      %v1687 = vadd.f32 0.0, %v1686
      %v1688 = vpop.f32.mrb[0].mxu0
      %v1689 = vpop.f32.mrb[0].mxu0
      %v1690 = vadd.f32 0.0, %v1689
      %v1691 = vpop.f32.mrb[0].mxu0
      %1692 = vmatprep.mubr.bf16.mxu0 0
      %1693 = vmatmul.mubr.bf16.gmra.mrb[0].mxu0 %v979
      %v1694 = vpop.f32.mrb[0].mxu0
      %v1695 = vadd.f32 0.0, %v1694
      %v1696 = vpop.f32.mrb[0].mxu0
      %v1697 = vpop.f32.mrb[0].mxu0
      %v1698 = vadd.f32 0.0, %v1697
      %v1699 = vpop.f32.mrb[0].mxu0
      %1700 = vmatprep.mubr.bf16.mxu0 0
      %1701 = vmatmul.mubr.bf16.gmra.mrb[0].mxu0 %v981
      %v1702 = vpop.f32.mrb[0].mxu0
      %v1703 = vadd.f32 0.0, %v1702
      %v1704 = vpop.f32.mrb[0].mxu0
      %v1705 = vpop.f32.mrb[0].mxu0
      %v1706 = vadd.f32 0.0, %v1705
      %v1707 = vpop.f32.mrb[0].mxu0
      %1708 = vmatprep.mubr.bf16.mxu0 0
      %1709 = vmatmul.mubr.bf16.gmra.mrb[0].mxu0 %v983
      %v1710 = vpop.f32.mrb[0].mxu0
      %v1711 = vadd.f32 0.0, %v1710
      %v1712 = vpop.f32.mrb[0].mxu0
      %v1713 = vpop.f32.mrb[0].mxu0
      %v1714 = vadd.f32 0.0, %v1713
      %v1715 = vpop.f32.mrb[0].mxu0
      %1716 = vmatprep.mubr.bf16.mxu0 0
      %1717 = vmatmul.mubr.bf16.gmra.mrb[0].mxu0 %v985
      %v1718 = vpop.f32.mrb[0].mxu0
      %v1719 = vadd.f32 0.0, %v1718
      %v1720 = vpop.f32.mrb[0].mxu0
      %v1721 = vpop.f32.mrb[0].mxu0
      %v1722 = vadd.f32 0.0, %v1721
      %v1723 = vpop.f32.mrb[0].mxu0
      %1724 = vmatprep.mubr.bf16.mxu0 0
      %1725 = vmatmul.mubr.bf16.gmra.mrb[0].mxu0 %v987
      %v1726 = vpop.f32.mrb[0].mxu0
      %v1727 = vadd.f32 0.0, %v1726
      %v1728 = vpop.f32.mrb[0].mxu0
      %v1729 = vpop.f32.mrb[0].mxu0
      %v1730 = vadd.f32 0.0, %v1729
      %v1731 = vpop.f32.mrb[0].mxu0
      %1732 = vmatprep.mubr.bf16.mxu0 0
      %1733 = vmatmul.mubr.bf16.gmra.mrb[0].mxu0 %v989
      %v1734 = vpop.f32.mrb[0].mxu0
      %v1735 = vadd.f32 0.0, %v1734
      %v1736 = vpop.f32.mrb[0].mxu0
      %v1737 = vpop.f32.mrb[0].mxu0
      %v1738 = vadd.f32 0.0, %v1737
      %v1739 = vpop.f32.mrb[0].mxu0
      %1740 = vmatprep.mubr.bf16.mxu0 0
      %1741 = vmatmul.mubr.bf16.gmra.mrb[0].mxu0 %v991
      %v1742 = vpop.f32.mrb[0].mxu0
      %v1743 = vadd.f32 0.0, %v1742
      %v1744 = vpop.f32.mrb[0].mxu0
      %v1745 = vpop.f32.mrb[0].mxu0
      %v1746 = vadd.f32 0.0, %v1745
      %v1747 = vpop.f32.mrb[0].mxu0
      %1748 = vmatprep.mubr.bf16.mxu0 0
      %1749 = vmatmul.mubr.bf16.gmra.mrb[0].mxu0 %v993
      %v1750 = vpop.f32.mrb[0].mxu0
      %v1751 = vadd.f32 0.0, %v1750
      %v1752 = vpop.f32.mrb[0].mxu0
      %v1753 = vpop.f32.mrb[0].mxu0
      %v1754 = vadd.f32 0.0, %v1753
      %v1755 = vpop.f32.mrb[0].mxu0
      %1756 = vmatprep.mubr.bf16.mxu0 0
      %1757 = vmatmul.mubr.bf16.gmra.mrb[0].mxu0 %v995
      %v1758 = vpop.f32.mrb[0].mxu0
      %v1759 = vadd.f32 0.0, %v1758
      %v1760 = vpop.f32.mrb[0].mxu0
      %v1761 = vpop.f32.mrb[0].mxu0
      %v1762 = vadd.f32 0.0, %v1761
      %v1763 = vpop.f32.mrb[0].mxu0
      %1764 = vmatprep.mubr.bf16.mxu0 0
      %1765 = vmatmul.mubr.bf16.gmra.mrb[0].mxu0 %v997
      %v1766 = vpop.f32.mrb[0].mxu0
      %v1767 = vadd.f32 0.0, %v1766
      %v1768 = vpop.f32.mrb[0].mxu0
      %v1769 = vpop.f32.mrb[0].mxu0
      %v1770 = vadd.f32 0.0, %v1769
      %v1771 = vpop.f32.mrb[0].mxu0
      %1772 = vmatprep.mubr.bf16.mxu0 0
      %1773 = vmatmul.mubr.bf16.gmra.mrb[0].mxu0 %v999
      %v1774 = vpop.f32.mrb[0].mxu0
      %v1775 = vadd.f32 0.0, %v1774
      %v1776 = vpop.f32.mrb[0].mxu0
      %v1777 = vpop.f32.mrb[0].mxu0
      %v1778 = vadd.f32 0.0, %v1777
      %v1779 = vpop.f32.mrb[0].mxu0
      %1780 = vmatprep.mubr.bf16.mxu0 0
      %1781 = vmatmul.mubr.bf16.gmra.mrb[0].mxu0 %v1001
      %v1782 = vpop.f32.mrb[0].mxu0
      %v1783 = vadd.f32 0.0, %v1782
      %v1784 = vpop.f32.mrb[0].mxu0
      %v1785 = vpop.f32.mrb[0].mxu0
      %v1786 = vadd.f32 0.0, %v1785
      %v1787 = vpop.f32.mrb[0].mxu0
      %1788 = vmatprep.mubr.bf16.mxu0 0
      %1789 = vmatmul.mubr.bf16.gmra.mrb[0].mxu0 %v1003
      %v1790 = vpop.f32.mrb[0].mxu0
      %v1791 = vadd.f32 0.0, %v1790
      %v1792 = vpop.f32.mrb[0].mxu0
      %v1793 = vpop.f32.mrb[0].mxu0
      %v1794 = vadd.f32 0.0, %v1793
      %v1795 = vpop.f32.mrb[0].mxu0
      %1796 = vdwg.mxu0
      %v1813 = vunpack.c.l.b16 %v1424
      %v1814 = vunpack.c.l.b16 %v1425
      %v1815 = vunpack.c.l.b16 %v1426
      %v1816 = vunpack.c.l.b16 %v1427
      %v1817 = vunpack.c.l.b16 %v1428
      %v1818 = vunpack.c.l.b16 %v1429
      %v1819 = vunpack.c.l.b16 %v1430
      %v1820 = vunpack.c.l.b16 %v1431
      %v1821 = vunpack.c.l.b16 %v1432
      %v1822 = vunpack.c.l.b16 %v1433
      %v1823 = vunpack.c.l.b16 %v1434
      %v1824 = vunpack.c.l.b16 %v1435
      %v1825 = vunpack.c.l.b16 %v1436
      %v1826 = vunpack.c.l.b16 %v1437
      %v1827 = vunpack.c.l.b16 %v1438
      %v1828 = vunpack.c.l.b16 %v1439
      %v1829 = vpack.c.b16 %v1814, %v1813
      %v1830 = vpack.c.b16 %v1816, %v1815
      %v1831 = vpack.c.b16 %v1818, %v1817
      %v1832 = vpack.c.b16 %v1820, %v1819
      %v1833 = vpack.c.b16 %v1822, %v1821
      %v1834 = vpack.c.b16 %v1824, %v1823
      %v1835 = vpack.c.b16 %v1826, %v1825
      %v1836 = vpack.c.b16 %v1828, %v1827
      %1845 = vmatprep.subr.bf16.mxu0 0
      %1846 = vmatpush1.bf16.msra.mxu0 %v1829
      %1847 = vmatprep.subr.bf16.mxu0 0
      %1848 = vmatpush1.bf16.msra.mxu0 %v1830
      %1849 = vmatprep.subr.bf16.mxu0 0
      %1850 = vmatpush1.bf16.msra.mxu0 %v1831
      %1851 = vmatprep.subr.bf16.mxu0 0
      %1852 = vmatpush1.bf16.msra.mxu0 %v1832
      %1853 = vmatprep.subr.bf16.mxu0 0
      %1854 = vmatpush1.bf16.msra.mxu0 %v1833
      %1855 = vmatprep.subr.bf16.mxu0 0
      %1856 = vmatpush1.bf16.msra.mxu0 %v1834
      %1857 = vmatprep.subr.bf16.mxu0 0
      %1858 = vmatpush1.bf16.msra.mxu0 %v1835
      %1859 = vmatprep.subr.bf16.mxu0 0
      %1860 = vmatpush1.bf16.msra.mxu0 %v1836
      %1861 = vmatprep.subr.bf16.mxu0 0
      %1862 = vmatpush1.bf16.msra.mxu0 0
      %1863 = vmatprep.subr.bf16.mxu0 0
      %1864 = vmatpush1.bf16.msra.mxu0 0
      %1865 = vmatprep.subr.bf16.mxu0 0
      %1866 = vmatpush1.bf16.msra.mxu0 0
      %1867 = vmatprep.subr.bf16.mxu0 0
      %1868 = vmatpush1.bf16.msra.mxu0 0
      %1869 = vmatprep.subr.bf16.mxu0 0
      %1870 = vmatpush1.bf16.msra.mxu0 0
      %1871 = vmatprep.subr.bf16.mxu0 0
      %1872 = vmatpush1.bf16.msra.mxu0 0
      %1873 = vmatprep.subr.bf16.mxu0 0
      %1874 = vmatpush1.bf16.msra.mxu0 0
      %1875 = vmatprep.subr.bf16.mxu0 0
      %1876 = vmatpush1.bf16.msra.mxu0 0
      %1877 = vmatprep.mubr.bf16.mxu0 0
      %1878 = vmatmul.mubr.bf16.gmra.mrb[0].mxu0 %v1016
      %v1879 = vpop.f32.mrb[0].mxu0
      %v1880 = vadd.f32 %v1543, %v1879
      %v1881 = vpop.f32.mrb[0].mxu0
      %v1882 = vpop.f32.mrb[0].mxu0
      %v1883 = vadd.f32 %v1546, %v1882
      %v1884 = vpop.f32.mrb[0].mxu0
      %1885 = vmatprep.mubr.bf16.mxu0 0
      %1886 = vmatmul.mubr.bf16.gmra.mrb[0].mxu0 %v1028
      %v1887 = vpop.f32.mrb[0].mxu0
      %v1888 = vadd.f32 %v1551, %v1887
      %v1889 = vpop.f32.mrb[0].mxu0
      %v1890 = vpop.f32.mrb[0].mxu0
      %v1891 = vadd.f32 %v1554, %v1890
      %v1892 = vpop.f32.mrb[0].mxu0
      %1893 = vmatprep.mubr.bf16.mxu0 0
      %1894 = vmatmul.mubr.bf16.gmra.mrb[0].mxu0 %v1040
      %v1895 = vpop.f32.mrb[0].mxu0
      %v1896 = vadd.f32 %v1559, %v1895
      %v1897 = vpop.f32.mrb[0].mxu0
      %v1898 = vpop.f32.mrb[0].mxu0
      %v1899 = vadd.f32 %v1562, %v1898
      %v1900 = vpop.f32.mrb[0].mxu0
      %1901 = vmatprep.mubr.bf16.mxu0 0
      %1902 = vmatmul.mubr.bf16.gmra.mrb[0].mxu0 %v1052
      %v1903 = vpop.f32.mrb[0].mxu0
      %v1904 = vadd.f32 %v1567, %v1903
      %v1905 = vpop.f32.mrb[0].mxu0
      %v1906 = vpop.f32.mrb[0].mxu0
      %v1907 = vadd.f32 %v1570, %v1906
      %v1908 = vpop.f32.mrb[0].mxu0
      %1909 = vmatprep.mubr.bf16.mxu0 0
      %1910 = vmatmul.mubr.bf16.gmra.mrb[0].mxu0 %v1064
      %v1911 = vpop.f32.mrb[0].mxu0
      %v1912 = vadd.f32 %v1575, %v1911
      %v1913 = vpop.f32.mrb[0].mxu0
      %v1914 = vpop.f32.mrb[0].mxu0
      %v1915 = vadd.f32 %v1578, %v1914
      %v1916 = vpop.f32.mrb[0].mxu0
      %1917 = vmatprep.mubr.bf16.mxu0 0
      %1918 = vmatmul.mubr.bf16.gmra.mrb[0].mxu0 %v1076
      %v1919 = vpop.f32.mrb[0].mxu0
      %v1920 = vadd.f32 %v1583, %v1919
      %v1921 = vpop.f32.mrb[0].mxu0
      %v1922 = vpop.f32.mrb[0].mxu0
      %v1923 = vadd.f32 %v1586, %v1922
      %v1924 = vpop.f32.mrb[0].mxu0
      %1925 = vmatprep.mubr.bf16.mxu0 0
      %1926 = vmatmul.mubr.bf16.gmra.mrb[0].mxu0 %v1088
      %v1927 = vpop.f32.mrb[0].mxu0
      %v1928 = vadd.f32 %v1591, %v1927
      %v1929 = vpop.f32.mrb[0].mxu0
      %v1930 = vpop.f32.mrb[0].mxu0
      %v1931 = vadd.f32 %v1594, %v1930
      %v1932 = vpop.f32.mrb[0].mxu0
      %1933 = vmatprep.mubr.bf16.mxu0 0
      %1934 = vmatmul.mubr.bf16.gmra.mrb[0].mxu0 %v1100
      %v1935 = vpop.f32.mrb[0].mxu0
      %v1936 = vadd.f32 %v1599, %v1935
      %v1937 = vpop.f32.mrb[0].mxu0
      %v1938 = vpop.f32.mrb[0].mxu0
      %v1939 = vadd.f32 %v1602, %v1938
      %v1940 = vpop.f32.mrb[0].mxu0
      %1941 = vmatprep.mubr.bf16.mxu0 0
      %1942 = vmatmul.mubr.bf16.gmra.mrb[0].mxu0 %v1112
      %v1943 = vpop.f32.mrb[0].mxu0
      %v1944 = vadd.f32 %v1607, %v1943
      %v1945 = vpop.f32.mrb[0].mxu0
      %v1946 = vpop.f32.mrb[0].mxu0
      %v1947 = vadd.f32 %v1610, %v1946
      %v1948 = vpop.f32.mrb[0].mxu0
      %1949 = vmatprep.mubr.bf16.mxu0 0
      %1950 = vmatmul.mubr.bf16.gmra.mrb[0].mxu0 %v1124
      %v1951 = vpop.f32.mrb[0].mxu0
      %v1952 = vadd.f32 %v1615, %v1951
      %v1953 = vpop.f32.mrb[0].mxu0
      %v1954 = vpop.f32.mrb[0].mxu0
      %v1955 = vadd.f32 %v1618, %v1954
      %v1956 = vpop.f32.mrb[0].mxu0
      %1957 = vmatprep.mubr.bf16.mxu0 0
      %1958 = vmatmul.mubr.bf16.gmra.mrb[0].mxu0 %v1136
      %v1959 = vpop.f32.mrb[0].mxu0
      %v1960 = vadd.f32 %v1623, %v1959
      %v1961 = vpop.f32.mrb[0].mxu0
      %v1962 = vpop.f32.mrb[0].mxu0
      %v1963 = vadd.f32 %v1626, %v1962
      %v1964 = vpop.f32.mrb[0].mxu0
      %1965 = vmatprep.mubr.bf16.mxu0 0
      %1966 = vmatmul.mubr.bf16.gmra.mrb[0].mxu0 %v1148
      %v1967 = vpop.f32.mrb[0].mxu0
      %v1968 = vadd.f32 %v1631, %v1967
      %v1969 = vpop.f32.mrb[0].mxu0
      %v1970 = vpop.f32.mrb[0].mxu0
      %v1971 = vadd.f32 %v1634, %v1970
      %v1972 = vpop.f32.mrb[0].mxu0
      %1973 = vmatprep.mubr.bf16.mxu0 0
      %1974 = vmatmul.mubr.bf16.gmra.mrb[0].mxu0 %v1160
      %v1975 = vpop.f32.mrb[0].mxu0
      %v1976 = vadd.f32 %v1639, %v1975
      %v1977 = vpop.f32.mrb[0].mxu0
      %v1978 = vpop.f32.mrb[0].mxu0
      %v1979 = vadd.f32 %v1642, %v1978
      %v1980 = vpop.f32.mrb[0].mxu0
      %1981 = vmatprep.mubr.bf16.mxu0 0
      %1982 = vmatmul.mubr.bf16.gmra.mrb[0].mxu0 %v1172
      %v1983 = vpop.f32.mrb[0].mxu0
      %v1984 = vadd.f32 %v1647, %v1983
      %v1985 = vpop.f32.mrb[0].mxu0
      %v1986 = vpop.f32.mrb[0].mxu0
      %v1987 = vadd.f32 %v1650, %v1986
      %v1988 = vpop.f32.mrb[0].mxu0
      %1989 = vmatprep.mubr.bf16.mxu0 0
      %1990 = vmatmul.mubr.bf16.gmra.mrb[0].mxu0 %v1184
      %v1991 = vpop.f32.mrb[0].mxu0
      %v1992 = vadd.f32 %v1655, %v1991
      %v1993 = vpop.f32.mrb[0].mxu0
      %v1994 = vpop.f32.mrb[0].mxu0
      %v1995 = vadd.f32 %v1658, %v1994
      %v1996 = vpop.f32.mrb[0].mxu0
      %1997 = vmatprep.mubr.bf16.mxu0 0
      %1998 = vmatmul.mubr.bf16.gmra.mrb[0].mxu0 %v1196
      %v1999 = vpop.f32.mrb[0].mxu0
      %v2000 = vadd.f32 %v1663, %v1999
      %v2001 = vpop.f32.mrb[0].mxu0
      %v2002 = vpop.f32.mrb[0].mxu0
      %v2003 = vadd.f32 %v1666, %v2002
      %v2004 = vpop.f32.mrb[0].mxu0
      %2005 = vmatprep.mubr.bf16.mxu0 0
      %2006 = vmatmul.mubr.bf16.gmra.mrb[0].mxu0 %v1208
      %v2007 = vpop.f32.mrb[0].mxu0
      %v2008 = vadd.f32 %v1671, %v2007
      %v2009 = vpop.f32.mrb[0].mxu0
      %v2010 = vpop.f32.mrb[0].mxu0
      %v2011 = vadd.f32 %v1674, %v2010
      %v2012 = vpop.f32.mrb[0].mxu0
      %2013 = vmatprep.mubr.bf16.mxu0 0
      %2014 = vmatmul.mubr.bf16.gmra.mrb[0].mxu0 %v1220
      %v2015 = vpop.f32.mrb[0].mxu0
      %v2016 = vadd.f32 %v1679, %v2015
      %v2017 = vpop.f32.mrb[0].mxu0
      %v2018 = vpop.f32.mrb[0].mxu0
      %v2019 = vadd.f32 %v1682, %v2018
      %v2020 = vpop.f32.mrb[0].mxu0
      %2021 = vmatprep.mubr.bf16.mxu0 0
      %2022 = vmatmul.mubr.bf16.gmra.mrb[0].mxu0 %v1232
      %v2023 = vpop.f32.mrb[0].mxu0
      %v2024 = vadd.f32 %v1687, %v2023
      %v2025 = vpop.f32.mrb[0].mxu0
      %v2026 = vpop.f32.mrb[0].mxu0
      %v2027 = vadd.f32 %v1690, %v2026
      %v2028 = vpop.f32.mrb[0].mxu0
      %2029 = vmatprep.mubr.bf16.mxu0 0
      %2030 = vmatmul.mubr.bf16.gmra.mrb[0].mxu0 %v1244
      %v2031 = vpop.f32.mrb[0].mxu0
      %v2032 = vadd.f32 %v1695, %v2031
      %v2033 = vpop.f32.mrb[0].mxu0
      %v2034 = vpop.f32.mrb[0].mxu0
      %v2035 = vadd.f32 %v1698, %v2034
      %v2036 = vpop.f32.mrb[0].mxu0
      %2037 = vmatprep.mubr.bf16.mxu0 0
      %2038 = vmatmul.mubr.bf16.gmra.mrb[0].mxu0 %v1256
      %v2039 = vpop.f32.mrb[0].mxu0
      %v2040 = vadd.f32 %v1703, %v2039
      %v2041 = vpop.f32.mrb[0].mxu0
      %v2042 = vpop.f32.mrb[0].mxu0
      %v2043 = vadd.f32 %v1706, %v2042
      %v2044 = vpop.f32.mrb[0].mxu0
      %2045 = vmatprep.mubr.bf16.mxu0 0
      %2046 = vmatmul.mubr.bf16.gmra.mrb[0].mxu0 %v1268
      %v2047 = vpop.f32.mrb[0].mxu0
      %v2048 = vadd.f32 %v1711, %v2047
      %v2049 = vpop.f32.mrb[0].mxu0
      %v2050 = vpop.f32.mrb[0].mxu0
      %v2051 = vadd.f32 %v1714, %v2050
      %v2052 = vpop.f32.mrb[0].mxu0
      %2053 = vmatprep.mubr.bf16.mxu0 0
      %2054 = vmatmul.mubr.bf16.gmra.mrb[0].mxu0 %v1280
      %v2055 = vpop.f32.mrb[0].mxu0
      %v2056 = vadd.f32 %v1719, %v2055
      %v2057 = vpop.f32.mrb[0].mxu0
      %v2058 = vpop.f32.mrb[0].mxu0
      %v2059 = vadd.f32 %v1722, %v2058
      %v2060 = vpop.f32.mrb[0].mxu0
      %2061 = vmatprep.mubr.bf16.mxu0 0
      %2062 = vmatmul.mubr.bf16.gmra.mrb[0].mxu0 %v1292
      %v2063 = vpop.f32.mrb[0].mxu0
      %v2064 = vadd.f32 %v1727, %v2063
      %v2065 = vpop.f32.mrb[0].mxu0
      %v2066 = vpop.f32.mrb[0].mxu0
      %v2067 = vadd.f32 %v1730, %v2066
      %v2068 = vpop.f32.mrb[0].mxu0
      %2069 = vmatprep.mubr.bf16.mxu0 0
      %2070 = vmatmul.mubr.bf16.gmra.mrb[0].mxu0 %v1304
      %v2071 = vpop.f32.mrb[0].mxu0
      %v2072 = vadd.f32 %v1735, %v2071
      %v2073 = vpop.f32.mrb[0].mxu0
      %v2074 = vpop.f32.mrb[0].mxu0
      %v2075 = vadd.f32 %v1738, %v2074
      %v2076 = vpop.f32.mrb[0].mxu0
      %2077 = vmatprep.mubr.bf16.mxu0 0
      %2078 = vmatmul.mubr.bf16.gmra.mrb[0].mxu0 %v1316
      %v2079 = vpop.f32.mrb[0].mxu0
      %v2080 = vadd.f32 %v1743, %v2079
      %v2081 = vpop.f32.mrb[0].mxu0
      %v2082 = vpop.f32.mrb[0].mxu0
      %v2083 = vadd.f32 %v1746, %v2082
      %v2084 = vpop.f32.mrb[0].mxu0
      %2085 = vmatprep.mubr.bf16.mxu0 0
      %2086 = vmatmul.mubr.bf16.gmra.mrb[0].mxu0 %v1328
      %v2087 = vpop.f32.mrb[0].mxu0
      %v2088 = vadd.f32 %v1751, %v2087
      %v2089 = vpop.f32.mrb[0].mxu0
      %v2090 = vpop.f32.mrb[0].mxu0
      %v2091 = vadd.f32 %v1754, %v2090
      %v2092 = vpop.f32.mrb[0].mxu0
      %2093 = vmatprep.mubr.bf16.mxu0 0
      %2094 = vmatmul.mubr.bf16.gmra.mrb[0].mxu0 %v1340
      %v2095 = vpop.f32.mrb[0].mxu0
      %v2096 = vadd.f32 %v1759, %v2095
      %v2097 = vpop.f32.mrb[0].mxu0
      %v2098 = vpop.f32.mrb[0].mxu0
      %v2099 = vadd.f32 %v1762, %v2098
      %v2100 = vpop.f32.mrb[0].mxu0
      %2101 = vmatprep.mubr.bf16.mxu0 0
      %2102 = vmatmul.mubr.bf16.gmra.mrb[0].mxu0 %v1352
      %v2103 = vpop.f32.mrb[0].mxu0
      %v2104 = vadd.f32 %v1767, %v2103
      %v2105 = vpop.f32.mrb[0].mxu0
      %v2106 = vpop.f32.mrb[0].mxu0
      %v2107 = vadd.f32 %v1770, %v2106
      %v2108 = vpop.f32.mrb[0].mxu0
      %2109 = vmatprep.mubr.bf16.mxu0 0
      %2110 = vmatmul.mubr.bf16.gmra.mrb[0].mxu0 %v1364
      %v2111 = vpop.f32.mrb[0].mxu0
      %v2112 = vadd.f32 %v1775, %v2111
      %v2113 = vpop.f32.mrb[0].mxu0
      %v2114 = vpop.f32.mrb[0].mxu0
      %v2115 = vadd.f32 %v1778, %v2114
      %v2116 = vpop.f32.mrb[0].mxu0
      %2117 = vmatprep.mubr.bf16.mxu0 0
      %2118 = vmatmul.mubr.bf16.gmra.mrb[0].mxu0 %v1376
      %v2119 = vpop.f32.mrb[0].mxu0
      %v2120 = vadd.f32 %v1783, %v2119
      %v2121 = vpop.f32.mrb[0].mxu0
      %v2122 = vpop.f32.mrb[0].mxu0
      %v2123 = vadd.f32 %v1786, %v2122
      %v2124 = vpop.f32.mrb[0].mxu0
      %2125 = vmatprep.mubr.bf16.mxu0 0
      %2126 = vmatmul.mubr.bf16.gmra.mrb[0].mxu0 %v1388
      %v2127 = vpop.f32.mrb[0].mxu0
      %v2128 = vadd.f32 %v1791, %v2127
      %v2129 = vpop.f32.mrb[0].mxu0
      %v2130 = vpop.f32.mrb[0].mxu0
      %v2131 = vadd.f32 %v1794, %v2130
      %v2132 = vpop.f32.mrb[0].mxu0
      %2133 = vdwg.mxu0
      %v2134 = vld [vmem:[#allocation2 + $0x8] sm:$0xff]
      %v2135 = vld [vmem:[#allocation2 + $0x10] sm:$0x1]
      %v2136 = vld [vmem:[#allocation2 + $0x20] sm:$0xff]
      %v2137 = vld [vmem:[#allocation2 + $0x28] sm:$0x1]
      %v2138 = vld [vmem:[#allocation2 + $0x38] sm:$0xff]
      %v2139 = vld [vmem:[#allocation2 + $0x40] sm:$0x1]
      %v2140 = vld [vmem:[#allocation2 + $0x50] sm:$0xff]
      %v2141 = vld [vmem:[#allocation2 + $0x58] sm:$0x1]
      %v2142 = vld [vmem:[#allocation2 + $0x68] sm:$0xff]
      %v2143 = vld [vmem:[#allocation2 + $0x70] sm:$0x1]
      %v2144 = vld [vmem:[#allocation2 + $0x80] sm:$0xff]
      %v2145 = vld [vmem:[#allocation2 + $0x88] sm:$0x1]
      %v2146 = vld [vmem:[#allocation2 + $0x98] sm:$0xff]
      %v2147 = vld [vmem:[#allocation2 + $0xa0] sm:$0x1]
      %v2148 = vld [vmem:[#allocation2 + $0xb0] sm:$0xff]
      %v2149 = vld [vmem:[#allocation2 + $0xb8] sm:$0x1]
      %v2150 = vld [vmem:[#allocation2 + $0xc8] sm:$0xff]
      %v2151 = vld [vmem:[#allocation2 + $0xd0] sm:$0x1]
      %v2152 = vld [vmem:[#allocation2 + $0xe0] sm:$0xff]
      %v2153 = vld [vmem:[#allocation2 + $0xe8] sm:$0x1]
      %v2154 = vld [vmem:[#allocation2 + $0xf8] sm:$0xff]
      %v2155 = vld [vmem:[#allocation2 + $0x100] sm:$0x1]
      %v2156 = vld [vmem:[#allocation2 + $0x110] sm:$0xff]
      %v2157 = vld [vmem:[#allocation2 + $0x118] sm:$0x1]
      %v2158 = vld [vmem:[#allocation2 + $0x128] sm:$0xff]
      %v2159 = vld [vmem:[#allocation2 + $0x130] sm:$0x1]
      %v2160 = vld [vmem:[#allocation2 + $0x140] sm:$0xff]
      %v2161 = vld [vmem:[#allocation2 + $0x148] sm:$0x1]
      %v2162 = vld [vmem:[#allocation2 + $0x158] sm:$0xff]
      %v2163 = vld [vmem:[#allocation2 + $0x160] sm:$0x1]
      %v2164 = vld [vmem:[#allocation2 + $0x170] sm:$0xff]
      %v2165 = vld [vmem:[#allocation2 + $0x178] sm:$0x1]
      %v2166 = vld [vmem:[#allocation2 + $0x1b8] sm:$0xff]
      %v2167 = vld [vmem:[#allocation2 + $0x1c0] sm:$0x1]
      %v2168 = vld [vmem:[#allocation2 + $0x1d0] sm:$0xff]
      %v2169 = vld [vmem:[#allocation2 + $0x1d8] sm:$0x1]
      %v2170 = vld [vmem:[#allocation2 + $0x1e8] sm:$0xff]
      %v2171 = vld [vmem:[#allocation2 + $0x1f0] sm:$0x1]
      %v2172 = vld [vmem:[#allocation2 + $0x200] sm:$0xff]
      %v2173 = vld [vmem:[#allocation2 + $0x208] sm:$0x1]
      %v2174 = vld [vmem:[#allocation2 + $0x218] sm:$0xff]
      %v2175 = vld [vmem:[#allocation2 + $0x220] sm:$0x1]
      %v2176 = vld [vmem:[#allocation2 + $0x230] sm:$0xff]
      %v2177 = vld [vmem:[#allocation2 + $0x238] sm:$0x1]
      %v2178 = vld [vmem:[#allocation2 + $0x248] sm:$0xff]
      %v2179 = vld [vmem:[#allocation2 + $0x250] sm:$0x1]
      %v2180 = vld [vmem:[#allocation2 + $0x260] sm:$0xff]
      %v2181 = vld [vmem:[#allocation2 + $0x268] sm:$0x1]
      %v2182 = vld [vmem:[#allocation2 + $0x278] sm:$0xff]
      %v2183 = vld [vmem:[#allocation2 + $0x280] sm:$0x1]
      %v2184 = vld [vmem:[#allocation2 + $0x290] sm:$0xff]
      %v2185 = vld [vmem:[#allocation2 + $0x298] sm:$0x1]
      %v2186 = vld [vmem:[#allocation2 + $0x2a8] sm:$0xff]
      %v2187 = vld [vmem:[#allocation2 + $0x2b0] sm:$0x1]
      %v2188 = vld [vmem:[#allocation2 + $0x2c0] sm:$0xff]
      %v2189 = vld [vmem:[#allocation2 + $0x2c8] sm:$0x1]
      %v2190 = vld [vmem:[#allocation2 + $0x2d8] sm:$0xff]
      %v2191 = vld [vmem:[#allocation2 + $0x2e0] sm:$0x1]
      %v2192 = vld [vmem:[#allocation2 + $0x2f0] sm:$0xff]
      %v2193 = vld [vmem:[#allocation2 + $0x2f8] sm:$0x1]
      %v2194 = vld [vmem:[#allocation2 + $0x308] sm:$0xff]
      %v2195 = vld [vmem:[#allocation2 + $0x310] sm:$0x1]
      %v2196 = vld [vmem:[#allocation2 + $0x320] sm:$0xff]
      %v2197 = vld [vmem:[#allocation2 + $0x328] sm:$0x1]
      %vm2198 = vsmask.f32 7424
      %v2200 = vshrl.u32 %v2134, 16
      %v2202 = vshll.u32 %v2134, 16
      %v2204 = vrot.slane %v2202, 1
      %v2205 = vor.u32 %v2200, %v2204
      %v2207 = vshll.u32 %v2135, 16
      %v2209 = vrot.slane %v2207, 1
      %v2210 = vsel %vm2198, %v2205, %v2209
      %v2212 = vshrl.u32 %v2136, 16
      %v2214 = vshll.u32 %v2136, 16
      %v2216 = vrot.slane %v2214, 1
      %v2217 = vor.u32 %v2212, %v2216
      %v2219 = vshll.u32 %v2137, 16
      %v2221 = vrot.slane %v2219, 1
      %v2222 = vsel %vm2198, %v2217, %v2221
      %v2224 = vshrl.u32 %v2138, 16
      %v2226 = vshll.u32 %v2138, 16
      %v2228 = vrot.slane %v2226, 1
      %v2229 = vor.u32 %v2224, %v2228
      %v2231 = vshll.u32 %v2139, 16
      %v2233 = vrot.slane %v2231, 1
      %v2234 = vsel %vm2198, %v2229, %v2233
      %v2236 = vshrl.u32 %v2140, 16
      %v2238 = vshll.u32 %v2140, 16
      %v2240 = vrot.slane %v2238, 1
      %v2241 = vor.u32 %v2236, %v2240
      %v2243 = vshll.u32 %v2141, 16
      %v2245 = vrot.slane %v2243, 1
      %v2246 = vsel %vm2198, %v2241, %v2245
      %v2248 = vshrl.u32 %v2142, 16
      %v2250 = vshll.u32 %v2142, 16
      %v2252 = vrot.slane %v2250, 1
      %v2253 = vor.u32 %v2248, %v2252
      %v2255 = vshll.u32 %v2143, 16
      %v2257 = vrot.slane %v2255, 1
      %v2258 = vsel %vm2198, %v2253, %v2257
      %v2260 = vshrl.u32 %v2144, 16
      %v2262 = vshll.u32 %v2144, 16
      %v2264 = vrot.slane %v2262, 1
      %v2265 = vor.u32 %v2260, %v2264
      %v2267 = vshll.u32 %v2145, 16
      %v2269 = vrot.slane %v2267, 1
      %v2270 = vsel %vm2198, %v2265, %v2269
      %v2272 = vshrl.u32 %v2146, 16
      %v2274 = vshll.u32 %v2146, 16
      %v2276 = vrot.slane %v2274, 1
      %v2277 = vor.u32 %v2272, %v2276
      %v2279 = vshll.u32 %v2147, 16
      %v2281 = vrot.slane %v2279, 1
      %v2282 = vsel %vm2198, %v2277, %v2281
      %v2284 = vshrl.u32 %v2148, 16
      %v2286 = vshll.u32 %v2148, 16
      %v2288 = vrot.slane %v2286, 1
      %v2289 = vor.u32 %v2284, %v2288
      %v2291 = vshll.u32 %v2149, 16
      %v2293 = vrot.slane %v2291, 1
      %v2294 = vsel %vm2198, %v2289, %v2293
      %v2296 = vshrl.u32 %v2150, 16
      %v2298 = vshll.u32 %v2150, 16
      %v2300 = vrot.slane %v2298, 1
      %v2301 = vor.u32 %v2296, %v2300
      %v2303 = vshll.u32 %v2151, 16
      %v2305 = vrot.slane %v2303, 1
      %v2306 = vsel %vm2198, %v2301, %v2305
      %v2308 = vshrl.u32 %v2152, 16
      %v2310 = vshll.u32 %v2152, 16
      %v2312 = vrot.slane %v2310, 1
      %v2313 = vor.u32 %v2308, %v2312
      %v2315 = vshll.u32 %v2153, 16
      %v2317 = vrot.slane %v2315, 1
      %v2318 = vsel %vm2198, %v2313, %v2317
      %v2320 = vshrl.u32 %v2154, 16
      %v2322 = vshll.u32 %v2154, 16
      %v2324 = vrot.slane %v2322, 1
      %v2325 = vor.u32 %v2320, %v2324
      %v2327 = vshll.u32 %v2155, 16
      %v2329 = vrot.slane %v2327, 1
      %v2330 = vsel %vm2198, %v2325, %v2329
      %v2332 = vshrl.u32 %v2156, 16
      %v2334 = vshll.u32 %v2156, 16
      %v2336 = vrot.slane %v2334, 1
      %v2337 = vor.u32 %v2332, %v2336
      %v2339 = vshll.u32 %v2157, 16
      %v2341 = vrot.slane %v2339, 1
      %v2342 = vsel %vm2198, %v2337, %v2341
      %v2344 = vshrl.u32 %v2158, 16
      %v2346 = vshll.u32 %v2158, 16
      %v2348 = vrot.slane %v2346, 1
      %v2349 = vor.u32 %v2344, %v2348
      %v2351 = vshll.u32 %v2159, 16
      %v2353 = vrot.slane %v2351, 1
      %v2354 = vsel %vm2198, %v2349, %v2353
      %v2356 = vshrl.u32 %v2160, 16
      %v2358 = vshll.u32 %v2160, 16
      %v2360 = vrot.slane %v2358, 1
      %v2361 = vor.u32 %v2356, %v2360
      %v2363 = vshll.u32 %v2161, 16
      %v2365 = vrot.slane %v2363, 1
      %v2366 = vsel %vm2198, %v2361, %v2365
      %v2368 = vshrl.u32 %v2162, 16
      %v2370 = vshll.u32 %v2162, 16
      %v2372 = vrot.slane %v2370, 1
      %v2373 = vor.u32 %v2368, %v2372
      %v2375 = vshll.u32 %v2163, 16
      %v2377 = vrot.slane %v2375, 1
      %v2378 = vsel %vm2198, %v2373, %v2377
      %v2380 = vshrl.u32 %v2164, 16
      %v2382 = vshll.u32 %v2164, 16
      %v2384 = vrot.slane %v2382, 1
      %v2385 = vor.u32 %v2380, %v2384
      %v2387 = vshll.u32 %v2165, 16
      %v2389 = vrot.slane %v2387, 1
      %v2390 = vsel %vm2198, %v2385, %v2389
      %v2392 = vshrl.u32 %v2166, 16
      %v2394 = vshll.u32 %v2166, 16
      %v2396 = vrot.slane %v2394, 1
      %v2397 = vor.u32 %v2392, %v2396
      %v2399 = vshll.u32 %v2167, 16
      %v2401 = vrot.slane %v2399, 1
      %v2402 = vsel %vm2198, %v2397, %v2401
      %v2404 = vshrl.u32 %v2168, 16
      %v2406 = vshll.u32 %v2168, 16
      %v2408 = vrot.slane %v2406, 1
      %v2409 = vor.u32 %v2404, %v2408
      %v2411 = vshll.u32 %v2169, 16
      %v2413 = vrot.slane %v2411, 1
      %v2414 = vsel %vm2198, %v2409, %v2413
      %v2416 = vshrl.u32 %v2170, 16
      %v2418 = vshll.u32 %v2170, 16
      %v2420 = vrot.slane %v2418, 1
      %v2421 = vor.u32 %v2416, %v2420
      %v2423 = vshll.u32 %v2171, 16
      %v2425 = vrot.slane %v2423, 1
      %v2426 = vsel %vm2198, %v2421, %v2425
      %v2428 = vshrl.u32 %v2172, 16
      %v2430 = vshll.u32 %v2172, 16
      %v2432 = vrot.slane %v2430, 1
      %v2433 = vor.u32 %v2428, %v2432
      %v2435 = vshll.u32 %v2173, 16
      %v2437 = vrot.slane %v2435, 1
      %v2438 = vsel %vm2198, %v2433, %v2437
      %v2440 = vshrl.u32 %v2174, 16
      %v2442 = vshll.u32 %v2174, 16
      %v2444 = vrot.slane %v2442, 1
      %v2445 = vor.u32 %v2440, %v2444
      %v2447 = vshll.u32 %v2175, 16
      %v2449 = vrot.slane %v2447, 1
      %v2450 = vsel %vm2198, %v2445, %v2449
      %v2452 = vshrl.u32 %v2176, 16
      %v2454 = vshll.u32 %v2176, 16
      %v2456 = vrot.slane %v2454, 1
      %v2457 = vor.u32 %v2452, %v2456
      %v2459 = vshll.u32 %v2177, 16
      %v2461 = vrot.slane %v2459, 1
      %v2462 = vsel %vm2198, %v2457, %v2461
      %v2464 = vshrl.u32 %v2178, 16
      %v2466 = vshll.u32 %v2178, 16
      %v2468 = vrot.slane %v2466, 1
      %v2469 = vor.u32 %v2464, %v2468
      %v2471 = vshll.u32 %v2179, 16
      %v2473 = vrot.slane %v2471, 1
      %v2474 = vsel %vm2198, %v2469, %v2473
      %v2476 = vshrl.u32 %v2180, 16
      %v2478 = vshll.u32 %v2180, 16
      %v2480 = vrot.slane %v2478, 1
      %v2481 = vor.u32 %v2476, %v2480
      %v2483 = vshll.u32 %v2181, 16
      %v2485 = vrot.slane %v2483, 1
      %v2486 = vsel %vm2198, %v2481, %v2485
      %v2488 = vshrl.u32 %v2182, 16
      %v2490 = vshll.u32 %v2182, 16
      %v2492 = vrot.slane %v2490, 1
      %v2493 = vor.u32 %v2488, %v2492
      %v2495 = vshll.u32 %v2183, 16
      %v2497 = vrot.slane %v2495, 1
      %v2498 = vsel %vm2198, %v2493, %v2497
      %v2500 = vshrl.u32 %v2184, 16
      %v2502 = vshll.u32 %v2184, 16
      %v2504 = vrot.slane %v2502, 1
      %v2505 = vor.u32 %v2500, %v2504
      %v2507 = vshll.u32 %v2185, 16
      %v2509 = vrot.slane %v2507, 1
      %v2510 = vsel %vm2198, %v2505, %v2509
      %v2512 = vshrl.u32 %v2186, 16
      %v2514 = vshll.u32 %v2186, 16
      %v2516 = vrot.slane %v2514, 1
      %v2517 = vor.u32 %v2512, %v2516
      %v2519 = vshll.u32 %v2187, 16
      %v2521 = vrot.slane %v2519, 1
      %v2522 = vsel %vm2198, %v2517, %v2521
      %v2524 = vshrl.u32 %v2188, 16
      %v2526 = vshll.u32 %v2188, 16
      %v2528 = vrot.slane %v2526, 1
      %v2529 = vor.u32 %v2524, %v2528
      %v2531 = vshll.u32 %v2189, 16
      %v2533 = vrot.slane %v2531, 1
      %v2534 = vsel %vm2198, %v2529, %v2533
      %v2536 = vshrl.u32 %v2190, 16
      %v2538 = vshll.u32 %v2190, 16
      %v2540 = vrot.slane %v2538, 1
      %v2541 = vor.u32 %v2536, %v2540
      %v2543 = vshll.u32 %v2191, 16
      %v2545 = vrot.slane %v2543, 1
      %v2546 = vsel %vm2198, %v2541, %v2545
      %v2548 = vshrl.u32 %v2192, 16
      %v2550 = vshll.u32 %v2192, 16
      %v2552 = vrot.slane %v2550, 1
      %v2553 = vor.u32 %v2548, %v2552
      %v2555 = vshll.u32 %v2193, 16
      %v2557 = vrot.slane %v2555, 1
      %v2558 = vsel %vm2198, %v2553, %v2557
      %v2560 = vshrl.u32 %v2194, 16
      %v2562 = vshll.u32 %v2194, 16
      %v2564 = vrot.slane %v2562, 1
      %v2565 = vor.u32 %v2560, %v2564
      %v2567 = vshll.u32 %v2195, 16
      %v2569 = vrot.slane %v2567, 1
      %v2570 = vsel %vm2198, %v2565, %v2569
      %v2572 = vshrl.u32 %v2196, 16
      %v2574 = vshll.u32 %v2196, 16
      %v2576 = vrot.slane %v2574, 1
      %v2577 = vor.u32 %v2572, %v2576
      %v2579 = vshll.u32 %v2197, 16
      %v2581 = vrot.slane %v2579, 1
      %v2582 = vsel %vm2198, %v2577, %v2581
      %s2615 = sadd.s32 %s939, 2
      %s2616 = smul.u32 %s2615, 16
      %s2617 = smul.addr %s2616, 4
      %s2618 = scalar_lea.vmem %s2, %s2617
      %v2619 = vld [vmem:[%s2618] sm:$0xf]
      %v2620 = vld [vmem:[%s2618 + $0x4] sm:$0xf]
      %v2621 = vld [vmem:[%s2618 + $0x8] sm:$0xf]
      %v2622 = vld [vmem:[%s2618 + $0xc] sm:$0xf]
      %v2623 = vld [vmem:[%s2618 + $0x10] sm:$0xf]
      %v2624 = vld [vmem:[%s2618 + $0x14] sm:$0xf]
      %v2625 = vld [vmem:[%s2618 + $0x18] sm:$0xf]
      %v2626 = vld [vmem:[%s2618 + $0x1c] sm:$0xf]
      %v2627 = vld [vmem:[%s2618 + $0x20] sm:$0xf]
      %v2628 = vld [vmem:[%s2618 + $0x24] sm:$0xf]
      %v2629 = vld [vmem:[%s2618 + $0x28] sm:$0xf]
      %v2630 = vld [vmem:[%s2618 + $0x2c] sm:$0xf]
      %v2631 = vld [vmem:[%s2618 + $0x30] sm:$0xf]
      %v2632 = vld [vmem:[%s2618 + $0x34] sm:$0xf]
      %v2633 = vld [vmem:[%s2618 + $0x38] sm:$0xf]
      %v2634 = vld [vmem:[%s2618 + $0x3c] sm:$0xf]
      %v2651 = vunpack.c.l.b16 %v2619
      %v2652 = vunpack.c.l.b16 %v2620
      %v2653 = vunpack.c.l.b16 %v2621
      %v2654 = vunpack.c.l.b16 %v2622
      %v2655 = vunpack.c.l.b16 %v2623
      %v2656 = vunpack.c.l.b16 %v2624
      %v2657 = vunpack.c.l.b16 %v2625
      %v2658 = vunpack.c.l.b16 %v2626
      %v2659 = vunpack.c.l.b16 %v2627
      %v2660 = vunpack.c.l.b16 %v2628
      %v2661 = vunpack.c.l.b16 %v2629
      %v2662 = vunpack.c.l.b16 %v2630
      %v2663 = vunpack.c.l.b16 %v2631
      %v2664 = vunpack.c.l.b16 %v2632
      %v2665 = vunpack.c.l.b16 %v2633
      %v2666 = vunpack.c.l.b16 %v2634
      %v2667 = vpack.c.b16 %v2652, %v2651
      %v2668 = vpack.c.b16 %v2654, %v2653
      %v2669 = vpack.c.b16 %v2656, %v2655
      %v2670 = vpack.c.b16 %v2658, %v2657
      %v2671 = vpack.c.b16 %v2660, %v2659
      %v2672 = vpack.c.b16 %v2662, %v2661
      %v2673 = vpack.c.b16 %v2664, %v2663
      %v2674 = vpack.c.b16 %v2666, %v2665
      %2683 = vmatprep.subr.bf16.mxu0 0
      %2684 = vmatpush1.bf16.msra.mxu0 %v2667
      %2685 = vmatprep.subr.bf16.mxu0 0
      %2686 = vmatpush1.bf16.msra.mxu0 %v2668
      %2687 = vmatprep.subr.bf16.mxu0 0
      %2688 = vmatpush1.bf16.msra.mxu0 %v2669
      %2689 = vmatprep.subr.bf16.mxu0 0
      %2690 = vmatpush1.bf16.msra.mxu0 %v2670
      %2691 = vmatprep.subr.bf16.mxu0 0
      %2692 = vmatpush1.bf16.msra.mxu0 %v2671
      %2693 = vmatprep.subr.bf16.mxu0 0
      %2694 = vmatpush1.bf16.msra.mxu0 %v2672
      %2695 = vmatprep.subr.bf16.mxu0 0
      %2696 = vmatpush1.bf16.msra.mxu0 %v2673
      %2697 = vmatprep.subr.bf16.mxu0 0
      %2698 = vmatpush1.bf16.msra.mxu0 %v2674
      %2699 = vmatprep.subr.bf16.mxu0 0
      %2700 = vmatpush1.bf16.msra.mxu0 0
      %2701 = vmatprep.subr.bf16.mxu0 0
      %2702 = vmatpush1.bf16.msra.mxu0 0
      %2703 = vmatprep.subr.bf16.mxu0 0
      %2704 = vmatpush1.bf16.msra.mxu0 0
      %2705 = vmatprep.subr.bf16.mxu0 0
      %2706 = vmatpush1.bf16.msra.mxu0 0
      %2707 = vmatprep.subr.bf16.mxu0 0
      %2708 = vmatpush1.bf16.msra.mxu0 0
      %2709 = vmatprep.subr.bf16.mxu0 0
      %2710 = vmatpush1.bf16.msra.mxu0 0
      %2711 = vmatprep.subr.bf16.mxu0 0
      %2712 = vmatpush1.bf16.msra.mxu0 0
      %2713 = vmatprep.subr.bf16.mxu0 0
      %2714 = vmatpush1.bf16.msra.mxu0 0
      %2715 = vmatprep.mubr.bf16.mxu0 0
      %2716 = vmatmul.mubr.bf16.gmra.mrb[0].mxu0 %v2210
      %v2717 = vpop.f32.mrb[0].mxu0
      %v2718 = vadd.f32 0.0, %v2717
      %v2719 = vpop.f32.mrb[0].mxu0
      %v2720 = vpop.f32.mrb[0].mxu0
      %v2721 = vadd.f32 0.0, %v2720
      %v2722 = vpop.f32.mrb[0].mxu0
      %2723 = vmatprep.mubr.bf16.mxu0 0
      %2724 = vmatmul.mubr.bf16.gmra.mrb[0].mxu0 %v2222
      %v2725 = vpop.f32.mrb[0].mxu0
      %v2726 = vadd.f32 0.0, %v2725
      %v2727 = vpop.f32.mrb[0].mxu0
      %v2728 = vpop.f32.mrb[0].mxu0
      %v2729 = vadd.f32 0.0, %v2728
      %v2730 = vpop.f32.mrb[0].mxu0
      %2731 = vmatprep.mubr.bf16.mxu0 0
      %2732 = vmatmul.mubr.bf16.gmra.mrb[0].mxu0 %v2234
      %v2733 = vpop.f32.mrb[0].mxu0
      %v2734 = vadd.f32 0.0, %v2733
      %v2735 = vpop.f32.mrb[0].mxu0
      %v2736 = vpop.f32.mrb[0].mxu0
      %v2737 = vadd.f32 0.0, %v2736
      %v2738 = vpop.f32.mrb[0].mxu0
      %2739 = vmatprep.mubr.bf16.mxu0 0
      %2740 = vmatmul.mubr.bf16.gmra.mrb[0].mxu0 %v2246
      %v2741 = vpop.f32.mrb[0].mxu0
      %v2742 = vadd.f32 0.0, %v2741
      %v2743 = vpop.f32.mrb[0].mxu0
      %v2744 = vpop.f32.mrb[0].mxu0
      %v2745 = vadd.f32 0.0, %v2744
      %v2746 = vpop.f32.mrb[0].mxu0
      %2747 = vmatprep.mubr.bf16.mxu0 0
      %2748 = vmatmul.mubr.bf16.gmra.mrb[0].mxu0 %v2258
      %v2749 = vpop.f32.mrb[0].mxu0
      %v2750 = vadd.f32 0.0, %v2749
      %v2751 = vpop.f32.mrb[0].mxu0
      %v2752 = vpop.f32.mrb[0].mxu0
      %v2753 = vadd.f32 0.0, %v2752
      %v2754 = vpop.f32.mrb[0].mxu0
      %2755 = vmatprep.mubr.bf16.mxu0 0
      %2756 = vmatmul.mubr.bf16.gmra.mrb[0].mxu0 %v2270
      %v2757 = vpop.f32.mrb[0].mxu0
      %v2758 = vadd.f32 0.0, %v2757
      %v2759 = vpop.f32.mrb[0].mxu0
      %v2760 = vpop.f32.mrb[0].mxu0
      %v2761 = vadd.f32 0.0, %v2760
      %v2762 = vpop.f32.mrb[0].mxu0
      %2763 = vmatprep.mubr.bf16.mxu0 0
      %2764 = vmatmul.mubr.bf16.gmra.mrb[0].mxu0 %v2282
      %v2765 = vpop.f32.mrb[0].mxu0
      %v2766 = vadd.f32 0.0, %v2765
      %v2767 = vpop.f32.mrb[0].mxu0
      %v2768 = vpop.f32.mrb[0].mxu0
      %v2769 = vadd.f32 0.0, %v2768
      %v2770 = vpop.f32.mrb[0].mxu0
      %2771 = vmatprep.mubr.bf16.mxu0 0
      %2772 = vmatmul.mubr.bf16.gmra.mrb[0].mxu0 %v2294
      %v2773 = vpop.f32.mrb[0].mxu0
      %v2774 = vadd.f32 0.0, %v2773
      %v2775 = vpop.f32.mrb[0].mxu0
      %v2776 = vpop.f32.mrb[0].mxu0
      %v2777 = vadd.f32 0.0, %v2776
      %v2778 = vpop.f32.mrb[0].mxu0
      %2779 = vmatprep.mubr.bf16.mxu0 0
      %2780 = vmatmul.mubr.bf16.gmra.mrb[0].mxu0 %v2306
      %v2781 = vpop.f32.mrb[0].mxu0
      %v2782 = vadd.f32 0.0, %v2781
      %v2783 = vpop.f32.mrb[0].mxu0
      %v2784 = vpop.f32.mrb[0].mxu0
      %v2785 = vadd.f32 0.0, %v2784
      %v2786 = vpop.f32.mrb[0].mxu0
      %2787 = vmatprep.mubr.bf16.mxu0 0
      %2788 = vmatmul.mubr.bf16.gmra.mrb[0].mxu0 %v2318
      %v2789 = vpop.f32.mrb[0].mxu0
      %v2790 = vadd.f32 0.0, %v2789
      %v2791 = vpop.f32.mrb[0].mxu0
      %v2792 = vpop.f32.mrb[0].mxu0
      %v2793 = vadd.f32 0.0, %v2792
      %v2794 = vpop.f32.mrb[0].mxu0
      %2795 = vmatprep.mubr.bf16.mxu0 0
      %2796 = vmatmul.mubr.bf16.gmra.mrb[0].mxu0 %v2330
      %v2797 = vpop.f32.mrb[0].mxu0
      %v2798 = vadd.f32 0.0, %v2797
      %v2799 = vpop.f32.mrb[0].mxu0
      %v2800 = vpop.f32.mrb[0].mxu0
      %v2801 = vadd.f32 0.0, %v2800
      %v2802 = vpop.f32.mrb[0].mxu0
      %2803 = vmatprep.mubr.bf16.mxu0 0
      %2804 = vmatmul.mubr.bf16.gmra.mrb[0].mxu0 %v2342
      %v2805 = vpop.f32.mrb[0].mxu0
      %v2806 = vadd.f32 0.0, %v2805
      %v2807 = vpop.f32.mrb[0].mxu0
      %v2808 = vpop.f32.mrb[0].mxu0
      %v2809 = vadd.f32 0.0, %v2808
      %v2810 = vpop.f32.mrb[0].mxu0
      %2811 = vmatprep.mubr.bf16.mxu0 0
      %2812 = vmatmul.mubr.bf16.gmra.mrb[0].mxu0 %v2354
      %v2813 = vpop.f32.mrb[0].mxu0
      %v2814 = vadd.f32 0.0, %v2813
      %v2815 = vpop.f32.mrb[0].mxu0
      %v2816 = vpop.f32.mrb[0].mxu0
      %v2817 = vadd.f32 0.0, %v2816
      %v2818 = vpop.f32.mrb[0].mxu0
      %2819 = vmatprep.mubr.bf16.mxu0 0
      %2820 = vmatmul.mubr.bf16.gmra.mrb[0].mxu0 %v2366
      %v2821 = vpop.f32.mrb[0].mxu0
      %v2822 = vadd.f32 0.0, %v2821
      %v2823 = vpop.f32.mrb[0].mxu0
      %v2824 = vpop.f32.mrb[0].mxu0
      %v2825 = vadd.f32 0.0, %v2824
      %v2826 = vpop.f32.mrb[0].mxu0
      %2827 = vmatprep.mubr.bf16.mxu0 0
      %2828 = vmatmul.mubr.bf16.gmra.mrb[0].mxu0 %v2378
      %v2829 = vpop.f32.mrb[0].mxu0
      %v2830 = vadd.f32 0.0, %v2829
      %v2831 = vpop.f32.mrb[0].mxu0
      %v2832 = vpop.f32.mrb[0].mxu0
      %v2833 = vadd.f32 0.0, %v2832
      %v2834 = vpop.f32.mrb[0].mxu0
      %2835 = vmatprep.mubr.bf16.mxu0 0
      %2836 = vmatmul.mubr.bf16.gmra.mrb[0].mxu0 %v2390
      %v2837 = vpop.f32.mrb[0].mxu0
      %v2838 = vadd.f32 0.0, %v2837
      %v2839 = vpop.f32.mrb[0].mxu0
      %v2840 = vpop.f32.mrb[0].mxu0
      %v2841 = vadd.f32 0.0, %v2840
      %v2842 = vpop.f32.mrb[0].mxu0
      %2843 = vmatprep.mubr.bf16.mxu0 0
      %2844 = vmatmul.mubr.bf16.gmra.mrb[0].mxu0 %v2402
      %v2845 = vpop.f32.mrb[0].mxu0
      %v2846 = vadd.f32 0.0, %v2845
      %v2847 = vpop.f32.mrb[0].mxu0
      %v2848 = vpop.f32.mrb[0].mxu0
      %v2849 = vadd.f32 0.0, %v2848
      %v2850 = vpop.f32.mrb[0].mxu0
      %2851 = vmatprep.mubr.bf16.mxu0 0
      %2852 = vmatmul.mubr.bf16.gmra.mrb[0].mxu0 %v2414
      %v2853 = vpop.f32.mrb[0].mxu0
      %v2854 = vadd.f32 0.0, %v2853
      %v2855 = vpop.f32.mrb[0].mxu0
      %v2856 = vpop.f32.mrb[0].mxu0
      %v2857 = vadd.f32 0.0, %v2856
      %v2858 = vpop.f32.mrb[0].mxu0
      %2859 = vmatprep.mubr.bf16.mxu0 0
      %2860 = vmatmul.mubr.bf16.gmra.mrb[0].mxu0 %v2426
      %v2861 = vpop.f32.mrb[0].mxu0
      %v2862 = vadd.f32 0.0, %v2861
      %v2863 = vpop.f32.mrb[0].mxu0
      %v2864 = vpop.f32.mrb[0].mxu0
      %v2865 = vadd.f32 0.0, %v2864
      %v2866 = vpop.f32.mrb[0].mxu0
      %2867 = vmatprep.mubr.bf16.mxu0 0
      %2868 = vmatmul.mubr.bf16.gmra.mrb[0].mxu0 %v2438
      %v2869 = vpop.f32.mrb[0].mxu0
      %v2870 = vadd.f32 0.0, %v2869
      %v2871 = vpop.f32.mrb[0].mxu0
      %v2872 = vpop.f32.mrb[0].mxu0
      %v2873 = vadd.f32 0.0, %v2872
      %v2874 = vpop.f32.mrb[0].mxu0
      %2875 = vmatprep.mubr.bf16.mxu0 0
      %2876 = vmatmul.mubr.bf16.gmra.mrb[0].mxu0 %v2450
      %v2877 = vpop.f32.mrb[0].mxu0
      %v2878 = vadd.f32 0.0, %v2877
      %v2879 = vpop.f32.mrb[0].mxu0
      %v2880 = vpop.f32.mrb[0].mxu0
      %v2881 = vadd.f32 0.0, %v2880
      %v2882 = vpop.f32.mrb[0].mxu0
      %2883 = vmatprep.mubr.bf16.mxu0 0
      %2884 = vmatmul.mubr.bf16.gmra.mrb[0].mxu0 %v2462
      %v2885 = vpop.f32.mrb[0].mxu0
      %v2886 = vadd.f32 0.0, %v2885
      %v2887 = vpop.f32.mrb[0].mxu0
      %v2888 = vpop.f32.mrb[0].mxu0
      %v2889 = vadd.f32 0.0, %v2888
      %v2890 = vpop.f32.mrb[0].mxu0
      %2891 = vmatprep.mubr.bf16.mxu0 0
      %2892 = vmatmul.mubr.bf16.gmra.mrb[0].mxu0 %v2474
      %v2893 = vpop.f32.mrb[0].mxu0
      %v2894 = vadd.f32 0.0, %v2893
      %v2895 = vpop.f32.mrb[0].mxu0
      %v2896 = vpop.f32.mrb[0].mxu0
      %v2897 = vadd.f32 0.0, %v2896
      %v2898 = vpop.f32.mrb[0].mxu0
      %2899 = vmatprep.mubr.bf16.mxu0 0
      %2900 = vmatmul.mubr.bf16.gmra.mrb[0].mxu0 %v2486
      %v2901 = vpop.f32.mrb[0].mxu0
      %v2902 = vadd.f32 0.0, %v2901
      %v2903 = vpop.f32.mrb[0].mxu0
      %v2904 = vpop.f32.mrb[0].mxu0
      %v2905 = vadd.f32 0.0, %v2904
      %v2906 = vpop.f32.mrb[0].mxu0
      %2907 = vmatprep.mubr.bf16.mxu0 0
      %2908 = vmatmul.mubr.bf16.gmra.mrb[0].mxu0 %v2498
      %v2909 = vpop.f32.mrb[0].mxu0
      %v2910 = vadd.f32 0.0, %v2909
      %v2911 = vpop.f32.mrb[0].mxu0
      %v2912 = vpop.f32.mrb[0].mxu0
      %v2913 = vadd.f32 0.0, %v2912
      %v2914 = vpop.f32.mrb[0].mxu0
      %2915 = vmatprep.mubr.bf16.mxu0 0
      %2916 = vmatmul.mubr.bf16.gmra.mrb[0].mxu0 %v2510
      %v2917 = vpop.f32.mrb[0].mxu0
      %v2918 = vadd.f32 0.0, %v2917
      %v2919 = vpop.f32.mrb[0].mxu0
      %v2920 = vpop.f32.mrb[0].mxu0
      %v2921 = vadd.f32 0.0, %v2920
      %v2922 = vpop.f32.mrb[0].mxu0
      %2923 = vmatprep.mubr.bf16.mxu0 0
      %2924 = vmatmul.mubr.bf16.gmra.mrb[0].mxu0 %v2522
      %v2925 = vpop.f32.mrb[0].mxu0
      %v2926 = vadd.f32 0.0, %v2925
      %v2927 = vpop.f32.mrb[0].mxu0
      %v2928 = vpop.f32.mrb[0].mxu0
      %v2929 = vadd.f32 0.0, %v2928
      %v2930 = vpop.f32.mrb[0].mxu0
      %2931 = vmatprep.mubr.bf16.mxu0 0
      %2932 = vmatmul.mubr.bf16.gmra.mrb[0].mxu0 %v2534
      %v2933 = vpop.f32.mrb[0].mxu0
      %v2934 = vadd.f32 0.0, %v2933
      %v2935 = vpop.f32.mrb[0].mxu0
      %v2936 = vpop.f32.mrb[0].mxu0
      %v2937 = vadd.f32 0.0, %v2936
      %v2938 = vpop.f32.mrb[0].mxu0
      %2939 = vmatprep.mubr.bf16.mxu0 0
      %2940 = vmatmul.mubr.bf16.gmra.mrb[0].mxu0 %v2546
      %v2941 = vpop.f32.mrb[0].mxu0
      %v2942 = vadd.f32 0.0, %v2941
      %v2943 = vpop.f32.mrb[0].mxu0
      %v2944 = vpop.f32.mrb[0].mxu0
      %v2945 = vadd.f32 0.0, %v2944
      %v2946 = vpop.f32.mrb[0].mxu0
      %2947 = vmatprep.mubr.bf16.mxu0 0
      %2948 = vmatmul.mubr.bf16.gmra.mrb[0].mxu0 %v2558
      %v2949 = vpop.f32.mrb[0].mxu0
      %v2950 = vadd.f32 0.0, %v2949
      %v2951 = vpop.f32.mrb[0].mxu0
      %v2952 = vpop.f32.mrb[0].mxu0
      %v2953 = vadd.f32 0.0, %v2952
      %v2954 = vpop.f32.mrb[0].mxu0
      %2955 = vmatprep.mubr.bf16.mxu0 0
      %2956 = vmatmul.mubr.bf16.gmra.mrb[0].mxu0 %v2570
      %v2957 = vpop.f32.mrb[0].mxu0
      %v2958 = vadd.f32 0.0, %v2957
      %v2959 = vpop.f32.mrb[0].mxu0
      %v2960 = vpop.f32.mrb[0].mxu0
      %v2961 = vadd.f32 0.0, %v2960
      %v2962 = vpop.f32.mrb[0].mxu0
      %2963 = vmatprep.mubr.bf16.mxu0 0
      %2964 = vmatmul.mubr.bf16.gmra.mrb[0].mxu0 %v2582
      %v2965 = vpop.f32.mrb[0].mxu0
      %v2966 = vadd.f32 0.0, %v2965
      %v2967 = vpop.f32.mrb[0].mxu0
      %v2968 = vpop.f32.mrb[0].mxu0
      %v2969 = vadd.f32 0.0, %v2968
      %v2970 = vpop.f32.mrb[0].mxu0
      %2971 = vdwg.mxu0
      %v2972 = vadd.f32 %v1880, %v2718
      %v2973 = vadd.f32 %v1883, %v2721
      %v2974 = vadd.f32 %v1888, %v2726
      %v2975 = vadd.f32 %v1891, %v2729
      %v2976 = vadd.f32 %v1896, %v2734
      %v2977 = vadd.f32 %v1899, %v2737
      %v2978 = vadd.f32 %v1904, %v2742
      %v2979 = vadd.f32 %v1907, %v2745
      %v2980 = vadd.f32 %v1912, %v2750
      %v2981 = vadd.f32 %v1915, %v2753
      %v2982 = vadd.f32 %v1920, %v2758
      %v2983 = vadd.f32 %v1923, %v2761
      %v2984 = vadd.f32 %v1928, %v2766
      %v2985 = vadd.f32 %v1931, %v2769
      %v2986 = vadd.f32 %v1936, %v2774
      %v2987 = vadd.f32 %v1939, %v2777
      %v2988 = vadd.f32 %v1944, %v2782
      %v2989 = vadd.f32 %v1947, %v2785
      %v2990 = vadd.f32 %v1952, %v2790
      %v2991 = vadd.f32 %v1955, %v2793
      %v2992 = vadd.f32 %v1960, %v2798
      %v2993 = vadd.f32 %v1963, %v2801
      %v2994 = vadd.f32 %v1968, %v2806
      %v2995 = vadd.f32 %v1971, %v2809
      %v2996 = vadd.f32 %v1976, %v2814
      %v2997 = vadd.f32 %v1979, %v2817
      %v2998 = vadd.f32 %v1984, %v2822
      %v2999 = vadd.f32 %v1987, %v2825
      %v3000 = vadd.f32 %v1992, %v2830
      %v3001 = vadd.f32 %v1995, %v2833
      %v3002 = vadd.f32 %v2000, %v2838
      %v3003 = vadd.f32 %v2003, %v2841
      %v3004 = vadd.f32 %v2008, %v2846
      %v3005 = vadd.f32 %v2011, %v2849
      %v3006 = vadd.f32 %v2016, %v2854
      %v3007 = vadd.f32 %v2019, %v2857
      %v3008 = vadd.f32 %v2024, %v2862
      %v3009 = vadd.f32 %v2027, %v2865
      %v3010 = vadd.f32 %v2032, %v2870
      %v3011 = vadd.f32 %v2035, %v2873
      %v3012 = vadd.f32 %v2040, %v2878
      %v3013 = vadd.f32 %v2043, %v2881
      %v3014 = vadd.f32 %v2048, %v2886
      %v3015 = vadd.f32 %v2051, %v2889
      %v3016 = vadd.f32 %v2056, %v2894
      %v3017 = vadd.f32 %v2059, %v2897
      %v3018 = vadd.f32 %v2064, %v2902
      %v3019 = vadd.f32 %v2067, %v2905
      %v3020 = vadd.f32 %v2072, %v2910
      %v3021 = vadd.f32 %v2075, %v2913
      %v3022 = vadd.f32 %v2080, %v2918
      %v3023 = vadd.f32 %v2083, %v2921
      %v3024 = vadd.f32 %v2088, %v2926
      %v3025 = vadd.f32 %v2091, %v2929
      %v3026 = vadd.f32 %v2096, %v2934
      %v3027 = vadd.f32 %v2099, %v2937
      %v3028 = vadd.f32 %v2104, %v2942
      %v3029 = vadd.f32 %v2107, %v2945
      %v3030 = vadd.f32 %v2112, %v2950
      %v3031 = vadd.f32 %v2115, %v2953
      %v3032 = vadd.f32 %v2120, %v2958
      %v3033 = vadd.f32 %v2123, %v2961
      %v3034 = vadd.f32 %v2128, %v2966
      %v3035 = vadd.f32 %v2131, %v2969
      %v3036 = vld [vmem:[%s899] sm:$0x80]
      %v3037 = vld [vmem:[%s899 + $0x8] sm:$0xff]
      %v3038 = vld [vmem:[%s899 + $0x18] sm:$0x80]
      %v3039 = vld [vmem:[%s899 + $0x20] sm:$0xff]
      %v3040 = vld [vmem:[%s899 + $0x30] sm:$0x80]
      %v3041 = vld [vmem:[%s899 + $0x38] sm:$0xff]
      %v3042 = vld [vmem:[%s899 + $0x48] sm:$0x80]
      %v3043 = vld [vmem:[%s899 + $0x50] sm:$0xff]
      %v3044 = vld [vmem:[%s899 + $0x60] sm:$0x80]
      %v3045 = vld [vmem:[%s899 + $0x68] sm:$0xff]
      %v3046 = vld [vmem:[%s899 + $0x78] sm:$0x80]
      %v3047 = vld [vmem:[%s899 + $0x80] sm:$0xff]
      %v3048 = vld [vmem:[%s899 + $0x90] sm:$0x80]
      %v3049 = vld [vmem:[%s899 + $0x98] sm:$0xff]
      %v3050 = vld [vmem:[%s899 + $0xa8] sm:$0x80]
      %v3051 = vld [vmem:[%s899 + $0xb0] sm:$0xff]
      %v3052 = vld [vmem:[%s899 + $0xc0] sm:$0x80]
      %v3053 = vld [vmem:[%s899 + $0xc8] sm:$0xff]
      %v3054 = vld [vmem:[%s899 + $0xd8] sm:$0x80]
      %v3055 = vld [vmem:[%s899 + $0xe0] sm:$0xff]
      %v3056 = vld [vmem:[%s899 + $0xf0] sm:$0x80]
      %v3057 = vld [vmem:[%s899 + $0xf8] sm:$0xff]
      %v3058 = vld [vmem:[%s899 + $0x108] sm:$0x80]
      %v3059 = vld [vmem:[%s899 + $0x110] sm:$0xff]
      %v3060 = vld [vmem:[%s899 + $0x120] sm:$0x80]
      %v3061 = vld [vmem:[%s899 + $0x128] sm:$0xff]
      %v3062 = vld [vmem:[%s899 + $0x138] sm:$0x80]
      %v3063 = vld [vmem:[%s899 + $0x140] sm:$0xff]
      %v3064 = vld [vmem:[%s899 + $0x150] sm:$0x80]
      %v3065 = vld [vmem:[%s899 + $0x158] sm:$0xff]
      %v3066 = vld [vmem:[%s899 + $0x168] sm:$0x80]
      %v3067 = vld [vmem:[%s899 + $0x170] sm:$0xff]
      %v3068 = vld [vmem:[%s899 + $0x1b0] sm:$0x80]
      %v3069 = vld [vmem:[%s899 + $0x1b8] sm:$0xff]
      %v3070 = vld [vmem:[%s899 + $0x1c8] sm:$0x80]
      %v3071 = vld [vmem:[%s899 + $0x1d0] sm:$0xff]
      %v3072 = vld [vmem:[%s899 + $0x1e0] sm:$0x80]
      %v3073 = vld [vmem:[%s899 + $0x1e8] sm:$0xff]
      %v3074 = vld [vmem:[%s899 + $0x1f8] sm:$0x80]
      %v3075 = vld [vmem:[%s899 + $0x200] sm:$0xff]
      %v3076 = vld [vmem:[%s899 + $0x210] sm:$0x80]
      %v3077 = vld [vmem:[%s899 + $0x218] sm:$0xff]
      %v3078 = vld [vmem:[%s899 + $0x228] sm:$0x80]
      %v3079 = vld [vmem:[%s899 + $0x230] sm:$0xff]
      %v3080 = vld [vmem:[%s899 + $0x240] sm:$0x80]
      %v3081 = vld [vmem:[%s899 + $0x248] sm:$0xff]
      %v3082 = vld [vmem:[%s899 + $0x258] sm:$0x80]
      %v3083 = vld [vmem:[%s899 + $0x260] sm:$0xff]
      %v3084 = vld [vmem:[%s899 + $0x270] sm:$0x80]
      %v3085 = vld [vmem:[%s899 + $0x278] sm:$0xff]
      %v3086 = vld [vmem:[%s899 + $0x288] sm:$0x80]
      %v3087 = vld [vmem:[%s899 + $0x290] sm:$0xff]
      %v3088 = vld [vmem:[%s899 + $0x2a0] sm:$0x80]
      %v3089 = vld [vmem:[%s899 + $0x2a8] sm:$0xff]
      %v3090 = vld [vmem:[%s899 + $0x2b8] sm:$0x80]
      %v3091 = vld [vmem:[%s899 + $0x2c0] sm:$0xff]
      %v3092 = vld [vmem:[%s899 + $0x2d0] sm:$0x80]
      %v3093 = vld [vmem:[%s899 + $0x2d8] sm:$0xff]
      %v3094 = vld [vmem:[%s899 + $0x2e8] sm:$0x80]
      %v3095 = vld [vmem:[%s899 + $0x2f0] sm:$0xff]
      %v3096 = vld [vmem:[%s899 + $0x300] sm:$0x80]
      %v3097 = vld [vmem:[%s899 + $0x308] sm:$0xff]
      %v3098 = vld [vmem:[%s899 + $0x318] sm:$0x80]
      %v3099 = vld [vmem:[%s899 + $0x320] sm:$0xff]
      %v3101 = vshrl.u32 %v3036, 16
      %v3103 = vrot.slane %v3101, 7
      %v3105 = vshrl.u32 %v3037, 16
      %v3107 = vrot.slane %v3105, 7
      %v3108 = vshll.u32 %v3037, 16
      %v3110 = vor.u32 %v3107, %v3108
      %v3111 = vsel %vm1004, %v3103, %v3110
      %v3113 = vshrl.u32 %v3038, 16
      %v3115 = vrot.slane %v3113, 7
      %v3117 = vshrl.u32 %v3039, 16
      %v3119 = vrot.slane %v3117, 7
      %v3120 = vshll.u32 %v3039, 16
      %v3122 = vor.u32 %v3119, %v3120
      %v3123 = vsel %vm1004, %v3115, %v3122
      %v3125 = vshrl.u32 %v3040, 16
      %v3127 = vrot.slane %v3125, 7
      %v3129 = vshrl.u32 %v3041, 16
      %v3131 = vrot.slane %v3129, 7
      %v3132 = vshll.u32 %v3041, 16
      %v3134 = vor.u32 %v3131, %v3132
      %v3135 = vsel %vm1004, %v3127, %v3134
      %v3137 = vshrl.u32 %v3042, 16
      %v3139 = vrot.slane %v3137, 7
      %v3141 = vshrl.u32 %v3043, 16
      %v3143 = vrot.slane %v3141, 7
      %v3144 = vshll.u32 %v3043, 16
      %v3146 = vor.u32 %v3143, %v3144
      %v3147 = vsel %vm1004, %v3139, %v3146
      %v3149 = vshrl.u32 %v3044, 16
      %v3151 = vrot.slane %v3149, 7
      %v3153 = vshrl.u32 %v3045, 16
      %v3155 = vrot.slane %v3153, 7
      %v3156 = vshll.u32 %v3045, 16
      %v3158 = vor.u32 %v3155, %v3156
      %v3159 = vsel %vm1004, %v3151, %v3158
      %v3161 = vshrl.u32 %v3046, 16
      %v3163 = vrot.slane %v3161, 7
      %v3165 = vshrl.u32 %v3047, 16
      %v3167 = vrot.slane %v3165, 7
      %v3168 = vshll.u32 %v3047, 16
      %v3170 = vor.u32 %v3167, %v3168
      %v3171 = vsel %vm1004, %v3163, %v3170
      %v3173 = vshrl.u32 %v3048, 16
      %v3175 = vrot.slane %v3173, 7
      %v3177 = vshrl.u32 %v3049, 16
      %v3179 = vrot.slane %v3177, 7
      %v3180 = vshll.u32 %v3049, 16
      %v3182 = vor.u32 %v3179, %v3180
      %v3183 = vsel %vm1004, %v3175, %v3182
      %v3185 = vshrl.u32 %v3050, 16
      %v3187 = vrot.slane %v3185, 7
      %v3189 = vshrl.u32 %v3051, 16
      %v3191 = vrot.slane %v3189, 7
      %v3192 = vshll.u32 %v3051, 16
      %v3194 = vor.u32 %v3191, %v3192
      %v3195 = vsel %vm1004, %v3187, %v3194
      %v3197 = vshrl.u32 %v3052, 16
      %v3199 = vrot.slane %v3197, 7
      %v3201 = vshrl.u32 %v3053, 16
      %v3203 = vrot.slane %v3201, 7
      %v3204 = vshll.u32 %v3053, 16
      %v3206 = vor.u32 %v3203, %v3204
      %v3207 = vsel %vm1004, %v3199, %v3206
      %v3209 = vshrl.u32 %v3054, 16
      %v3211 = vrot.slane %v3209, 7
      %v3213 = vshrl.u32 %v3055, 16
      %v3215 = vrot.slane %v3213, 7
      %v3216 = vshll.u32 %v3055, 16
      %v3218 = vor.u32 %v3215, %v3216
      %v3219 = vsel %vm1004, %v3211, %v3218
      %v3221 = vshrl.u32 %v3056, 16
      %v3223 = vrot.slane %v3221, 7
      %v3225 = vshrl.u32 %v3057, 16
      %v3227 = vrot.slane %v3225, 7
      %v3228 = vshll.u32 %v3057, 16
      %v3230 = vor.u32 %v3227, %v3228
      %v3231 = vsel %vm1004, %v3223, %v3230
      %v3233 = vshrl.u32 %v3058, 16
      %v3235 = vrot.slane %v3233, 7
      %v3237 = vshrl.u32 %v3059, 16
      %v3239 = vrot.slane %v3237, 7
      %v3240 = vshll.u32 %v3059, 16
      %v3242 = vor.u32 %v3239, %v3240
      %v3243 = vsel %vm1004, %v3235, %v3242
      %v3245 = vshrl.u32 %v3060, 16
      %v3247 = vrot.slane %v3245, 7
      %v3249 = vshrl.u32 %v3061, 16
      %v3251 = vrot.slane %v3249, 7
      %v3252 = vshll.u32 %v3061, 16
      %v3254 = vor.u32 %v3251, %v3252
      %v3255 = vsel %vm1004, %v3247, %v3254
      %v3257 = vshrl.u32 %v3062, 16
      %v3259 = vrot.slane %v3257, 7
      %v3261 = vshrl.u32 %v3063, 16
      %v3263 = vrot.slane %v3261, 7
      %v3264 = vshll.u32 %v3063, 16
      %v3266 = vor.u32 %v3263, %v3264
      %v3267 = vsel %vm1004, %v3259, %v3266
      %v3269 = vshrl.u32 %v3064, 16
      %v3271 = vrot.slane %v3269, 7
      %v3273 = vshrl.u32 %v3065, 16
      %v3275 = vrot.slane %v3273, 7
      %v3276 = vshll.u32 %v3065, 16
      %v3278 = vor.u32 %v3275, %v3276
      %v3279 = vsel %vm1004, %v3271, %v3278
      %v3281 = vshrl.u32 %v3066, 16
      %v3283 = vrot.slane %v3281, 7
      %v3285 = vshrl.u32 %v3067, 16
      %v3287 = vrot.slane %v3285, 7
      %v3288 = vshll.u32 %v3067, 16
      %v3290 = vor.u32 %v3287, %v3288
      %v3291 = vsel %vm1004, %v3283, %v3290
      %v3293 = vshrl.u32 %v3068, 16
      %v3295 = vrot.slane %v3293, 7
      %v3297 = vshrl.u32 %v3069, 16
      %v3299 = vrot.slane %v3297, 7
      %v3300 = vshll.u32 %v3069, 16
      %v3302 = vor.u32 %v3299, %v3300
      %v3303 = vsel %vm1004, %v3295, %v3302
      %v3305 = vshrl.u32 %v3070, 16
      %v3307 = vrot.slane %v3305, 7
      %v3309 = vshrl.u32 %v3071, 16
      %v3311 = vrot.slane %v3309, 7
      %v3312 = vshll.u32 %v3071, 16
      %v3314 = vor.u32 %v3311, %v3312
      %v3315 = vsel %vm1004, %v3307, %v3314
      %v3317 = vshrl.u32 %v3072, 16
      %v3319 = vrot.slane %v3317, 7
      %v3321 = vshrl.u32 %v3073, 16
      %v3323 = vrot.slane %v3321, 7
      %v3324 = vshll.u32 %v3073, 16
      %v3326 = vor.u32 %v3323, %v3324
      %v3327 = vsel %vm1004, %v3319, %v3326
      %v3329 = vshrl.u32 %v3074, 16
      %v3331 = vrot.slane %v3329, 7
      %v3333 = vshrl.u32 %v3075, 16
      %v3335 = vrot.slane %v3333, 7
      %v3336 = vshll.u32 %v3075, 16
      %v3338 = vor.u32 %v3335, %v3336
      %v3339 = vsel %vm1004, %v3331, %v3338
      %v3341 = vshrl.u32 %v3076, 16
      %v3343 = vrot.slane %v3341, 7
      %v3345 = vshrl.u32 %v3077, 16
      %v3347 = vrot.slane %v3345, 7
      %v3348 = vshll.u32 %v3077, 16
      %v3350 = vor.u32 %v3347, %v3348
      %v3351 = vsel %vm1004, %v3343, %v3350
      %v3353 = vshrl.u32 %v3078, 16
      %v3355 = vrot.slane %v3353, 7
      %v3357 = vshrl.u32 %v3079, 16
      %v3359 = vrot.slane %v3357, 7
      %v3360 = vshll.u32 %v3079, 16
      %v3362 = vor.u32 %v3359, %v3360
      %v3363 = vsel %vm1004, %v3355, %v3362
      %v3365 = vshrl.u32 %v3080, 16
      %v3367 = vrot.slane %v3365, 7
      %v3369 = vshrl.u32 %v3081, 16
      %v3371 = vrot.slane %v3369, 7
      %v3372 = vshll.u32 %v3081, 16
      %v3374 = vor.u32 %v3371, %v3372
      %v3375 = vsel %vm1004, %v3367, %v3374
      %v3377 = vshrl.u32 %v3082, 16
      %v3379 = vrot.slane %v3377, 7
      %v3381 = vshrl.u32 %v3083, 16
      %v3383 = vrot.slane %v3381, 7
      %v3384 = vshll.u32 %v3083, 16
      %v3386 = vor.u32 %v3383, %v3384
      %v3387 = vsel %vm1004, %v3379, %v3386
      %v3389 = vshrl.u32 %v3084, 16
      %v3391 = vrot.slane %v3389, 7
      %v3393 = vshrl.u32 %v3085, 16
      %v3395 = vrot.slane %v3393, 7
      %v3396 = vshll.u32 %v3085, 16
      %v3398 = vor.u32 %v3395, %v3396
      %v3399 = vsel %vm1004, %v3391, %v3398
      %v3401 = vshrl.u32 %v3086, 16
      %v3403 = vrot.slane %v3401, 7
      %v3405 = vshrl.u32 %v3087, 16
      %v3407 = vrot.slane %v3405, 7
      %v3408 = vshll.u32 %v3087, 16
      %v3410 = vor.u32 %v3407, %v3408
      %v3411 = vsel %vm1004, %v3403, %v3410
      %v3413 = vshrl.u32 %v3088, 16
      %v3415 = vrot.slane %v3413, 7
      %v3417 = vshrl.u32 %v3089, 16
      %v3419 = vrot.slane %v3417, 7
      %v3420 = vshll.u32 %v3089, 16
      %v3422 = vor.u32 %v3419, %v3420
      %v3423 = vsel %vm1004, %v3415, %v3422
      %v3425 = vshrl.u32 %v3090, 16
      %v3427 = vrot.slane %v3425, 7
      %v3429 = vshrl.u32 %v3091, 16
      %v3431 = vrot.slane %v3429, 7
      %v3432 = vshll.u32 %v3091, 16
      %v3434 = vor.u32 %v3431, %v3432
      %v3435 = vsel %vm1004, %v3427, %v3434
      %v3437 = vshrl.u32 %v3092, 16
      %v3439 = vrot.slane %v3437, 7
      %v3441 = vshrl.u32 %v3093, 16
      %v3443 = vrot.slane %v3441, 7
      %v3444 = vshll.u32 %v3093, 16
      %v3446 = vor.u32 %v3443, %v3444
      %v3447 = vsel %vm1004, %v3439, %v3446
      %v3449 = vshrl.u32 %v3094, 16
      %v3451 = vrot.slane %v3449, 7
      %v3453 = vshrl.u32 %v3095, 16
      %v3455 = vrot.slane %v3453, 7
      %v3456 = vshll.u32 %v3095, 16
      %v3458 = vor.u32 %v3455, %v3456
      %v3459 = vsel %vm1004, %v3451, %v3458
      %v3461 = vshrl.u32 %v3096, 16
      %v3463 = vrot.slane %v3461, 7
      %v3465 = vshrl.u32 %v3097, 16
      %v3467 = vrot.slane %v3465, 7
      %v3468 = vshll.u32 %v3097, 16
      %v3470 = vor.u32 %v3467, %v3468
      %v3471 = vsel %vm1004, %v3463, %v3470
      %v3473 = vshrl.u32 %v3098, 16
      %v3475 = vrot.slane %v3473, 7
      %v3477 = vshrl.u32 %v3099, 16
      %v3479 = vrot.slane %v3477, 7
      %v3480 = vshll.u32 %v3099, 16
      %v3482 = vor.u32 %v3479, %v3480
      %v3483 = vsel %vm1004, %v3475, %v3482
      %s3516 = sadd.s32 %s939, 3
      %s3517 = smul.u32 %s3516, 16
      %s3518 = smul.addr %s3517, 4
      %s3519 = scalar_lea.vmem %s2, %s3518
      %v3520 = vld [vmem:[%s3519] sm:$0xf]
      %v3521 = vld [vmem:[%s3519 + $0x4] sm:$0xf]
      %v3522 = vld [vmem:[%s3519 + $0x8] sm:$0xf]
      %v3523 = vld [vmem:[%s3519 + $0xc] sm:$0xf]
      %v3524 = vld [vmem:[%s3519 + $0x10] sm:$0xf]
      %v3525 = vld [vmem:[%s3519 + $0x14] sm:$0xf]
      %v3526 = vld [vmem:[%s3519 + $0x18] sm:$0xf]
      %v3527 = vld [vmem:[%s3519 + $0x1c] sm:$0xf]
      %v3528 = vld [vmem:[%s3519 + $0x20] sm:$0xf]
      %v3529 = vld [vmem:[%s3519 + $0x24] sm:$0xf]
      %v3530 = vld [vmem:[%s3519 + $0x28] sm:$0xf]
      %v3531 = vld [vmem:[%s3519 + $0x2c] sm:$0xf]
      %v3532 = vld [vmem:[%s3519 + $0x30] sm:$0xf]
      %v3533 = vld [vmem:[%s3519 + $0x34] sm:$0xf]
      %v3534 = vld [vmem:[%s3519 + $0x38] sm:$0xf]
      %v3535 = vld [vmem:[%s3519 + $0x3c] sm:$0xf]
      %v3552 = vunpack.c.l.b16 %v3520
      %v3553 = vunpack.c.l.b16 %v3521
      %v3554 = vunpack.c.l.b16 %v3522
      %v3555 = vunpack.c.l.b16 %v3523
      %v3556 = vunpack.c.l.b16 %v3524
      %v3557 = vunpack.c.l.b16 %v3525
      %v3558 = vunpack.c.l.b16 %v3526
      %v3559 = vunpack.c.l.b16 %v3527
      %v3560 = vunpack.c.l.b16 %v3528
      %v3561 = vunpack.c.l.b16 %v3529
      %v3562 = vunpack.c.l.b16 %v3530
      %v3563 = vunpack.c.l.b16 %v3531
      %v3564 = vunpack.c.l.b16 %v3532
      %v3565 = vunpack.c.l.b16 %v3533
      %v3566 = vunpack.c.l.b16 %v3534
      %v3567 = vunpack.c.l.b16 %v3535
      %v3568 = vpack.c.b16 %v3553, %v3552
      %v3569 = vpack.c.b16 %v3555, %v3554
      %v3570 = vpack.c.b16 %v3557, %v3556
      %v3571 = vpack.c.b16 %v3559, %v3558
      %v3572 = vpack.c.b16 %v3561, %v3560
      %v3573 = vpack.c.b16 %v3563, %v3562
      %v3574 = vpack.c.b16 %v3565, %v3564
      %v3575 = vpack.c.b16 %v3567, %v3566
      %3584 = vmatprep.subr.bf16.mxu0 0
      %3585 = vmatpush1.bf16.msra.mxu0 %v3568
      %3586 = vmatprep.subr.bf16.mxu0 0
      %3587 = vmatpush1.bf16.msra.mxu0 %v3569
      %3588 = vmatprep.subr.bf16.mxu0 0
      %3589 = vmatpush1.bf16.msra.mxu0 %v3570
      %3590 = vmatprep.subr.bf16.mxu0 0
      %3591 = vmatpush1.bf16.msra.mxu0 %v3571
      %3592 = vmatprep.subr.bf16.mxu0 0
      %3593 = vmatpush1.bf16.msra.mxu0 %v3572
      %3594 = vmatprep.subr.bf16.mxu0 0
      %3595 = vmatpush1.bf16.msra.mxu0 %v3573
      %3596 = vmatprep.subr.bf16.mxu0 0
      %3597 = vmatpush1.bf16.msra.mxu0 %v3574
      %3598 = vmatprep.subr.bf16.mxu0 0
      %3599 = vmatpush1.bf16.msra.mxu0 %v3575
      %3600 = vmatprep.subr.bf16.mxu0 0
      %3601 = vmatpush1.bf16.msra.mxu0 0
      %3602 = vmatprep.subr.bf16.mxu0 0
      %3603 = vmatpush1.bf16.msra.mxu0 0
      %3604 = vmatprep.subr.bf16.mxu0 0
      %3605 = vmatpush1.bf16.msra.mxu0 0
      %3606 = vmatprep.subr.bf16.mxu0 0
      %3607 = vmatpush1.bf16.msra.mxu0 0
      %3608 = vmatprep.subr.bf16.mxu0 0
      %3609 = vmatpush1.bf16.msra.mxu0 0
      %3610 = vmatprep.subr.bf16.mxu0 0
      %3611 = vmatpush1.bf16.msra.mxu0 0
      %3612 = vmatprep.subr.bf16.mxu0 0
      %3613 = vmatpush1.bf16.msra.mxu0 0
      %3614 = vmatprep.subr.bf16.mxu0 0
      %3615 = vmatpush1.bf16.msra.mxu0 0
      %3616 = vmatprep.mubr.bf16.mxu0 0
      %3617 = vmatmul.mubr.bf16.gmra.mrb[0].mxu0 %v3111
      %v3618 = vpop.f32.mrb[0].mxu0
      %v3619 = vadd.f32 0.0, %v3618
      %v3620 = vpop.f32.mrb[0].mxu0
      %v3621 = vpop.f32.mrb[0].mxu0
      %v3622 = vadd.f32 0.0, %v3621
      %v3623 = vpop.f32.mrb[0].mxu0
      %3624 = vmatprep.mubr.bf16.mxu0 0
      %3625 = vmatmul.mubr.bf16.gmra.mrb[0].mxu0 %v3123
      %v3626 = vpop.f32.mrb[0].mxu0
      %v3627 = vadd.f32 0.0, %v3626
      %v3628 = vpop.f32.mrb[0].mxu0
      %v3629 = vpop.f32.mrb[0].mxu0
      %v3630 = vadd.f32 0.0, %v3629
      %v3631 = vpop.f32.mrb[0].mxu0
      %3632 = vmatprep.mubr.bf16.mxu0 0
      %3633 = vmatmul.mubr.bf16.gmra.mrb[0].mxu0 %v3135
      %v3634 = vpop.f32.mrb[0].mxu0
      %v3635 = vadd.f32 0.0, %v3634
      %v3636 = vpop.f32.mrb[0].mxu0
      %v3637 = vpop.f32.mrb[0].mxu0
      %v3638 = vadd.f32 0.0, %v3637
      %v3639 = vpop.f32.mrb[0].mxu0
      %3640 = vmatprep.mubr.bf16.mxu0 0
      %3641 = vmatmul.mubr.bf16.gmra.mrb[0].mxu0 %v3147
      %v3642 = vpop.f32.mrb[0].mxu0
      %v3643 = vadd.f32 0.0, %v3642
      %v3644 = vpop.f32.mrb[0].mxu0
      %v3645 = vpop.f32.mrb[0].mxu0
      %v3646 = vadd.f32 0.0, %v3645
      %v3647 = vpop.f32.mrb[0].mxu0
      %3648 = vmatprep.mubr.bf16.mxu0 0
      %3649 = vmatmul.mubr.bf16.gmra.mrb[0].mxu0 %v3159
      %v3650 = vpop.f32.mrb[0].mxu0
      %v3651 = vadd.f32 0.0, %v3650
      %v3652 = vpop.f32.mrb[0].mxu0
      %v3653 = vpop.f32.mrb[0].mxu0
      %v3654 = vadd.f32 0.0, %v3653
      %v3655 = vpop.f32.mrb[0].mxu0
      %3656 = vmatprep.mubr.bf16.mxu0 0
      %3657 = vmatmul.mubr.bf16.gmra.mrb[0].mxu0 %v3171
      %v3658 = vpop.f32.mrb[0].mxu0
      %v3659 = vadd.f32 0.0, %v3658
      %v3660 = vpop.f32.mrb[0].mxu0
      %v3661 = vpop.f32.mrb[0].mxu0
      %v3662 = vadd.f32 0.0, %v3661
      %v3663 = vpop.f32.mrb[0].mxu0
      %3664 = vmatprep.mubr.bf16.mxu0 0
      %3665 = vmatmul.mubr.bf16.gmra.mrb[0].mxu0 %v3183
      %v3666 = vpop.f32.mrb[0].mxu0
      %v3667 = vadd.f32 0.0, %v3666
      %v3668 = vpop.f32.mrb[0].mxu0
      %v3669 = vpop.f32.mrb[0].mxu0
      %v3670 = vadd.f32 0.0, %v3669
      %v3671 = vpop.f32.mrb[0].mxu0
      %3672 = vmatprep.mubr.bf16.mxu0 0
      %3673 = vmatmul.mubr.bf16.gmra.mrb[0].mxu0 %v3195
      %v3674 = vpop.f32.mrb[0].mxu0
      %v3675 = vadd.f32 0.0, %v3674
      %v3676 = vpop.f32.mrb[0].mxu0
      %v3677 = vpop.f32.mrb[0].mxu0
      %v3678 = vadd.f32 0.0, %v3677
      %v3679 = vpop.f32.mrb[0].mxu0
      %3680 = vmatprep.mubr.bf16.mxu0 0
      %3681 = vmatmul.mubr.bf16.gmra.mrb[0].mxu0 %v3207
      %v3682 = vpop.f32.mrb[0].mxu0
      %v3683 = vadd.f32 0.0, %v3682
      %v3684 = vpop.f32.mrb[0].mxu0
      %v3685 = vpop.f32.mrb[0].mxu0
      %v3686 = vadd.f32 0.0, %v3685
      %v3687 = vpop.f32.mrb[0].mxu0
      %3688 = vmatprep.mubr.bf16.mxu0 0
      %3689 = vmatmul.mubr.bf16.gmra.mrb[0].mxu0 %v3219
      %v3690 = vpop.f32.mrb[0].mxu0
      %v3691 = vadd.f32 0.0, %v3690
      %v3692 = vpop.f32.mrb[0].mxu0
      %v3693 = vpop.f32.mrb[0].mxu0
      %v3694 = vadd.f32 0.0, %v3693
      %v3695 = vpop.f32.mrb[0].mxu0
      %3696 = vmatprep.mubr.bf16.mxu0 0
      %3697 = vmatmul.mubr.bf16.gmra.mrb[0].mxu0 %v3231
      %v3698 = vpop.f32.mrb[0].mxu0
      %v3699 = vadd.f32 0.0, %v3698
      %v3700 = vpop.f32.mrb[0].mxu0
      %v3701 = vpop.f32.mrb[0].mxu0
      %v3702 = vadd.f32 0.0, %v3701
      %v3703 = vpop.f32.mrb[0].mxu0
      %3704 = vmatprep.mubr.bf16.mxu0 0
      %3705 = vmatmul.mubr.bf16.gmra.mrb[0].mxu0 %v3243
      %v3706 = vpop.f32.mrb[0].mxu0
      %v3707 = vadd.f32 0.0, %v3706
      %v3708 = vpop.f32.mrb[0].mxu0
      %v3709 = vpop.f32.mrb[0].mxu0
      %v3710 = vadd.f32 0.0, %v3709
      %v3711 = vpop.f32.mrb[0].mxu0
      %3712 = vmatprep.mubr.bf16.mxu0 0
      %3713 = vmatmul.mubr.bf16.gmra.mrb[0].mxu0 %v3255
      %v3714 = vpop.f32.mrb[0].mxu0
      %v3715 = vadd.f32 0.0, %v3714
      %v3716 = vpop.f32.mrb[0].mxu0
      %v3717 = vpop.f32.mrb[0].mxu0
      %v3718 = vadd.f32 0.0, %v3717
      %v3719 = vpop.f32.mrb[0].mxu0
      %3720 = vmatprep.mubr.bf16.mxu0 0
      %3721 = vmatmul.mubr.bf16.gmra.mrb[0].mxu0 %v3267
      %v3722 = vpop.f32.mrb[0].mxu0
      %v3723 = vadd.f32 0.0, %v3722
      %v3724 = vpop.f32.mrb[0].mxu0
      %v3725 = vpop.f32.mrb[0].mxu0
      %v3726 = vadd.f32 0.0, %v3725
      %v3727 = vpop.f32.mrb[0].mxu0
      %3728 = vmatprep.mubr.bf16.mxu0 0
      %3729 = vmatmul.mubr.bf16.gmra.mrb[0].mxu0 %v3279
      %v3730 = vpop.f32.mrb[0].mxu0
      %v3731 = vadd.f32 0.0, %v3730
      %v3732 = vpop.f32.mrb[0].mxu0
      %v3733 = vpop.f32.mrb[0].mxu0
      %v3734 = vadd.f32 0.0, %v3733
      %v3735 = vpop.f32.mrb[0].mxu0
      %3736 = vmatprep.mubr.bf16.mxu0 0
      %3737 = vmatmul.mubr.bf16.gmra.mrb[0].mxu0 %v3291
      %v3738 = vpop.f32.mrb[0].mxu0
      %v3739 = vadd.f32 0.0, %v3738
      %v3740 = vpop.f32.mrb[0].mxu0
      %v3741 = vpop.f32.mrb[0].mxu0
      %v3742 = vadd.f32 0.0, %v3741
      %v3743 = vpop.f32.mrb[0].mxu0
      %3744 = vmatprep.mubr.bf16.mxu0 0
      %3745 = vmatmul.mubr.bf16.gmra.mrb[0].mxu0 %v3303
      %v3746 = vpop.f32.mrb[0].mxu0
      %v3747 = vadd.f32 0.0, %v3746
      %v3748 = vpop.f32.mrb[0].mxu0
      %v3749 = vpop.f32.mrb[0].mxu0
      %v3750 = vadd.f32 0.0, %v3749
      %v3751 = vpop.f32.mrb[0].mxu0
      %3752 = vmatprep.mubr.bf16.mxu0 0
      %3753 = vmatmul.mubr.bf16.gmra.mrb[0].mxu0 %v3315
      %v3754 = vpop.f32.mrb[0].mxu0
      %v3755 = vadd.f32 0.0, %v3754
      %v3756 = vpop.f32.mrb[0].mxu0
      %v3757 = vpop.f32.mrb[0].mxu0
      %v3758 = vadd.f32 0.0, %v3757
      %v3759 = vpop.f32.mrb[0].mxu0
      %3760 = vmatprep.mubr.bf16.mxu0 0
      %3761 = vmatmul.mubr.bf16.gmra.mrb[0].mxu0 %v3327
      %v3762 = vpop.f32.mrb[0].mxu0
      %v3763 = vadd.f32 0.0, %v3762
      %v3764 = vpop.f32.mrb[0].mxu0
      %v3765 = vpop.f32.mrb[0].mxu0
      %v3766 = vadd.f32 0.0, %v3765
      %v3767 = vpop.f32.mrb[0].mxu0
      %3768 = vmatprep.mubr.bf16.mxu0 0
      %3769 = vmatmul.mubr.bf16.gmra.mrb[0].mxu0 %v3339
      %v3770 = vpop.f32.mrb[0].mxu0
      %v3771 = vadd.f32 0.0, %v3770
      %v3772 = vpop.f32.mrb[0].mxu0
      %v3773 = vpop.f32.mrb[0].mxu0
      %v3774 = vadd.f32 0.0, %v3773
      %v3775 = vpop.f32.mrb[0].mxu0
      %3776 = vmatprep.mubr.bf16.mxu0 0
      %3777 = vmatmul.mubr.bf16.gmra.mrb[0].mxu0 %v3351
      %v3778 = vpop.f32.mrb[0].mxu0
      %v3779 = vadd.f32 0.0, %v3778
      %v3780 = vpop.f32.mrb[0].mxu0
      %v3781 = vpop.f32.mrb[0].mxu0
      %v3782 = vadd.f32 0.0, %v3781
      %v3783 = vpop.f32.mrb[0].mxu0
      %3784 = vmatprep.mubr.bf16.mxu0 0
      %3785 = vmatmul.mubr.bf16.gmra.mrb[0].mxu0 %v3363
      %v3786 = vpop.f32.mrb[0].mxu0
      %v3787 = vadd.f32 0.0, %v3786
      %v3788 = vpop.f32.mrb[0].mxu0
      %v3789 = vpop.f32.mrb[0].mxu0
      %v3790 = vadd.f32 0.0, %v3789
      %v3791 = vpop.f32.mrb[0].mxu0
      %3792 = vmatprep.mubr.bf16.mxu0 0
      %3793 = vmatmul.mubr.bf16.gmra.mrb[0].mxu0 %v3375
      %v3794 = vpop.f32.mrb[0].mxu0
      %v3795 = vadd.f32 0.0, %v3794
      %v3796 = vpop.f32.mrb[0].mxu0
      %v3797 = vpop.f32.mrb[0].mxu0
      %v3798 = vadd.f32 0.0, %v3797
      %v3799 = vpop.f32.mrb[0].mxu0
      %3800 = vmatprep.mubr.bf16.mxu0 0
      %3801 = vmatmul.mubr.bf16.gmra.mrb[0].mxu0 %v3387
      %v3802 = vpop.f32.mrb[0].mxu0
      %v3803 = vadd.f32 0.0, %v3802
      %v3804 = vpop.f32.mrb[0].mxu0
      %v3805 = vpop.f32.mrb[0].mxu0
      %v3806 = vadd.f32 0.0, %v3805
      %v3807 = vpop.f32.mrb[0].mxu0
      %3808 = vmatprep.mubr.bf16.mxu0 0
      %3809 = vmatmul.mubr.bf16.gmra.mrb[0].mxu0 %v3399
      %v3810 = vpop.f32.mrb[0].mxu0
      %v3811 = vadd.f32 0.0, %v3810
      %v3812 = vpop.f32.mrb[0].mxu0
      %v3813 = vpop.f32.mrb[0].mxu0
      %v3814 = vadd.f32 0.0, %v3813
      %v3815 = vpop.f32.mrb[0].mxu0
      %3816 = vmatprep.mubr.bf16.mxu0 0
      %3817 = vmatmul.mubr.bf16.gmra.mrb[0].mxu0 %v3411
      %v3818 = vpop.f32.mrb[0].mxu0
      %v3819 = vadd.f32 0.0, %v3818
      %v3820 = vpop.f32.mrb[0].mxu0
      %v3821 = vpop.f32.mrb[0].mxu0
      %v3822 = vadd.f32 0.0, %v3821
      %v3823 = vpop.f32.mrb[0].mxu0
      %3824 = vmatprep.mubr.bf16.mxu0 0
      %3825 = vmatmul.mubr.bf16.gmra.mrb[0].mxu0 %v3423
      %v3826 = vpop.f32.mrb[0].mxu0
      %v3827 = vadd.f32 0.0, %v3826
      %v3828 = vpop.f32.mrb[0].mxu0
      %v3829 = vpop.f32.mrb[0].mxu0
      %v3830 = vadd.f32 0.0, %v3829
      %v3831 = vpop.f32.mrb[0].mxu0
      %3832 = vmatprep.mubr.bf16.mxu0 0
      %3833 = vmatmul.mubr.bf16.gmra.mrb[0].mxu0 %v3435
      %v3834 = vpop.f32.mrb[0].mxu0
      %v3835 = vadd.f32 0.0, %v3834
      %v3836 = vpop.f32.mrb[0].mxu0
      %v3837 = vpop.f32.mrb[0].mxu0
      %v3838 = vadd.f32 0.0, %v3837
      %v3839 = vpop.f32.mrb[0].mxu0
      %3840 = vmatprep.mubr.bf16.mxu0 0
      %3841 = vmatmul.mubr.bf16.gmra.mrb[0].mxu0 %v3447
      %v3842 = vpop.f32.mrb[0].mxu0
      %v3843 = vadd.f32 0.0, %v3842
      %v3844 = vpop.f32.mrb[0].mxu0
      %v3845 = vpop.f32.mrb[0].mxu0
      %v3846 = vadd.f32 0.0, %v3845
      %v3847 = vpop.f32.mrb[0].mxu0
      %3848 = vmatprep.mubr.bf16.mxu0 0
      %3849 = vmatmul.mubr.bf16.gmra.mrb[0].mxu0 %v3459
      %v3850 = vpop.f32.mrb[0].mxu0
      %v3851 = vadd.f32 0.0, %v3850
      %v3852 = vpop.f32.mrb[0].mxu0
      %v3853 = vpop.f32.mrb[0].mxu0
      %v3854 = vadd.f32 0.0, %v3853
      %v3855 = vpop.f32.mrb[0].mxu0
      %3856 = vmatprep.mubr.bf16.mxu0 0
      %3857 = vmatmul.mubr.bf16.gmra.mrb[0].mxu0 %v3471
      %v3858 = vpop.f32.mrb[0].mxu0
      %v3859 = vadd.f32 0.0, %v3858
      %v3860 = vpop.f32.mrb[0].mxu0
      %v3861 = vpop.f32.mrb[0].mxu0
      %v3862 = vadd.f32 0.0, %v3861
      %v3863 = vpop.f32.mrb[0].mxu0
      %3864 = vmatprep.mubr.bf16.mxu0 0
      %3865 = vmatmul.mubr.bf16.gmra.mrb[0].mxu0 %v3483
      %v3866 = vpop.f32.mrb[0].mxu0
      %v3867 = vadd.f32 0.0, %v3866
      %v3868 = vpop.f32.mrb[0].mxu0
      %v3869 = vpop.f32.mrb[0].mxu0
      %v3870 = vadd.f32 0.0, %v3869
      %v3871 = vpop.f32.mrb[0].mxu0
      %3872 = vdwg.mxu0
      %v3873 = vadd.f32 %v2972, %v3619
      %v3874 = vadd.f32 %v2973, %v3622
      %v3875 = vadd.f32 %v2974, %v3627
      %v3876 = vadd.f32 %v2975, %v3630
      %v3877 = vadd.f32 %v2976, %v3635
      %v3878 = vadd.f32 %v2977, %v3638
      %v3879 = vadd.f32 %v2978, %v3643
      %v3880 = vadd.f32 %v2979, %v3646
      %v3881 = vadd.f32 %v2980, %v3651
      %v3882 = vadd.f32 %v2981, %v3654
      %v3883 = vadd.f32 %v2982, %v3659
      %v3884 = vadd.f32 %v2983, %v3662
      %v3885 = vadd.f32 %v2984, %v3667
      %v3886 = vadd.f32 %v2985, %v3670
      %v3887 = vadd.f32 %v2986, %v3675
      %v3888 = vadd.f32 %v2987, %v3678
      %v3889 = vadd.f32 %v2988, %v3683
      %v3890 = vadd.f32 %v2989, %v3686
      %v3891 = vadd.f32 %v2990, %v3691
      %v3892 = vadd.f32 %v2991, %v3694
      %v3893 = vadd.f32 %v2992, %v3699
      %v3894 = vadd.f32 %v2993, %v3702
      %v3895 = vadd.f32 %v2994, %v3707
      %v3896 = vadd.f32 %v2995, %v3710
      %v3897 = vadd.f32 %v2996, %v3715
      %v3898 = vadd.f32 %v2997, %v3718
      %v3899 = vadd.f32 %v2998, %v3723
      %v3900 = vadd.f32 %v2999, %v3726
      %v3901 = vadd.f32 %v3000, %v3731
      %v3902 = vadd.f32 %v3001, %v3734
      %v3903 = vadd.f32 %v3002, %v3739
      %v3904 = vadd.f32 %v3003, %v3742
      %v3905 = vadd.f32 %v3004, %v3747
      %v3906 = vadd.f32 %v3005, %v3750
      %v3907 = vadd.f32 %v3006, %v3755
      %v3908 = vadd.f32 %v3007, %v3758
      %v3909 = vadd.f32 %v3008, %v3763
      %v3910 = vadd.f32 %v3009, %v3766
      %v3911 = vadd.f32 %v3010, %v3771
      %v3912 = vadd.f32 %v3011, %v3774
      %v3913 = vadd.f32 %v3012, %v3779
      %v3914 = vadd.f32 %v3013, %v3782
      %v3915 = vadd.f32 %v3014, %v3787
      %v3916 = vadd.f32 %v3015, %v3790
      %v3917 = vadd.f32 %v3016, %v3795
      %v3918 = vadd.f32 %v3017, %v3798
      %v3919 = vadd.f32 %v3018, %v3803
      %v3920 = vadd.f32 %v3019, %v3806
      %v3921 = vadd.f32 %v3020, %v3811
      %v3922 = vadd.f32 %v3021, %v3814
      %v3923 = vadd.f32 %v3022, %v3819
      %v3924 = vadd.f32 %v3023, %v3822
      %v3925 = vadd.f32 %v3024, %v3827
      %v3926 = vadd.f32 %v3025, %v3830
      %v3927 = vadd.f32 %v3026, %v3835
      %v3928 = vadd.f32 %v3027, %v3838
      %v3929 = vadd.f32 %v3028, %v3843
      %v3930 = vadd.f32 %v3029, %v3846
      %v3931 = vadd.f32 %v3030, %v3851
      %v3932 = vadd.f32 %v3031, %v3854
      %v3933 = vadd.f32 %v3032, %v3859
      %v3934 = vadd.f32 %v3033, %v3862
      %v3935 = vadd.f32 %v3034, %v3867
      %v3936 = vadd.f32 %v3035, %v3870
      %s3937 = sadd.s32 %s939, 4
      %s3938 = smul.u32 %s3937, 16
      %s3939 = smul.addr %s3938, 4
      %s3940 = scalar_lea.vmem %s2, %s3939
      %v3941 = vld [vmem:[%s3940] sm:$0xf]
      %v3942 = vld [vmem:[%s3940 + $0x4] sm:$0xf]
      %v3943 = vld [vmem:[%s3940 + $0x8] sm:$0xf]
      %v3944 = vld [vmem:[%s3940 + $0xc] sm:$0xf]
      %v3945 = vld [vmem:[%s3940 + $0x10] sm:$0xf]
      %v3946 = vld [vmem:[%s3940 + $0x14] sm:$0xf]
      %v3947 = vld [vmem:[%s3940 + $0x18] sm:$0xf]
      %v3948 = vld [vmem:[%s3940 + $0x1c] sm:$0xf]
      %v3949 = vld [vmem:[%s3940 + $0x20] sm:$0xf]
      %v3950 = vld [vmem:[%s3940 + $0x24] sm:$0xf]
      %v3951 = vld [vmem:[%s3940 + $0x28] sm:$0xf]
      %v3952 = vld [vmem:[%s3940 + $0x2c] sm:$0xf]
      %v3953 = vld [vmem:[%s3940 + $0x30] sm:$0xf]
      %v3954 = vld [vmem:[%s3940 + $0x34] sm:$0xf]
      %v3955 = vld [vmem:[%s3940 + $0x38] sm:$0xf]
      %v3956 = vld [vmem:[%s3940 + $0x3c] sm:$0xf]
      %v3973 = vunpack.c.l.b16 %v3941
      %v3974 = vunpack.c.l.b16 %v3942
      %v3975 = vunpack.c.l.b16 %v3943
      %v3976 = vunpack.c.l.b16 %v3944
      %v3977 = vunpack.c.l.b16 %v3945
      %v3978 = vunpack.c.l.b16 %v3946
      %v3979 = vunpack.c.l.b16 %v3947
      %v3980 = vunpack.c.l.b16 %v3948
      %v3981 = vunpack.c.l.b16 %v3949
      %v3982 = vunpack.c.l.b16 %v3950
      %v3983 = vunpack.c.l.b16 %v3951
      %v3984 = vunpack.c.l.b16 %v3952
      %v3985 = vunpack.c.l.b16 %v3953
      %v3986 = vunpack.c.l.b16 %v3954
      %v3987 = vunpack.c.l.b16 %v3955
      %v3988 = vunpack.c.l.b16 %v3956
      %v3989 = vpack.c.b16 %v3974, %v3973
      %v3990 = vpack.c.b16 %v3976, %v3975
      %v3991 = vpack.c.b16 %v3978, %v3977
      %v3992 = vpack.c.b16 %v3980, %v3979
      %v3993 = vpack.c.b16 %v3982, %v3981
      %v3994 = vpack.c.b16 %v3984, %v3983
      %v3995 = vpack.c.b16 %v3986, %v3985
      %v3996 = vpack.c.b16 %v3988, %v3987
      %4005 = vmatprep.subr.bf16.mxu0 0
      %4006 = vmatpush1.bf16.msra.mxu0 %v3989
      %4007 = vmatprep.subr.bf16.mxu0 0
      %4008 = vmatpush1.bf16.msra.mxu0 %v3990
      %4009 = vmatprep.subr.bf16.mxu0 0
      %4010 = vmatpush1.bf16.msra.mxu0 %v3991
      %4011 = vmatprep.subr.bf16.mxu0 0
      %4012 = vmatpush1.bf16.msra.mxu0 %v3992
      %4013 = vmatprep.subr.bf16.mxu0 0
      %4014 = vmatpush1.bf16.msra.mxu0 %v3993
      %4015 = vmatprep.subr.bf16.mxu0 0
      %4016 = vmatpush1.bf16.msra.mxu0 %v3994
      %4017 = vmatprep.subr.bf16.mxu0 0
      %4018 = vmatpush1.bf16.msra.mxu0 %v3995
      %4019 = vmatprep.subr.bf16.mxu0 0
      %4020 = vmatpush1.bf16.msra.mxu0 %v3996
      %4021 = vmatprep.subr.bf16.mxu0 0
      %4022 = vmatpush1.bf16.msra.mxu0 0
      %4023 = vmatprep.subr.bf16.mxu0 0
      %4024 = vmatpush1.bf16.msra.mxu0 0
      %4025 = vmatprep.subr.bf16.mxu0 0
      %4026 = vmatpush1.bf16.msra.mxu0 0
      %4027 = vmatprep.subr.bf16.mxu0 0
      %4028 = vmatpush1.bf16.msra.mxu0 0
      %4029 = vmatprep.subr.bf16.mxu0 0
      %4030 = vmatpush1.bf16.msra.mxu0 0
      %4031 = vmatprep.subr.bf16.mxu0 0
      %4032 = vmatpush1.bf16.msra.mxu0 0
      %4033 = vmatprep.subr.bf16.mxu0 0
      %4034 = vmatpush1.bf16.msra.mxu0 0
      %4035 = vmatprep.subr.bf16.mxu0 0
      %4036 = vmatpush1.bf16.msra.mxu0 0
      %4037 = vmatprep.mubr.bf16.mxu0 0
      %4038 = vmatmul.mubr.bf16.gmra.mrb[0].mxu0 %v3037
      %v4039 = vpop.f32.mrb[0].mxu0
      %v4040 = vadd.f32 0.0, %v4039
      %v4041 = vpop.f32.mrb[0].mxu0
      %v4042 = vpop.f32.mrb[0].mxu0
      %v4043 = vadd.f32 0.0, %v4042
      %v4044 = vpop.f32.mrb[0].mxu0
      %4045 = vmatprep.mubr.bf16.mxu0 0
      %4046 = vmatmul.mubr.bf16.gmra.mrb[0].mxu0 %v3039
      %v4047 = vpop.f32.mrb[0].mxu0
      %v4048 = vadd.f32 0.0, %v4047
      %v4049 = vpop.f32.mrb[0].mxu0
      %v4050 = vpop.f32.mrb[0].mxu0
      %v4051 = vadd.f32 0.0, %v4050
      %v4052 = vpop.f32.mrb[0].mxu0
      %4053 = vmatprep.mubr.bf16.mxu0 0
      %4054 = vmatmul.mubr.bf16.gmra.mrb[0].mxu0 %v3041
      %v4055 = vpop.f32.mrb[0].mxu0
      %v4056 = vadd.f32 0.0, %v4055
      %v4057 = vpop.f32.mrb[0].mxu0
      %v4058 = vpop.f32.mrb[0].mxu0
      %v4059 = vadd.f32 0.0, %v4058
      %v4060 = vpop.f32.mrb[0].mxu0
      %4061 = vmatprep.mubr.bf16.mxu0 0
      %4062 = vmatmul.mubr.bf16.gmra.mrb[0].mxu0 %v3043
      %v4063 = vpop.f32.mrb[0].mxu0
      %v4064 = vadd.f32 0.0, %v4063
      %v4065 = vpop.f32.mrb[0].mxu0
      %v4066 = vpop.f32.mrb[0].mxu0
      %v4067 = vadd.f32 0.0, %v4066
      %v4068 = vpop.f32.mrb[0].mxu0
      %4069 = vmatprep.mubr.bf16.mxu0 0
      %4070 = vmatmul.mubr.bf16.gmra.mrb[0].mxu0 %v3045
      %v4071 = vpop.f32.mrb[0].mxu0
      %v4072 = vadd.f32 0.0, %v4071
      %v4073 = vpop.f32.mrb[0].mxu0
      %v4074 = vpop.f32.mrb[0].mxu0
      %v4075 = vadd.f32 0.0, %v4074
      %v4076 = vpop.f32.mrb[0].mxu0
      %4077 = vmatprep.mubr.bf16.mxu0 0
      %4078 = vmatmul.mubr.bf16.gmra.mrb[0].mxu0 %v3047
      %v4079 = vpop.f32.mrb[0].mxu0
      %v4080 = vadd.f32 0.0, %v4079
      %v4081 = vpop.f32.mrb[0].mxu0
      %v4082 = vpop.f32.mrb[0].mxu0
      %v4083 = vadd.f32 0.0, %v4082
      %v4084 = vpop.f32.mrb[0].mxu0
      %4085 = vmatprep.mubr.bf16.mxu0 0
      %4086 = vmatmul.mubr.bf16.gmra.mrb[0].mxu0 %v3049
      %v4087 = vpop.f32.mrb[0].mxu0
      %v4088 = vadd.f32 0.0, %v4087
      %v4089 = vpop.f32.mrb[0].mxu0
      %v4090 = vpop.f32.mrb[0].mxu0
      %v4091 = vadd.f32 0.0, %v4090
      %v4092 = vpop.f32.mrb[0].mxu0
      %4093 = vmatprep.mubr.bf16.mxu0 0
      %4094 = vmatmul.mubr.bf16.gmra.mrb[0].mxu0 %v3051
      %v4095 = vpop.f32.mrb[0].mxu0
      %v4096 = vadd.f32 0.0, %v4095
      %v4097 = vpop.f32.mrb[0].mxu0
      %v4098 = vpop.f32.mrb[0].mxu0
      %v4099 = vadd.f32 0.0, %v4098
      %v4100 = vpop.f32.mrb[0].mxu0
      %4101 = vmatprep.mubr.bf16.mxu0 0
      %4102 = vmatmul.mubr.bf16.gmra.mrb[0].mxu0 %v3053
      %v4103 = vpop.f32.mrb[0].mxu0
      %v4104 = vadd.f32 0.0, %v4103
      %v4105 = vpop.f32.mrb[0].mxu0
      %v4106 = vpop.f32.mrb[0].mxu0
      %v4107 = vadd.f32 0.0, %v4106
      %v4108 = vpop.f32.mrb[0].mxu0
      %4109 = vmatprep.mubr.bf16.mxu0 0
      %4110 = vmatmul.mubr.bf16.gmra.mrb[0].mxu0 %v3055
      %v4111 = vpop.f32.mrb[0].mxu0
      %v4112 = vadd.f32 0.0, %v4111
      %v4113 = vpop.f32.mrb[0].mxu0
      %v4114 = vpop.f32.mrb[0].mxu0
      %v4115 = vadd.f32 0.0, %v4114
      %v4116 = vpop.f32.mrb[0].mxu0
      %4117 = vmatprep.mubr.bf16.mxu0 0
      %4118 = vmatmul.mubr.bf16.gmra.mrb[0].mxu0 %v3057
      %v4119 = vpop.f32.mrb[0].mxu0
      %v4120 = vadd.f32 0.0, %v4119
      %v4121 = vpop.f32.mrb[0].mxu0
      %v4122 = vpop.f32.mrb[0].mxu0
      %v4123 = vadd.f32 0.0, %v4122
      %v4124 = vpop.f32.mrb[0].mxu0
      %4125 = vmatprep.mubr.bf16.mxu0 0
      %4126 = vmatmul.mubr.bf16.gmra.mrb[0].mxu0 %v3059
      %v4127 = vpop.f32.mrb[0].mxu0
      %v4128 = vadd.f32 0.0, %v4127
      %v4129 = vpop.f32.mrb[0].mxu0
      %v4130 = vpop.f32.mrb[0].mxu0
      %v4131 = vadd.f32 0.0, %v4130
      %v4132 = vpop.f32.mrb[0].mxu0
      %4133 = vmatprep.mubr.bf16.mxu0 0
      %4134 = vmatmul.mubr.bf16.gmra.mrb[0].mxu0 %v3061
      %v4135 = vpop.f32.mrb[0].mxu0
      %v4136 = vadd.f32 0.0, %v4135
      %v4137 = vpop.f32.mrb[0].mxu0
      %v4138 = vpop.f32.mrb[0].mxu0
      %v4139 = vadd.f32 0.0, %v4138
      %v4140 = vpop.f32.mrb[0].mxu0
      %4141 = vmatprep.mubr.bf16.mxu0 0
      %4142 = vmatmul.mubr.bf16.gmra.mrb[0].mxu0 %v3063
      %v4143 = vpop.f32.mrb[0].mxu0
      %v4144 = vadd.f32 0.0, %v4143
      %v4145 = vpop.f32.mrb[0].mxu0
      %v4146 = vpop.f32.mrb[0].mxu0
      %v4147 = vadd.f32 0.0, %v4146
      %v4148 = vpop.f32.mrb[0].mxu0
      %4149 = vmatprep.mubr.bf16.mxu0 0
      %4150 = vmatmul.mubr.bf16.gmra.mrb[0].mxu0 %v3065
      %v4151 = vpop.f32.mrb[0].mxu0
      %v4152 = vadd.f32 0.0, %v4151
      %v4153 = vpop.f32.mrb[0].mxu0
      %v4154 = vpop.f32.mrb[0].mxu0
      %v4155 = vadd.f32 0.0, %v4154
      %v4156 = vpop.f32.mrb[0].mxu0
      %4157 = vmatprep.mubr.bf16.mxu0 0
      %4158 = vmatmul.mubr.bf16.gmra.mrb[0].mxu0 %v3067
      %v4159 = vpop.f32.mrb[0].mxu0
      %v4160 = vadd.f32 0.0, %v4159
      %v4161 = vpop.f32.mrb[0].mxu0
      %v4162 = vpop.f32.mrb[0].mxu0
      %v4163 = vadd.f32 0.0, %v4162
      %v4164 = vpop.f32.mrb[0].mxu0
      %4165 = vmatprep.mubr.bf16.mxu0 0
      %4166 = vmatmul.mubr.bf16.gmra.mrb[0].mxu0 %v3069
      %v4167 = vpop.f32.mrb[0].mxu0
      %v4168 = vadd.f32 0.0, %v4167
      %v4169 = vpop.f32.mrb[0].mxu0
      %v4170 = vpop.f32.mrb[0].mxu0
      %v4171 = vadd.f32 0.0, %v4170
      %v4172 = vpop.f32.mrb[0].mxu0
      %4173 = vmatprep.mubr.bf16.mxu0 0
      %4174 = vmatmul.mubr.bf16.gmra.mrb[0].mxu0 %v3071
      %v4175 = vpop.f32.mrb[0].mxu0
      %v4176 = vadd.f32 0.0, %v4175
      %v4177 = vpop.f32.mrb[0].mxu0
      %v4178 = vpop.f32.mrb[0].mxu0
      %v4179 = vadd.f32 0.0, %v4178
      %v4180 = vpop.f32.mrb[0].mxu0
      %4181 = vmatprep.mubr.bf16.mxu0 0
      %4182 = vmatmul.mubr.bf16.gmra.mrb[0].mxu0 %v3073
      %v4183 = vpop.f32.mrb[0].mxu0
      %v4184 = vadd.f32 0.0, %v4183
      %v4185 = vpop.f32.mrb[0].mxu0
      %v4186 = vpop.f32.mrb[0].mxu0
      %v4187 = vadd.f32 0.0, %v4186
      %v4188 = vpop.f32.mrb[0].mxu0
      %4189 = vmatprep.mubr.bf16.mxu0 0
      %4190 = vmatmul.mubr.bf16.gmra.mrb[0].mxu0 %v3075
      %v4191 = vpop.f32.mrb[0].mxu0
      %v4192 = vadd.f32 0.0, %v4191
      %v4193 = vpop.f32.mrb[0].mxu0
      %v4194 = vpop.f32.mrb[0].mxu0
      %v4195 = vadd.f32 0.0, %v4194
      %v4196 = vpop.f32.mrb[0].mxu0
      %4197 = vmatprep.mubr.bf16.mxu0 0
      %4198 = vmatmul.mubr.bf16.gmra.mrb[0].mxu0 %v3077
      %v4199 = vpop.f32.mrb[0].mxu0
      %v4200 = vadd.f32 0.0, %v4199
      %v4201 = vpop.f32.mrb[0].mxu0
      %v4202 = vpop.f32.mrb[0].mxu0
      %v4203 = vadd.f32 0.0, %v4202
      %v4204 = vpop.f32.mrb[0].mxu0
      %4205 = vmatprep.mubr.bf16.mxu0 0
      %4206 = vmatmul.mubr.bf16.gmra.mrb[0].mxu0 %v3079
      %v4207 = vpop.f32.mrb[0].mxu0
      %v4208 = vadd.f32 0.0, %v4207
      %v4209 = vpop.f32.mrb[0].mxu0
      %v4210 = vpop.f32.mrb[0].mxu0
      %v4211 = vadd.f32 0.0, %v4210
      %v4212 = vpop.f32.mrb[0].mxu0
      %4213 = vmatprep.mubr.bf16.mxu0 0
      %4214 = vmatmul.mubr.bf16.gmra.mrb[0].mxu0 %v3081
      %v4215 = vpop.f32.mrb[0].mxu0
      %v4216 = vadd.f32 0.0, %v4215
      %v4217 = vpop.f32.mrb[0].mxu0
      %v4218 = vpop.f32.mrb[0].mxu0
      %v4219 = vadd.f32 0.0, %v4218
      %v4220 = vpop.f32.mrb[0].mxu0
      %4221 = vmatprep.mubr.bf16.mxu0 0
      %4222 = vmatmul.mubr.bf16.gmra.mrb[0].mxu0 %v3083
      %v4223 = vpop.f32.mrb[0].mxu0
      %v4224 = vadd.f32 0.0, %v4223
      %v4225 = vpop.f32.mrb[0].mxu0
      %v4226 = vpop.f32.mrb[0].mxu0
      %v4227 = vadd.f32 0.0, %v4226
      %v4228 = vpop.f32.mrb[0].mxu0
      %4229 = vmatprep.mubr.bf16.mxu0 0
      %4230 = vmatmul.mubr.bf16.gmra.mrb[0].mxu0 %v3085
      %v4231 = vpop.f32.mrb[0].mxu0
      %v4232 = vadd.f32 0.0, %v4231
      %v4233 = vpop.f32.mrb[0].mxu0
      %v4234 = vpop.f32.mrb[0].mxu0
      %v4235 = vadd.f32 0.0, %v4234
      %v4236 = vpop.f32.mrb[0].mxu0
      %4237 = vmatprep.mubr.bf16.mxu0 0
      %4238 = vmatmul.mubr.bf16.gmra.mrb[0].mxu0 %v3087
      %v4239 = vpop.f32.mrb[0].mxu0
      %v4240 = vadd.f32 0.0, %v4239
      %v4241 = vpop.f32.mrb[0].mxu0
      %v4242 = vpop.f32.mrb[0].mxu0
      %v4243 = vadd.f32 0.0, %v4242
      %v4244 = vpop.f32.mrb[0].mxu0
      %4245 = vmatprep.mubr.bf16.mxu0 0
      %4246 = vmatmul.mubr.bf16.gmra.mrb[0].mxu0 %v3089
      %v4247 = vpop.f32.mrb[0].mxu0
      %v4248 = vadd.f32 0.0, %v4247
      %v4249 = vpop.f32.mrb[0].mxu0
      %v4250 = vpop.f32.mrb[0].mxu0
      %v4251 = vadd.f32 0.0, %v4250
      %v4252 = vpop.f32.mrb[0].mxu0
      %4253 = vmatprep.mubr.bf16.mxu0 0
      %4254 = vmatmul.mubr.bf16.gmra.mrb[0].mxu0 %v3091
      %v4255 = vpop.f32.mrb[0].mxu0
      %v4256 = vadd.f32 0.0, %v4255
      %v4257 = vpop.f32.mrb[0].mxu0
      %v4258 = vpop.f32.mrb[0].mxu0
      %v4259 = vadd.f32 0.0, %v4258
      %v4260 = vpop.f32.mrb[0].mxu0
      %4261 = vmatprep.mubr.bf16.mxu0 0
      %4262 = vmatmul.mubr.bf16.gmra.mrb[0].mxu0 %v3093
      %v4263 = vpop.f32.mrb[0].mxu0
      %v4264 = vadd.f32 0.0, %v4263
      %v4265 = vpop.f32.mrb[0].mxu0
      %v4266 = vpop.f32.mrb[0].mxu0
      %v4267 = vadd.f32 0.0, %v4266
      %v4268 = vpop.f32.mrb[0].mxu0
      %4269 = vmatprep.mubr.bf16.mxu0 0
      %4270 = vmatmul.mubr.bf16.gmra.mrb[0].mxu0 %v3095
      %v4271 = vpop.f32.mrb[0].mxu0
      %v4272 = vadd.f32 0.0, %v4271
      %v4273 = vpop.f32.mrb[0].mxu0
      %v4274 = vpop.f32.mrb[0].mxu0
      %v4275 = vadd.f32 0.0, %v4274
      %v4276 = vpop.f32.mrb[0].mxu0
      %4277 = vmatprep.mubr.bf16.mxu0 0
      %4278 = vmatmul.mubr.bf16.gmra.mrb[0].mxu0 %v3097
      %v4279 = vpop.f32.mrb[0].mxu0
      %v4280 = vadd.f32 0.0, %v4279
      %v4281 = vpop.f32.mrb[0].mxu0
      %v4282 = vpop.f32.mrb[0].mxu0
      %v4283 = vadd.f32 0.0, %v4282
      %v4284 = vpop.f32.mrb[0].mxu0
      %4285 = vmatprep.mubr.bf16.mxu0 0
      %4286 = vmatmul.mubr.bf16.gmra.mrb[0].mxu0 %v3099
      %v4287 = vpop.f32.mrb[0].mxu0
      %v4288 = vadd.f32 0.0, %v4287
      %v4289 = vpop.f32.mrb[0].mxu0
      %v4290 = vpop.f32.mrb[0].mxu0
      %v4291 = vadd.f32 0.0, %v4290
      %v4292 = vpop.f32.mrb[0].mxu0
      %4293 = vdwg.mxu0
      %v4294 = vadd.f32 %v3873, %v4040
      %v4295 = vadd.f32 %v3874, %v4043
      %v4296 = vadd.f32 %v3875, %v4048
      %v4297 = vadd.f32 %v3876, %v4051
      %v4298 = vadd.f32 %v3877, %v4056
      %v4299 = vadd.f32 %v3878, %v4059
      %v4300 = vadd.f32 %v3879, %v4064
      %v4301 = vadd.f32 %v3880, %v4067
      %v4302 = vadd.f32 %v3881, %v4072
      %v4303 = vadd.f32 %v3882, %v4075
      %v4304 = vadd.f32 %v3883, %v4080
      %v4305 = vadd.f32 %v3884, %v4083
      %v4306 = vadd.f32 %v3885, %v4088
      %v4307 = vadd.f32 %v3886, %v4091
      %v4308 = vadd.f32 %v3887, %v4096
      %v4309 = vadd.f32 %v3888, %v4099
      %v4310 = vadd.f32 %v3889, %v4104
      %v4311 = vadd.f32 %v3890, %v4107
      %v4312 = vadd.f32 %v3891, %v4112
      %v4313 = vadd.f32 %v3892, %v4115
      %v4314 = vadd.f32 %v3893, %v4120
      %v4315 = vadd.f32 %v3894, %v4123
      %v4316 = vadd.f32 %v3895, %v4128
      %v4317 = vadd.f32 %v3896, %v4131
      %v4318 = vadd.f32 %v3897, %v4136
      %v4319 = vadd.f32 %v3898, %v4139
      %v4320 = vadd.f32 %v3899, %v4144
      %v4321 = vadd.f32 %v3900, %v4147
      %v4322 = vadd.f32 %v3901, %v4152
      %v4323 = vadd.f32 %v3902, %v4155
      %v4324 = vadd.f32 %v3903, %v4160
      %v4325 = vadd.f32 %v3904, %v4163
      %v4326 = vadd.f32 %v3905, %v4168
      %v4327 = vadd.f32 %v3906, %v4171
      %v4328 = vadd.f32 %v3907, %v4176
      %v4329 = vadd.f32 %v3908, %v4179
      %v4330 = vadd.f32 %v3909, %v4184
      %v4331 = vadd.f32 %v3910, %v4187
      %v4332 = vadd.f32 %v3911, %v4192
      %v4333 = vadd.f32 %v3912, %v4195
      %v4334 = vadd.f32 %v3913, %v4200
      %v4335 = vadd.f32 %v3914, %v4203
      %v4336 = vadd.f32 %v3915, %v4208
      %v4337 = vadd.f32 %v3916, %v4211
      %v4338 = vadd.f32 %v3917, %v4216
      %v4339 = vadd.f32 %v3918, %v4219
      %v4340 = vadd.f32 %v3919, %v4224
      %v4341 = vadd.f32 %v3920, %v4227
      %v4342 = vadd.f32 %v3921, %v4232
      %v4343 = vadd.f32 %v3922, %v4235
      %v4344 = vadd.f32 %v3923, %v4240
      %v4345 = vadd.f32 %v3924, %v4243
      %v4346 = vadd.f32 %v3925, %v4248
      %v4347 = vadd.f32 %v3926, %v4251
      %v4348 = vadd.f32 %v3927, %v4256
      %v4349 = vadd.f32 %v3928, %v4259
      %v4350 = vadd.f32 %v3929, %v4264
      %v4351 = vadd.f32 %v3930, %v4267
      %v4352 = vadd.f32 %v3931, %v4272
      %v4353 = vadd.f32 %v3932, %v4275
      %v4354 = vadd.f32 %v3933, %v4280
      %v4355 = vadd.f32 %v3934, %v4283
      %v4356 = vadd.f32 %v3935, %v4288
      %v4357 = vadd.f32 %v3936, %v4291
      %v4358 = vld [vmem:[%s899 + $0x8] sm:$0xff]
      %v4359 = vld [vmem:[%s899 + $0x10] sm:$0x1]
      %v4360 = vld [vmem:[%s899 + $0x20] sm:$0xff]
      %v4361 = vld [vmem:[%s899 + $0x28] sm:$0x1]
      %v4362 = vld [vmem:[%s899 + $0x38] sm:$0xff]
      %v4363 = vld [vmem:[%s899 + $0x40] sm:$0x1]
      %v4364 = vld [vmem:[%s899 + $0x50] sm:$0xff]
      %v4365 = vld [vmem:[%s899 + $0x58] sm:$0x1]
      %v4366 = vld [vmem:[%s899 + $0x68] sm:$0xff]
      %v4367 = vld [vmem:[%s899 + $0x70] sm:$0x1]
      %v4368 = vld [vmem:[%s899 + $0x80] sm:$0xff]
      %v4369 = vld [vmem:[%s899 + $0x88] sm:$0x1]
      %v4370 = vld [vmem:[%s899 + $0x98] sm:$0xff]
      %v4371 = vld [vmem:[%s899 + $0xa0] sm:$0x1]
      %v4372 = vld [vmem:[%s899 + $0xb0] sm:$0xff]
      %v4373 = vld [vmem:[%s899 + $0xb8] sm:$0x1]
      %v4374 = vld [vmem:[%s899 + $0xc8] sm:$0xff]
      %v4375 = vld [vmem:[%s899 + $0xd0] sm:$0x1]
      %v4376 = vld [vmem:[%s899 + $0xe0] sm:$0xff]
      %v4377 = vld [vmem:[%s899 + $0xe8] sm:$0x1]
      %v4378 = vld [vmem:[%s899 + $0xf8] sm:$0xff]
      %v4379 = vld [vmem:[%s899 + $0x100] sm:$0x1]
      %v4380 = vld [vmem:[%s899 + $0x110] sm:$0xff]
      %v4381 = vld [vmem:[%s899 + $0x118] sm:$0x1]
      %v4382 = vld [vmem:[%s899 + $0x128] sm:$0xff]
      %v4383 = vld [vmem:[%s899 + $0x130] sm:$0x1]
      %v4384 = vld [vmem:[%s899 + $0x140] sm:$0xff]
      %v4385 = vld [vmem:[%s899 + $0x148] sm:$0x1]
      %v4386 = vld [vmem:[%s899 + $0x158] sm:$0xff]
      %v4387 = vld [vmem:[%s899 + $0x160] sm:$0x1]
      %v4388 = vld [vmem:[%s899 + $0x170] sm:$0xff]
      %v4389 = vld [vmem:[%s899 + $0x178] sm:$0x1]
      %v4390 = vld [vmem:[%s899 + $0x1b8] sm:$0xff]
      %v4391 = vld [vmem:[%s899 + $0x1c0] sm:$0x1]
      %v4392 = vld [vmem:[%s899 + $0x1d0] sm:$0xff]
      %v4393 = vld [vmem:[%s899 + $0x1d8] sm:$0x1]
      %v4394 = vld [vmem:[%s899 + $0x1e8] sm:$0xff]
      %v4395 = vld [vmem:[%s899 + $0x1f0] sm:$0x1]
      %v4396 = vld [vmem:[%s899 + $0x200] sm:$0xff]
      %v4397 = vld [vmem:[%s899 + $0x208] sm:$0x1]
      %v4398 = vld [vmem:[%s899 + $0x218] sm:$0xff]
      %v4399 = vld [vmem:[%s899 + $0x220] sm:$0x1]
      %v4400 = vld [vmem:[%s899 + $0x230] sm:$0xff]
      %v4401 = vld [vmem:[%s899 + $0x238] sm:$0x1]
      %v4402 = vld [vmem:[%s899 + $0x248] sm:$0xff]
      %v4403 = vld [vmem:[%s899 + $0x250] sm:$0x1]
      %v4404 = vld [vmem:[%s899 + $0x260] sm:$0xff]
      %v4405 = vld [vmem:[%s899 + $0x268] sm:$0x1]
      %v4406 = vld [vmem:[%s899 + $0x278] sm:$0xff]
      %v4407 = vld [vmem:[%s899 + $0x280] sm:$0x1]
      %v4408 = vld [vmem:[%s899 + $0x290] sm:$0xff]
      %v4409 = vld [vmem:[%s899 + $0x298] sm:$0x1]
      %v4410 = vld [vmem:[%s899 + $0x2a8] sm:$0xff]
      %v4411 = vld [vmem:[%s899 + $0x2b0] sm:$0x1]
      %v4412 = vld [vmem:[%s899 + $0x2c0] sm:$0xff]
      %v4413 = vld [vmem:[%s899 + $0x2c8] sm:$0x1]
      %v4414 = vld [vmem:[%s899 + $0x2d8] sm:$0xff]
      %v4415 = vld [vmem:[%s899 + $0x2e0] sm:$0x1]
      %v4416 = vld [vmem:[%s899 + $0x2f0] sm:$0xff]
      %v4417 = vld [vmem:[%s899 + $0x2f8] sm:$0x1]
      %v4418 = vld [vmem:[%s899 + $0x308] sm:$0xff]
      %v4419 = vld [vmem:[%s899 + $0x310] sm:$0x1]
      %v4420 = vld [vmem:[%s899 + $0x320] sm:$0xff]
      %v4421 = vld [vmem:[%s899 + $0x328] sm:$0x1]
      %v4423 = vshrl.u32 %v4358, 16
      %v4425 = vshll.u32 %v4358, 16
      %v4427 = vrot.slane %v4425, 1
      %v4428 = vor.u32 %v4423, %v4427
      %v4430 = vshll.u32 %v4359, 16
      %v4432 = vrot.slane %v4430, 1
      %v4433 = vsel %vm2198, %v4428, %v4432
      %v4435 = vshrl.u32 %v4360, 16
      %v4437 = vshll.u32 %v4360, 16
      %v4439 = vrot.slane %v4437, 1
      %v4440 = vor.u32 %v4435, %v4439
      %v4442 = vshll.u32 %v4361, 16
      %v4444 = vrot.slane %v4442, 1
      %v4445 = vsel %vm2198, %v4440, %v4444
      %v4447 = vshrl.u32 %v4362, 16
      %v4449 = vshll.u32 %v4362, 16
      %v4451 = vrot.slane %v4449, 1
      %v4452 = vor.u32 %v4447, %v4451
      %v4454 = vshll.u32 %v4363, 16
      %v4456 = vrot.slane %v4454, 1
      %v4457 = vsel %vm2198, %v4452, %v4456
      %v4459 = vshrl.u32 %v4364, 16
      %v4461 = vshll.u32 %v4364, 16
      %v4463 = vrot.slane %v4461, 1
      %v4464 = vor.u32 %v4459, %v4463
      %v4466 = vshll.u32 %v4365, 16
      %v4468 = vrot.slane %v4466, 1
      %v4469 = vsel %vm2198, %v4464, %v4468
      %v4471 = vshrl.u32 %v4366, 16
      %v4473 = vshll.u32 %v4366, 16
      %v4475 = vrot.slane %v4473, 1
      %v4476 = vor.u32 %v4471, %v4475
      %v4478 = vshll.u32 %v4367, 16
      %v4480 = vrot.slane %v4478, 1
      %v4481 = vsel %vm2198, %v4476, %v4480
      %v4483 = vshrl.u32 %v4368, 16
      %v4485 = vshll.u32 %v4368, 16
      %v4487 = vrot.slane %v4485, 1
      %v4488 = vor.u32 %v4483, %v4487
      %v4490 = vshll.u32 %v4369, 16
      %v4492 = vrot.slane %v4490, 1
      %v4493 = vsel %vm2198, %v4488, %v4492
      %v4495 = vshrl.u32 %v4370, 16
      %v4497 = vshll.u32 %v4370, 16
      %v4499 = vrot.slane %v4497, 1
      %v4500 = vor.u32 %v4495, %v4499
      %v4502 = vshll.u32 %v4371, 16
      %v4504 = vrot.slane %v4502, 1
      %v4505 = vsel %vm2198, %v4500, %v4504
      %v4507 = vshrl.u32 %v4372, 16
      %v4509 = vshll.u32 %v4372, 16
      %v4511 = vrot.slane %v4509, 1
      %v4512 = vor.u32 %v4507, %v4511
      %v4514 = vshll.u32 %v4373, 16
      %v4516 = vrot.slane %v4514, 1
      %v4517 = vsel %vm2198, %v4512, %v4516
      %v4519 = vshrl.u32 %v4374, 16
      %v4521 = vshll.u32 %v4374, 16
      %v4523 = vrot.slane %v4521, 1
      %v4524 = vor.u32 %v4519, %v4523
      %v4526 = vshll.u32 %v4375, 16
      %v4528 = vrot.slane %v4526, 1
      %v4529 = vsel %vm2198, %v4524, %v4528
      %v4531 = vshrl.u32 %v4376, 16
      %v4533 = vshll.u32 %v4376, 16
      %v4535 = vrot.slane %v4533, 1
      %v4536 = vor.u32 %v4531, %v4535
      %v4538 = vshll.u32 %v4377, 16
      %v4540 = vrot.slane %v4538, 1
      %v4541 = vsel %vm2198, %v4536, %v4540
      %v4543 = vshrl.u32 %v4378, 16
      %v4545 = vshll.u32 %v4378, 16
      %v4547 = vrot.slane %v4545, 1
      %v4548 = vor.u32 %v4543, %v4547
      %v4550 = vshll.u32 %v4379, 16
      %v4552 = vrot.slane %v4550, 1
      %v4553 = vsel %vm2198, %v4548, %v4552
      %v4555 = vshrl.u32 %v4380, 16
      %v4557 = vshll.u32 %v4380, 16
      %v4559 = vrot.slane %v4557, 1
      %v4560 = vor.u32 %v4555, %v4559
      %v4562 = vshll.u32 %v4381, 16
      %v4564 = vrot.slane %v4562, 1
      %v4565 = vsel %vm2198, %v4560, %v4564
      %v4567 = vshrl.u32 %v4382, 16
      %v4569 = vshll.u32 %v4382, 16
      %v4571 = vrot.slane %v4569, 1
      %v4572 = vor.u32 %v4567, %v4571
      %v4574 = vshll.u32 %v4383, 16
      %v4576 = vrot.slane %v4574, 1
      %v4577 = vsel %vm2198, %v4572, %v4576
      %v4579 = vshrl.u32 %v4384, 16
      %v4581 = vshll.u32 %v4384, 16
      %v4583 = vrot.slane %v4581, 1
      %v4584 = vor.u32 %v4579, %v4583
      %v4586 = vshll.u32 %v4385, 16
      %v4588 = vrot.slane %v4586, 1
      %v4589 = vsel %vm2198, %v4584, %v4588
      %v4591 = vshrl.u32 %v4386, 16
      %v4593 = vshll.u32 %v4386, 16
      %v4595 = vrot.slane %v4593, 1
      %v4596 = vor.u32 %v4591, %v4595
      %v4598 = vshll.u32 %v4387, 16
      %v4600 = vrot.slane %v4598, 1
      %v4601 = vsel %vm2198, %v4596, %v4600
      %v4603 = vshrl.u32 %v4388, 16
      %v4605 = vshll.u32 %v4388, 16
      %v4607 = vrot.slane %v4605, 1
      %v4608 = vor.u32 %v4603, %v4607
      %v4610 = vshll.u32 %v4389, 16
      %v4612 = vrot.slane %v4610, 1
      %v4613 = vsel %vm2198, %v4608, %v4612
      %v4615 = vshrl.u32 %v4390, 16
      %v4617 = vshll.u32 %v4390, 16
      %v4619 = vrot.slane %v4617, 1
      %v4620 = vor.u32 %v4615, %v4619
      %v4622 = vshll.u32 %v4391, 16
      %v4624 = vrot.slane %v4622, 1
      %v4625 = vsel %vm2198, %v4620, %v4624
      %v4627 = vshrl.u32 %v4392, 16
      %v4629 = vshll.u32 %v4392, 16
      %v4631 = vrot.slane %v4629, 1
      %v4632 = vor.u32 %v4627, %v4631
      %v4634 = vshll.u32 %v4393, 16
      %v4636 = vrot.slane %v4634, 1
      %v4637 = vsel %vm2198, %v4632, %v4636
      %v4639 = vshrl.u32 %v4394, 16
      %v4641 = vshll.u32 %v4394, 16
      %v4643 = vrot.slane %v4641, 1
      %v4644 = vor.u32 %v4639, %v4643
      %v4646 = vshll.u32 %v4395, 16
      %v4648 = vrot.slane %v4646, 1
      %v4649 = vsel %vm2198, %v4644, %v4648
      %v4651 = vshrl.u32 %v4396, 16
      %v4653 = vshll.u32 %v4396, 16
      %v4655 = vrot.slane %v4653, 1
      %v4656 = vor.u32 %v4651, %v4655
      %v4658 = vshll.u32 %v4397, 16
      %v4660 = vrot.slane %v4658, 1
      %v4661 = vsel %vm2198, %v4656, %v4660
      %v4663 = vshrl.u32 %v4398, 16
      %v4665 = vshll.u32 %v4398, 16
      %v4667 = vrot.slane %v4665, 1
      %v4668 = vor.u32 %v4663, %v4667
      %v4670 = vshll.u32 %v4399, 16
      %v4672 = vrot.slane %v4670, 1
      %v4673 = vsel %vm2198, %v4668, %v4672
      %v4675 = vshrl.u32 %v4400, 16
      %v4677 = vshll.u32 %v4400, 16
      %v4679 = vrot.slane %v4677, 1
      %v4680 = vor.u32 %v4675, %v4679
      %v4682 = vshll.u32 %v4401, 16
      %v4684 = vrot.slane %v4682, 1
      %v4685 = vsel %vm2198, %v4680, %v4684
      %v4687 = vshrl.u32 %v4402, 16
      %v4689 = vshll.u32 %v4402, 16
      %v4691 = vrot.slane %v4689, 1
      %v4692 = vor.u32 %v4687, %v4691
      %v4694 = vshll.u32 %v4403, 16
      %v4696 = vrot.slane %v4694, 1
      %v4697 = vsel %vm2198, %v4692, %v4696
      %v4699 = vshrl.u32 %v4404, 16
      %v4701 = vshll.u32 %v4404, 16
      %v4703 = vrot.slane %v4701, 1
      %v4704 = vor.u32 %v4699, %v4703
      %v4706 = vshll.u32 %v4405, 16
      %v4708 = vrot.slane %v4706, 1
      %v4709 = vsel %vm2198, %v4704, %v4708
      %v4711 = vshrl.u32 %v4406, 16
      %v4713 = vshll.u32 %v4406, 16
      %v4715 = vrot.slane %v4713, 1
      %v4716 = vor.u32 %v4711, %v4715
      %v4718 = vshll.u32 %v4407, 16
      %v4720 = vrot.slane %v4718, 1
      %v4721 = vsel %vm2198, %v4716, %v4720
      %v4723 = vshrl.u32 %v4408, 16
      %v4725 = vshll.u32 %v4408, 16
      %v4727 = vrot.slane %v4725, 1
      %v4728 = vor.u32 %v4723, %v4727
      %v4730 = vshll.u32 %v4409, 16
      %v4732 = vrot.slane %v4730, 1
      %v4733 = vsel %vm2198, %v4728, %v4732
      %v4735 = vshrl.u32 %v4410, 16
      %v4737 = vshll.u32 %v4410, 16
      %v4739 = vrot.slane %v4737, 1
      %v4740 = vor.u32 %v4735, %v4739
      %v4742 = vshll.u32 %v4411, 16
      %v4744 = vrot.slane %v4742, 1
      %v4745 = vsel %vm2198, %v4740, %v4744
      %v4747 = vshrl.u32 %v4412, 16
      %v4749 = vshll.u32 %v4412, 16
      %v4751 = vrot.slane %v4749, 1
      %v4752 = vor.u32 %v4747, %v4751
      %v4754 = vshll.u32 %v4413, 16
      %v4756 = vrot.slane %v4754, 1
      %v4757 = vsel %vm2198, %v4752, %v4756
      %v4759 = vshrl.u32 %v4414, 16
      %v4761 = vshll.u32 %v4414, 16
      %v4763 = vrot.slane %v4761, 1
      %v4764 = vor.u32 %v4759, %v4763
      %v4766 = vshll.u32 %v4415, 16
      %v4768 = vrot.slane %v4766, 1
      %v4769 = vsel %vm2198, %v4764, %v4768
      %v4771 = vshrl.u32 %v4416, 16
      %v4773 = vshll.u32 %v4416, 16
      %v4775 = vrot.slane %v4773, 1
      %v4776 = vor.u32 %v4771, %v4775
      %v4778 = vshll.u32 %v4417, 16
      %v4780 = vrot.slane %v4778, 1
      %v4781 = vsel %vm2198, %v4776, %v4780
      %v4783 = vshrl.u32 %v4418, 16
      %v4785 = vshll.u32 %v4418, 16
      %v4787 = vrot.slane %v4785, 1
      %v4788 = vor.u32 %v4783, %v4787
      %v4790 = vshll.u32 %v4419, 16
      %v4792 = vrot.slane %v4790, 1
      %v4793 = vsel %vm2198, %v4788, %v4792
      %v4795 = vshrl.u32 %v4420, 16
      %v4797 = vshll.u32 %v4420, 16
      %v4799 = vrot.slane %v4797, 1
      %v4800 = vor.u32 %v4795, %v4799
      %v4802 = vshll.u32 %v4421, 16
      %v4804 = vrot.slane %v4802, 1
      %v4805 = vsel %vm2198, %v4800, %v4804
      %s4838 = sadd.s32 %s939, 5
      %s4839 = smul.u32 %s4838, 16
      %s4840 = smul.addr %s4839, 4
      %s4841 = scalar_lea.vmem %s2, %s4840
      %v4842 = vld [vmem:[%s4841] sm:$0xf]
      %v4843 = vld [vmem:[%s4841 + $0x4] sm:$0xf]
      %v4844 = vld [vmem:[%s4841 + $0x8] sm:$0xf]
      %v4845 = vld [vmem:[%s4841 + $0xc] sm:$0xf]
      %v4846 = vld [vmem:[%s4841 + $0x10] sm:$0xf]
      %v4847 = vld [vmem:[%s4841 + $0x14] sm:$0xf]
      %v4848 = vld [vmem:[%s4841 + $0x18] sm:$0xf]
      %v4849 = vld [vmem:[%s4841 + $0x1c] sm:$0xf]
      %v4850 = vld [vmem:[%s4841 + $0x20] sm:$0xf]
      %v4851 = vld [vmem:[%s4841 + $0x24] sm:$0xf]
      %v4852 = vld [vmem:[%s4841 + $0x28] sm:$0xf]
      %v4853 = vld [vmem:[%s4841 + $0x2c] sm:$0xf]
      %v4854 = vld [vmem:[%s4841 + $0x30] sm:$0xf]
      %v4855 = vld [vmem:[%s4841 + $0x34] sm:$0xf]
      %v4856 = vld [vmem:[%s4841 + $0x38] sm:$0xf]
      %v4857 = vld [vmem:[%s4841 + $0x3c] sm:$0xf]
      %v4874 = vunpack.c.l.b16 %v4842
      %v4875 = vunpack.c.l.b16 %v4843
      %v4876 = vunpack.c.l.b16 %v4844
      %v4877 = vunpack.c.l.b16 %v4845
      %v4878 = vunpack.c.l.b16 %v4846
      %v4879 = vunpack.c.l.b16 %v4847
      %v4880 = vunpack.c.l.b16 %v4848
      %v4881 = vunpack.c.l.b16 %v4849
      %v4882 = vunpack.c.l.b16 %v4850
      %v4883 = vunpack.c.l.b16 %v4851
      %v4884 = vunpack.c.l.b16 %v4852
      %v4885 = vunpack.c.l.b16 %v4853
      %v4886 = vunpack.c.l.b16 %v4854
      %v4887 = vunpack.c.l.b16 %v4855
      %v4888 = vunpack.c.l.b16 %v4856
      %v4889 = vunpack.c.l.b16 %v4857
      %v4890 = vpack.c.b16 %v4875, %v4874
      %v4891 = vpack.c.b16 %v4877, %v4876
      %v4892 = vpack.c.b16 %v4879, %v4878
      %v4893 = vpack.c.b16 %v4881, %v4880
      %v4894 = vpack.c.b16 %v4883, %v4882
      %v4895 = vpack.c.b16 %v4885, %v4884
      %v4896 = vpack.c.b16 %v4887, %v4886
      %v4897 = vpack.c.b16 %v4889, %v4888
      %4906 = vmatprep.subr.bf16.mxu0 0
      %4907 = vmatpush1.bf16.msra.mxu0 %v4890
      %4908 = vmatprep.subr.bf16.mxu0 0
      %4909 = vmatpush1.bf16.msra.mxu0 %v4891
      %4910 = vmatprep.subr.bf16.mxu0 0
      %4911 = vmatpush1.bf16.msra.mxu0 %v4892
      %4912 = vmatprep.subr.bf16.mxu0 0
      %4913 = vmatpush1.bf16.msra.mxu0 %v4893
      %4914 = vmatprep.subr.bf16.mxu0 0
      %4915 = vmatpush1.bf16.msra.mxu0 %v4894
      %4916 = vmatprep.subr.bf16.mxu0 0
      %4917 = vmatpush1.bf16.msra.mxu0 %v4895
      %4918 = vmatprep.subr.bf16.mxu0 0
      %4919 = vmatpush1.bf16.msra.mxu0 %v4896
      %4920 = vmatprep.subr.bf16.mxu0 0
      %4921 = vmatpush1.bf16.msra.mxu0 %v4897
      %4922 = vmatprep.subr.bf16.mxu0 0
      %4923 = vmatpush1.bf16.msra.mxu0 0
      %4924 = vmatprep.subr.bf16.mxu0 0
      %4925 = vmatpush1.bf16.msra.mxu0 0
      %4926 = vmatprep.subr.bf16.mxu0 0
      %4927 = vmatpush1.bf16.msra.mxu0 0
      %4928 = vmatprep.subr.bf16.mxu0 0
      %4929 = vmatpush1.bf16.msra.mxu0 0
      %4930 = vmatprep.subr.bf16.mxu0 0
      %4931 = vmatpush1.bf16.msra.mxu0 0
      %4932 = vmatprep.subr.bf16.mxu0 0
      %4933 = vmatpush1.bf16.msra.mxu0 0
      %4934 = vmatprep.subr.bf16.mxu0 0
      %4935 = vmatpush1.bf16.msra.mxu0 0
      %4936 = vmatprep.subr.bf16.mxu0 0
      %4937 = vmatpush1.bf16.msra.mxu0 0
      %4938 = vmatprep.mubr.bf16.mxu0 0
      %4939 = vmatmul.mubr.bf16.gmra.mrb[0].mxu0 %v4433
      %v4940 = vpop.f32.mrb[0].mxu0
      %v4941 = vadd.f32 0.0, %v4940
      %v4942 = vpop.f32.mrb[0].mxu0
      %v4943 = vpop.f32.mrb[0].mxu0
      %v4944 = vadd.f32 0.0, %v4943
      %v4945 = vpop.f32.mrb[0].mxu0
      %4946 = vmatprep.mubr.bf16.mxu0 0
      %4947 = vmatmul.mubr.bf16.gmra.mrb[0].mxu0 %v4445
      %v4948 = vpop.f32.mrb[0].mxu0
      %v4949 = vadd.f32 0.0, %v4948
      %v4950 = vpop.f32.mrb[0].mxu0
      %v4951 = vpop.f32.mrb[0].mxu0
      %v4952 = vadd.f32 0.0, %v4951
      %v4953 = vpop.f32.mrb[0].mxu0
      %4954 = vmatprep.mubr.bf16.mxu0 0
      %4955 = vmatmul.mubr.bf16.gmra.mrb[0].mxu0 %v4457
      %v4956 = vpop.f32.mrb[0].mxu0
      %v4957 = vadd.f32 0.0, %v4956
      %v4958 = vpop.f32.mrb[0].mxu0
      %v4959 = vpop.f32.mrb[0].mxu0
      %v4960 = vadd.f32 0.0, %v4959
      %v4961 = vpop.f32.mrb[0].mxu0
      %4962 = vmatprep.mubr.bf16.mxu0 0
      %4963 = vmatmul.mubr.bf16.gmra.mrb[0].mxu0 %v4469
      %v4964 = vpop.f32.mrb[0].mxu0
      %v4965 = vadd.f32 0.0, %v4964
      %v4966 = vpop.f32.mrb[0].mxu0
      %v4967 = vpop.f32.mrb[0].mxu0
      %v4968 = vadd.f32 0.0, %v4967
      %v4969 = vpop.f32.mrb[0].mxu0
      %4970 = vmatprep.mubr.bf16.mxu0 0
      %4971 = vmatmul.mubr.bf16.gmra.mrb[0].mxu0 %v4481
      %v4972 = vpop.f32.mrb[0].mxu0
      %v4973 = vadd.f32 0.0, %v4972
      %v4974 = vpop.f32.mrb[0].mxu0
      %v4975 = vpop.f32.mrb[0].mxu0
      %v4976 = vadd.f32 0.0, %v4975
      %v4977 = vpop.f32.mrb[0].mxu0
      %4978 = vmatprep.mubr.bf16.mxu0 0
      %4979 = vmatmul.mubr.bf16.gmra.mrb[0].mxu0 %v4493
      %v4980 = vpop.f32.mrb[0].mxu0
      %v4981 = vadd.f32 0.0, %v4980
      %v4982 = vpop.f32.mrb[0].mxu0
      %v4983 = vpop.f32.mrb[0].mxu0
      %v4984 = vadd.f32 0.0, %v4983
      %v4985 = vpop.f32.mrb[0].mxu0
      %4986 = vmatprep.mubr.bf16.mxu0 0
      %4987 = vmatmul.mubr.bf16.gmra.mrb[0].mxu0 %v4505
      %v4988 = vpop.f32.mrb[0].mxu0
      %v4989 = vadd.f32 0.0, %v4988
      %v4990 = vpop.f32.mrb[0].mxu0
      %v4991 = vpop.f32.mrb[0].mxu0
      %v4992 = vadd.f32 0.0, %v4991
      %v4993 = vpop.f32.mrb[0].mxu0
      %4994 = vmatprep.mubr.bf16.mxu0 0
      %4995 = vmatmul.mubr.bf16.gmra.mrb[0].mxu0 %v4517
      %v4996 = vpop.f32.mrb[0].mxu0
      %v4997 = vadd.f32 0.0, %v4996
      %v4998 = vpop.f32.mrb[0].mxu0
      %v4999 = vpop.f32.mrb[0].mxu0
      %v5000 = vadd.f32 0.0, %v4999
      %v5001 = vpop.f32.mrb[0].mxu0
      %5002 = vmatprep.mubr.bf16.mxu0 0
      %5003 = vmatmul.mubr.bf16.gmra.mrb[0].mxu0 %v4529
      %v5004 = vpop.f32.mrb[0].mxu0
      %v5005 = vadd.f32 0.0, %v5004
      %v5006 = vpop.f32.mrb[0].mxu0
      %v5007 = vpop.f32.mrb[0].mxu0
      %v5008 = vadd.f32 0.0, %v5007
      %v5009 = vpop.f32.mrb[0].mxu0
      %5010 = vmatprep.mubr.bf16.mxu0 0
      %5011 = vmatmul.mubr.bf16.gmra.mrb[0].mxu0 %v4541
      %v5012 = vpop.f32.mrb[0].mxu0
      %v5013 = vadd.f32 0.0, %v5012
      %v5014 = vpop.f32.mrb[0].mxu0
      %v5015 = vpop.f32.mrb[0].mxu0
      %v5016 = vadd.f32 0.0, %v5015
      %v5017 = vpop.f32.mrb[0].mxu0
      %5018 = vmatprep.mubr.bf16.mxu0 0
      %5019 = vmatmul.mubr.bf16.gmra.mrb[0].mxu0 %v4553
      %v5020 = vpop.f32.mrb[0].mxu0
      %v5021 = vadd.f32 0.0, %v5020
      %v5022 = vpop.f32.mrb[0].mxu0
      %v5023 = vpop.f32.mrb[0].mxu0
      %v5024 = vadd.f32 0.0, %v5023
      %v5025 = vpop.f32.mrb[0].mxu0
      %5026 = vmatprep.mubr.bf16.mxu0 0
      %5027 = vmatmul.mubr.bf16.gmra.mrb[0].mxu0 %v4565
      %v5028 = vpop.f32.mrb[0].mxu0
      %v5029 = vadd.f32 0.0, %v5028
      %v5030 = vpop.f32.mrb[0].mxu0
      %v5031 = vpop.f32.mrb[0].mxu0
      %v5032 = vadd.f32 0.0, %v5031
      %v5033 = vpop.f32.mrb[0].mxu0
      %5034 = vmatprep.mubr.bf16.mxu0 0
      %5035 = vmatmul.mubr.bf16.gmra.mrb[0].mxu0 %v4577
      %v5036 = vpop.f32.mrb[0].mxu0
      %v5037 = vadd.f32 0.0, %v5036
      %v5038 = vpop.f32.mrb[0].mxu0
      %v5039 = vpop.f32.mrb[0].mxu0
      %v5040 = vadd.f32 0.0, %v5039
      %v5041 = vpop.f32.mrb[0].mxu0
      %5042 = vmatprep.mubr.bf16.mxu0 0
      %5043 = vmatmul.mubr.bf16.gmra.mrb[0].mxu0 %v4589
      %v5044 = vpop.f32.mrb[0].mxu0
      %v5045 = vadd.f32 0.0, %v5044
      %v5046 = vpop.f32.mrb[0].mxu0
      %v5047 = vpop.f32.mrb[0].mxu0
      %v5048 = vadd.f32 0.0, %v5047
      %v5049 = vpop.f32.mrb[0].mxu0
      %5050 = vmatprep.mubr.bf16.mxu0 0
      %5051 = vmatmul.mubr.bf16.gmra.mrb[0].mxu0 %v4601
      %v5052 = vpop.f32.mrb[0].mxu0
      %v5053 = vadd.f32 0.0, %v5052
      %v5054 = vpop.f32.mrb[0].mxu0
      %v5055 = vpop.f32.mrb[0].mxu0
      %v5056 = vadd.f32 0.0, %v5055
      %v5057 = vpop.f32.mrb[0].mxu0
      %5058 = vmatprep.mubr.bf16.mxu0 0
      %5059 = vmatmul.mubr.bf16.gmra.mrb[0].mxu0 %v4613
      %v5060 = vpop.f32.mrb[0].mxu0
      %v5061 = vadd.f32 0.0, %v5060
      %v5062 = vpop.f32.mrb[0].mxu0
      %v5063 = vpop.f32.mrb[0].mxu0
      %v5064 = vadd.f32 0.0, %v5063
      %v5065 = vpop.f32.mrb[0].mxu0
      %5066 = vmatprep.mubr.bf16.mxu0 0
      %5067 = vmatmul.mubr.bf16.gmra.mrb[0].mxu0 %v4625
      %v5068 = vpop.f32.mrb[0].mxu0
      %v5069 = vadd.f32 0.0, %v5068
      %v5070 = vpop.f32.mrb[0].mxu0
      %v5071 = vpop.f32.mrb[0].mxu0
      %v5072 = vadd.f32 0.0, %v5071
      %v5073 = vpop.f32.mrb[0].mxu0
      %5074 = vmatprep.mubr.bf16.mxu0 0
      %5075 = vmatmul.mubr.bf16.gmra.mrb[0].mxu0 %v4637
      %v5076 = vpop.f32.mrb[0].mxu0
      %v5077 = vadd.f32 0.0, %v5076
      %v5078 = vpop.f32.mrb[0].mxu0
      %v5079 = vpop.f32.mrb[0].mxu0
      %v5080 = vadd.f32 0.0, %v5079
      %v5081 = vpop.f32.mrb[0].mxu0
      %5082 = vmatprep.mubr.bf16.mxu0 0
      %5083 = vmatmul.mubr.bf16.gmra.mrb[0].mxu0 %v4649
      %v5084 = vpop.f32.mrb[0].mxu0
      %v5085 = vadd.f32 0.0, %v5084
      %v5086 = vpop.f32.mrb[0].mxu0
      %v5087 = vpop.f32.mrb[0].mxu0
      %v5088 = vadd.f32 0.0, %v5087
      %v5089 = vpop.f32.mrb[0].mxu0
      %5090 = vmatprep.mubr.bf16.mxu0 0
      %5091 = vmatmul.mubr.bf16.gmra.mrb[0].mxu0 %v4661
      %v5092 = vpop.f32.mrb[0].mxu0
      %v5093 = vadd.f32 0.0, %v5092
      %v5094 = vpop.f32.mrb[0].mxu0
      %v5095 = vpop.f32.mrb[0].mxu0
      %v5096 = vadd.f32 0.0, %v5095
      %v5097 = vpop.f32.mrb[0].mxu0
      %5098 = vmatprep.mubr.bf16.mxu0 0
      %5099 = vmatmul.mubr.bf16.gmra.mrb[0].mxu0 %v4673
      %v5100 = vpop.f32.mrb[0].mxu0
      %v5101 = vadd.f32 0.0, %v5100
      %v5102 = vpop.f32.mrb[0].mxu0
      %v5103 = vpop.f32.mrb[0].mxu0
      %v5104 = vadd.f32 0.0, %v5103
      %v5105 = vpop.f32.mrb[0].mxu0
      %5106 = vmatprep.mubr.bf16.mxu0 0
      %5107 = vmatmul.mubr.bf16.gmra.mrb[0].mxu0 %v4685
      %v5108 = vpop.f32.mrb[0].mxu0
      %v5109 = vadd.f32 0.0, %v5108
      %v5110 = vpop.f32.mrb[0].mxu0
      %v5111 = vpop.f32.mrb[0].mxu0
      %v5112 = vadd.f32 0.0, %v5111
      %v5113 = vpop.f32.mrb[0].mxu0
      %5114 = vmatprep.mubr.bf16.mxu0 0
      %5115 = vmatmul.mubr.bf16.gmra.mrb[0].mxu0 %v4697
      %v5116 = vpop.f32.mrb[0].mxu0
      %v5117 = vadd.f32 0.0, %v5116
      %v5118 = vpop.f32.mrb[0].mxu0
      %v5119 = vpop.f32.mrb[0].mxu0
      %v5120 = vadd.f32 0.0, %v5119
      %v5121 = vpop.f32.mrb[0].mxu0
      %5122 = vmatprep.mubr.bf16.mxu0 0
      %5123 = vmatmul.mubr.bf16.gmra.mrb[0].mxu0 %v4709
      %v5124 = vpop.f32.mrb[0].mxu0
      %v5125 = vadd.f32 0.0, %v5124
      %v5126 = vpop.f32.mrb[0].mxu0
      %v5127 = vpop.f32.mrb[0].mxu0
      %v5128 = vadd.f32 0.0, %v5127
      %v5129 = vpop.f32.mrb[0].mxu0
      %5130 = vmatprep.mubr.bf16.mxu0 0
      %5131 = vmatmul.mubr.bf16.gmra.mrb[0].mxu0 %v4721
      %v5132 = vpop.f32.mrb[0].mxu0
      %v5133 = vadd.f32 0.0, %v5132
      %v5134 = vpop.f32.mrb[0].mxu0
      %v5135 = vpop.f32.mrb[0].mxu0
      %v5136 = vadd.f32 0.0, %v5135
      %v5137 = vpop.f32.mrb[0].mxu0
      %5138 = vmatprep.mubr.bf16.mxu0 0
      %5139 = vmatmul.mubr.bf16.gmra.mrb[0].mxu0 %v4733
      %v5140 = vpop.f32.mrb[0].mxu0
      %v5141 = vadd.f32 0.0, %v5140
      %v5142 = vpop.f32.mrb[0].mxu0
      %v5143 = vpop.f32.mrb[0].mxu0
      %v5144 = vadd.f32 0.0, %v5143
      %v5145 = vpop.f32.mrb[0].mxu0
      %5146 = vmatprep.mubr.bf16.mxu0 0
      %5147 = vmatmul.mubr.bf16.gmra.mrb[0].mxu0 %v4745
      %v5148 = vpop.f32.mrb[0].mxu0
      %v5149 = vadd.f32 0.0, %v5148
      %v5150 = vpop.f32.mrb[0].mxu0
      %v5151 = vpop.f32.mrb[0].mxu0
      %v5152 = vadd.f32 0.0, %v5151
      %v5153 = vpop.f32.mrb[0].mxu0
      %5154 = vmatprep.mubr.bf16.mxu0 0
      %5155 = vmatmul.mubr.bf16.gmra.mrb[0].mxu0 %v4757
      %v5156 = vpop.f32.mrb[0].mxu0
      %v5157 = vadd.f32 0.0, %v5156
      %v5158 = vpop.f32.mrb[0].mxu0
      %v5159 = vpop.f32.mrb[0].mxu0
      %v5160 = vadd.f32 0.0, %v5159
      %v5161 = vpop.f32.mrb[0].mxu0
      %5162 = vmatprep.mubr.bf16.mxu0 0
      %5163 = vmatmul.mubr.bf16.gmra.mrb[0].mxu0 %v4769
      %v5164 = vpop.f32.mrb[0].mxu0
      %v5165 = vadd.f32 0.0, %v5164
      %v5166 = vpop.f32.mrb[0].mxu0
      %v5167 = vpop.f32.mrb[0].mxu0
      %v5168 = vadd.f32 0.0, %v5167
      %v5169 = vpop.f32.mrb[0].mxu0
      %5170 = vmatprep.mubr.bf16.mxu0 0
      %5171 = vmatmul.mubr.bf16.gmra.mrb[0].mxu0 %v4781
      %v5172 = vpop.f32.mrb[0].mxu0
      %v5173 = vadd.f32 0.0, %v5172
      %v5174 = vpop.f32.mrb[0].mxu0
      %v5175 = vpop.f32.mrb[0].mxu0
      %v5176 = vadd.f32 0.0, %v5175
      %v5177 = vpop.f32.mrb[0].mxu0
      %5178 = vmatprep.mubr.bf16.mxu0 0
      %5179 = vmatmul.mubr.bf16.gmra.mrb[0].mxu0 %v4793
      %v5180 = vpop.f32.mrb[0].mxu0
      %v5181 = vadd.f32 0.0, %v5180
      %v5182 = vpop.f32.mrb[0].mxu0
      %v5183 = vpop.f32.mrb[0].mxu0
      %v5184 = vadd.f32 0.0, %v5183
      %v5185 = vpop.f32.mrb[0].mxu0
      %5186 = vmatprep.mubr.bf16.mxu0 0
      %5187 = vmatmul.mubr.bf16.gmra.mrb[0].mxu0 %v4805
      %v5188 = vpop.f32.mrb[0].mxu0
      %v5189 = vadd.f32 0.0, %v5188
      %v5190 = vpop.f32.mrb[0].mxu0
      %v5191 = vpop.f32.mrb[0].mxu0
      %v5192 = vadd.f32 0.0, %v5191
      %v5193 = vpop.f32.mrb[0].mxu0
      %5194 = vdwg.mxu0
      %v5195 = vadd.f32 %v4294, %v4941
      %v5196 = vadd.f32 %v4295, %v4944
      %v5197 = vadd.f32 %v4296, %v4949
      %v5198 = vadd.f32 %v4297, %v4952
      %v5199 = vadd.f32 %v4298, %v4957
      %v5200 = vadd.f32 %v4299, %v4960
      %v5201 = vadd.f32 %v4300, %v4965
      %v5202 = vadd.f32 %v4301, %v4968
      %v5203 = vadd.f32 %v4302, %v4973
      %v5204 = vadd.f32 %v4303, %v4976
      %v5205 = vadd.f32 %v4304, %v4981
      %v5206 = vadd.f32 %v4305, %v4984
      %v5207 = vadd.f32 %v4306, %v4989
      %v5208 = vadd.f32 %v4307, %v4992
      %v5209 = vadd.f32 %v4308, %v4997
      %v5210 = vadd.f32 %v4309, %v5000
      %v5211 = vadd.f32 %v4310, %v5005
      %v5212 = vadd.f32 %v4311, %v5008
      %v5213 = vadd.f32 %v4312, %v5013
      %v5214 = vadd.f32 %v4313, %v5016
      %v5215 = vadd.f32 %v4314, %v5021
      %v5216 = vadd.f32 %v4315, %v5024
      %v5217 = vadd.f32 %v4316, %v5029
      %v5218 = vadd.f32 %v4317, %v5032
      %v5219 = vadd.f32 %v4318, %v5037
      %v5220 = vadd.f32 %v4319, %v5040
      %v5221 = vadd.f32 %v4320, %v5045
      %v5222 = vadd.f32 %v4321, %v5048
      %v5223 = vadd.f32 %v4322, %v5053
      %v5224 = vadd.f32 %v4323, %v5056
      %v5225 = vadd.f32 %v4324, %v5061
      %v5226 = vadd.f32 %v4325, %v5064
      %v5227 = vadd.f32 %v4326, %v5069
      %v5228 = vadd.f32 %v4327, %v5072
      %v5229 = vadd.f32 %v4328, %v5077
      %v5230 = vadd.f32 %v4329, %v5080
      %v5231 = vadd.f32 %v4330, %v5085
      %v5232 = vadd.f32 %v4331, %v5088
      %v5233 = vadd.f32 %v4332, %v5093
      %v5234 = vadd.f32 %v4333, %v5096
      %v5235 = vadd.f32 %v4334, %v5101
      %v5236 = vadd.f32 %v4335, %v5104
      %v5237 = vadd.f32 %v4336, %v5109
      %v5238 = vadd.f32 %v4337, %v5112
      %v5239 = vadd.f32 %v4338, %v5117
      %v5240 = vadd.f32 %v4339, %v5120
      %v5241 = vadd.f32 %v4340, %v5125
      %v5242 = vadd.f32 %v4341, %v5128
      %v5243 = vadd.f32 %v4342, %v5133
      %v5244 = vadd.f32 %v4343, %v5136
      %v5245 = vadd.f32 %v4344, %v5141
      %v5246 = vadd.f32 %v4345, %v5144
      %v5247 = vadd.f32 %v4346, %v5149
      %v5248 = vadd.f32 %v4347, %v5152
      %v5249 = vadd.f32 %v4348, %v5157
      %v5250 = vadd.f32 %v4349, %v5160
      %v5251 = vadd.f32 %v4350, %v5165
      %v5252 = vadd.f32 %v4351, %v5168
      %v5253 = vadd.f32 %v4352, %v5173
      %v5254 = vadd.f32 %v4353, %v5176
      %v5255 = vadd.f32 %v4354, %v5181
      %v5256 = vadd.f32 %v4355, %v5184
      %v5257 = vadd.f32 %v4356, %v5189
      %v5258 = vadd.f32 %v4357, %v5192
      %s5259 = scalar_lea.vmem [#allocation2], 48
      %v5260 = vld [vmem:[%s5259] sm:$0x80]
      %v5261 = vld [vmem:[%s5259 + $0x8] sm:$0xff]
      %v5262 = vld [vmem:[%s5259 + $0x18] sm:$0x80]
      %v5263 = vld [vmem:[%s5259 + $0x20] sm:$0xff]
      %v5264 = vld [vmem:[%s5259 + $0x30] sm:$0x80]
      %v5265 = vld [vmem:[%s5259 + $0x38] sm:$0xff]
      %v5266 = vld [vmem:[%s5259 + $0x48] sm:$0x80]
      %v5267 = vld [vmem:[%s5259 + $0x50] sm:$0xff]
      %v5268 = vld [vmem:[%s5259 + $0x60] sm:$0x80]
      %v5269 = vld [vmem:[%s5259 + $0x68] sm:$0xff]
      %v5270 = vld [vmem:[%s5259 + $0x78] sm:$0x80]
      %v5271 = vld [vmem:[%s5259 + $0x80] sm:$0xff]
      %v5272 = vld [vmem:[%s5259 + $0x90] sm:$0x80]
      %v5273 = vld [vmem:[%s5259 + $0x98] sm:$0xff]
      %v5274 = vld [vmem:[%s5259 + $0xa8] sm:$0x80]
      %v5275 = vld [vmem:[%s5259 + $0xb0] sm:$0xff]
      %v5276 = vld [vmem:[%s5259 + $0xc0] sm:$0x80]
      %v5277 = vld [vmem:[%s5259 + $0xc8] sm:$0xff]
      %v5278 = vld [vmem:[%s5259 + $0xd8] sm:$0x80]
      %v5279 = vld [vmem:[%s5259 + $0xe0] sm:$0xff]
      %v5280 = vld [vmem:[%s5259 + $0xf0] sm:$0x80]
      %v5281 = vld [vmem:[%s5259 + $0xf8] sm:$0xff]
      %v5282 = vld [vmem:[%s5259 + $0x108] sm:$0x80]
      %v5283 = vld [vmem:[%s5259 + $0x110] sm:$0xff]
      %v5284 = vld [vmem:[%s5259 + $0x120] sm:$0x80]
      %v5285 = vld [vmem:[%s5259 + $0x128] sm:$0xff]
      %v5286 = vld [vmem:[%s5259 + $0x138] sm:$0x80]
      %v5287 = vld [vmem:[%s5259 + $0x140] sm:$0xff]
      %v5288 = vld [vmem:[%s5259 + $0x150] sm:$0x80]
      %v5289 = vld [vmem:[%s5259 + $0x158] sm:$0xff]
      %v5290 = vld [vmem:[%s5259 + $0x168] sm:$0x80]
      %v5291 = vld [vmem:[%s5259 + $0x170] sm:$0xff]
      %v5292 = vld [vmem:[%s5259 + $0x1b0] sm:$0x80]
      %v5293 = vld [vmem:[%s5259 + $0x1b8] sm:$0xff]
      %v5294 = vld [vmem:[%s5259 + $0x1c8] sm:$0x80]
      %v5295 = vld [vmem:[%s5259 + $0x1d0] sm:$0xff]
      %v5296 = vld [vmem:[%s5259 + $0x1e0] sm:$0x80]
      %v5297 = vld [vmem:[%s5259 + $0x1e8] sm:$0xff]
      %v5298 = vld [vmem:[%s5259 + $0x1f8] sm:$0x80]
      %v5299 = vld [vmem:[%s5259 + $0x200] sm:$0xff]
      %v5300 = vld [vmem:[%s5259 + $0x210] sm:$0x80]
      %v5301 = vld [vmem:[%s5259 + $0x218] sm:$0xff]
      %v5302 = vld [vmem:[%s5259 + $0x228] sm:$0x80]
      %v5303 = vld [vmem:[%s5259 + $0x230] sm:$0xff]
      %v5304 = vld [vmem:[%s5259 + $0x240] sm:$0x80]
      %v5305 = vld [vmem:[%s5259 + $0x248] sm:$0xff]
      %v5306 = vld [vmem:[%s5259 + $0x258] sm:$0x80]
      %v5307 = vld [vmem:[%s5259 + $0x260] sm:$0xff]
      %v5308 = vld [vmem:[%s5259 + $0x270] sm:$0x80]
      %v5309 = vld [vmem:[%s5259 + $0x278] sm:$0xff]
      %v5310 = vld [vmem:[%s5259 + $0x288] sm:$0x80]
      %v5311 = vld [vmem:[%s5259 + $0x290] sm:$0xff]
      %v5312 = vld [vmem:[%s5259 + $0x2a0] sm:$0x80]
      %v5313 = vld [vmem:[%s5259 + $0x2a8] sm:$0xff]
      %v5314 = vld [vmem:[%s5259 + $0x2b8] sm:$0x80]
      %v5315 = vld [vmem:[%s5259 + $0x2c0] sm:$0xff]
      %v5316 = vld [vmem:[%s5259 + $0x2d0] sm:$0x80]
      %v5317 = vld [vmem:[%s5259 + $0x2d8] sm:$0xff]
      %v5318 = vld [vmem:[%s5259 + $0x2e8] sm:$0x80]
      %v5319 = vld [vmem:[%s5259 + $0x2f0] sm:$0xff]
      %v5320 = vld [vmem:[%s5259 + $0x300] sm:$0x80]
      %v5321 = vld [vmem:[%s5259 + $0x308] sm:$0xff]
      %v5322 = vld [vmem:[%s5259 + $0x318] sm:$0x80]
      %v5323 = vld [vmem:[%s5259 + $0x320] sm:$0xff]
      %v5325 = vshrl.u32 %v5260, 16
      %v5327 = vrot.slane %v5325, 7
      %v5329 = vshrl.u32 %v5261, 16
      %v5331 = vrot.slane %v5329, 7
      %v5332 = vshll.u32 %v5261, 16
      %v5334 = vor.u32 %v5331, %v5332
      %v5335 = vsel %vm1004, %v5327, %v5334
      %v5337 = vshrl.u32 %v5262, 16
      %v5339 = vrot.slane %v5337, 7
      %v5341 = vshrl.u32 %v5263, 16
      %v5343 = vrot.slane %v5341, 7
      %v5344 = vshll.u32 %v5263, 16
      %v5346 = vor.u32 %v5343, %v5344
      %v5347 = vsel %vm1004, %v5339, %v5346
      %v5349 = vshrl.u32 %v5264, 16
      %v5351 = vrot.slane %v5349, 7
      %v5353 = vshrl.u32 %v5265, 16
      %v5355 = vrot.slane %v5353, 7
      %v5356 = vshll.u32 %v5265, 16
      %v5358 = vor.u32 %v5355, %v5356
      %v5359 = vsel %vm1004, %v5351, %v5358
      %v5361 = vshrl.u32 %v5266, 16
      %v5363 = vrot.slane %v5361, 7
      %v5365 = vshrl.u32 %v5267, 16
      %v5367 = vrot.slane %v5365, 7
      %v5368 = vshll.u32 %v5267, 16
      %v5370 = vor.u32 %v5367, %v5368
      %v5371 = vsel %vm1004, %v5363, %v5370
      %v5373 = vshrl.u32 %v5268, 16
      %v5375 = vrot.slane %v5373, 7
      %v5377 = vshrl.u32 %v5269, 16
      %v5379 = vrot.slane %v5377, 7
      %v5380 = vshll.u32 %v5269, 16
      %v5382 = vor.u32 %v5379, %v5380
      %v5383 = vsel %vm1004, %v5375, %v5382
      %v5385 = vshrl.u32 %v5270, 16
      %v5387 = vrot.slane %v5385, 7
      %v5389 = vshrl.u32 %v5271, 16
      %v5391 = vrot.slane %v5389, 7
      %v5392 = vshll.u32 %v5271, 16
      %v5394 = vor.u32 %v5391, %v5392
      %v5395 = vsel %vm1004, %v5387, %v5394
      %v5397 = vshrl.u32 %v5272, 16
      %v5399 = vrot.slane %v5397, 7
      %v5401 = vshrl.u32 %v5273, 16
      %v5403 = vrot.slane %v5401, 7
      %v5404 = vshll.u32 %v5273, 16
      %v5406 = vor.u32 %v5403, %v5404
      %v5407 = vsel %vm1004, %v5399, %v5406
      %v5409 = vshrl.u32 %v5274, 16
      %v5411 = vrot.slane %v5409, 7
      %v5413 = vshrl.u32 %v5275, 16
      %v5415 = vrot.slane %v5413, 7
      %v5416 = vshll.u32 %v5275, 16
      %v5418 = vor.u32 %v5415, %v5416
      %v5419 = vsel %vm1004, %v5411, %v5418
      %v5421 = vshrl.u32 %v5276, 16
      %v5423 = vrot.slane %v5421, 7
      %v5425 = vshrl.u32 %v5277, 16
      %v5427 = vrot.slane %v5425, 7
      %v5428 = vshll.u32 %v5277, 16
      %v5430 = vor.u32 %v5427, %v5428
      %v5431 = vsel %vm1004, %v5423, %v5430
      %v5433 = vshrl.u32 %v5278, 16
      %v5435 = vrot.slane %v5433, 7
      %v5437 = vshrl.u32 %v5279, 16
      %v5439 = vrot.slane %v5437, 7
      %v5440 = vshll.u32 %v5279, 16
      %v5442 = vor.u32 %v5439, %v5440
      %v5443 = vsel %vm1004, %v5435, %v5442
      %v5445 = vshrl.u32 %v5280, 16
      %v5447 = vrot.slane %v5445, 7
      %v5449 = vshrl.u32 %v5281, 16
      %v5451 = vrot.slane %v5449, 7
      %v5452 = vshll.u32 %v5281, 16
      %v5454 = vor.u32 %v5451, %v5452
      %v5455 = vsel %vm1004, %v5447, %v5454
      %v5457 = vshrl.u32 %v5282, 16
      %v5459 = vrot.slane %v5457, 7
      %v5461 = vshrl.u32 %v5283, 16
      %v5463 = vrot.slane %v5461, 7
      %v5464 = vshll.u32 %v5283, 16
      %v5466 = vor.u32 %v5463, %v5464
      %v5467 = vsel %vm1004, %v5459, %v5466
      %v5469 = vshrl.u32 %v5284, 16
      %v5471 = vrot.slane %v5469, 7
      %v5473 = vshrl.u32 %v5285, 16
      %v5475 = vrot.slane %v5473, 7
      %v5476 = vshll.u32 %v5285, 16
      %v5478 = vor.u32 %v5475, %v5476
      %v5479 = vsel %vm1004, %v5471, %v5478
      %v5481 = vshrl.u32 %v5286, 16
      %v5483 = vrot.slane %v5481, 7
      %v5485 = vshrl.u32 %v5287, 16
      %v5487 = vrot.slane %v5485, 7
      %v5488 = vshll.u32 %v5287, 16
      %v5490 = vor.u32 %v5487, %v5488
      %v5491 = vsel %vm1004, %v5483, %v5490
      %v5493 = vshrl.u32 %v5288, 16
      %v5495 = vrot.slane %v5493, 7
      %v5497 = vshrl.u32 %v5289, 16
      %v5499 = vrot.slane %v5497, 7
      %v5500 = vshll.u32 %v5289, 16
      %v5502 = vor.u32 %v5499, %v5500
      %v5503 = vsel %vm1004, %v5495, %v5502
      %v5505 = vshrl.u32 %v5290, 16
      %v5507 = vrot.slane %v5505, 7
      %v5509 = vshrl.u32 %v5291, 16
      %v5511 = vrot.slane %v5509, 7
      %v5512 = vshll.u32 %v5291, 16
      %v5514 = vor.u32 %v5511, %v5512
      %v5515 = vsel %vm1004, %v5507, %v5514
      %v5517 = vshrl.u32 %v5292, 16
      %v5519 = vrot.slane %v5517, 7
      %v5521 = vshrl.u32 %v5293, 16
      %v5523 = vrot.slane %v5521, 7
      %v5524 = vshll.u32 %v5293, 16
      %v5526 = vor.u32 %v5523, %v5524
      %v5527 = vsel %vm1004, %v5519, %v5526
      %v5529 = vshrl.u32 %v5294, 16
      %v5531 = vrot.slane %v5529, 7
      %v5533 = vshrl.u32 %v5295, 16
      %v5535 = vrot.slane %v5533, 7
      %v5536 = vshll.u32 %v5295, 16
      %v5538 = vor.u32 %v5535, %v5536
      %v5539 = vsel %vm1004, %v5531, %v5538
      %v5541 = vshrl.u32 %v5296, 16
      %v5543 = vrot.slane %v5541, 7
      %v5545 = vshrl.u32 %v5297, 16
      %v5547 = vrot.slane %v5545, 7
      %v5548 = vshll.u32 %v5297, 16
      %v5550 = vor.u32 %v5547, %v5548
      %v5551 = vsel %vm1004, %v5543, %v5550
      %v5553 = vshrl.u32 %v5298, 16
      %v5555 = vrot.slane %v5553, 7
      %v5557 = vshrl.u32 %v5299, 16
      %v5559 = vrot.slane %v5557, 7
      %v5560 = vshll.u32 %v5299, 16
      %v5562 = vor.u32 %v5559, %v5560
      %v5563 = vsel %vm1004, %v5555, %v5562
      %v5565 = vshrl.u32 %v5300, 16
      %v5567 = vrot.slane %v5565, 7
      %v5569 = vshrl.u32 %v5301, 16
      %v5571 = vrot.slane %v5569, 7
      %v5572 = vshll.u32 %v5301, 16
      %v5574 = vor.u32 %v5571, %v5572
      %v5575 = vsel %vm1004, %v5567, %v5574
      %v5577 = vshrl.u32 %v5302, 16
      %v5579 = vrot.slane %v5577, 7
      %v5581 = vshrl.u32 %v5303, 16
      %v5583 = vrot.slane %v5581, 7
      %v5584 = vshll.u32 %v5303, 16
      %v5586 = vor.u32 %v5583, %v5584
      %v5587 = vsel %vm1004, %v5579, %v5586
      %v5589 = vshrl.u32 %v5304, 16
      %v5591 = vrot.slane %v5589, 7
      %v5593 = vshrl.u32 %v5305, 16
      %v5595 = vrot.slane %v5593, 7
      %v5596 = vshll.u32 %v5305, 16
      %v5598 = vor.u32 %v5595, %v5596
      %v5599 = vsel %vm1004, %v5591, %v5598
      %v5601 = vshrl.u32 %v5306, 16
      %v5603 = vrot.slane %v5601, 7
      %v5605 = vshrl.u32 %v5307, 16
      %v5607 = vrot.slane %v5605, 7
      %v5608 = vshll.u32 %v5307, 16
      %v5610 = vor.u32 %v5607, %v5608
      %v5611 = vsel %vm1004, %v5603, %v5610
      %v5613 = vshrl.u32 %v5308, 16
      %v5615 = vrot.slane %v5613, 7
      %v5617 = vshrl.u32 %v5309, 16
      %v5619 = vrot.slane %v5617, 7
      %v5620 = vshll.u32 %v5309, 16
      %v5622 = vor.u32 %v5619, %v5620
      %v5623 = vsel %vm1004, %v5615, %v5622
      %v5625 = vshrl.u32 %v5310, 16
      %v5627 = vrot.slane %v5625, 7
      %v5629 = vshrl.u32 %v5311, 16
      %v5631 = vrot.slane %v5629, 7
      %v5632 = vshll.u32 %v5311, 16
      %v5634 = vor.u32 %v5631, %v5632
      %v5635 = vsel %vm1004, %v5627, %v5634
      %v5637 = vshrl.u32 %v5312, 16
      %v5639 = vrot.slane %v5637, 7
      %v5641 = vshrl.u32 %v5313, 16
      %v5643 = vrot.slane %v5641, 7
      %v5644 = vshll.u32 %v5313, 16
      %v5646 = vor.u32 %v5643, %v5644
      %v5647 = vsel %vm1004, %v5639, %v5646
      %v5649 = vshrl.u32 %v5314, 16
      %v5651 = vrot.slane %v5649, 7
      %v5653 = vshrl.u32 %v5315, 16
      %v5655 = vrot.slane %v5653, 7
      %v5656 = vshll.u32 %v5315, 16
      %v5658 = vor.u32 %v5655, %v5656
      %v5659 = vsel %vm1004, %v5651, %v5658
      %v5661 = vshrl.u32 %v5316, 16
      %v5663 = vrot.slane %v5661, 7
      %v5665 = vshrl.u32 %v5317, 16
      %v5667 = vrot.slane %v5665, 7
      %v5668 = vshll.u32 %v5317, 16
      %v5670 = vor.u32 %v5667, %v5668
      %v5671 = vsel %vm1004, %v5663, %v5670
      %v5673 = vshrl.u32 %v5318, 16
      %v5675 = vrot.slane %v5673, 7
      %v5677 = vshrl.u32 %v5319, 16
      %v5679 = vrot.slane %v5677, 7
      %v5680 = vshll.u32 %v5319, 16
      %v5682 = vor.u32 %v5679, %v5680
      %v5683 = vsel %vm1004, %v5675, %v5682
      %v5685 = vshrl.u32 %v5320, 16
      %v5687 = vrot.slane %v5685, 7
      %v5689 = vshrl.u32 %v5321, 16
      %v5691 = vrot.slane %v5689, 7
      %v5692 = vshll.u32 %v5321, 16
      %v5694 = vor.u32 %v5691, %v5692
      %v5695 = vsel %vm1004, %v5687, %v5694
      %v5697 = vshrl.u32 %v5322, 16
      %v5699 = vrot.slane %v5697, 7
      %v5701 = vshrl.u32 %v5323, 16
      %v5703 = vrot.slane %v5701, 7
      %v5704 = vshll.u32 %v5323, 16
      %v5706 = vor.u32 %v5703, %v5704
      %v5707 = vsel %vm1004, %v5699, %v5706
      %s5740 = sadd.s32 %s939, 6
      %s5741 = smul.u32 %s5740, 16
      %s5742 = smul.addr %s5741, 4
      %s5743 = scalar_lea.vmem %s2, %s5742
      %v5744 = vld [vmem:[%s5743] sm:$0xf]
      %v5745 = vld [vmem:[%s5743 + $0x4] sm:$0xf]
      %v5746 = vld [vmem:[%s5743 + $0x8] sm:$0xf]
      %v5747 = vld [vmem:[%s5743 + $0xc] sm:$0xf]
      %v5748 = vld [vmem:[%s5743 + $0x10] sm:$0xf]
      %v5749 = vld [vmem:[%s5743 + $0x14] sm:$0xf]
      %v5750 = vld [vmem:[%s5743 + $0x18] sm:$0xf]
      %v5751 = vld [vmem:[%s5743 + $0x1c] sm:$0xf]
      %v5752 = vld [vmem:[%s5743 + $0x20] sm:$0xf]
      %v5753 = vld [vmem:[%s5743 + $0x24] sm:$0xf]
      %v5754 = vld [vmem:[%s5743 + $0x28] sm:$0xf]
      %v5755 = vld [vmem:[%s5743 + $0x2c] sm:$0xf]
      %v5756 = vld [vmem:[%s5743 + $0x30] sm:$0xf]
      %v5757 = vld [vmem:[%s5743 + $0x34] sm:$0xf]
      %v5758 = vld [vmem:[%s5743 + $0x38] sm:$0xf]
      %v5759 = vld [vmem:[%s5743 + $0x3c] sm:$0xf]
      %v5776 = vunpack.c.l.b16 %v5744
      %v5777 = vunpack.c.l.b16 %v5745
      %v5778 = vunpack.c.l.b16 %v5746
      %v5779 = vunpack.c.l.b16 %v5747
      %v5780 = vunpack.c.l.b16 %v5748
      %v5781 = vunpack.c.l.b16 %v5749
      %v5782 = vunpack.c.l.b16 %v5750
      %v5783 = vunpack.c.l.b16 %v5751
      %v5784 = vunpack.c.l.b16 %v5752
      %v5785 = vunpack.c.l.b16 %v5753
      %v5786 = vunpack.c.l.b16 %v5754
      %v5787 = vunpack.c.l.b16 %v5755
      %v5788 = vunpack.c.l.b16 %v5756
      %v5789 = vunpack.c.l.b16 %v5757
      %v5790 = vunpack.c.l.b16 %v5758
      %v5791 = vunpack.c.l.b16 %v5759
      %v5792 = vpack.c.b16 %v5777, %v5776
      %v5793 = vpack.c.b16 %v5779, %v5778
      %v5794 = vpack.c.b16 %v5781, %v5780
      %v5795 = vpack.c.b16 %v5783, %v5782
      %v5796 = vpack.c.b16 %v5785, %v5784
      %v5797 = vpack.c.b16 %v5787, %v5786
      %v5798 = vpack.c.b16 %v5789, %v5788
      %v5799 = vpack.c.b16 %v5791, %v5790
      %5808 = vmatprep.subr.bf16.mxu0 0
      %5809 = vmatpush1.bf16.msra.mxu0 %v5792
      %5810 = vmatprep.subr.bf16.mxu0 0
      %5811 = vmatpush1.bf16.msra.mxu0 %v5793
      %5812 = vmatprep.subr.bf16.mxu0 0
      %5813 = vmatpush1.bf16.msra.mxu0 %v5794
      %5814 = vmatprep.subr.bf16.mxu0 0
      %5815 = vmatpush1.bf16.msra.mxu0 %v5795
      %5816 = vmatprep.subr.bf16.mxu0 0
      %5817 = vmatpush1.bf16.msra.mxu0 %v5796
      %5818 = vmatprep.subr.bf16.mxu0 0
      %5819 = vmatpush1.bf16.msra.mxu0 %v5797
      %5820 = vmatprep.subr.bf16.mxu0 0
      %5821 = vmatpush1.bf16.msra.mxu0 %v5798
      %5822 = vmatprep.subr.bf16.mxu0 0
      %5823 = vmatpush1.bf16.msra.mxu0 %v5799
      %5824 = vmatprep.subr.bf16.mxu0 0
      %5825 = vmatpush1.bf16.msra.mxu0 0
      %5826 = vmatprep.subr.bf16.mxu0 0
      %5827 = vmatpush1.bf16.msra.mxu0 0
      %5828 = vmatprep.subr.bf16.mxu0 0
      %5829 = vmatpush1.bf16.msra.mxu0 0
      %5830 = vmatprep.subr.bf16.mxu0 0
      %5831 = vmatpush1.bf16.msra.mxu0 0
      %5832 = vmatprep.subr.bf16.mxu0 0
      %5833 = vmatpush1.bf16.msra.mxu0 0
      %5834 = vmatprep.subr.bf16.mxu0 0
      %5835 = vmatpush1.bf16.msra.mxu0 0
      %5836 = vmatprep.subr.bf16.mxu0 0
      %5837 = vmatpush1.bf16.msra.mxu0 0
      %5838 = vmatprep.subr.bf16.mxu0 0
      %5839 = vmatpush1.bf16.msra.mxu0 0
      %5840 = vmatprep.mubr.bf16.mxu0 0
      %5841 = vmatmul.mubr.bf16.gmra.mrb[0].mxu0 %v5335
      %v5842 = vpop.f32.mrb[0].mxu0
      %v5843 = vadd.f32 0.0, %v5842
      %v5844 = vpop.f32.mrb[0].mxu0
      %v5845 = vpop.f32.mrb[0].mxu0
      %v5846 = vadd.f32 0.0, %v5845
      %v5847 = vpop.f32.mrb[0].mxu0
      %5848 = vmatprep.mubr.bf16.mxu0 0
      %5849 = vmatmul.mubr.bf16.gmra.mrb[0].mxu0 %v5347
      %v5850 = vpop.f32.mrb[0].mxu0
      %v5851 = vadd.f32 0.0, %v5850
      %v5852 = vpop.f32.mrb[0].mxu0
      %v5853 = vpop.f32.mrb[0].mxu0
      %v5854 = vadd.f32 0.0, %v5853
      %v5855 = vpop.f32.mrb[0].mxu0
      %5856 = vmatprep.mubr.bf16.mxu0 0
      %5857 = vmatmul.mubr.bf16.gmra.mrb[0].mxu0 %v5359
      %v5858 = vpop.f32.mrb[0].mxu0
      %v5859 = vadd.f32 0.0, %v5858
      %v5860 = vpop.f32.mrb[0].mxu0
      %v5861 = vpop.f32.mrb[0].mxu0
      %v5862 = vadd.f32 0.0, %v5861
      %v5863 = vpop.f32.mrb[0].mxu0
      %5864 = vmatprep.mubr.bf16.mxu0 0
      %5865 = vmatmul.mubr.bf16.gmra.mrb[0].mxu0 %v5371
      %v5866 = vpop.f32.mrb[0].mxu0
      %v5867 = vadd.f32 0.0, %v5866
      %v5868 = vpop.f32.mrb[0].mxu0
      %v5869 = vpop.f32.mrb[0].mxu0
      %v5870 = vadd.f32 0.0, %v5869
      %v5871 = vpop.f32.mrb[0].mxu0
      %5872 = vmatprep.mubr.bf16.mxu0 0
      %5873 = vmatmul.mubr.bf16.gmra.mrb[0].mxu0 %v5383
      %v5874 = vpop.f32.mrb[0].mxu0
      %v5875 = vadd.f32 0.0, %v5874
      %v5876 = vpop.f32.mrb[0].mxu0
      %v5877 = vpop.f32.mrb[0].mxu0
      %v5878 = vadd.f32 0.0, %v5877
      %v5879 = vpop.f32.mrb[0].mxu0
      %5880 = vmatprep.mubr.bf16.mxu0 0
      %5881 = vmatmul.mubr.bf16.gmra.mrb[0].mxu0 %v5395
      %v5882 = vpop.f32.mrb[0].mxu0
      %v5883 = vadd.f32 0.0, %v5882
      %v5884 = vpop.f32.mrb[0].mxu0
      %v5885 = vpop.f32.mrb[0].mxu0
      %v5886 = vadd.f32 0.0, %v5885
      %v5887 = vpop.f32.mrb[0].mxu0
      %5888 = vmatprep.mubr.bf16.mxu0 0
      %5889 = vmatmul.mubr.bf16.gmra.mrb[0].mxu0 %v5407
      %v5890 = vpop.f32.mrb[0].mxu0
      %v5891 = vadd.f32 0.0, %v5890
      %v5892 = vpop.f32.mrb[0].mxu0
      %v5893 = vpop.f32.mrb[0].mxu0
      %v5894 = vadd.f32 0.0, %v5893
      %v5895 = vpop.f32.mrb[0].mxu0
      %5896 = vmatprep.mubr.bf16.mxu0 0
      %5897 = vmatmul.mubr.bf16.gmra.mrb[0].mxu0 %v5419
      %v5898 = vpop.f32.mrb[0].mxu0
      %v5899 = vadd.f32 0.0, %v5898
      %v5900 = vpop.f32.mrb[0].mxu0
      %v5901 = vpop.f32.mrb[0].mxu0
      %v5902 = vadd.f32 0.0, %v5901
      %v5903 = vpop.f32.mrb[0].mxu0
      %5904 = vmatprep.mubr.bf16.mxu0 0
      %5905 = vmatmul.mubr.bf16.gmra.mrb[0].mxu0 %v5431
      %v5906 = vpop.f32.mrb[0].mxu0
      %v5907 = vadd.f32 0.0, %v5906
      %v5908 = vpop.f32.mrb[0].mxu0
      %v5909 = vpop.f32.mrb[0].mxu0
      %v5910 = vadd.f32 0.0, %v5909
      %v5911 = vpop.f32.mrb[0].mxu0
      %5912 = vmatprep.mubr.bf16.mxu0 0
      %5913 = vmatmul.mubr.bf16.gmra.mrb[0].mxu0 %v5443
      %v5914 = vpop.f32.mrb[0].mxu0
      %v5915 = vadd.f32 0.0, %v5914
      %v5916 = vpop.f32.mrb[0].mxu0
      %v5917 = vpop.f32.mrb[0].mxu0
      %v5918 = vadd.f32 0.0, %v5917
      %v5919 = vpop.f32.mrb[0].mxu0
      %5920 = vmatprep.mubr.bf16.mxu0 0
      %5921 = vmatmul.mubr.bf16.gmra.mrb[0].mxu0 %v5455
      %v5922 = vpop.f32.mrb[0].mxu0
      %v5923 = vadd.f32 0.0, %v5922
      %v5924 = vpop.f32.mrb[0].mxu0
      %v5925 = vpop.f32.mrb[0].mxu0
      %v5926 = vadd.f32 0.0, %v5925
      %v5927 = vpop.f32.mrb[0].mxu0
      %5928 = vmatprep.mubr.bf16.mxu0 0
      %5929 = vmatmul.mubr.bf16.gmra.mrb[0].mxu0 %v5467
      %v5930 = vpop.f32.mrb[0].mxu0
      %v5931 = vadd.f32 0.0, %v5930
      %v5932 = vpop.f32.mrb[0].mxu0
      %v5933 = vpop.f32.mrb[0].mxu0
      %v5934 = vadd.f32 0.0, %v5933
      %v5935 = vpop.f32.mrb[0].mxu0
      %5936 = vmatprep.mubr.bf16.mxu0 0
      %5937 = vmatmul.mubr.bf16.gmra.mrb[0].mxu0 %v5479
      %v5938 = vpop.f32.mrb[0].mxu0
      %v5939 = vadd.f32 0.0, %v5938
      %v5940 = vpop.f32.mrb[0].mxu0
      %v5941 = vpop.f32.mrb[0].mxu0
      %v5942 = vadd.f32 0.0, %v5941
      %v5943 = vpop.f32.mrb[0].mxu0
      %5944 = vmatprep.mubr.bf16.mxu0 0
      %5945 = vmatmul.mubr.bf16.gmra.mrb[0].mxu0 %v5491
      %v5946 = vpop.f32.mrb[0].mxu0
      %v5947 = vadd.f32 0.0, %v5946
      %v5948 = vpop.f32.mrb[0].mxu0
      %v5949 = vpop.f32.mrb[0].mxu0
      %v5950 = vadd.f32 0.0, %v5949
      %v5951 = vpop.f32.mrb[0].mxu0
      %5952 = vmatprep.mubr.bf16.mxu0 0
      %5953 = vmatmul.mubr.bf16.gmra.mrb[0].mxu0 %v5503
      %v5954 = vpop.f32.mrb[0].mxu0
      %v5955 = vadd.f32 0.0, %v5954
      %v5956 = vpop.f32.mrb[0].mxu0
      %v5957 = vpop.f32.mrb[0].mxu0
      %v5958 = vadd.f32 0.0, %v5957
      %v5959 = vpop.f32.mrb[0].mxu0
      %5960 = vmatprep.mubr.bf16.mxu0 0
      %5961 = vmatmul.mubr.bf16.gmra.mrb[0].mxu0 %v5515
      %v5962 = vpop.f32.mrb[0].mxu0
      %v5963 = vadd.f32 0.0, %v5962
      %v5964 = vpop.f32.mrb[0].mxu0
      %v5965 = vpop.f32.mrb[0].mxu0
      %v5966 = vadd.f32 0.0, %v5965
      %v5967 = vpop.f32.mrb[0].mxu0
      %5968 = vmatprep.mubr.bf16.mxu0 0
      %5969 = vmatmul.mubr.bf16.gmra.mrb[0].mxu0 %v5527
      %v5970 = vpop.f32.mrb[0].mxu0
      %v5971 = vadd.f32 0.0, %v5970
      %v5972 = vpop.f32.mrb[0].mxu0
      %v5973 = vpop.f32.mrb[0].mxu0
      %v5974 = vadd.f32 0.0, %v5973
      %v5975 = vpop.f32.mrb[0].mxu0
      %5976 = vmatprep.mubr.bf16.mxu0 0
      %5977 = vmatmul.mubr.bf16.gmra.mrb[0].mxu0 %v5539
      %v5978 = vpop.f32.mrb[0].mxu0
      %v5979 = vadd.f32 0.0, %v5978
      %v5980 = vpop.f32.mrb[0].mxu0
      %v5981 = vpop.f32.mrb[0].mxu0
      %v5982 = vadd.f32 0.0, %v5981
      %v5983 = vpop.f32.mrb[0].mxu0
      %5984 = vmatprep.mubr.bf16.mxu0 0
      %5985 = vmatmul.mubr.bf16.gmra.mrb[0].mxu0 %v5551
      %v5986 = vpop.f32.mrb[0].mxu0
      %v5987 = vadd.f32 0.0, %v5986
      %v5988 = vpop.f32.mrb[0].mxu0
      %v5989 = vpop.f32.mrb[0].mxu0
      %v5990 = vadd.f32 0.0, %v5989
      %v5991 = vpop.f32.mrb[0].mxu0
      %5992 = vmatprep.mubr.bf16.mxu0 0
      %5993 = vmatmul.mubr.bf16.gmra.mrb[0].mxu0 %v5563
      %v5994 = vpop.f32.mrb[0].mxu0
      %v5995 = vadd.f32 0.0, %v5994
      %v5996 = vpop.f32.mrb[0].mxu0
      %v5997 = vpop.f32.mrb[0].mxu0
      %v5998 = vadd.f32 0.0, %v5997
      %v5999 = vpop.f32.mrb[0].mxu0
      %6000 = vmatprep.mubr.bf16.mxu0 0
      %6001 = vmatmul.mubr.bf16.gmra.mrb[0].mxu0 %v5575
      %v6002 = vpop.f32.mrb[0].mxu0
      %v6003 = vadd.f32 0.0, %v6002
      %v6004 = vpop.f32.mrb[0].mxu0
      %v6005 = vpop.f32.mrb[0].mxu0
      %v6006 = vadd.f32 0.0, %v6005
      %v6007 = vpop.f32.mrb[0].mxu0
      %6008 = vmatprep.mubr.bf16.mxu0 0
      %6009 = vmatmul.mubr.bf16.gmra.mrb[0].mxu0 %v5587
      %v6010 = vpop.f32.mrb[0].mxu0
      %v6011 = vadd.f32 0.0, %v6010
      %v6012 = vpop.f32.mrb[0].mxu0
      %v6013 = vpop.f32.mrb[0].mxu0
      %v6014 = vadd.f32 0.0, %v6013
      %v6015 = vpop.f32.mrb[0].mxu0
      %6016 = vmatprep.mubr.bf16.mxu0 0
      %6017 = vmatmul.mubr.bf16.gmra.mrb[0].mxu0 %v5599
      %v6018 = vpop.f32.mrb[0].mxu0
      %v6019 = vadd.f32 0.0, %v6018
      %v6020 = vpop.f32.mrb[0].mxu0
      %v6021 = vpop.f32.mrb[0].mxu0
      %v6022 = vadd.f32 0.0, %v6021
      %v6023 = vpop.f32.mrb[0].mxu0
      %6024 = vmatprep.mubr.bf16.mxu0 0
      %6025 = vmatmul.mubr.bf16.gmra.mrb[0].mxu0 %v5611
      %v6026 = vpop.f32.mrb[0].mxu0
      %v6027 = vadd.f32 0.0, %v6026
      %v6028 = vpop.f32.mrb[0].mxu0
      %v6029 = vpop.f32.mrb[0].mxu0
      %v6030 = vadd.f32 0.0, %v6029
      %v6031 = vpop.f32.mrb[0].mxu0
      %6032 = vmatprep.mubr.bf16.mxu0 0
      %6033 = vmatmul.mubr.bf16.gmra.mrb[0].mxu0 %v5623
      %v6034 = vpop.f32.mrb[0].mxu0
      %v6035 = vadd.f32 0.0, %v6034
      %v6036 = vpop.f32.mrb[0].mxu0
      %v6037 = vpop.f32.mrb[0].mxu0
      %v6038 = vadd.f32 0.0, %v6037
      %v6039 = vpop.f32.mrb[0].mxu0
      %6040 = vmatprep.mubr.bf16.mxu0 0
      %6041 = vmatmul.mubr.bf16.gmra.mrb[0].mxu0 %v5635
      %v6042 = vpop.f32.mrb[0].mxu0
      %v6043 = vadd.f32 0.0, %v6042
      %v6044 = vpop.f32.mrb[0].mxu0
      %v6045 = vpop.f32.mrb[0].mxu0
      %v6046 = vadd.f32 0.0, %v6045
      %v6047 = vpop.f32.mrb[0].mxu0
      %6048 = vmatprep.mubr.bf16.mxu0 0
      %6049 = vmatmul.mubr.bf16.gmra.mrb[0].mxu0 %v5647
      %v6050 = vpop.f32.mrb[0].mxu0
      %v6051 = vadd.f32 0.0, %v6050
      %v6052 = vpop.f32.mrb[0].mxu0
      %v6053 = vpop.f32.mrb[0].mxu0
      %v6054 = vadd.f32 0.0, %v6053
      %v6055 = vpop.f32.mrb[0].mxu0
      %6056 = vmatprep.mubr.bf16.mxu0 0
      %6057 = vmatmul.mubr.bf16.gmra.mrb[0].mxu0 %v5659
      %v6058 = vpop.f32.mrb[0].mxu0
      %v6059 = vadd.f32 0.0, %v6058
      %v6060 = vpop.f32.mrb[0].mxu0
      %v6061 = vpop.f32.mrb[0].mxu0
      %v6062 = vadd.f32 0.0, %v6061
      %v6063 = vpop.f32.mrb[0].mxu0
      %6064 = vmatprep.mubr.bf16.mxu0 0
      %6065 = vmatmul.mubr.bf16.gmra.mrb[0].mxu0 %v5671
      %v6066 = vpop.f32.mrb[0].mxu0
      %v6067 = vadd.f32 0.0, %v6066
      %v6068 = vpop.f32.mrb[0].mxu0
      %v6069 = vpop.f32.mrb[0].mxu0
      %v6070 = vadd.f32 0.0, %v6069
      %v6071 = vpop.f32.mrb[0].mxu0
      %6072 = vmatprep.mubr.bf16.mxu0 0
      %6073 = vmatmul.mubr.bf16.gmra.mrb[0].mxu0 %v5683
      %v6074 = vpop.f32.mrb[0].mxu0
      %v6075 = vadd.f32 0.0, %v6074
      %v6076 = vpop.f32.mrb[0].mxu0
      %v6077 = vpop.f32.mrb[0].mxu0
      %v6078 = vadd.f32 0.0, %v6077
      %v6079 = vpop.f32.mrb[0].mxu0
      %6080 = vmatprep.mubr.bf16.mxu0 0
      %6081 = vmatmul.mubr.bf16.gmra.mrb[0].mxu0 %v5695
      %v6082 = vpop.f32.mrb[0].mxu0
      %v6083 = vadd.f32 0.0, %v6082
      %v6084 = vpop.f32.mrb[0].mxu0
      %v6085 = vpop.f32.mrb[0].mxu0
      %v6086 = vadd.f32 0.0, %v6085
      %v6087 = vpop.f32.mrb[0].mxu0
      %6088 = vmatprep.mubr.bf16.mxu0 0
      %6089 = vmatmul.mubr.bf16.gmra.mrb[0].mxu0 %v5707
      %v6090 = vpop.f32.mrb[0].mxu0
      %v6091 = vadd.f32 0.0, %v6090
      %v6092 = vpop.f32.mrb[0].mxu0
      %v6093 = vpop.f32.mrb[0].mxu0
      %v6094 = vadd.f32 0.0, %v6093
      %v6095 = vpop.f32.mrb[0].mxu0
      %6096 = vdwg.mxu0
      %v6097 = vadd.f32 %v5195, %v5843
      %v6098 = vadd.f32 %v5196, %v5846
      %v6099 = vadd.f32 %v5197, %v5851
      %v6100 = vadd.f32 %v5198, %v5854
      %v6101 = vadd.f32 %v5199, %v5859
      %v6102 = vadd.f32 %v5200, %v5862
      %v6103 = vadd.f32 %v5201, %v5867
      %v6104 = vadd.f32 %v5202, %v5870
      %v6105 = vadd.f32 %v5203, %v5875
      %v6106 = vadd.f32 %v5204, %v5878
      %v6107 = vadd.f32 %v5205, %v5883
      %v6108 = vadd.f32 %v5206, %v5886
      %v6109 = vadd.f32 %v5207, %v5891
      %v6110 = vadd.f32 %v5208, %v5894
      %v6111 = vadd.f32 %v5209, %v5899
      %v6112 = vadd.f32 %v5210, %v5902
      %v6113 = vadd.f32 %v5211, %v5907
      %v6114 = vadd.f32 %v5212, %v5910
      %v6115 = vadd.f32 %v5213, %v5915
      %v6116 = vadd.f32 %v5214, %v5918
      %v6117 = vadd.f32 %v5215, %v5923
      %v6118 = vadd.f32 %v5216, %v5926
      %v6119 = vadd.f32 %v5217, %v5931
      %v6120 = vadd.f32 %v5218, %v5934
      %v6121 = vadd.f32 %v5219, %v5939
      %v6122 = vadd.f32 %v5220, %v5942
      %v6123 = vadd.f32 %v5221, %v5947
      %v6124 = vadd.f32 %v5222, %v5950
      %v6125 = vadd.f32 %v5223, %v5955
      %v6126 = vadd.f32 %v5224, %v5958
      %v6127 = vadd.f32 %v5225, %v5963
      %v6128 = vadd.f32 %v5226, %v5966
      %v6129 = vadd.f32 %v5227, %v5971
      %v6130 = vadd.f32 %v5228, %v5974
      %v6131 = vadd.f32 %v5229, %v5979
      %v6132 = vadd.f32 %v5230, %v5982
      %v6133 = vadd.f32 %v5231, %v5987
      %v6134 = vadd.f32 %v5232, %v5990
      %v6135 = vadd.f32 %v5233, %v5995
      %v6136 = vadd.f32 %v5234, %v5998
      %v6137 = vadd.f32 %v5235, %v6003
      %v6138 = vadd.f32 %v5236, %v6006
      %v6139 = vadd.f32 %v5237, %v6011
      %v6140 = vadd.f32 %v5238, %v6014
      %v6141 = vadd.f32 %v5239, %v6019
      %v6142 = vadd.f32 %v5240, %v6022
      %v6143 = vadd.f32 %v5241, %v6027
      %v6144 = vadd.f32 %v5242, %v6030
      %v6145 = vadd.f32 %v5243, %v6035
      %v6146 = vadd.f32 %v5244, %v6038
      %v6147 = vadd.f32 %v5245, %v6043
      %v6148 = vadd.f32 %v5246, %v6046
      %v6149 = vadd.f32 %v5247, %v6051
      %v6150 = vadd.f32 %v5248, %v6054
      %v6151 = vadd.f32 %v5249, %v6059
      %v6152 = vadd.f32 %v5250, %v6062
      %v6153 = vadd.f32 %v5251, %v6067
      %v6154 = vadd.f32 %v5252, %v6070
      %v6155 = vadd.f32 %v5253, %v6075
      %v6156 = vadd.f32 %v5254, %v6078
      %v6157 = vadd.f32 %v5255, %v6083
      %v6158 = vadd.f32 %v5256, %v6086
      %v6159 = vadd.f32 %v5257, %v6091
      %v6160 = vadd.f32 %v5258, %v6094
      %s6161 = sadd.s32 %s939, 7
      %s6162 = smul.u32 %s6161, 16
      %s6163 = smul.addr %s6162, 4
      %s6164 = scalar_lea.vmem %s2, %s6163
      %v6165 = vld [vmem:[%s6164] sm:$0xf]
      %v6166 = vld [vmem:[%s6164 + $0x4] sm:$0xf]
      %v6167 = vld [vmem:[%s6164 + $0x8] sm:$0xf]
      %v6168 = vld [vmem:[%s6164 + $0xc] sm:$0xf]
      %v6169 = vld [vmem:[%s6164 + $0x10] sm:$0xf]
      %v6170 = vld [vmem:[%s6164 + $0x14] sm:$0xf]
      %v6171 = vld [vmem:[%s6164 + $0x18] sm:$0xf]
      %v6172 = vld [vmem:[%s6164 + $0x1c] sm:$0xf]
      %v6173 = vld [vmem:[%s6164 + $0x20] sm:$0xf]
      %v6174 = vld [vmem:[%s6164 + $0x24] sm:$0xf]
      %v6175 = vld [vmem:[%s6164 + $0x28] sm:$0xf]
      %v6176 = vld [vmem:[%s6164 + $0x2c] sm:$0xf]
      %v6177 = vld [vmem:[%s6164 + $0x30] sm:$0xf]
      %v6178 = vld [vmem:[%s6164 + $0x34] sm:$0xf]
      %v6179 = vld [vmem:[%s6164 + $0x38] sm:$0xf]
      %v6180 = vld [vmem:[%s6164 + $0x3c] sm:$0xf]
      %v6197 = vunpack.c.l.b16 %v6165
      %v6198 = vunpack.c.l.b16 %v6166
      %v6199 = vunpack.c.l.b16 %v6167
      %v6200 = vunpack.c.l.b16 %v6168
      %v6201 = vunpack.c.l.b16 %v6169
      %v6202 = vunpack.c.l.b16 %v6170
      %v6203 = vunpack.c.l.b16 %v6171
      %v6204 = vunpack.c.l.b16 %v6172
      %v6205 = vunpack.c.l.b16 %v6173
      %v6206 = vunpack.c.l.b16 %v6174
      %v6207 = vunpack.c.l.b16 %v6175
      %v6208 = vunpack.c.l.b16 %v6176
      %v6209 = vunpack.c.l.b16 %v6177
      %v6210 = vunpack.c.l.b16 %v6178
      %v6211 = vunpack.c.l.b16 %v6179
      %v6212 = vunpack.c.l.b16 %v6180
      %v6213 = vpack.c.b16 %v6198, %v6197
      %v6214 = vpack.c.b16 %v6200, %v6199
      %v6215 = vpack.c.b16 %v6202, %v6201
      %v6216 = vpack.c.b16 %v6204, %v6203
      %v6217 = vpack.c.b16 %v6206, %v6205
      %v6218 = vpack.c.b16 %v6208, %v6207
      %v6219 = vpack.c.b16 %v6210, %v6209
      %v6220 = vpack.c.b16 %v6212, %v6211
      %6229 = vmatprep.subr.bf16.mxu0 0
      %6230 = vmatpush1.bf16.msra.mxu0 %v6213
      %6231 = vmatprep.subr.bf16.mxu0 0
      %6232 = vmatpush1.bf16.msra.mxu0 %v6214
      %6233 = vmatprep.subr.bf16.mxu0 0
      %6234 = vmatpush1.bf16.msra.mxu0 %v6215
      %6235 = vmatprep.subr.bf16.mxu0 0
      %6236 = vmatpush1.bf16.msra.mxu0 %v6216
      %6237 = vmatprep.subr.bf16.mxu0 0
      %6238 = vmatpush1.bf16.msra.mxu0 %v6217
      %6239 = vmatprep.subr.bf16.mxu0 0
      %6240 = vmatpush1.bf16.msra.mxu0 %v6218
      %6241 = vmatprep.subr.bf16.mxu0 0
      %6242 = vmatpush1.bf16.msra.mxu0 %v6219
      %6243 = vmatprep.subr.bf16.mxu0 0
      %6244 = vmatpush1.bf16.msra.mxu0 %v6220
      %6245 = vmatprep.subr.bf16.mxu0 0
      %6246 = vmatpush1.bf16.msra.mxu0 0
      %6247 = vmatprep.subr.bf16.mxu0 0
      %6248 = vmatpush1.bf16.msra.mxu0 0
      %6249 = vmatprep.subr.bf16.mxu0 0
      %6250 = vmatpush1.bf16.msra.mxu0 0
      %6251 = vmatprep.subr.bf16.mxu0 0
      %6252 = vmatpush1.bf16.msra.mxu0 0
      %6253 = vmatprep.subr.bf16.mxu0 0
      %6254 = vmatpush1.bf16.msra.mxu0 0
      %6255 = vmatprep.subr.bf16.mxu0 0
      %6256 = vmatpush1.bf16.msra.mxu0 0
      %6257 = vmatprep.subr.bf16.mxu0 0
      %6258 = vmatpush1.bf16.msra.mxu0 0
      %6259 = vmatprep.subr.bf16.mxu0 0
      %6260 = vmatpush1.bf16.msra.mxu0 0
      %6261 = vmatprep.mubr.bf16.mxu0 0
      %6262 = vmatmul.mubr.bf16.gmra.mrb[0].mxu0 %v5261
      %v6263 = vpop.f32.mrb[0].mxu0
      %v6264 = vadd.f32 0.0, %v6263
      %v6265 = vpop.f32.mrb[0].mxu0
      %v6266 = vpop.f32.mrb[0].mxu0
      %v6267 = vadd.f32 0.0, %v6266
      %v6268 = vpop.f32.mrb[0].mxu0
      %6269 = vmatprep.mubr.bf16.mxu0 0
      %6270 = vmatmul.mubr.bf16.gmra.mrb[0].mxu0 %v5263
      %v6271 = vpop.f32.mrb[0].mxu0
      %v6272 = vadd.f32 0.0, %v6271
      %v6273 = vpop.f32.mrb[0].mxu0
      %v6274 = vpop.f32.mrb[0].mxu0
      %v6275 = vadd.f32 0.0, %v6274
      %v6276 = vpop.f32.mrb[0].mxu0
      %6277 = vmatprep.mubr.bf16.mxu0 0
      %6278 = vmatmul.mubr.bf16.gmra.mrb[0].mxu0 %v5265
      %v6279 = vpop.f32.mrb[0].mxu0
      %v6280 = vadd.f32 0.0, %v6279
      %v6281 = vpop.f32.mrb[0].mxu0
      %v6282 = vpop.f32.mrb[0].mxu0
      %v6283 = vadd.f32 0.0, %v6282
      %v6284 = vpop.f32.mrb[0].mxu0
      %6285 = vmatprep.mubr.bf16.mxu0 0
      %6286 = vmatmul.mubr.bf16.gmra.mrb[0].mxu0 %v5267
      %v6287 = vpop.f32.mrb[0].mxu0
      %v6288 = vadd.f32 0.0, %v6287
      %v6289 = vpop.f32.mrb[0].mxu0
      %v6290 = vpop.f32.mrb[0].mxu0
      %v6291 = vadd.f32 0.0, %v6290
      %v6292 = vpop.f32.mrb[0].mxu0
      %6293 = vmatprep.mubr.bf16.mxu0 0
      %6294 = vmatmul.mubr.bf16.gmra.mrb[0].mxu0 %v5269
      %v6295 = vpop.f32.mrb[0].mxu0
      %v6296 = vadd.f32 0.0, %v6295
      %v6297 = vpop.f32.mrb[0].mxu0
      %v6298 = vpop.f32.mrb[0].mxu0
      %v6299 = vadd.f32 0.0, %v6298
      %v6300 = vpop.f32.mrb[0].mxu0
      %6301 = vmatprep.mubr.bf16.mxu0 0
      %6302 = vmatmul.mubr.bf16.gmra.mrb[0].mxu0 %v5271
      %v6303 = vpop.f32.mrb[0].mxu0
      %v6304 = vadd.f32 0.0, %v6303
      %v6305 = vpop.f32.mrb[0].mxu0
      %v6306 = vpop.f32.mrb[0].mxu0
      %v6307 = vadd.f32 0.0, %v6306
      %v6308 = vpop.f32.mrb[0].mxu0
      %6309 = vmatprep.mubr.bf16.mxu0 0
      %6310 = vmatmul.mubr.bf16.gmra.mrb[0].mxu0 %v5273
      %v6311 = vpop.f32.mrb[0].mxu0
      %v6312 = vadd.f32 0.0, %v6311
      %v6313 = vpop.f32.mrb[0].mxu0
      %v6314 = vpop.f32.mrb[0].mxu0
      %v6315 = vadd.f32 0.0, %v6314
      %v6316 = vpop.f32.mrb[0].mxu0
      %6317 = vmatprep.mubr.bf16.mxu0 0
      %6318 = vmatmul.mubr.bf16.gmra.mrb[0].mxu0 %v5275
      %v6319 = vpop.f32.mrb[0].mxu0
      %v6320 = vadd.f32 0.0, %v6319
      %v6321 = vpop.f32.mrb[0].mxu0
      %v6322 = vpop.f32.mrb[0].mxu0
      %v6323 = vadd.f32 0.0, %v6322
      %v6324 = vpop.f32.mrb[0].mxu0
      %6325 = vmatprep.mubr.bf16.mxu0 0
      %6326 = vmatmul.mubr.bf16.gmra.mrb[0].mxu0 %v5277
      %v6327 = vpop.f32.mrb[0].mxu0
      %v6328 = vadd.f32 0.0, %v6327
      %v6329 = vpop.f32.mrb[0].mxu0
      %v6330 = vpop.f32.mrb[0].mxu0
      %v6331 = vadd.f32 0.0, %v6330
      %v6332 = vpop.f32.mrb[0].mxu0
      %6333 = vmatprep.mubr.bf16.mxu0 0
      %6334 = vmatmul.mubr.bf16.gmra.mrb[0].mxu0 %v5279
      %v6335 = vpop.f32.mrb[0].mxu0
      %v6336 = vadd.f32 0.0, %v6335
      %v6337 = vpop.f32.mrb[0].mxu0
      %v6338 = vpop.f32.mrb[0].mxu0
      %v6339 = vadd.f32 0.0, %v6338
      %v6340 = vpop.f32.mrb[0].mxu0
      %6341 = vmatprep.mubr.bf16.mxu0 0
      %6342 = vmatmul.mubr.bf16.gmra.mrb[0].mxu0 %v5281
      %v6343 = vpop.f32.mrb[0].mxu0
      %v6344 = vadd.f32 0.0, %v6343
      %v6345 = vpop.f32.mrb[0].mxu0
      %v6346 = vpop.f32.mrb[0].mxu0
      %v6347 = vadd.f32 0.0, %v6346
      %v6348 = vpop.f32.mrb[0].mxu0
      %6349 = vmatprep.mubr.bf16.mxu0 0
      %6350 = vmatmul.mubr.bf16.gmra.mrb[0].mxu0 %v5283
      %v6351 = vpop.f32.mrb[0].mxu0
      %v6352 = vadd.f32 0.0, %v6351
      %v6353 = vpop.f32.mrb[0].mxu0
      %v6354 = vpop.f32.mrb[0].mxu0
      %v6355 = vadd.f32 0.0, %v6354
      %v6356 = vpop.f32.mrb[0].mxu0
      %6357 = vmatprep.mubr.bf16.mxu0 0
      %6358 = vmatmul.mubr.bf16.gmra.mrb[0].mxu0 %v5285
      %v6359 = vpop.f32.mrb[0].mxu0
      %v6360 = vadd.f32 0.0, %v6359
      %v6361 = vpop.f32.mrb[0].mxu0
      %v6362 = vpop.f32.mrb[0].mxu0
      %v6363 = vadd.f32 0.0, %v6362
      %v6364 = vpop.f32.mrb[0].mxu0
      %6365 = vmatprep.mubr.bf16.mxu0 0
      %6366 = vmatmul.mubr.bf16.gmra.mrb[0].mxu0 %v5287
      %v6367 = vpop.f32.mrb[0].mxu0
      %v6368 = vadd.f32 0.0, %v6367
      %v6369 = vpop.f32.mrb[0].mxu0
      %v6370 = vpop.f32.mrb[0].mxu0
      %v6371 = vadd.f32 0.0, %v6370
      %v6372 = vpop.f32.mrb[0].mxu0
      %6373 = vmatprep.mubr.bf16.mxu0 0
      %6374 = vmatmul.mubr.bf16.gmra.mrb[0].mxu0 %v5289
      %v6375 = vpop.f32.mrb[0].mxu0
      %v6376 = vadd.f32 0.0, %v6375
      %v6377 = vpop.f32.mrb[0].mxu0
      %v6378 = vpop.f32.mrb[0].mxu0
      %v6379 = vadd.f32 0.0, %v6378
      %v6380 = vpop.f32.mrb[0].mxu0
      %6381 = vmatprep.mubr.bf16.mxu0 0
      %6382 = vmatmul.mubr.bf16.gmra.mrb[0].mxu0 %v5291
      %v6383 = vpop.f32.mrb[0].mxu0
      %v6384 = vadd.f32 0.0, %v6383
      %v6385 = vpop.f32.mrb[0].mxu0
      %v6386 = vpop.f32.mrb[0].mxu0
      %v6387 = vadd.f32 0.0, %v6386
      %v6388 = vpop.f32.mrb[0].mxu0
      %6389 = vmatprep.mubr.bf16.mxu0 0
      %6390 = vmatmul.mubr.bf16.gmra.mrb[0].mxu0 %v5293
      %v6391 = vpop.f32.mrb[0].mxu0
      %v6392 = vadd.f32 0.0, %v6391
      %v6393 = vpop.f32.mrb[0].mxu0
      %v6394 = vpop.f32.mrb[0].mxu0
      %v6395 = vadd.f32 0.0, %v6394
      %v6396 = vpop.f32.mrb[0].mxu0
      %6397 = vmatprep.mubr.bf16.mxu0 0
      %6398 = vmatmul.mubr.bf16.gmra.mrb[0].mxu0 %v5295
      %v6399 = vpop.f32.mrb[0].mxu0
      %v6400 = vadd.f32 0.0, %v6399
      %v6401 = vpop.f32.mrb[0].mxu0
      %v6402 = vpop.f32.mrb[0].mxu0
      %v6403 = vadd.f32 0.0, %v6402
      %v6404 = vpop.f32.mrb[0].mxu0
      %6405 = vmatprep.mubr.bf16.mxu0 0
      %6406 = vmatmul.mubr.bf16.gmra.mrb[0].mxu0 %v5297
      %v6407 = vpop.f32.mrb[0].mxu0
      %v6408 = vadd.f32 0.0, %v6407
      %v6409 = vpop.f32.mrb[0].mxu0
      %v6410 = vpop.f32.mrb[0].mxu0
      %v6411 = vadd.f32 0.0, %v6410
      %v6412 = vpop.f32.mrb[0].mxu0
      %6413 = vmatprep.mubr.bf16.mxu0 0
      %6414 = vmatmul.mubr.bf16.gmra.mrb[0].mxu0 %v5299
      %v6415 = vpop.f32.mrb[0].mxu0
      %v6416 = vadd.f32 0.0, %v6415
      %v6417 = vpop.f32.mrb[0].mxu0
      %v6418 = vpop.f32.mrb[0].mxu0
      %v6419 = vadd.f32 0.0, %v6418
      %v6420 = vpop.f32.mrb[0].mxu0
      %6421 = vmatprep.mubr.bf16.mxu0 0
      %6422 = vmatmul.mubr.bf16.gmra.mrb[0].mxu0 %v5301
      %v6423 = vpop.f32.mrb[0].mxu0
      %v6424 = vadd.f32 0.0, %v6423
      %v6425 = vpop.f32.mrb[0].mxu0
      %v6426 = vpop.f32.mrb[0].mxu0
      %v6427 = vadd.f32 0.0, %v6426
      %v6428 = vpop.f32.mrb[0].mxu0
      %6429 = vmatprep.mubr.bf16.mxu0 0
      %6430 = vmatmul.mubr.bf16.gmra.mrb[0].mxu0 %v5303
      %v6431 = vpop.f32.mrb[0].mxu0
      %v6432 = vadd.f32 0.0, %v6431
      %v6433 = vpop.f32.mrb[0].mxu0
      %v6434 = vpop.f32.mrb[0].mxu0
      %v6435 = vadd.f32 0.0, %v6434
      %v6436 = vpop.f32.mrb[0].mxu0
      %6437 = vmatprep.mubr.bf16.mxu0 0
      %6438 = vmatmul.mubr.bf16.gmra.mrb[0].mxu0 %v5305
      %v6439 = vpop.f32.mrb[0].mxu0
      %v6440 = vadd.f32 0.0, %v6439
      %v6441 = vpop.f32.mrb[0].mxu0
      %v6442 = vpop.f32.mrb[0].mxu0
      %v6443 = vadd.f32 0.0, %v6442
      %v6444 = vpop.f32.mrb[0].mxu0
      %6445 = vmatprep.mubr.bf16.mxu0 0
      %6446 = vmatmul.mubr.bf16.gmra.mrb[0].mxu0 %v5307
      %v6447 = vpop.f32.mrb[0].mxu0
      %v6448 = vadd.f32 0.0, %v6447
      %v6449 = vpop.f32.mrb[0].mxu0
      %v6450 = vpop.f32.mrb[0].mxu0
      %v6451 = vadd.f32 0.0, %v6450
      %v6452 = vpop.f32.mrb[0].mxu0
      %6453 = vmatprep.mubr.bf16.mxu0 0
      %6454 = vmatmul.mubr.bf16.gmra.mrb[0].mxu0 %v5309
      %v6455 = vpop.f32.mrb[0].mxu0
      %v6456 = vadd.f32 0.0, %v6455
      %v6457 = vpop.f32.mrb[0].mxu0
      %v6458 = vpop.f32.mrb[0].mxu0
      %v6459 = vadd.f32 0.0, %v6458
      %v6460 = vpop.f32.mrb[0].mxu0
      %6461 = vmatprep.mubr.bf16.mxu0 0
      %6462 = vmatmul.mubr.bf16.gmra.mrb[0].mxu0 %v5311
      %v6463 = vpop.f32.mrb[0].mxu0
      %v6464 = vadd.f32 0.0, %v6463
      %v6465 = vpop.f32.mrb[0].mxu0
      %v6466 = vpop.f32.mrb[0].mxu0
      %v6467 = vadd.f32 0.0, %v6466
      %v6468 = vpop.f32.mrb[0].mxu0
      %6469 = vmatprep.mubr.bf16.mxu0 0
      %6470 = vmatmul.mubr.bf16.gmra.mrb[0].mxu0 %v5313
      %v6471 = vpop.f32.mrb[0].mxu0
      %v6472 = vadd.f32 0.0, %v6471
      %v6473 = vpop.f32.mrb[0].mxu0
      %v6474 = vpop.f32.mrb[0].mxu0
      %v6475 = vadd.f32 0.0, %v6474
      %v6476 = vpop.f32.mrb[0].mxu0
      %6477 = vmatprep.mubr.bf16.mxu0 0
      %6478 = vmatmul.mubr.bf16.gmra.mrb[0].mxu0 %v5315
      %v6479 = vpop.f32.mrb[0].mxu0
      %v6480 = vadd.f32 0.0, %v6479
      %v6481 = vpop.f32.mrb[0].mxu0
      %v6482 = vpop.f32.mrb[0].mxu0
      %v6483 = vadd.f32 0.0, %v6482
      %v6484 = vpop.f32.mrb[0].mxu0
      %6485 = vmatprep.mubr.bf16.mxu0 0
      %6486 = vmatmul.mubr.bf16.gmra.mrb[0].mxu0 %v5317
      %v6487 = vpop.f32.mrb[0].mxu0
      %v6488 = vadd.f32 0.0, %v6487
      %v6489 = vpop.f32.mrb[0].mxu0
      %v6490 = vpop.f32.mrb[0].mxu0
      %v6491 = vadd.f32 0.0, %v6490
      %v6492 = vpop.f32.mrb[0].mxu0
      %6493 = vmatprep.mubr.bf16.mxu0 0
      %6494 = vmatmul.mubr.bf16.gmra.mrb[0].mxu0 %v5319
      %v6495 = vpop.f32.mrb[0].mxu0
      %v6496 = vadd.f32 0.0, %v6495
      %v6497 = vpop.f32.mrb[0].mxu0
      %v6498 = vpop.f32.mrb[0].mxu0
      %v6499 = vadd.f32 0.0, %v6498
      %v6500 = vpop.f32.mrb[0].mxu0
      %6501 = vmatprep.mubr.bf16.mxu0 0
      %6502 = vmatmul.mubr.bf16.gmra.mrb[0].mxu0 %v5321
      %v6503 = vpop.f32.mrb[0].mxu0
      %v6504 = vadd.f32 0.0, %v6503
      %v6505 = vpop.f32.mrb[0].mxu0
      %v6506 = vpop.f32.mrb[0].mxu0
      %v6507 = vadd.f32 0.0, %v6506
      %v6508 = vpop.f32.mrb[0].mxu0
      %6509 = vmatprep.mubr.bf16.mxu0 0
      %6510 = vmatmul.mubr.bf16.gmra.mrb[0].mxu0 %v5323
      %v6511 = vpop.f32.mrb[0].mxu0
      %v6512 = vadd.f32 0.0, %v6511
      %v6513 = vpop.f32.mrb[0].mxu0
      %v6514 = vpop.f32.mrb[0].mxu0
      %v6515 = vadd.f32 0.0, %v6514
      %v6516 = vpop.f32.mrb[0].mxu0
      %6517 = vdwg.mxu0
      %v6518 = vadd.f32 %v6097, %v6264
      %v6519 = vadd.f32 %v6098, %v6267
      %v6520 = vadd.f32 %v6099, %v6272
      %v6521 = vadd.f32 %v6100, %v6275
      %v6522 = vadd.f32 %v6101, %v6280
      %v6523 = vadd.f32 %v6102, %v6283
      %v6524 = vadd.f32 %v6103, %v6288
      %v6525 = vadd.f32 %v6104, %v6291
      %v6526 = vadd.f32 %v6105, %v6296
      %v6527 = vadd.f32 %v6106, %v6299
      %v6528 = vadd.f32 %v6107, %v6304
      %v6529 = vadd.f32 %v6108, %v6307
      %v6530 = vadd.f32 %v6109, %v6312
      %v6531 = vadd.f32 %v6110, %v6315
      %v6532 = vadd.f32 %v6111, %v6320
      %v6533 = vadd.f32 %v6112, %v6323
      %v6534 = vadd.f32 %v6113, %v6328
      %v6535 = vadd.f32 %v6114, %v6331
      %v6536 = vadd.f32 %v6115, %v6336
      %v6537 = vadd.f32 %v6116, %v6339
      %v6538 = vadd.f32 %v6117, %v6344
      %v6539 = vadd.f32 %v6118, %v6347
      %v6540 = vadd.f32 %v6119, %v6352
      %v6541 = vadd.f32 %v6120, %v6355
      %v6542 = vadd.f32 %v6121, %v6360
      %v6543 = vadd.f32 %v6122, %v6363
      %v6544 = vadd.f32 %v6123, %v6368
      %v6545 = vadd.f32 %v6124, %v6371
      %v6546 = vadd.f32 %v6125, %v6376
      %v6547 = vadd.f32 %v6126, %v6379
      %v6548 = vadd.f32 %v6127, %v6384
      %v6549 = vadd.f32 %v6128, %v6387
      %v6550 = vadd.f32 %v6129, %v6392
      %v6551 = vadd.f32 %v6130, %v6395
      %v6552 = vadd.f32 %v6131, %v6400
      %v6553 = vadd.f32 %v6132, %v6403
      %v6554 = vadd.f32 %v6133, %v6408
      %v6555 = vadd.f32 %v6134, %v6411
      %v6556 = vadd.f32 %v6135, %v6416
      %v6557 = vadd.f32 %v6136, %v6419
      %v6558 = vadd.f32 %v6137, %v6424
      %v6559 = vadd.f32 %v6138, %v6427
      %v6560 = vadd.f32 %v6139, %v6432
      %v6561 = vadd.f32 %v6140, %v6435
      %v6562 = vadd.f32 %v6141, %v6440
      %v6563 = vadd.f32 %v6142, %v6443
      %v6564 = vadd.f32 %v6143, %v6448
      %v6565 = vadd.f32 %v6144, %v6451
      %v6566 = vadd.f32 %v6145, %v6456
      %v6567 = vadd.f32 %v6146, %v6459
      %v6568 = vadd.f32 %v6147, %v6464
      %v6569 = vadd.f32 %v6148, %v6467
      %v6570 = vadd.f32 %v6149, %v6472
      %v6571 = vadd.f32 %v6150, %v6475
      %v6572 = vadd.f32 %v6151, %v6480
      %v6573 = vadd.f32 %v6152, %v6483
      %v6574 = vadd.f32 %v6153, %v6488
      %v6575 = vadd.f32 %v6154, %v6491
      %v6576 = vadd.f32 %v6155, %v6496
      %v6577 = vadd.f32 %v6156, %v6499
      %v6578 = vadd.f32 %v6157, %v6504
      %v6579 = vadd.f32 %v6158, %v6507
      %v6580 = vadd.f32 %v6159, %v6512
      %v6581 = vadd.f32 %v6160, %v6515
      %v6582 = vld [vmem:[%s5259 + $0x8] sm:$0xff]
      %v6583 = vld [vmem:[%s5259 + $0x10] sm:$0x1]
      %v6584 = vld [vmem:[%s5259 + $0x20] sm:$0xff]
      %v6585 = vld [vmem:[%s5259 + $0x28] sm:$0x1]
      %v6586 = vld [vmem:[%s5259 + $0x38] sm:$0xff]
      %v6587 = vld [vmem:[%s5259 + $0x40] sm:$0x1]
      %v6588 = vld [vmem:[%s5259 + $0x50] sm:$0xff]
      %v6589 = vld [vmem:[%s5259 + $0x58] sm:$0x1]
      %v6590 = vld [vmem:[%s5259 + $0x68] sm:$0xff]
      %v6591 = vld [vmem:[%s5259 + $0x70] sm:$0x1]
      %v6592 = vld [vmem:[%s5259 + $0x80] sm:$0xff]
      %v6593 = vld [vmem:[%s5259 + $0x88] sm:$0x1]
      %v6594 = vld [vmem:[%s5259 + $0x98] sm:$0xff]
      %v6595 = vld [vmem:[%s5259 + $0xa0] sm:$0x1]
      %v6596 = vld [vmem:[%s5259 + $0xb0] sm:$0xff]
      %v6597 = vld [vmem:[%s5259 + $0xb8] sm:$0x1]
      %v6598 = vld [vmem:[%s5259 + $0xc8] sm:$0xff]
      %v6599 = vld [vmem:[%s5259 + $0xd0] sm:$0x1]
      %v6600 = vld [vmem:[%s5259 + $0xe0] sm:$0xff]
      %v6601 = vld [vmem:[%s5259 + $0xe8] sm:$0x1]
      %v6602 = vld [vmem:[%s5259 + $0xf8] sm:$0xff]
      %v6603 = vld [vmem:[%s5259 + $0x100] sm:$0x1]
      %v6604 = vld [vmem:[%s5259 + $0x110] sm:$0xff]
      %v6605 = vld [vmem:[%s5259 + $0x118] sm:$0x1]
      %v6606 = vld [vmem:[%s5259 + $0x128] sm:$0xff]
      %v6607 = vld [vmem:[%s5259 + $0x130] sm:$0x1]
      %v6608 = vld [vmem:[%s5259 + $0x140] sm:$0xff]
      %v6609 = vld [vmem:[%s5259 + $0x148] sm:$0x1]
      %v6610 = vld [vmem:[%s5259 + $0x158] sm:$0xff]
      %v6611 = vld [vmem:[%s5259 + $0x160] sm:$0x1]
      %v6612 = vld [vmem:[%s5259 + $0x170] sm:$0xff]
      %v6613 = vld [vmem:[%s5259 + $0x178] sm:$0x1]
      %v6614 = vld [vmem:[%s5259 + $0x1b8] sm:$0xff]
      %v6615 = vld [vmem:[%s5259 + $0x1c0] sm:$0x1]
      %v6616 = vld [vmem:[%s5259 + $0x1d0] sm:$0xff]
      %v6617 = vld [vmem:[%s5259 + $0x1d8] sm:$0x1]
      %v6618 = vld [vmem:[%s5259 + $0x1e8] sm:$0xff]
      %v6619 = vld [vmem:[%s5259 + $0x1f0] sm:$0x1]
      %v6620 = vld [vmem:[%s5259 + $0x200] sm:$0xff]
      %v6621 = vld [vmem:[%s5259 + $0x208] sm:$0x1]
      %v6622 = vld [vmem:[%s5259 + $0x218] sm:$0xff]
      %v6623 = vld [vmem:[%s5259 + $0x220] sm:$0x1]
      %v6624 = vld [vmem:[%s5259 + $0x230] sm:$0xff]
      %v6625 = vld [vmem:[%s5259 + $0x238] sm:$0x1]
      %v6626 = vld [vmem:[%s5259 + $0x248] sm:$0xff]
      %v6627 = vld [vmem:[%s5259 + $0x250] sm:$0x1]
      %v6628 = vld [vmem:[%s5259 + $0x260] sm:$0xff]
      %v6629 = vld [vmem:[%s5259 + $0x268] sm:$0x1]
      %v6630 = vld [vmem:[%s5259 + $0x278] sm:$0xff]
      %v6631 = vld [vmem:[%s5259 + $0x280] sm:$0x1]
      %v6632 = vld [vmem:[%s5259 + $0x290] sm:$0xff]
      %v6633 = vld [vmem:[%s5259 + $0x298] sm:$0x1]
      %v6634 = vld [vmem:[%s5259 + $0x2a8] sm:$0xff]
      %v6635 = vld [vmem:[%s5259 + $0x2b0] sm:$0x1]
      %v6636 = vld [vmem:[%s5259 + $0x2c0] sm:$0xff]
      %v6637 = vld [vmem:[%s5259 + $0x2c8] sm:$0x1]
      %v6638 = vld [vmem:[%s5259 + $0x2d8] sm:$0xff]
      %v6639 = vld [vmem:[%s5259 + $0x2e0] sm:$0x1]
      %v6640 = vld [vmem:[%s5259 + $0x2f0] sm:$0xff]
      %v6641 = vld [vmem:[%s5259 + $0x2f8] sm:$0x1]
      %v6642 = vld [vmem:[%s5259 + $0x308] sm:$0xff]
      %v6643 = vld [vmem:[%s5259 + $0x310] sm:$0x1]
      %v6644 = vld [vmem:[%s5259 + $0x320] sm:$0xff]
      %v6645 = vld [vmem:[%s5259 + $0x328] sm:$0x1]
      %v6647 = vshrl.u32 %v6582, 16
      %v6649 = vshll.u32 %v6582, 16
      %v6651 = vrot.slane %v6649, 1
      %v6652 = vor.u32 %v6647, %v6651
      %v6654 = vshll.u32 %v6583, 16
      %v6656 = vrot.slane %v6654, 1
      %v6657 = vsel %vm2198, %v6652, %v6656
      %v6659 = vshrl.u32 %v6584, 16
      %v6661 = vshll.u32 %v6584, 16
      %v6663 = vrot.slane %v6661, 1
      %v6664 = vor.u32 %v6659, %v6663
      %v6666 = vshll.u32 %v6585, 16
      %v6668 = vrot.slane %v6666, 1
      %v6669 = vsel %vm2198, %v6664, %v6668
      %v6671 = vshrl.u32 %v6586, 16
      %v6673 = vshll.u32 %v6586, 16
      %v6675 = vrot.slane %v6673, 1
      %v6676 = vor.u32 %v6671, %v6675
      %v6678 = vshll.u32 %v6587, 16
      %v6680 = vrot.slane %v6678, 1
      %v6681 = vsel %vm2198, %v6676, %v6680
      %v6683 = vshrl.u32 %v6588, 16
      %v6685 = vshll.u32 %v6588, 16
      %v6687 = vrot.slane %v6685, 1
      %v6688 = vor.u32 %v6683, %v6687
      %v6690 = vshll.u32 %v6589, 16
      %v6692 = vrot.slane %v6690, 1
      %v6693 = vsel %vm2198, %v6688, %v6692
      %v6695 = vshrl.u32 %v6590, 16
      %v6697 = vshll.u32 %v6590, 16
      %v6699 = vrot.slane %v6697, 1
      %v6700 = vor.u32 %v6695, %v6699
      %v6702 = vshll.u32 %v6591, 16
      %v6704 = vrot.slane %v6702, 1
      %v6705 = vsel %vm2198, %v6700, %v6704
      %v6707 = vshrl.u32 %v6592, 16
      %v6709 = vshll.u32 %v6592, 16
      %v6711 = vrot.slane %v6709, 1
      %v6712 = vor.u32 %v6707, %v6711
      %v6714 = vshll.u32 %v6593, 16
      %v6716 = vrot.slane %v6714, 1
      %v6717 = vsel %vm2198, %v6712, %v6716
      %v6719 = vshrl.u32 %v6594, 16
      %v6721 = vshll.u32 %v6594, 16
      %v6723 = vrot.slane %v6721, 1
      %v6724 = vor.u32 %v6719, %v6723
      %v6726 = vshll.u32 %v6595, 16
      %v6728 = vrot.slane %v6726, 1
      %v6729 = vsel %vm2198, %v6724, %v6728
      %v6731 = vshrl.u32 %v6596, 16
      %v6733 = vshll.u32 %v6596, 16
      %v6735 = vrot.slane %v6733, 1
      %v6736 = vor.u32 %v6731, %v6735
      %v6738 = vshll.u32 %v6597, 16
      %v6740 = vrot.slane %v6738, 1
      %v6741 = vsel %vm2198, %v6736, %v6740
      %v6743 = vshrl.u32 %v6598, 16
      %v6745 = vshll.u32 %v6598, 16
      %v6747 = vrot.slane %v6745, 1
      %v6748 = vor.u32 %v6743, %v6747
      %v6750 = vshll.u32 %v6599, 16
      %v6752 = vrot.slane %v6750, 1
      %v6753 = vsel %vm2198, %v6748, %v6752
      %v6755 = vshrl.u32 %v6600, 16
      %v6757 = vshll.u32 %v6600, 16
      %v6759 = vrot.slane %v6757, 1
      %v6760 = vor.u32 %v6755, %v6759
      %v6762 = vshll.u32 %v6601, 16
      %v6764 = vrot.slane %v6762, 1
      %v6765 = vsel %vm2198, %v6760, %v6764
      %v6767 = vshrl.u32 %v6602, 16
      %v6769 = vshll.u32 %v6602, 16
      %v6771 = vrot.slane %v6769, 1
      %v6772 = vor.u32 %v6767, %v6771
      %v6774 = vshll.u32 %v6603, 16
      %v6776 = vrot.slane %v6774, 1
      %v6777 = vsel %vm2198, %v6772, %v6776
      %v6779 = vshrl.u32 %v6604, 16
      %v6781 = vshll.u32 %v6604, 16
      %v6783 = vrot.slane %v6781, 1
      %v6784 = vor.u32 %v6779, %v6783
      %v6786 = vshll.u32 %v6605, 16
      %v6788 = vrot.slane %v6786, 1
      %v6789 = vsel %vm2198, %v6784, %v6788
      %v6791 = vshrl.u32 %v6606, 16
      %v6793 = vshll.u32 %v6606, 16
      %v6795 = vrot.slane %v6793, 1
      %v6796 = vor.u32 %v6791, %v6795
      %v6798 = vshll.u32 %v6607, 16
      %v6800 = vrot.slane %v6798, 1
      %v6801 = vsel %vm2198, %v6796, %v6800
      %v6803 = vshrl.u32 %v6608, 16
      %v6805 = vshll.u32 %v6608, 16
      %v6807 = vrot.slane %v6805, 1
      %v6808 = vor.u32 %v6803, %v6807
      %v6810 = vshll.u32 %v6609, 16
      %v6812 = vrot.slane %v6810, 1
      %v6813 = vsel %vm2198, %v6808, %v6812
      %v6815 = vshrl.u32 %v6610, 16
      %v6817 = vshll.u32 %v6610, 16
      %v6819 = vrot.slane %v6817, 1
      %v6820 = vor.u32 %v6815, %v6819
      %v6822 = vshll.u32 %v6611, 16
      %v6824 = vrot.slane %v6822, 1
      %v6825 = vsel %vm2198, %v6820, %v6824
      %v6827 = vshrl.u32 %v6612, 16
      %v6829 = vshll.u32 %v6612, 16
      %v6831 = vrot.slane %v6829, 1
      %v6832 = vor.u32 %v6827, %v6831
      %v6834 = vshll.u32 %v6613, 16
      %v6836 = vrot.slane %v6834, 1
      %v6837 = vsel %vm2198, %v6832, %v6836
      %v6839 = vshrl.u32 %v6614, 16
      %v6841 = vshll.u32 %v6614, 16
      %v6843 = vrot.slane %v6841, 1
      %v6844 = vor.u32 %v6839, %v6843
      %v6846 = vshll.u32 %v6615, 16
      %v6848 = vrot.slane %v6846, 1
      %v6849 = vsel %vm2198, %v6844, %v6848
      %v6851 = vshrl.u32 %v6616, 16
      %v6853 = vshll.u32 %v6616, 16
      %v6855 = vrot.slane %v6853, 1
      %v6856 = vor.u32 %v6851, %v6855
      %v6858 = vshll.u32 %v6617, 16
      %v6860 = vrot.slane %v6858, 1
      %v6861 = vsel %vm2198, %v6856, %v6860
      %v6863 = vshrl.u32 %v6618, 16
      %v6865 = vshll.u32 %v6618, 16
      %v6867 = vrot.slane %v6865, 1
      %v6868 = vor.u32 %v6863, %v6867
      %v6870 = vshll.u32 %v6619, 16
      %v6872 = vrot.slane %v6870, 1
      %v6873 = vsel %vm2198, %v6868, %v6872
      %v6875 = vshrl.u32 %v6620, 16
      %v6877 = vshll.u32 %v6620, 16
      %v6879 = vrot.slane %v6877, 1
      %v6880 = vor.u32 %v6875, %v6879
      %v6882 = vshll.u32 %v6621, 16
      %v6884 = vrot.slane %v6882, 1
      %v6885 = vsel %vm2198, %v6880, %v6884
      %v6887 = vshrl.u32 %v6622, 16
      %v6889 = vshll.u32 %v6622, 16
      %v6891 = vrot.slane %v6889, 1
      %v6892 = vor.u32 %v6887, %v6891
      %v6894 = vshll.u32 %v6623, 16
      %v6896 = vrot.slane %v6894, 1
      %v6897 = vsel %vm2198, %v6892, %v6896
      %v6899 = vshrl.u32 %v6624, 16
      %v6901 = vshll.u32 %v6624, 16
      %v6903 = vrot.slane %v6901, 1
      %v6904 = vor.u32 %v6899, %v6903
      %v6906 = vshll.u32 %v6625, 16
      %v6908 = vrot.slane %v6906, 1
      %v6909 = vsel %vm2198, %v6904, %v6908
      %v6911 = vshrl.u32 %v6626, 16
      %v6913 = vshll.u32 %v6626, 16
      %v6915 = vrot.slane %v6913, 1
      %v6916 = vor.u32 %v6911, %v6915
      %v6918 = vshll.u32 %v6627, 16
      %v6920 = vrot.slane %v6918, 1
      %v6921 = vsel %vm2198, %v6916, %v6920
      %v6923 = vshrl.u32 %v6628, 16
      %v6925 = vshll.u32 %v6628, 16
      %v6927 = vrot.slane %v6925, 1
      %v6928 = vor.u32 %v6923, %v6927
      %v6930 = vshll.u32 %v6629, 16
      %v6932 = vrot.slane %v6930, 1
      %v6933 = vsel %vm2198, %v6928, %v6932
      %v6935 = vshrl.u32 %v6630, 16
      %v6937 = vshll.u32 %v6630, 16
      %v6939 = vrot.slane %v6937, 1
      %v6940 = vor.u32 %v6935, %v6939
      %v6942 = vshll.u32 %v6631, 16
      %v6944 = vrot.slane %v6942, 1
      %v6945 = vsel %vm2198, %v6940, %v6944
      %v6947 = vshrl.u32 %v6632, 16
      %v6949 = vshll.u32 %v6632, 16
      %v6951 = vrot.slane %v6949, 1
      %v6952 = vor.u32 %v6947, %v6951
      %v6954 = vshll.u32 %v6633, 16
      %v6956 = vrot.slane %v6954, 1
      %v6957 = vsel %vm2198, %v6952, %v6956
      %v6959 = vshrl.u32 %v6634, 16
      %v6961 = vshll.u32 %v6634, 16
      %v6963 = vrot.slane %v6961, 1
      %v6964 = vor.u32 %v6959, %v6963
      %v6966 = vshll.u32 %v6635, 16
      %v6968 = vrot.slane %v6966, 1
      %v6969 = vsel %vm2198, %v6964, %v6968
      %v6971 = vshrl.u32 %v6636, 16
      %v6973 = vshll.u32 %v6636, 16
      %v6975 = vrot.slane %v6973, 1
      %v6976 = vor.u32 %v6971, %v6975
      %v6978 = vshll.u32 %v6637, 16
      %v6980 = vrot.slane %v6978, 1
      %v6981 = vsel %vm2198, %v6976, %v6980
      %v6983 = vshrl.u32 %v6638, 16
      %v6985 = vshll.u32 %v6638, 16
      %v6987 = vrot.slane %v6985, 1
      %v6988 = vor.u32 %v6983, %v6987
      %v6990 = vshll.u32 %v6639, 16
      %v6992 = vrot.slane %v6990, 1
      %v6993 = vsel %vm2198, %v6988, %v6992
      %v6995 = vshrl.u32 %v6640, 16
      %v6997 = vshll.u32 %v6640, 16
      %v6999 = vrot.slane %v6997, 1
      %v7000 = vor.u32 %v6995, %v6999
      %v7002 = vshll.u32 %v6641, 16
      %v7004 = vrot.slane %v7002, 1
      %v7005 = vsel %vm2198, %v7000, %v7004
      %v7007 = vshrl.u32 %v6642, 16
      %v7009 = vshll.u32 %v6642, 16
      %v7011 = vrot.slane %v7009, 1
      %v7012 = vor.u32 %v7007, %v7011
      %v7014 = vshll.u32 %v6643, 16
      %v7016 = vrot.slane %v7014, 1
      %v7017 = vsel %vm2198, %v7012, %v7016
      %v7019 = vshrl.u32 %v6644, 16
      %v7021 = vshll.u32 %v6644, 16
      %v7023 = vrot.slane %v7021, 1
      %v7024 = vor.u32 %v7019, %v7023
      %v7026 = vshll.u32 %v6645, 16
      %v7028 = vrot.slane %v7026, 1
      %v7029 = vsel %vm2198, %v7024, %v7028
      %s7062 = sadd.s32 %s939, 8
      %s7063 = smul.u32 %s7062, 16
      %s7064 = smul.addr %s7063, 4
      %s7065 = scalar_lea.vmem %s2, %s7064
      %v7066 = vld [vmem:[%s7065] sm:$0xf]
      %v7067 = vld [vmem:[%s7065 + $0x4] sm:$0xf]
      %v7068 = vld [vmem:[%s7065 + $0x8] sm:$0xf]
      %v7069 = vld [vmem:[%s7065 + $0xc] sm:$0xf]
      %v7070 = vld [vmem:[%s7065 + $0x10] sm:$0xf]
      %v7071 = vld [vmem:[%s7065 + $0x14] sm:$0xf]
      %v7072 = vld [vmem:[%s7065 + $0x18] sm:$0xf]
      %v7073 = vld [vmem:[%s7065 + $0x1c] sm:$0xf]
      %v7074 = vld [vmem:[%s7065 + $0x20] sm:$0xf]
      %v7075 = vld [vmem:[%s7065 + $0x24] sm:$0xf]
      %v7076 = vld [vmem:[%s7065 + $0x28] sm:$0xf]
      %v7077 = vld [vmem:[%s7065 + $0x2c] sm:$0xf]
      %v7078 = vld [vmem:[%s7065 + $0x30] sm:$0xf]
      %v7079 = vld [vmem:[%s7065 + $0x34] sm:$0xf]
      %v7080 = vld [vmem:[%s7065 + $0x38] sm:$0xf]
      %v7081 = vld [vmem:[%s7065 + $0x3c] sm:$0xf]
      %v7098 = vunpack.c.l.b16 %v7066
      %v7099 = vunpack.c.l.b16 %v7067
      %v7100 = vunpack.c.l.b16 %v7068
      %v7101 = vunpack.c.l.b16 %v7069
      %v7102 = vunpack.c.l.b16 %v7070
      %v7103 = vunpack.c.l.b16 %v7071
      %v7104 = vunpack.c.l.b16 %v7072
      %v7105 = vunpack.c.l.b16 %v7073
      %v7106 = vunpack.c.l.b16 %v7074
      %v7107 = vunpack.c.l.b16 %v7075
      %v7108 = vunpack.c.l.b16 %v7076
      %v7109 = vunpack.c.l.b16 %v7077
      %v7110 = vunpack.c.l.b16 %v7078
      %v7111 = vunpack.c.l.b16 %v7079
      %v7112 = vunpack.c.l.b16 %v7080
      %v7113 = vunpack.c.l.b16 %v7081
      %v7114 = vpack.c.b16 %v7099, %v7098
      %v7115 = vpack.c.b16 %v7101, %v7100
      %v7116 = vpack.c.b16 %v7103, %v7102
      %v7117 = vpack.c.b16 %v7105, %v7104
      %v7118 = vpack.c.b16 %v7107, %v7106
      %v7119 = vpack.c.b16 %v7109, %v7108
      %v7120 = vpack.c.b16 %v7111, %v7110
      %v7121 = vpack.c.b16 %v7113, %v7112
      %7130 = vmatprep.subr.bf16.mxu0 0
      %7131 = vmatpush1.bf16.msra.mxu0 %v7114
      %7132 = vmatprep.subr.bf16.mxu0 0
      %7133 = vmatpush1.bf16.msra.mxu0 %v7115
      %7134 = vmatprep.subr.bf16.mxu0 0
      %7135 = vmatpush1.bf16.msra.mxu0 %v7116
      %7136 = vmatprep.subr.bf16.mxu0 0
      %7137 = vmatpush1.bf16.msra.mxu0 %v7117
      %7138 = vmatprep.subr.bf16.mxu0 0
      %7139 = vmatpush1.bf16.msra.mxu0 %v7118
      %7140 = vmatprep.subr.bf16.mxu0 0
      %7141 = vmatpush1.bf16.msra.mxu0 %v7119
      %7142 = vmatprep.subr.bf16.mxu0 0
      %7143 = vmatpush1.bf16.msra.mxu0 %v7120
      %7144 = vmatprep.subr.bf16.mxu0 0
      %7145 = vmatpush1.bf16.msra.mxu0 %v7121
      %7146 = vmatprep.subr.bf16.mxu0 0
      %7147 = vmatpush1.bf16.msra.mxu0 0
      %7148 = vmatprep.subr.bf16.mxu0 0
      %7149 = vmatpush1.bf16.msra.mxu0 0
      %7150 = vmatprep.subr.bf16.mxu0 0
      %7151 = vmatpush1.bf16.msra.mxu0 0
      %7152 = vmatprep.subr.bf16.mxu0 0
      %7153 = vmatpush1.bf16.msra.mxu0 0
      %7154 = vmatprep.subr.bf16.mxu0 0
      %7155 = vmatpush1.bf16.msra.mxu0 0
      %7156 = vmatprep.subr.bf16.mxu0 0
      %7157 = vmatpush1.bf16.msra.mxu0 0
      %7158 = vmatprep.subr.bf16.mxu0 0
      %7159 = vmatpush1.bf16.msra.mxu0 0
      %7160 = vmatprep.subr.bf16.mxu0 0
      %7161 = vmatpush1.bf16.msra.mxu0 0
      %7162 = vmatprep.mubr.bf16.mxu0 0
      %7163 = vmatmul.mubr.bf16.gmra.mrb[0].mxu0 %v6657
      %v7164 = vpop.f32.mrb[0].mxu0
      %v7165 = vadd.f32 0.0, %v7164
      %v7166 = vpop.f32.mrb[0].mxu0
      %v7167 = vpop.f32.mrb[0].mxu0
      %v7168 = vadd.f32 0.0, %v7167
      %v7169 = vpop.f32.mrb[0].mxu0
      %7170 = vmatprep.mubr.bf16.mxu0 0
      %7171 = vmatmul.mubr.bf16.gmra.mrb[0].mxu0 %v6669
      %v7172 = vpop.f32.mrb[0].mxu0
      %v7173 = vadd.f32 0.0, %v7172
      %v7174 = vpop.f32.mrb[0].mxu0
      %v7175 = vpop.f32.mrb[0].mxu0
      %v7176 = vadd.f32 0.0, %v7175
      %v7177 = vpop.f32.mrb[0].mxu0
      %7178 = vmatprep.mubr.bf16.mxu0 0
      %7179 = vmatmul.mubr.bf16.gmra.mrb[0].mxu0 %v6681
      %v7180 = vpop.f32.mrb[0].mxu0
      %v7181 = vadd.f32 0.0, %v7180
      %v7182 = vpop.f32.mrb[0].mxu0
      %v7183 = vpop.f32.mrb[0].mxu0
      %v7184 = vadd.f32 0.0, %v7183
      %v7185 = vpop.f32.mrb[0].mxu0
      %7186 = vmatprep.mubr.bf16.mxu0 0
      %7187 = vmatmul.mubr.bf16.gmra.mrb[0].mxu0 %v6693
      %v7188 = vpop.f32.mrb[0].mxu0
      %v7189 = vadd.f32 0.0, %v7188
      %v7190 = vpop.f32.mrb[0].mxu0
      %v7191 = vpop.f32.mrb[0].mxu0
      %v7192 = vadd.f32 0.0, %v7191
      %v7193 = vpop.f32.mrb[0].mxu0
      %7194 = vmatprep.mubr.bf16.mxu0 0
      %7195 = vmatmul.mubr.bf16.gmra.mrb[0].mxu0 %v6705
      %v7196 = vpop.f32.mrb[0].mxu0
      %v7197 = vadd.f32 0.0, %v7196
      %v7198 = vpop.f32.mrb[0].mxu0
      %v7199 = vpop.f32.mrb[0].mxu0
      %v7200 = vadd.f32 0.0, %v7199
      %v7201 = vpop.f32.mrb[0].mxu0
      %7202 = vmatprep.mubr.bf16.mxu0 0
      %7203 = vmatmul.mubr.bf16.gmra.mrb[0].mxu0 %v6717
      %v7204 = vpop.f32.mrb[0].mxu0
      %v7205 = vadd.f32 0.0, %v7204
      %v7206 = vpop.f32.mrb[0].mxu0
      %v7207 = vpop.f32.mrb[0].mxu0
      %v7208 = vadd.f32 0.0, %v7207
      %v7209 = vpop.f32.mrb[0].mxu0
      %7210 = vmatprep.mubr.bf16.mxu0 0
      %7211 = vmatmul.mubr.bf16.gmra.mrb[0].mxu0 %v6729
      %v7212 = vpop.f32.mrb[0].mxu0
      %v7213 = vadd.f32 0.0, %v7212
      %v7214 = vpop.f32.mrb[0].mxu0
      %v7215 = vpop.f32.mrb[0].mxu0
      %v7216 = vadd.f32 0.0, %v7215
      %v7217 = vpop.f32.mrb[0].mxu0
      %7218 = vmatprep.mubr.bf16.mxu0 0
      %7219 = vmatmul.mubr.bf16.gmra.mrb[0].mxu0 %v6741
      %v7220 = vpop.f32.mrb[0].mxu0
      %v7221 = vadd.f32 0.0, %v7220
      %v7222 = vpop.f32.mrb[0].mxu0
      %v7223 = vpop.f32.mrb[0].mxu0
      %v7224 = vadd.f32 0.0, %v7223
      %v7225 = vpop.f32.mrb[0].mxu0
      %7226 = vmatprep.mubr.bf16.mxu0 0
      %7227 = vmatmul.mubr.bf16.gmra.mrb[0].mxu0 %v6753
      %v7228 = vpop.f32.mrb[0].mxu0
      %v7229 = vadd.f32 0.0, %v7228
      %v7230 = vpop.f32.mrb[0].mxu0
      %v7231 = vpop.f32.mrb[0].mxu0
      %v7232 = vadd.f32 0.0, %v7231
      %v7233 = vpop.f32.mrb[0].mxu0
      %7234 = vmatprep.mubr.bf16.mxu0 0
      %7235 = vmatmul.mubr.bf16.gmra.mrb[0].mxu0 %v6765
      %v7236 = vpop.f32.mrb[0].mxu0
      %v7237 = vadd.f32 0.0, %v7236
      %v7238 = vpop.f32.mrb[0].mxu0
      %v7239 = vpop.f32.mrb[0].mxu0
      %v7240 = vadd.f32 0.0, %v7239
      %v7241 = vpop.f32.mrb[0].mxu0
      %7242 = vmatprep.mubr.bf16.mxu0 0
      %7243 = vmatmul.mubr.bf16.gmra.mrb[0].mxu0 %v6777
      %v7244 = vpop.f32.mrb[0].mxu0
      %v7245 = vadd.f32 0.0, %v7244
      %v7246 = vpop.f32.mrb[0].mxu0
      %v7247 = vpop.f32.mrb[0].mxu0
      %v7248 = vadd.f32 0.0, %v7247
      %v7249 = vpop.f32.mrb[0].mxu0
      %7250 = vmatprep.mubr.bf16.mxu0 0
      %7251 = vmatmul.mubr.bf16.gmra.mrb[0].mxu0 %v6789
      %v7252 = vpop.f32.mrb[0].mxu0
      %v7253 = vadd.f32 0.0, %v7252
      %v7254 = vpop.f32.mrb[0].mxu0
      %v7255 = vpop.f32.mrb[0].mxu0
      %v7256 = vadd.f32 0.0, %v7255
      %v7257 = vpop.f32.mrb[0].mxu0
      %7258 = vmatprep.mubr.bf16.mxu0 0
      %7259 = vmatmul.mubr.bf16.gmra.mrb[0].mxu0 %v6801
      %v7260 = vpop.f32.mrb[0].mxu0
      %v7261 = vadd.f32 0.0, %v7260
      %v7262 = vpop.f32.mrb[0].mxu0
      %v7263 = vpop.f32.mrb[0].mxu0
      %v7264 = vadd.f32 0.0, %v7263
      %v7265 = vpop.f32.mrb[0].mxu0
      %7266 = vmatprep.mubr.bf16.mxu0 0
      %7267 = vmatmul.mubr.bf16.gmra.mrb[0].mxu0 %v6813
      %v7268 = vpop.f32.mrb[0].mxu0
      %v7269 = vadd.f32 0.0, %v7268
      %v7270 = vpop.f32.mrb[0].mxu0
      %v7271 = vpop.f32.mrb[0].mxu0
      %v7272 = vadd.f32 0.0, %v7271
      %v7273 = vpop.f32.mrb[0].mxu0
      %7274 = vmatprep.mubr.bf16.mxu0 0
      %7275 = vmatmul.mubr.bf16.gmra.mrb[0].mxu0 %v6825
      %v7276 = vpop.f32.mrb[0].mxu0
      %v7277 = vadd.f32 0.0, %v7276
      %v7278 = vpop.f32.mrb[0].mxu0
      %v7279 = vpop.f32.mrb[0].mxu0
      %v7280 = vadd.f32 0.0, %v7279
      %v7281 = vpop.f32.mrb[0].mxu0
      %7282 = vmatprep.mubr.bf16.mxu0 0
      %7283 = vmatmul.mubr.bf16.gmra.mrb[0].mxu0 %v6837
      %v7284 = vpop.f32.mrb[0].mxu0
      %v7285 = vadd.f32 0.0, %v7284
      %v7286 = vpop.f32.mrb[0].mxu0
      %v7287 = vpop.f32.mrb[0].mxu0
      %v7288 = vadd.f32 0.0, %v7287
      %v7289 = vpop.f32.mrb[0].mxu0
      %7290 = vmatprep.mubr.bf16.mxu0 0
      %7291 = vmatmul.mubr.bf16.gmra.mrb[0].mxu0 %v6849
      %v7292 = vpop.f32.mrb[0].mxu0
      %v7293 = vadd.f32 0.0, %v7292
      %v7294 = vpop.f32.mrb[0].mxu0
      %v7295 = vpop.f32.mrb[0].mxu0
      %v7296 = vadd.f32 0.0, %v7295
      %v7297 = vpop.f32.mrb[0].mxu0
      %7298 = vmatprep.mubr.bf16.mxu0 0
      %7299 = vmatmul.mubr.bf16.gmra.mrb[0].mxu0 %v6861
      %v7300 = vpop.f32.mrb[0].mxu0
      %v7301 = vadd.f32 0.0, %v7300
      %v7302 = vpop.f32.mrb[0].mxu0
      %v7303 = vpop.f32.mrb[0].mxu0
      %v7304 = vadd.f32 0.0, %v7303
      %v7305 = vpop.f32.mrb[0].mxu0
      %7306 = vmatprep.mubr.bf16.mxu0 0
      %7307 = vmatmul.mubr.bf16.gmra.mrb[0].mxu0 %v6873
      %v7308 = vpop.f32.mrb[0].mxu0
      %v7309 = vadd.f32 0.0, %v7308
      %v7310 = vpop.f32.mrb[0].mxu0
      %v7311 = vpop.f32.mrb[0].mxu0
      %v7312 = vadd.f32 0.0, %v7311
      %v7313 = vpop.f32.mrb[0].mxu0
      %7314 = vmatprep.mubr.bf16.mxu0 0
      %7315 = vmatmul.mubr.bf16.gmra.mrb[0].mxu0 %v6885
      %v7316 = vpop.f32.mrb[0].mxu0
      %v7317 = vadd.f32 0.0, %v7316
      %v7318 = vpop.f32.mrb[0].mxu0
      %v7319 = vpop.f32.mrb[0].mxu0
      %v7320 = vadd.f32 0.0, %v7319
      %v7321 = vpop.f32.mrb[0].mxu0
      %7322 = vmatprep.mubr.bf16.mxu0 0
      %7323 = vmatmul.mubr.bf16.gmra.mrb[0].mxu0 %v6897
      %v7324 = vpop.f32.mrb[0].mxu0
      %v7325 = vadd.f32 0.0, %v7324
      %v7326 = vpop.f32.mrb[0].mxu0
      %v7327 = vpop.f32.mrb[0].mxu0
      %v7328 = vadd.f32 0.0, %v7327
      %v7329 = vpop.f32.mrb[0].mxu0
      %7330 = vmatprep.mubr.bf16.mxu0 0
      %7331 = vmatmul.mubr.bf16.gmra.mrb[0].mxu0 %v6909
      %v7332 = vpop.f32.mrb[0].mxu0
      %v7333 = vadd.f32 0.0, %v7332
      %v7334 = vpop.f32.mrb[0].mxu0
      %v7335 = vpop.f32.mrb[0].mxu0
      %v7336 = vadd.f32 0.0, %v7335
      %v7337 = vpop.f32.mrb[0].mxu0
      %7338 = vmatprep.mubr.bf16.mxu0 0
      %7339 = vmatmul.mubr.bf16.gmra.mrb[0].mxu0 %v6921
      %v7340 = vpop.f32.mrb[0].mxu0
      %v7341 = vadd.f32 0.0, %v7340
      %v7342 = vpop.f32.mrb[0].mxu0
      %v7343 = vpop.f32.mrb[0].mxu0
      %v7344 = vadd.f32 0.0, %v7343
      %v7345 = vpop.f32.mrb[0].mxu0
      %7346 = vmatprep.mubr.bf16.mxu0 0
      %7347 = vmatmul.mubr.bf16.gmra.mrb[0].mxu0 %v6933
      %v7348 = vpop.f32.mrb[0].mxu0
      %v7349 = vadd.f32 0.0, %v7348
      %v7350 = vpop.f32.mrb[0].mxu0
      %v7351 = vpop.f32.mrb[0].mxu0
      %v7352 = vadd.f32 0.0, %v7351
      %v7353 = vpop.f32.mrb[0].mxu0
      %7354 = vmatprep.mubr.bf16.mxu0 0
      %7355 = vmatmul.mubr.bf16.gmra.mrb[0].mxu0 %v6945
      %v7356 = vpop.f32.mrb[0].mxu0
      %v7357 = vadd.f32 0.0, %v7356
      %v7358 = vpop.f32.mrb[0].mxu0
      %v7359 = vpop.f32.mrb[0].mxu0
      %v7360 = vadd.f32 0.0, %v7359
      %v7361 = vpop.f32.mrb[0].mxu0
      %7362 = vmatprep.mubr.bf16.mxu0 0
      %7363 = vmatmul.mubr.bf16.gmra.mrb[0].mxu0 %v6957
      %v7364 = vpop.f32.mrb[0].mxu0
      %v7365 = vadd.f32 0.0, %v7364
      %v7366 = vpop.f32.mrb[0].mxu0
      %v7367 = vpop.f32.mrb[0].mxu0
      %v7368 = vadd.f32 0.0, %v7367
      %v7369 = vpop.f32.mrb[0].mxu0
      %7370 = vmatprep.mubr.bf16.mxu0 0
      %7371 = vmatmul.mubr.bf16.gmra.mrb[0].mxu0 %v6969
      %v7372 = vpop.f32.mrb[0].mxu0
      %v7373 = vadd.f32 0.0, %v7372
      %v7374 = vpop.f32.mrb[0].mxu0
      %v7375 = vpop.f32.mrb[0].mxu0
      %v7376 = vadd.f32 0.0, %v7375
      %v7377 = vpop.f32.mrb[0].mxu0
      %7378 = vmatprep.mubr.bf16.mxu0 0
      %7379 = vmatmul.mubr.bf16.gmra.mrb[0].mxu0 %v6981
      %v7380 = vpop.f32.mrb[0].mxu0
      %v7381 = vadd.f32 0.0, %v7380
      %v7382 = vpop.f32.mrb[0].mxu0
      %v7383 = vpop.f32.mrb[0].mxu0
      %v7384 = vadd.f32 0.0, %v7383
      %v7385 = vpop.f32.mrb[0].mxu0
      %7386 = vmatprep.mubr.bf16.mxu0 0
      %7387 = vmatmul.mubr.bf16.gmra.mrb[0].mxu0 %v6993
      %v7388 = vpop.f32.mrb[0].mxu0
      %v7389 = vadd.f32 0.0, %v7388
      %v7390 = vpop.f32.mrb[0].mxu0
      %v7391 = vpop.f32.mrb[0].mxu0
      %v7392 = vadd.f32 0.0, %v7391
      %v7393 = vpop.f32.mrb[0].mxu0
      %7394 = vmatprep.mubr.bf16.mxu0 0
      %7395 = vmatmul.mubr.bf16.gmra.mrb[0].mxu0 %v7005
      %v7396 = vpop.f32.mrb[0].mxu0
      %v7397 = vadd.f32 0.0, %v7396
      %v7398 = vpop.f32.mrb[0].mxu0
      %v7399 = vpop.f32.mrb[0].mxu0
      %v7400 = vadd.f32 0.0, %v7399
      %v7401 = vpop.f32.mrb[0].mxu0
      %7402 = vmatprep.mubr.bf16.mxu0 0
      %7403 = vmatmul.mubr.bf16.gmra.mrb[0].mxu0 %v7017
      %v7404 = vpop.f32.mrb[0].mxu0
      %v7405 = vadd.f32 0.0, %v7404
      %v7406 = vpop.f32.mrb[0].mxu0
      %v7407 = vpop.f32.mrb[0].mxu0
      %v7408 = vadd.f32 0.0, %v7407
      %v7409 = vpop.f32.mrb[0].mxu0
      %7410 = vmatprep.mubr.bf16.mxu0 0
      %7411 = vmatmul.mubr.bf16.gmra.mrb[0].mxu0 %v7029
      %v7412 = vpop.f32.mrb[0].mxu0
      %v7413 = vadd.f32 0.0, %v7412
      %v7414 = vpop.f32.mrb[0].mxu0
      %v7415 = vpop.f32.mrb[0].mxu0
      %v7416 = vadd.f32 0.0, %v7415
      %v7417 = vpop.f32.mrb[0].mxu0
      %7418 = vdwg.mxu0
      %v7419 = vadd.f32 %v6518, %v7165
      %v7420 = vadd.f32 %v6519, %v7168
      %v7421 = vadd.f32 %v6520, %v7173
      %v7422 = vadd.f32 %v6521, %v7176
      %v7423 = vadd.f32 %v6522, %v7181
      %v7424 = vadd.f32 %v6523, %v7184
      %v7425 = vadd.f32 %v6524, %v7189
      %v7426 = vadd.f32 %v6525, %v7192
      %v7427 = vadd.f32 %v6526, %v7197
      %v7428 = vadd.f32 %v6527, %v7200
      %v7429 = vadd.f32 %v6528, %v7205
      %v7430 = vadd.f32 %v6529, %v7208
      %v7431 = vadd.f32 %v6530, %v7213
      %v7432 = vadd.f32 %v6531, %v7216
      %v7433 = vadd.f32 %v6532, %v7221
      %v7434 = vadd.f32 %v6533, %v7224
      %v7435 = vadd.f32 %v6534, %v7229
      %v7436 = vadd.f32 %v6535, %v7232
      %v7437 = vadd.f32 %v6536, %v7237
      %v7438 = vadd.f32 %v6537, %v7240
      %v7439 = vadd.f32 %v6538, %v7245
      %v7440 = vadd.f32 %v6539, %v7248
      %v7441 = vadd.f32 %v6540, %v7253
      %v7442 = vadd.f32 %v6541, %v7256
      %v7443 = vadd.f32 %v6542, %v7261
      %v7444 = vadd.f32 %v6543, %v7264
      %v7445 = vadd.f32 %v6544, %v7269
      %v7446 = vadd.f32 %v6545, %v7272
      %v7447 = vadd.f32 %v6546, %v7277
      %v7448 = vadd.f32 %v6547, %v7280
      %v7449 = vadd.f32 %v6548, %v7285
      %v7450 = vadd.f32 %v6549, %v7288
      %v7451 = vadd.f32 %v6550, %v7293
      %v7452 = vadd.f32 %v6551, %v7296
      %v7453 = vadd.f32 %v6552, %v7301
      %v7454 = vadd.f32 %v6553, %v7304
      %v7455 = vadd.f32 %v6554, %v7309
      %v7456 = vadd.f32 %v6555, %v7312
      %v7457 = vadd.f32 %v6556, %v7317
      %v7458 = vadd.f32 %v6557, %v7320
      %v7459 = vadd.f32 %v6558, %v7325
      %v7460 = vadd.f32 %v6559, %v7328
      %v7461 = vadd.f32 %v6560, %v7333
      %v7462 = vadd.f32 %v6561, %v7336
      %v7463 = vadd.f32 %v6562, %v7341
      %v7464 = vadd.f32 %v6563, %v7344
      %v7465 = vadd.f32 %v6564, %v7349
      %v7466 = vadd.f32 %v6565, %v7352
      %v7467 = vadd.f32 %v6566, %v7357
      %v7468 = vadd.f32 %v6567, %v7360
      %v7469 = vadd.f32 %v6568, %v7365
      %v7470 = vadd.f32 %v6569, %v7368
      %v7471 = vadd.f32 %v6570, %v7373
      %v7472 = vadd.f32 %v6571, %v7376
      %v7473 = vadd.f32 %v6572, %v7381
      %v7474 = vadd.f32 %v6573, %v7384
      %v7475 = vadd.f32 %v6574, %v7389
      %v7476 = vadd.f32 %v6575, %v7392
      %v7477 = vadd.f32 %v6576, %v7397
      %v7478 = vadd.f32 %v6577, %v7400
      %v7479 = vadd.f32 %v6578, %v7405
      %v7480 = vadd.f32 %v6579, %v7408
      %v7481 = vadd.f32 %v6580, %v7413
      %v7482 = vadd.f32 %v6581, %v7416
      %v7483 = vmax.f32 %v7419, 0.0
      %v7484 = vmax.f32 %v7420, 0.0
      %v7485 = vmax.f32 %v7421, 0.0
      %v7486 = vmax.f32 %v7422, 0.0
      %v7487 = vmax.f32 %v7423, 0.0
      %v7488 = vmax.f32 %v7424, 0.0
      %v7489 = vmax.f32 %v7425, 0.0
      %v7490 = vmax.f32 %v7426, 0.0
      %v7491 = vmax.f32 %v7427, 0.0
      %v7492 = vmax.f32 %v7428, 0.0
      %v7493 = vmax.f32 %v7429, 0.0
      %v7494 = vmax.f32 %v7430, 0.0
      %v7495 = vmax.f32 %v7431, 0.0
      %v7496 = vmax.f32 %v7432, 0.0
      %v7497 = vmax.f32 %v7433, 0.0
      %v7498 = vmax.f32 %v7434, 0.0
      %v7499 = vmax.f32 %v7435, 0.0
      %v7500 = vmax.f32 %v7436, 0.0
      %v7501 = vmax.f32 %v7437, 0.0
      %v7502 = vmax.f32 %v7438, 0.0
      %v7503 = vmax.f32 %v7439, 0.0
      %v7504 = vmax.f32 %v7440, 0.0
      %v7505 = vmax.f32 %v7441, 0.0
      %v7506 = vmax.f32 %v7442, 0.0
      %v7507 = vmax.f32 %v7443, 0.0
      %v7508 = vmax.f32 %v7444, 0.0
      %v7509 = vmax.f32 %v7445, 0.0
      %v7510 = vmax.f32 %v7446, 0.0
      %v7511 = vmax.f32 %v7447, 0.0
      %v7512 = vmax.f32 %v7448, 0.0
      %v7513 = vmax.f32 %v7449, 0.0
      %v7514 = vmax.f32 %v7450, 0.0
      %v7515 = vmax.f32 %v7451, 0.0
      %v7516 = vmax.f32 %v7452, 0.0
      %v7517 = vmax.f32 %v7453, 0.0
      %v7518 = vmax.f32 %v7454, 0.0
      %v7519 = vmax.f32 %v7455, 0.0
      %v7520 = vmax.f32 %v7456, 0.0
      %v7521 = vmax.f32 %v7457, 0.0
      %v7522 = vmax.f32 %v7458, 0.0
      %v7523 = vmax.f32 %v7459, 0.0
      %v7524 = vmax.f32 %v7460, 0.0
      %v7525 = vmax.f32 %v7461, 0.0
      %v7526 = vmax.f32 %v7462, 0.0
      %v7527 = vmax.f32 %v7463, 0.0
      %v7528 = vmax.f32 %v7464, 0.0
      %v7529 = vmax.f32 %v7465, 0.0
      %v7530 = vmax.f32 %v7466, 0.0
      %v7531 = vmax.f32 %v7467, 0.0
      %v7532 = vmax.f32 %v7468, 0.0
      %v7533 = vmax.f32 %v7469, 0.0
      %v7534 = vmax.f32 %v7470, 0.0
      %v7535 = vmax.f32 %v7471, 0.0
      %v7536 = vmax.f32 %v7472, 0.0
      %v7537 = vmax.f32 %v7473, 0.0
      %v7538 = vmax.f32 %v7474, 0.0
      %v7539 = vmax.f32 %v7475, 0.0
      %v7540 = vmax.f32 %v7476, 0.0
      %v7541 = vmax.f32 %v7477, 0.0
      %v7542 = vmax.f32 %v7478, 0.0
      %v7543 = vmax.f32 %v7479, 0.0
      %v7544 = vmax.f32 %v7480, 0.0
      %v7545 = vmax.f32 %v7481, 0.0
      %v7546 = vmax.f32 %v7482, 0.0
      %p7547 = scmp.lt.s32.totalorder %s938, 0
      %s7548 = ssub.s32 0, %s938
      %s7549 = scalar_select %p7547, %s7548, %s938
      %s7550 = sand.u32 %s7549, 1
      %s7551 = ssub.s32 0, %s7550
      %s7552 = scalar_select %p7547, %s7551, %s7550
      %p7553 = scmp.ne.s32.totalorder %s7552, 0
      %p7554 = scmp.lt.s32.totalorder %s7552, 0
      %p7555 = pnand %p7554, %p7553
      %p7556 = pneg %p7555
      %s7557 = sadd.s32 %s7552, 2
      %s7558 = scalar_select %p7556, %s7557, %s7552
      %p7559 = scmp.eq.s32.totalorder %s7558, 0
      %v7560 = vld [vmem:[#allocation3] sm:$0xff]
      %v7561 = vld [vmem:[#allocation3 + $0x8] sm:$0xff]
      %v7562 = vld [vmem:[#allocation3 + $0x10] sm:$0xff]
      %v7563 = vld [vmem:[#allocation3 + $0x18] sm:$0xff]
      %v7564 = vld [vmem:[#allocation3 + $0x20] sm:$0xff]
      %v7565 = vld [vmem:[#allocation3 + $0x28] sm:$0xff]
      %v7566 = vld [vmem:[#allocation3 + $0x30] sm:$0xff]
      %v7567 = vld [vmem:[#allocation3 + $0x38] sm:$0xff]
      %v7568 = vld [vmem:[#allocation3 + $0x40] sm:$0xff]
      %v7569 = vld [vmem:[#allocation3 + $0x48] sm:$0xff]
      %v7570 = vld [vmem:[#allocation3 + $0x50] sm:$0xff]
      %v7571 = vld [vmem:[#allocation3 + $0x58] sm:$0xff]
      %v7572 = vld [vmem:[#allocation3 + $0x60] sm:$0xff]
      %v7573 = vld [vmem:[#allocation3 + $0x68] sm:$0xff]
      %v7574 = vld [vmem:[#allocation3 + $0x70] sm:$0xff]
      %v7575 = vld [vmem:[#allocation3 + $0x78] sm:$0xff]
      %v7576 = vld [vmem:[#allocation3 + $0x80] sm:$0xff]
      %v7577 = vld [vmem:[#allocation3 + $0x88] sm:$0xff]
      %v7578 = vld [vmem:[#allocation3 + $0x90] sm:$0xff]
      %v7579 = vld [vmem:[#allocation3 + $0x98] sm:$0xff]
      %v7580 = vld [vmem:[#allocation3 + $0xa0] sm:$0xff]
      %v7581 = vld [vmem:[#allocation3 + $0xa8] sm:$0xff]
      %v7582 = vld [vmem:[#allocation3 + $0xb0] sm:$0xff]
      %v7583 = vld [vmem:[#allocation3 + $0xb8] sm:$0xff]
      %v7584 = vld [vmem:[#allocation3 + $0xc0] sm:$0xff]
      %v7585 = vld [vmem:[#allocation3 + $0xc8] sm:$0xff]
      %v7586 = vld [vmem:[#allocation3 + $0xd0] sm:$0xff]
      %v7587 = vld [vmem:[#allocation3 + $0xd8] sm:$0xff]
      %v7588 = vld [vmem:[#allocation3 + $0xe0] sm:$0xff]
      %v7589 = vld [vmem:[#allocation3 + $0xe8] sm:$0xff]
      %v7590 = vld [vmem:[#allocation3 + $0xf0] sm:$0xff]
      %v7591 = vld [vmem:[#allocation3 + $0xf8] sm:$0xff]
      %v7592 = vld [vmem:[#allocation3 + $0x100] sm:$0xff]
      %v7593 = vld [vmem:[#allocation3 + $0x108] sm:$0xff]
      %v7594 = vld [vmem:[#allocation3 + $0x110] sm:$0xff]
      %v7595 = vld [vmem:[#allocation3 + $0x118] sm:$0xff]
      %v7596 = vld [vmem:[#allocation3 + $0x120] sm:$0xff]
      %v7597 = vld [vmem:[#allocation3 + $0x128] sm:$0xff]
      %v7598 = vld [vmem:[#allocation3 + $0x130] sm:$0xff]
      %v7599 = vld [vmem:[#allocation3 + $0x138] sm:$0xff]
      %v7600 = vld [vmem:[#allocation3 + $0x140] sm:$0xff]
      %v7601 = vld [vmem:[#allocation3 + $0x148] sm:$0xff]
      %v7602 = vld [vmem:[#allocation3 + $0x150] sm:$0xff]
      %v7603 = vld [vmem:[#allocation3 + $0x158] sm:$0xff]
      %v7604 = vld [vmem:[#allocation3 + $0x160] sm:$0xff]
      %v7605 = vld [vmem:[#allocation3 + $0x168] sm:$0xff]
      %v7606 = vld [vmem:[#allocation3 + $0x170] sm:$0xff]
      %v7607 = vld [vmem:[#allocation3 + $0x178] sm:$0xff]
      %v7608 = vld [vmem:[#allocation3 + $0x180] sm:$0xff]
      %v7609 = vld [vmem:[#allocation3 + $0x188] sm:$0xff]
      %v7610 = vld [vmem:[#allocation3 + $0x190] sm:$0xff]
      %v7611 = vld [vmem:[#allocation3 + $0x198] sm:$0xff]
      %v7612 = vld [vmem:[#allocation3 + $0x1a0] sm:$0xff]
      %v7613 = vld [vmem:[#allocation3 + $0x1a8] sm:$0xff]
      %v7614 = vld [vmem:[#allocation3 + $0x1b0] sm:$0xff]
      %v7615 = vld [vmem:[#allocation3 + $0x1b8] sm:$0xff]
      %v7616 = vld [vmem:[#allocation3 + $0x1c0] sm:$0xff]
      %v7617 = vld [vmem:[#allocation3 + $0x1c8] sm:$0xff]
      %v7618 = vld [vmem:[#allocation3 + $0x1d0] sm:$0xff]
      %v7619 = vld [vmem:[#allocation3 + $0x1d8] sm:$0xff]
      %v7620 = vld [vmem:[#allocation3 + $0x1e0] sm:$0xff]
      %v7621 = vld [vmem:[#allocation3 + $0x1e8] sm:$0xff]
      %v7622 = vld [vmem:[#allocation3 + $0x1f0] sm:$0xff]
      %v7623 = vld [vmem:[#allocation3 + $0x1f8] sm:$0xff]
      %v7624 = vadd.f32 %v7483, %v7560
      %v7625 = vadd.f32 %v7484, %v7561
      %v7626 = vadd.f32 %v7485, %v7562
      %v7627 = vadd.f32 %v7486, %v7563
      %v7628 = vadd.f32 %v7487, %v7564
      %v7629 = vadd.f32 %v7488, %v7565
      %v7630 = vadd.f32 %v7489, %v7566
      %v7631 = vadd.f32 %v7490, %v7567
      %v7632 = vadd.f32 %v7491, %v7568
      %v7633 = vadd.f32 %v7492, %v7569
      %v7634 = vadd.f32 %v7493, %v7570
      %v7635 = vadd.f32 %v7494, %v7571
      %v7636 = vadd.f32 %v7495, %v7572
      %v7637 = vadd.f32 %v7496, %v7573
      %v7638 = vadd.f32 %v7497, %v7574
      %v7639 = vadd.f32 %v7498, %v7575
      %v7640 = vadd.f32 %v7499, %v7576
      %v7641 = vadd.f32 %v7500, %v7577
      %v7642 = vadd.f32 %v7501, %v7578
      %v7643 = vadd.f32 %v7502, %v7579
      %v7644 = vadd.f32 %v7503, %v7580
      %v7645 = vadd.f32 %v7504, %v7581
      %v7646 = vadd.f32 %v7505, %v7582
      %v7647 = vadd.f32 %v7506, %v7583
      %v7648 = vadd.f32 %v7507, %v7584
      %v7649 = vadd.f32 %v7508, %v7585
      %v7650 = vadd.f32 %v7509, %v7586
      %v7651 = vadd.f32 %v7510, %v7587
      %v7652 = vadd.f32 %v7511, %v7588
      %v7653 = vadd.f32 %v7512, %v7589
      %v7654 = vadd.f32 %v7513, %v7590
      %v7655 = vadd.f32 %v7514, %v7591
      %v7656 = vadd.f32 %v7515, %v7592
      %v7657 = vadd.f32 %v7516, %v7593
      %v7658 = vadd.f32 %v7517, %v7594
      %v7659 = vadd.f32 %v7518, %v7595
      %v7660 = vadd.f32 %v7519, %v7596
      %v7661 = vadd.f32 %v7520, %v7597
      %v7662 = vadd.f32 %v7521, %v7598
      %v7663 = vadd.f32 %v7522, %v7599
      %v7664 = vadd.f32 %v7523, %v7600
      %v7665 = vadd.f32 %v7524, %v7601
      %v7666 = vadd.f32 %v7525, %v7602
      %v7667 = vadd.f32 %v7526, %v7603
      %v7668 = vadd.f32 %v7527, %v7604
      %v7669 = vadd.f32 %v7528, %v7605
      %v7670 = vadd.f32 %v7529, %v7606
      %v7671 = vadd.f32 %v7530, %v7607
      %v7672 = vadd.f32 %v7531, %v7608
      %v7673 = vadd.f32 %v7532, %v7609
      %v7674 = vadd.f32 %v7533, %v7610
      %v7675 = vadd.f32 %v7534, %v7611
      %v7676 = vadd.f32 %v7535, %v7612
      %v7677 = vadd.f32 %v7536, %v7613
      %v7678 = vadd.f32 %v7537, %v7614
      %v7679 = vadd.f32 %v7538, %v7615
      %v7680 = vadd.f32 %v7539, %v7616
      %v7681 = vadd.f32 %v7540, %v7617
      %v7682 = vadd.f32 %v7541, %v7618
      %v7683 = vadd.f32 %v7542, %v7619
      %v7684 = vadd.f32 %v7543, %v7620
      %v7685 = vadd.f32 %v7544, %v7621
      %v7686 = vadd.f32 %v7545, %v7622
      %v7687 = vadd.f32 %v7546, %v7623
      %s7688 = scalar_select %p7559, 1, 0
      %v7689 = vstv %s7688
      %vm7690 = vcmp.eq.s32.totalorder %v7689, 1
      %v7691 = vsel %vm7690, %v7624, %v7483
      %v7692 = vsel %vm7690, %v7625, %v7484
      %v7693 = vsel %vm7690, %v7626, %v7485
      %v7694 = vsel %vm7690, %v7627, %v7486
      %v7695 = vsel %vm7690, %v7628, %v7487
      %v7696 = vsel %vm7690, %v7629, %v7488
      %v7697 = vsel %vm7690, %v7630, %v7489
      %v7698 = vsel %vm7690, %v7631, %v7490
      %v7699 = vsel %vm7690, %v7632, %v7491
      %v7700 = vsel %vm7690, %v7633, %v7492
      %v7701 = vsel %vm7690, %v7634, %v7493
      %v7702 = vsel %vm7690, %v7635, %v7494
      %v7703 = vsel %vm7690, %v7636, %v7495
      %v7704 = vsel %vm7690, %v7637, %v7496
      %v7705 = vsel %vm7690, %v7638, %v7497
      %v7706 = vsel %vm7690, %v7639, %v7498
      %v7707 = vsel %vm7690, %v7640, %v7499
      %v7708 = vsel %vm7690, %v7641, %v7500
      %v7709 = vsel %vm7690, %v7642, %v7501
      %v7710 = vsel %vm7690, %v7643, %v7502
      %v7711 = vsel %vm7690, %v7644, %v7503
      %v7712 = vsel %vm7690, %v7645, %v7504
      %v7713 = vsel %vm7690, %v7646, %v7505
      %v7714 = vsel %vm7690, %v7647, %v7506
      %v7715 = vsel %vm7690, %v7648, %v7507
      %v7716 = vsel %vm7690, %v7649, %v7508
      %v7717 = vsel %vm7690, %v7650, %v7509
      %v7718 = vsel %vm7690, %v7651, %v7510
      %v7719 = vsel %vm7690, %v7652, %v7511
      %v7720 = vsel %vm7690, %v7653, %v7512
      %v7721 = vsel %vm7690, %v7654, %v7513
      %v7722 = vsel %vm7690, %v7655, %v7514
      %v7723 = vsel %vm7690, %v7656, %v7515
      %v7724 = vsel %vm7690, %v7657, %v7516
      %v7725 = vsel %vm7690, %v7658, %v7517
      %v7726 = vsel %vm7690, %v7659, %v7518
      %v7727 = vsel %vm7690, %v7660, %v7519
      %v7728 = vsel %vm7690, %v7661, %v7520
      %v7729 = vsel %vm7690, %v7662, %v7521
      %v7730 = vsel %vm7690, %v7663, %v7522
      %v7731 = vsel %vm7690, %v7664, %v7523
      %v7732 = vsel %vm7690, %v7665, %v7524
      %v7733 = vsel %vm7690, %v7666, %v7525
      %v7734 = vsel %vm7690, %v7667, %v7526
      %v7735 = vsel %vm7690, %v7668, %v7527
      %v7736 = vsel %vm7690, %v7669, %v7528
      %v7737 = vsel %vm7690, %v7670, %v7529
      %v7738 = vsel %vm7690, %v7671, %v7530
      %v7739 = vsel %vm7690, %v7672, %v7531
      %v7740 = vsel %vm7690, %v7673, %v7532
      %v7741 = vsel %vm7690, %v7674, %v7533
      %v7742 = vsel %vm7690, %v7675, %v7534
      %v7743 = vsel %vm7690, %v7676, %v7535
      %v7744 = vsel %vm7690, %v7677, %v7536
      %v7745 = vsel %vm7690, %v7678, %v7537
      %v7746 = vsel %vm7690, %v7679, %v7538
      %v7747 = vsel %vm7690, %v7680, %v7539
      %v7748 = vsel %vm7690, %v7681, %v7540
      %v7749 = vsel %vm7690, %v7682, %v7541
      %v7750 = vsel %vm7690, %v7683, %v7542
      %v7751 = vsel %vm7690, %v7684, %v7543
      %v7752 = vsel %vm7690, %v7685, %v7544
      %v7753 = vsel %vm7690, %v7686, %v7545
      %v7754 = vsel %vm7690, %v7687, %v7546
      // Predicated region
      $region29: #{res_model_forward.1} parent=25 // pred_check
        %p7755 = pneg %p7559
      $region30: #{res_model_forward.1} parent=25 // pred_check_branch
        %7757 = sbr.rel (%p7755) target = $region32
      $region31: #{res_model_forward.1} parent=25 // pred_region
        %7758 = vst [vmem:[#allocation3] sm:$0xff] %v7691
        %7759 = vst [vmem:[#allocation3 + $0x8] sm:$0xff] %v7692
        %7760 = vst [vmem:[#allocation3 + $0x10] sm:$0xff] %v7693
        %7761 = vst [vmem:[#allocation3 + $0x18] sm:$0xff] %v7694
        %7762 = vst [vmem:[#allocation3 + $0x20] sm:$0xff] %v7695
        %7763 = vst [vmem:[#allocation3 + $0x28] sm:$0xff] %v7696
        %7764 = vst [vmem:[#allocation3 + $0x30] sm:$0xff] %v7697
        %7765 = vst [vmem:[#allocation3 + $0x38] sm:$0xff] %v7698
        %7766 = vst [vmem:[#allocation3 + $0x40] sm:$0xff] %v7699
        %7767 = vst [vmem:[#allocation3 + $0x48] sm:$0xff] %v7700
        %7768 = vst [vmem:[#allocation3 + $0x50] sm:$0xff] %v7701
        %7769 = vst [vmem:[#allocation3 + $0x58] sm:$0xff] %v7702
        %7770 = vst [vmem:[#allocation3 + $0x60] sm:$0xff] %v7703
        %7771 = vst [vmem:[#allocation3 + $0x68] sm:$0xff] %v7704
        %7772 = vst [vmem:[#allocation3 + $0x70] sm:$0xff] %v7705
        %7773 = vst [vmem:[#allocation3 + $0x78] sm:$0xff] %v7706
        %7774 = vst [vmem:[#allocation3 + $0x80] sm:$0xff] %v7707
        %7775 = vst [vmem:[#allocation3 + $0x88] sm:$0xff] %v7708
        %7776 = vst [vmem:[#allocation3 + $0x90] sm:$0xff] %v7709
        %7777 = vst [vmem:[#allocation3 + $0x98] sm:$0xff] %v7710
        %7778 = vst [vmem:[#allocation3 + $0xa0] sm:$0xff] %v7711
        %7779 = vst [vmem:[#allocation3 + $0xa8] sm:$0xff] %v7712
        %7780 = vst [vmem:[#allocation3 + $0xb0] sm:$0xff] %v7713
        %7781 = vst [vmem:[#allocation3 + $0xb8] sm:$0xff] %v7714
        %7782 = vst [vmem:[#allocation3 + $0xc0] sm:$0xff] %v7715
        %7783 = vst [vmem:[#allocation3 + $0xc8] sm:$0xff] %v7716
        %7784 = vst [vmem:[#allocation3 + $0xd0] sm:$0xff] %v7717
        %7785 = vst [vmem:[#allocation3 + $0xd8] sm:$0xff] %v7718
        %7786 = vst [vmem:[#allocation3 + $0xe0] sm:$0xff] %v7719
        %7787 = vst [vmem:[#allocation3 + $0xe8] sm:$0xff] %v7720
        %7788 = vst [vmem:[#allocation3 + $0xf0] sm:$0xff] %v7721
        %7789 = vst [vmem:[#allocation3 + $0xf8] sm:$0xff] %v7722
        %7790 = vst [vmem:[#allocation3 + $0x100] sm:$0xff] %v7723
        %7791 = vst [vmem:[#allocation3 + $0x108] sm:$0xff] %v7724
        %7792 = vst [vmem:[#allocation3 + $0x110] sm:$0xff] %v7725
        %7793 = vst [vmem:[#allocation3 + $0x118] sm:$0xff] %v7726
        %7794 = vst [vmem:[#allocation3 + $0x120] sm:$0xff] %v7727
        %7795 = vst [vmem:[#allocation3 + $0x128] sm:$0xff] %v7728
        %7796 = vst [vmem:[#allocation3 + $0x130] sm:$0xff] %v7729
        %7797 = vst [vmem:[#allocation3 + $0x138] sm:$0xff] %v7730
        %7798 = vst [vmem:[#allocation3 + $0x140] sm:$0xff] %v7731
        %7799 = vst [vmem:[#allocation3 + $0x148] sm:$0xff] %v7732
        %7800 = vst [vmem:[#allocation3 + $0x150] sm:$0xff] %v7733
        %7801 = vst [vmem:[#allocation3 + $0x158] sm:$0xff] %v7734
        %7802 = vst [vmem:[#allocation3 + $0x160] sm:$0xff] %v7735
        %7803 = vst [vmem:[#allocation3 + $0x168] sm:$0xff] %v7736
        %7804 = vst [vmem:[#allocation3 + $0x170] sm:$0xff] %v7737
        %7805 = vst [vmem:[#allocation3 + $0x178] sm:$0xff] %v7738
        %7806 = vst [vmem:[#allocation3 + $0x180] sm:$0xff] %v7739
        %7807 = vst [vmem:[#allocation3 + $0x188] sm:$0xff] %v7740
        %7808 = vst [vmem:[#allocation3 + $0x190] sm:$0xff] %v7741
        %7809 = vst [vmem:[#allocation3 + $0x198] sm:$0xff] %v7742
        %7810 = vst [vmem:[#allocation3 + $0x1a0] sm:$0xff] %v7743
        %7811 = vst [vmem:[#allocation3 + $0x1a8] sm:$0xff] %v7744
        %7812 = vst [vmem:[#allocation3 + $0x1b0] sm:$0xff] %v7745
        %7813 = vst [vmem:[#allocation3 + $0x1b8] sm:$0xff] %v7746
        %7814 = vst [vmem:[#allocation3 + $0x1c0] sm:$0xff] %v7747
        %7815 = vst [vmem:[#allocation3 + $0x1c8] sm:$0xff] %v7748
        %7816 = vst [vmem:[#allocation3 + $0x1d0] sm:$0xff] %v7749
        %7817 = vst [vmem:[#allocation3 + $0x1d8] sm:$0xff] %v7750
        %7818 = vst [vmem:[#allocation3 + $0x1e0] sm:$0xff] %v7751
        %7819 = vst [vmem:[#allocation3 + $0x1e8] sm:$0xff] %v7752
        %7820 = vst [vmem:[#allocation3 + $0x1f0] sm:$0xff] %v7753
        %7821 = vst [vmem:[#allocation3 + $0x1f8] sm:$0xff] %v7754
      $region32: #{res_model_forward.1} parent=25 // pred_fallthru
        _
      %v7822 = vadd.f32 %v7691, %v7692
      %v7823 = vadd.f32 %v7822, %v7693
      %v7824 = vadd.f32 %v7823, %v7694
      %v7825 = vadd.f32 %v7824, %v7695
      %v7826 = vadd.f32 %v7825, %v7696
      %v7827 = vadd.f32 %v7826, %v7697
      %v7828 = vadd.f32 %v7827, %v7698
      %v7829 = vadd.f32 %v7828, %v7699
      %v7830 = vadd.f32 %v7829, %v7700
      %v7831 = vadd.f32 %v7830, %v7701
      %v7832 = vadd.f32 %v7831, %v7702
      %v7833 = vadd.f32 %v7832, %v7703
      %v7834 = vadd.f32 %v7833, %v7704
      %v7835 = vadd.f32 %v7834, %v7705
      %v7836 = vadd.f32 %v7835, %v7706
      %v7837 = vadd.f32 %v7836, %v7707
      %v7838 = vadd.f32 %v7837, %v7708
      %v7839 = vadd.f32 %v7838, %v7709
      %v7840 = vadd.f32 %v7839, %v7710
      %v7841 = vadd.f32 %v7840, %v7711
      %v7842 = vadd.f32 %v7841, %v7712
      %v7843 = vadd.f32 %v7842, %v7713
      %v7844 = vadd.f32 %v7843, %v7714
      %v7845 = vadd.f32 %v7844, %v7715
      %v7846 = vadd.f32 %v7845, %v7716
      %v7847 = vadd.f32 %v7846, %v7717
      %v7848 = vadd.f32 %v7847, %v7718
      %v7849 = vadd.f32 %v7848, %v7719
      %v7850 = vadd.f32 %v7849, %v7720
      %v7851 = vadd.f32 %v7850, %v7721
      %v7852 = vadd.f32 %v7851, %v7722
      %v7853 = vadd.f32 %v7852, %v7723
      %v7854 = vadd.f32 %v7853, %v7724
      %v7855 = vadd.f32 %v7854, %v7725
      %v7856 = vadd.f32 %v7855, %v7726
      %v7857 = vadd.f32 %v7856, %v7727
      %v7858 = vadd.f32 %v7857, %v7728
      %v7859 = vadd.f32 %v7858, %v7729
      %v7860 = vadd.f32 %v7859, %v7730
      %v7861 = vadd.f32 %v7860, %v7731
      %v7862 = vadd.f32 %v7861, %v7732
      %v7863 = vadd.f32 %v7862, %v7733
      %v7864 = vadd.f32 %v7863, %v7734
      %v7865 = vadd.f32 %v7864, %v7735
      %v7866 = vadd.f32 %v7865, %v7736
      %v7867 = vadd.f32 %v7866, %v7737
      %v7868 = vadd.f32 %v7867, %v7738
      %v7869 = vadd.f32 %v7868, %v7739
      %v7870 = vadd.f32 %v7869, %v7740
      %v7871 = vadd.f32 %v7870, %v7741
      %v7872 = vadd.f32 %v7871, %v7742
      %v7873 = vadd.f32 %v7872, %v7743
      %v7874 = vadd.f32 %v7873, %v7744
      %v7875 = vadd.f32 %v7874, %v7745
      %v7876 = vadd.f32 %v7875, %v7746
      %v7877 = vadd.f32 %v7876, %v7747
      %v7878 = vadd.f32 %v7877, %v7748
      %v7879 = vadd.f32 %v7878, %v7749
      %v7880 = vadd.f32 %v7879, %v7750
      %v7881 = vadd.f32 %v7880, %v7751
      %v7882 = vadd.f32 %v7881, %v7752
      %v7883 = vadd.f32 %v7882, %v7753
      %v7884 = vadd.f32 %v7883, %v7754
      %v7885 = vrot.slane %v7884, 4
      %v7886 = vadd.f32 %v7884, %v7885
      %v7887 = vrot.slane %v7886, 2
      %v7888 = vadd.f32 %v7886, %v7887
      %v7889 = vrot.slane %v7888, 1
      %v7890 = vadd.f32 %v7888, %v7889
      %v7891 = vrcp.pop 512.0
      %v7892 = vmul.f32 %v7890, %v7891
      %v7893 = vsub.f32 %v7691, %v7892
      %v7894 = vsub.f32 %v7692, %v7892
      %v7895 = vsub.f32 %v7693, %v7892
      %v7896 = vsub.f32 %v7694, %v7892
      %v7897 = vsub.f32 %v7695, %v7892
      %v7898 = vsub.f32 %v7696, %v7892
      %v7899 = vsub.f32 %v7697, %v7892
      %v7900 = vsub.f32 %v7698, %v7892
      %v7901 = vsub.f32 %v7699, %v7892
      %v7902 = vsub.f32 %v7700, %v7892
      %v7903 = vsub.f32 %v7701, %v7892
      %v7904 = vsub.f32 %v7702, %v7892
      %v7905 = vsub.f32 %v7703, %v7892
      %v7906 = vsub.f32 %v7704, %v7892
      %v7907 = vsub.f32 %v7705, %v7892
      %v7908 = vsub.f32 %v7706, %v7892
      %v7909 = vsub.f32 %v7707, %v7892
      %v7910 = vsub.f32 %v7708, %v7892
      %v7911 = vsub.f32 %v7709, %v7892
      %v7912 = vsub.f32 %v7710, %v7892
      %v7913 = vsub.f32 %v7711, %v7892
      %v7914 = vsub.f32 %v7712, %v7892
      %v7915 = vsub.f32 %v7713, %v7892
      %v7916 = vsub.f32 %v7714, %v7892
      %v7917 = vsub.f32 %v7715, %v7892
      %v7918 = vsub.f32 %v7716, %v7892
      %v7919 = vsub.f32 %v7717, %v7892
      %v7920 = vsub.f32 %v7718, %v7892
      %v7921 = vsub.f32 %v7719, %v7892
      %v7922 = vsub.f32 %v7720, %v7892
      %v7923 = vsub.f32 %v7721, %v7892
      %v7924 = vsub.f32 %v7722, %v7892
      %v7925 = vsub.f32 %v7723, %v7892
      %v7926 = vsub.f32 %v7724, %v7892
      %v7927 = vsub.f32 %v7725, %v7892
      %v7928 = vsub.f32 %v7726, %v7892
      %v7929 = vsub.f32 %v7727, %v7892
      %v7930 = vsub.f32 %v7728, %v7892
      %v7931 = vsub.f32 %v7729, %v7892
      %v7932 = vsub.f32 %v7730, %v7892
      %v7933 = vsub.f32 %v7731, %v7892
      %v7934 = vsub.f32 %v7732, %v7892
      %v7935 = vsub.f32 %v7733, %v7892
      %v7936 = vsub.f32 %v7734, %v7892
      %v7937 = vsub.f32 %v7735, %v7892
      %v7938 = vsub.f32 %v7736, %v7892
      %v7939 = vsub.f32 %v7737, %v7892
      %v7940 = vsub.f32 %v7738, %v7892
      %v7941 = vsub.f32 %v7739, %v7892
      %v7942 = vsub.f32 %v7740, %v7892
      %v7943 = vsub.f32 %v7741, %v7892
      %v7944 = vsub.f32 %v7742, %v7892
      %v7945 = vsub.f32 %v7743, %v7892
      %v7946 = vsub.f32 %v7744, %v7892
      %v7947 = vsub.f32 %v7745, %v7892
      %v7948 = vsub.f32 %v7746, %v7892
      %v7949 = vsub.f32 %v7747, %v7892
      %v7950 = vsub.f32 %v7748, %v7892
      %v7951 = vsub.f32 %v7749, %v7892
      %v7952 = vsub.f32 %v7750, %v7892
      %v7953 = vsub.f32 %v7751, %v7892
      %v7954 = vsub.f32 %v7752, %v7892
      %v7955 = vsub.f32 %v7753, %v7892
      %v7956 = vsub.f32 %v7754, %v7892
      %v7957 = vmul.f32 %v7893, %v7893
      %v7958 = vmul.f32 %v7894, %v7894
      %v7959 = vmul.f32 %v7895, %v7895
      %v7960 = vmul.f32 %v7896, %v7896
      %v7961 = vmul.f32 %v7897, %v7897
      %v7962 = vmul.f32 %v7898, %v7898
      %v7963 = vmul.f32 %v7899, %v7899
      %v7964 = vmul.f32 %v7900, %v7900
      %v7965 = vmul.f32 %v7901, %v7901
      %v7966 = vmul.f32 %v7902, %v7902
      %v7967 = vmul.f32 %v7903, %v7903
      %v7968 = vmul.f32 %v7904, %v7904
      %v7969 = vmul.f32 %v7905, %v7905
      %v7970 = vmul.f32 %v7906, %v7906
      %v7971 = vmul.f32 %v7907, %v7907
      %v7972 = vmul.f32 %v7908, %v7908
      %v7973 = vmul.f32 %v7909, %v7909
      %v7974 = vmul.f32 %v7910, %v7910
      %v7975 = vmul.f32 %v7911, %v7911
      %v7976 = vmul.f32 %v7912, %v7912
      %v7977 = vmul.f32 %v7913, %v7913
      %v7978 = vmul.f32 %v7914, %v7914
      %v7979 = vmul.f32 %v7915, %v7915
      %v7980 = vmul.f32 %v7916, %v7916
      %v7981 = vmul.f32 %v7917, %v7917
      %v7982 = vmul.f32 %v7918, %v7918
      %v7983 = vmul.f32 %v7919, %v7919
      %v7984 = vmul.f32 %v7920, %v7920
      %v7985 = vmul.f32 %v7921, %v7921
      %v7986 = vmul.f32 %v7922, %v7922
      %v7987 = vmul.f32 %v7923, %v7923
      %v7988 = vmul.f32 %v7924, %v7924
      %v7989 = vmul.f32 %v7925, %v7925
      %v7990 = vmul.f32 %v7926, %v7926
      %v7991 = vmul.f32 %v7927, %v7927
      %v7992 = vmul.f32 %v7928, %v7928
      %v7993 = vmul.f32 %v7929, %v7929
      %v7994 = vmul.f32 %v7930, %v7930
      %v7995 = vmul.f32 %v7931, %v7931
      %v7996 = vmul.f32 %v7932, %v7932
      %v7997 = vmul.f32 %v7933, %v7933
      %v7998 = vmul.f32 %v7934, %v7934
      %v7999 = vmul.f32 %v7935, %v7935
      %v8000 = vmul.f32 %v7936, %v7936
      %v8001 = vmul.f32 %v7937, %v7937
      %v8002 = vmul.f32 %v7938, %v7938
      %v8003 = vmul.f32 %v7939, %v7939
      %v8004 = vmul.f32 %v7940, %v7940
      %v8005 = vmul.f32 %v7941, %v7941
      %v8006 = vmul.f32 %v7942, %v7942
      %v8007 = vmul.f32 %v7943, %v7943
      %v8008 = vmul.f32 %v7944, %v7944
      %v8009 = vmul.f32 %v7945, %v7945
      %v8010 = vmul.f32 %v7946, %v7946
      %v8011 = vmul.f32 %v7947, %v7947
      %v8012 = vmul.f32 %v7948, %v7948
      %v8013 = vmul.f32 %v7949, %v7949
      %v8014 = vmul.f32 %v7950, %v7950
      %v8015 = vmul.f32 %v7951, %v7951
      %v8016 = vmul.f32 %v7952, %v7952
      %v8017 = vmul.f32 %v7953, %v7953
      %v8018 = vmul.f32 %v7954, %v7954
      %v8019 = vmul.f32 %v7955, %v7955
      %v8020 = vmul.f32 %v7956, %v7956
      %v8021 = vadd.f32 %v7957, %v7958
      %v8022 = vadd.f32 %v8021, %v7959
      %v8023 = vadd.f32 %v8022, %v7960
      %v8024 = vadd.f32 %v8023, %v7961
      %v8025 = vadd.f32 %v8024, %v7962
      %v8026 = vadd.f32 %v8025, %v7963
      %v8027 = vadd.f32 %v8026, %v7964
      %v8028 = vadd.f32 %v8027, %v7965
      %v8029 = vadd.f32 %v8028, %v7966
      %v8030 = vadd.f32 %v8029, %v7967
      %v8031 = vadd.f32 %v8030, %v7968
      %v8032 = vadd.f32 %v8031, %v7969
      %v8033 = vadd.f32 %v8032, %v7970
      %v8034 = vadd.f32 %v8033, %v7971
      %v8035 = vadd.f32 %v8034, %v7972
      %v8036 = vadd.f32 %v8035, %v7973
      %v8037 = vadd.f32 %v8036, %v7974
      %v8038 = vadd.f32 %v8037, %v7975
      %v8039 = vadd.f32 %v8038, %v7976
      %v8040 = vadd.f32 %v8039, %v7977
      %v8041 = vadd.f32 %v8040, %v7978
      %v8042 = vadd.f32 %v8041, %v7979
      %v8043 = vadd.f32 %v8042, %v7980
      %v8044 = vadd.f32 %v8043, %v7981
      %v8045 = vadd.f32 %v8044, %v7982
      %v8046 = vadd.f32 %v8045, %v7983
      %v8047 = vadd.f32 %v8046, %v7984
      %v8048 = vadd.f32 %v8047, %v7985
      %v8049 = vadd.f32 %v8048, %v7986
      %v8050 = vadd.f32 %v8049, %v7987
      %v8051 = vadd.f32 %v8050, %v7988
      %v8052 = vadd.f32 %v8051, %v7989
      %v8053 = vadd.f32 %v8052, %v7990
      %v8054 = vadd.f32 %v8053, %v7991
      %v8055 = vadd.f32 %v8054, %v7992
      %v8056 = vadd.f32 %v8055, %v7993
      %v8057 = vadd.f32 %v8056, %v7994
      %v8058 = vadd.f32 %v8057, %v7995
      %v8059 = vadd.f32 %v8058, %v7996
      %v8060 = vadd.f32 %v8059, %v7997
      %v8061 = vadd.f32 %v8060, %v7998
      %v8062 = vadd.f32 %v8061, %v7999
      %v8063 = vadd.f32 %v8062, %v8000
      %v8064 = vadd.f32 %v8063, %v8001
      %v8065 = vadd.f32 %v8064, %v8002
      %v8066 = vadd.f32 %v8065, %v8003
      %v8067 = vadd.f32 %v8066, %v8004
      %v8068 = vadd.f32 %v8067, %v8005
      %v8069 = vadd.f32 %v8068, %v8006
      %v8070 = vadd.f32 %v8069, %v8007
      %v8071 = vadd.f32 %v8070, %v8008
      %v8072 = vadd.f32 %v8071, %v8009
      %v8073 = vadd.f32 %v8072, %v8010
      %v8074 = vadd.f32 %v8073, %v8011
      %v8075 = vadd.f32 %v8074, %v8012
      %v8076 = vadd.f32 %v8075, %v8013
      %v8077 = vadd.f32 %v8076, %v8014
      %v8078 = vadd.f32 %v8077, %v8015
      %v8079 = vadd.f32 %v8078, %v8016
      %v8080 = vadd.f32 %v8079, %v8017
      %v8081 = vadd.f32 %v8080, %v8018
      %v8082 = vadd.f32 %v8081, %v8019
      %v8083 = vadd.f32 %v8082, %v8020
      %v8084 = vrot.slane %v8083, 4
      %v8085 = vadd.f32 %v8083, %v8084
      %v8086 = vrot.slane %v8085, 2
      %v8087 = vadd.f32 %v8085, %v8086
      %v8088 = vrot.slane %v8087, 1
      %v8089 = vadd.f32 %v8087, %v8088
      %v8090 = vmul.f32 %v8089, %v7891
      %v8091 = vadd.f32 %v8090, 1e-05
      %v8092 = vrsqrt.pop %v8091
      %v8093 = vmul.f32 %v7893, %v8092
      %v8094 = vmul.f32 %v7894, %v8092
      %v8095 = vmul.f32 %v7895, %v8092
      %v8096 = vmul.f32 %v7896, %v8092
      %v8097 = vmul.f32 %v7897, %v8092
      %v8098 = vmul.f32 %v7898, %v8092
      %v8099 = vmul.f32 %v7899, %v8092
      %v8100 = vmul.f32 %v7900, %v8092
      %v8101 = vmul.f32 %v7901, %v8092
      %v8102 = vmul.f32 %v7902, %v8092
      %v8103 = vmul.f32 %v7903, %v8092
      %v8104 = vmul.f32 %v7904, %v8092
      %v8105 = vmul.f32 %v7905, %v8092
      %v8106 = vmul.f32 %v7906, %v8092
      %v8107 = vmul.f32 %v7907, %v8092
      %v8108 = vmul.f32 %v7908, %v8092
      %v8109 = vmul.f32 %v7909, %v8092
      %v8110 = vmul.f32 %v7910, %v8092
      %v8111 = vmul.f32 %v7911, %v8092
      %v8112 = vmul.f32 %v7912, %v8092
      %v8113 = vmul.f32 %v7913, %v8092
      %v8114 = vmul.f32 %v7914, %v8092
      %v8115 = vmul.f32 %v7915, %v8092
      %v8116 = vmul.f32 %v7916, %v8092
      %v8117 = vmul.f32 %v7917, %v8092
      %v8118 = vmul.f32 %v7918, %v8092
      %v8119 = vmul.f32 %v7919, %v8092
      %v8120 = vmul.f32 %v7920, %v8092
      %v8121 = vmul.f32 %v7921, %v8092
      %v8122 = vmul.f32 %v7922, %v8092
      %v8123 = vmul.f32 %v7923, %v8092
      %v8124 = vmul.f32 %v7924, %v8092
      %v8125 = vmul.f32 %v7925, %v8092
      %v8126 = vmul.f32 %v7926, %v8092
      %v8127 = vmul.f32 %v7927, %v8092
      %v8128 = vmul.f32 %v7928, %v8092
      %v8129 = vmul.f32 %v7929, %v8092
      %v8130 = vmul.f32 %v7930, %v8092
      %v8131 = vmul.f32 %v7931, %v8092
      %v8132 = vmul.f32 %v7932, %v8092
      %v8133 = vmul.f32 %v7933, %v8092
      %v8134 = vmul.f32 %v7934, %v8092
      %v8135 = vmul.f32 %v7935, %v8092
      %v8136 = vmul.f32 %v7936, %v8092
      %v8137 = vmul.f32 %v7937, %v8092
      %v8138 = vmul.f32 %v7938, %v8092
      %v8139 = vmul.f32 %v7939, %v8092
      %v8140 = vmul.f32 %v7940, %v8092
      %v8141 = vmul.f32 %v7941, %v8092
      %v8142 = vmul.f32 %v7942, %v8092
      %v8143 = vmul.f32 %v7943, %v8092
      %v8144 = vmul.f32 %v7944, %v8092
      %v8145 = vmul.f32 %v7945, %v8092
      %v8146 = vmul.f32 %v7946, %v8092
      %v8147 = vmul.f32 %v7947, %v8092
      %v8148 = vmul.f32 %v7948, %v8092
      %v8149 = vmul.f32 %v7949, %v8092
      %v8150 = vmul.f32 %v7950, %v8092
      %v8151 = vmul.f32 %v7951, %v8092
      %v8152 = vmul.f32 %v7952, %v8092
      %v8153 = vmul.f32 %v7953, %v8092
      %v8154 = vmul.f32 %v7954, %v8092
      %v8155 = vmul.f32 %v7955, %v8092
      %v8156 = vmul.f32 %v7956, %v8092
      %v8157 = vpack.c.bf16 %v8094, %v8093
      %v8158 = vpack.c.bf16 %v8096, %v8095
      %v8159 = vpack.c.bf16 %v8098, %v8097
      %v8160 = vpack.c.bf16 %v8100, %v8099
      %v8161 = vpack.c.bf16 %v8102, %v8101
      %v8162 = vpack.c.bf16 %v8104, %v8103
      %v8163 = vpack.c.bf16 %v8106, %v8105
      %v8164 = vpack.c.bf16 %v8108, %v8107
      %v8165 = vpack.c.bf16 %v8110, %v8109
      %v8166 = vpack.c.bf16 %v8112, %v8111
      %v8167 = vpack.c.bf16 %v8114, %v8113
      %v8168 = vpack.c.bf16 %v8116, %v8115
      %v8169 = vpack.c.bf16 %v8118, %v8117
      %v8170 = vpack.c.bf16 %v8120, %v8119
      %v8171 = vpack.c.bf16 %v8122, %v8121
      %v8172 = vpack.c.bf16 %v8124, %v8123
      %v8173 = vpack.c.bf16 %v8126, %v8125
      %v8174 = vpack.c.bf16 %v8128, %v8127
      %v8175 = vpack.c.bf16 %v8130, %v8129
      %v8176 = vpack.c.bf16 %v8132, %v8131
      %v8177 = vpack.c.bf16 %v8134, %v8133
      %v8178 = vpack.c.bf16 %v8136, %v8135
      %v8179 = vpack.c.bf16 %v8138, %v8137
      %v8180 = vpack.c.bf16 %v8140, %v8139
      %v8181 = vpack.c.bf16 %v8142, %v8141
      %v8182 = vpack.c.bf16 %v8144, %v8143
      %v8183 = vpack.c.bf16 %v8146, %v8145
      %v8184 = vpack.c.bf16 %v8148, %v8147
      %v8185 = vpack.c.bf16 %v8150, %v8149
      %v8186 = vpack.c.bf16 %v8152, %v8151
      %v8187 = vpack.c.bf16 %v8154, %v8153
      %v8188 = vpack.c.bf16 %v8156, %v8155
      %8189 = vst [vmem:[%s899 + $0x8] sm:$0xff] %v8157
      %8190 = vst [vmem:[%s899 + $0x20] sm:$0xff] %v8158
      %8191 = vst [vmem:[%s899 + $0x38] sm:$0xff] %v8159
      %8192 = vst [vmem:[%s899 + $0x50] sm:$0xff] %v8160
      %8193 = vst [vmem:[%s899 + $0x68] sm:$0xff] %v8161
      %8194 = vst [vmem:[%s899 + $0x80] sm:$0xff] %v8162
      %8195 = vst [vmem:[%s899 + $0x98] sm:$0xff] %v8163
      %8196 = vst [vmem:[%s899 + $0xb0] sm:$0xff] %v8164
      %8197 = vst [vmem:[%s899 + $0xc8] sm:$0xff] %v8165
      %8198 = vst [vmem:[%s899 + $0xe0] sm:$0xff] %v8166
      %8199 = vst [vmem:[%s899 + $0xf8] sm:$0xff] %v8167
      %8200 = vst [vmem:[%s899 + $0x110] sm:$0xff] %v8168
      %8201 = vst [vmem:[%s899 + $0x128] sm:$0xff] %v8169
      %8202 = vst [vmem:[%s899 + $0x140] sm:$0xff] %v8170
      %8203 = vst [vmem:[%s899 + $0x158] sm:$0xff] %v8171
      %8204 = vst [vmem:[%s899 + $0x170] sm:$0xff] %v8172
      %8205 = vst [vmem:[%s899 + $0x1b8] sm:$0xff] %v8173
      %8206 = vst [vmem:[%s899 + $0x1d0] sm:$0xff] %v8174
      %8207 = vst [vmem:[%s899 + $0x1e8] sm:$0xff] %v8175
      %8208 = vst [vmem:[%s899 + $0x200] sm:$0xff] %v8176
      %8209 = vst [vmem:[%s899 + $0x218] sm:$0xff] %v8177
      %8210 = vst [vmem:[%s899 + $0x230] sm:$0xff] %v8178
      %8211 = vst [vmem:[%s899 + $0x248] sm:$0xff] %v8179
      %8212 = vst [vmem:[%s899 + $0x260] sm:$0xff] %v8180
      %8213 = vst [vmem:[%s899 + $0x278] sm:$0xff] %v8181
      %8214 = vst [vmem:[%s899 + $0x290] sm:$0xff] %v8182
      %8215 = vst [vmem:[%s899 + $0x2a8] sm:$0xff] %v8183
      %8216 = vst [vmem:[%s899 + $0x2c0] sm:$0xff] %v8184
      %8217 = vst [vmem:[%s899 + $0x2d8] sm:$0xff] %v8185
      %8218 = vst [vmem:[%s899 + $0x2f0] sm:$0xff] %v8186
      %8219 = vst [vmem:[%s899 + $0x308] sm:$0xff] %v8187
      %8220 = vst [vmem:[%s899 + $0x320] sm:$0xff] %v8188
      %p8221 = scmp.eq.s32.totalorder %s938, 9
      // Predicated region
      $region33: #{res_model_forward.1} parent=25 // pred_check
        %p8222 = pneg %p8221
      $region34: #{res_model_forward.1} parent=25 // pred_check_branch
        %8224 = sbr.rel (%p8222) target = $region36
      $region35: #{res_model_forward.1} parent=25 // pred_region
        %v8225 = vadd.f32 %v8093, %v8094
        %v8226 = vadd.f32 %v8225, %v8095
        %v8227 = vadd.f32 %v8226, %v8096
        %v8228 = vadd.f32 %v8227, %v8097
        %v8229 = vadd.f32 %v8228, %v8098
        %v8230 = vadd.f32 %v8229, %v8099
        %v8231 = vadd.f32 %v8230, %v8100
        %v8232 = vadd.f32 %v8231, %v8101
        %v8233 = vadd.f32 %v8232, %v8102
        %v8234 = vadd.f32 %v8233, %v8103
        %v8235 = vadd.f32 %v8234, %v8104
        %v8236 = vadd.f32 %v8235, %v8105
        %v8237 = vadd.f32 %v8236, %v8106
        %v8238 = vadd.f32 %v8237, %v8107
        %v8239 = vadd.f32 %v8238, %v8108
        %v8240 = vadd.f32 %v8239, %v8109
        %v8241 = vadd.f32 %v8240, %v8110
        %v8242 = vadd.f32 %v8241, %v8111
        %v8243 = vadd.f32 %v8242, %v8112
        %v8244 = vadd.f32 %v8243, %v8113
        %v8245 = vadd.f32 %v8244, %v8114
        %v8246 = vadd.f32 %v8245, %v8115
        %v8247 = vadd.f32 %v8246, %v8116
        %v8248 = vadd.f32 %v8247, %v8117
        %v8249 = vadd.f32 %v8248, %v8118
        %v8250 = vadd.f32 %v8249, %v8119
        %v8251 = vadd.f32 %v8250, %v8120
        %v8252 = vadd.f32 %v8251, %v8121
        %v8253 = vadd.f32 %v8252, %v8122
        %v8254 = vadd.f32 %v8253, %v8123
        %v8255 = vadd.f32 %v8254, %v8124
        %v8256 = vrot.slane %v8255, 4
        %v8257 = vadd.f32 %v8255, %v8256
        %v8258 = vrot.slane %v8257, 2
        %v8259 = vadd.f32 %v8257, %v8258
        %v8260 = vrot.slane %v8259, 1
        %v8261 = vadd.f32 %v8259, %v8260
        %v8262 = vadd.f32 %v8125, %v8126
        %v8263 = vadd.f32 %v8262, %v8127
        %v8264 = vadd.f32 %v8263, %v8128
        %v8265 = vadd.f32 %v8264, %v8129
        %v8266 = vadd.f32 %v8265, %v8130
        %v8267 = vadd.f32 %v8266, %v8131
        %v8268 = vadd.f32 %v8267, %v8132
        %v8269 = vadd.f32 %v8268, %v8133
        %v8270 = vadd.f32 %v8269, %v8134
        %v8271 = vadd.f32 %v8270, %v8135
        %v8272 = vadd.f32 %v8271, %v8136
        %v8273 = vadd.f32 %v8272, %v8137
        %v8274 = vadd.f32 %v8273, %v8138
        %v8275 = vadd.f32 %v8274, %v8139
        %v8276 = vadd.f32 %v8275, %v8140
        %v8277 = vadd.f32 %v8276, %v8141
        %v8278 = vadd.f32 %v8277, %v8142
        %v8279 = vadd.f32 %v8278, %v8143
        %v8280 = vadd.f32 %v8279, %v8144
        %v8281 = vadd.f32 %v8280, %v8145
        %v8282 = vadd.f32 %v8281, %v8146
        %v8283 = vadd.f32 %v8282, %v8147
        %v8284 = vadd.f32 %v8283, %v8148
        %v8285 = vadd.f32 %v8284, %v8149
        %v8286 = vadd.f32 %v8285, %v8150
        %v8287 = vadd.f32 %v8286, %v8151
        %v8288 = vadd.f32 %v8287, %v8152
        %v8289 = vadd.f32 %v8288, %v8153
        %v8290 = vadd.f32 %v8289, %v8154
        %v8291 = vadd.f32 %v8290, %v8155
        %v8292 = vadd.f32 %v8291, %v8156
        %v8293 = vrot.slane %v8292, 4
        %v8294 = vadd.f32 %v8292, %v8293
        %v8295 = vrot.slane %v8294, 2
        %v8296 = vadd.f32 %v8294, %v8295
        %v8297 = vrot.slane %v8296, 1
        %v8298 = vadd.f32 %v8296, %v8297
        %v8299 = vrcp.pop 256.0
        %v8300 = vmul.f32 %v8261, %v8299
        %v8301 = vmul.f32 %v8298, %v8299
        %v8302 = vld [vmem:[%s3] sm:$0xff]
        %v8303 = vld [vmem:[%s3 + $0x8] sm:$0xff]
        %v8304 = vld [vmem:[%s3 + $0x10] sm:$0xff]
        %v8305 = vld [vmem:[%s3 + $0x18] sm:$0xff]
        %v8306 = vld [vmem:[%s3 + $0x20] sm:$0xff]
        %v8307 = vld [vmem:[%s3 + $0x28] sm:$0xff]
        %v8308 = vld [vmem:[%s3 + $0x30] sm:$0xff]
        %v8309 = vld [vmem:[%s3 + $0x38] sm:$0xff]
        %v8310 = vld [vmem:[%s3 + $0x40] sm:$0xff]
        %v8311 = vld [vmem:[%s3 + $0x48] sm:$0xff]
        %v8312 = vld [vmem:[%s3 + $0x50] sm:$0xff]
        %v8313 = vld [vmem:[%s3 + $0x58] sm:$0xff]
        %v8314 = vld [vmem:[%s3 + $0x60] sm:$0xff]
        %v8315 = vld [vmem:[%s3 + $0x68] sm:$0xff]
        %v8316 = vld [vmem:[%s3 + $0x70] sm:$0xff]
        %v8317 = vld [vmem:[%s3 + $0x78] sm:$0xff]
        %v8318 = vld [vmem:[%s4] sm:$0x1]
        %v8320 = vlaneseq
        %v8321 = vshrl.u32 %v8320, 7
        %v8322 = vsub.s32 0, %v8321
        %v8323 = vrot.slane %v8318, %v8322
        %vm8327 = vcmask 1041409
        %v8328 = vsel %vm8327, %v8301, %v8300
        %8330 = vmatprep.subr.mxu0 0.0
        %8331 = vmatpush1.msra.mxu0 %v8302
        %8332 = vmatprep.subr.mxu0 0.0
        %8333 = vmatpush1.msra.mxu0 %v8303
        %8334 = vmatprep.subr.mxu0 0.0
        %8335 = vmatpush1.msra.mxu0 %v8304
        %8336 = vmatprep.subr.mxu0 0.0
        %8337 = vmatpush1.msra.mxu0 %v8305
        %8338 = vmatprep.subr.mxu0 0.0
        %8339 = vmatpush1.msra.mxu0 %v8306
        %8340 = vmatprep.subr.mxu0 0.0
        %8341 = vmatpush1.msra.mxu0 %v8307
        %8342 = vmatprep.subr.mxu0 0.0
        %8343 = vmatpush1.msra.mxu0 %v8308
        %8344 = vmatprep.subr.mxu0 0.0
        %8345 = vmatpush1.msra.mxu0 %v8309
        %8346 = vmatprep.subr.mxu0 0.0
        %8347 = vmatpush1.msra.mxu0 %v8310
        %8348 = vmatprep.subr.mxu0 0.0
        %8349 = vmatpush1.msra.mxu0 %v8311
        %8350 = vmatprep.subr.mxu0 0.0
        %8351 = vmatpush1.msra.mxu0 %v8312
        %8352 = vmatprep.subr.mxu0 0.0
        %8353 = vmatpush1.msra.mxu0 %v8313
        %8354 = vmatprep.subr.mxu0 0.0
        %8355 = vmatpush1.msra.mxu0 %v8314
        %8356 = vmatprep.subr.mxu0 0.0
        %8357 = vmatpush1.msra.mxu0 %v8315
        %8358 = vmatprep.subr.mxu0 0.0
        %8359 = vmatpush1.msra.mxu0 %v8316
        %8360 = vmatprep.subr.mxu0 0.0
        %8361 = vmatpush1.msra.mxu0 %v8317
        %8362 = vmatprep.subr.mxu0 0.0
        %8363 = vmatpush1.msra.mxu0 0.0
        %8364 = vmatprep.subr.mxu0 0.0
        %8365 = vmatpush1.msra.mxu0 0.0
        %8366 = vmatprep.subr.mxu0 0.0
        %8367 = vmatpush1.msra.mxu0 0.0
        %8368 = vmatprep.subr.mxu0 0.0
        %8369 = vmatpush1.msra.mxu0 0.0
        %8370 = vmatprep.subr.mxu0 0.0
        %8371 = vmatpush1.msra.mxu0 0.0
        %8372 = vmatprep.subr.mxu0 0.0
        %8373 = vmatpush1.msra.mxu0 0.0
        %8374 = vmatprep.subr.mxu0 0.0
        %8375 = vmatpush1.msra.mxu0 0.0
        %8376 = vmatprep.subr.mxu0 0.0
        %8377 = vmatpush1.msra.mxu0 0.0
        %8378 = vmatprep.subr.mxu0 0.0
        %8379 = vmatpush1.msra.mxu0 0.0
        %8380 = vmatprep.subr.mxu0 0.0
        %8381 = vmatpush1.msra.mxu0 0.0
        %8382 = vmatprep.subr.mxu0 0.0
        %8383 = vmatpush1.msra.mxu0 0.0
        %8384 = vmatprep.subr.mxu0 0.0
        %8385 = vmatpush1.msra.mxu0 0.0
        %8386 = vmatprep.subr.mxu0 0.0
        %8387 = vmatpush1.msra.mxu0 0.0
        %8388 = vmatprep.subr.mxu0 0.0
        %8389 = vmatpush1.msra.mxu0 0.0
        %8390 = vmatprep.subr.mxu0 0.0
        %8391 = vmatpush1.msra.mxu0 0.0
        %8392 = vmatprep.subr.mxu0 0.0
        %8393 = vmatpush1.msra.mxu0 0.0
        %8394 = vmatprep.mubr.f32.mxu0 0.0
        %8395 = vmatmul.mubr.f32.gmra.mrb[0].mxu0 %v8328
        %v8396 = vpop.f32.mrb[0].mxu0
        %v8397 = vadd.f32 %v8323, %v8396
        %v8398 = vpop.f32.mrb[0].mxu0
        %8399 = vdwg.mxu0
        %8400 = vst [vmem:[#allocation4] sm:$0x3] %v8397
      $region36: #{res_model_forward.1} parent=25 // pred_fallthru
        _
    $region26: #{res_model_forward.1} parent=1 // loop_footer
      %s937 = sadd.s32 1, %s933
    $region27: #{res_model_forward.1} parent=1 // loop_footer_branch
      %932 = sbr.rel target = $region23
    $region28: #{res_model_forward.1} parent=1 // loop_exit
      _
    // Predicated region
    $region37: #{res_model_forward.1} parent=1 // pred_check
      _
    $region38: #{res_model_forward.1} parent=1 // pred_check_branch
      %8402 = sbr.rel (0) target = $region40
    $region39: #{res_model_forward.1} parent=1 // pred_region
      %s8404 = ssub.s32 32, 32
      %8405 = vsyncadd [#allocation5], %s8404
      %s8407 = sshll.u32 [#allocation4], 4
      %s8408 = int_to_ptr.vmem [resolvable:$true] %s8407
      %8410 = dma.vmem_to_hbm [thread:$0]  %s8408, 32, %s5, [#allocation5]
    $region40: #{res_model_forward.1} parent=1 // pred_fallthru
      _
    // Predicated region
    $region41: #{res_model_forward.1} parent=1 // pred_check
      _
    $region42: #{res_model_forward.1} parent=1 // pred_check_branch
      %8412 = sbr.rel (0) target = $region44
    $region43: #{res_model_forward.1} parent=1 // pred_region
      %8413 = dma.done [#allocation5], 32
    $region44: #{res_model_forward.1} parent=1 // pred_fallthru
      _
    %8414 = vsyncpa [#allocation5], 1

</llo_original>
